<compile_context>
chip_gen: v5e
topology: v5e:2x2
jax: 0.10.0
libtpu: 0.0.40
codegen_flags: <defaults>
</compile_context>

<pallas_src>
import functools

import jax
import jax.numpy as jnp
from jax import lax
from jax.experimental import pallas as pl
from jax.experimental.pallas import tpu as pltpu


def _round_up(x, m):
    return ((x + m - 1) // m) * m


def _flow_head_kernel(x_ref, w1_ref, b1_ref, w2_ref, b2_ref, o_ref,
                      xpad_ref, hpad_ref, *, block_m):
    """Fused FlowHead forward for one NCHW batch element.

    x_ref   : (1, Cin, H, W)    f32   input tile (NCHW)
    w1_ref  : (9, Cin, Chid)    bf16  conv1 weights, one (Cin, Chid) per tap
    b1_ref  : (1, Chid)         f32   conv1 bias
    w2_ref  : (Chid, 9*Cout)    bf16  conv2 weights, col t*Cout+co = w2[co,:,dy,dx]
    b2_ref  : (1, Cout)         f32   conv2 bias
    o_ref   : (1, Cout, H, W)   f32   output tile (NCHW)
    xpad_ref: (L, Cin)          bf16  zero-padded input, spatial dims flattened
    hpad_ref: (L, Chid)         bf16  zero-padded hidden, spatial dims flattened

    Flattening: padded image (Hp, Wp) row-major -> flat row r*Wp + c, so a
    3x3 tap (dy, dx) is a constant flat offset off = dy*Wp + dx and every tap
    read is a plain contiguous row-slice (no reshape/relayout per tap).
    Columns with (q mod Wp) >= W "wrap" across image rows; they are computed
    but masked to zero so they double as conv2's left/right zero padding.
    """
    _, cin, h, w = x_ref.shape
    chid = w1_ref.shape[2]
    cout = o_ref.shape[1]
    wp = w + 2
    m = h * wp                              # rows of the padded-width grid
    cdt = xpad_ref.dtype                    # bf16 compute dtype for the MXU
    offs = [dy * wp + dx for dy in range(3) for dx in range(3)]

    # ---- Stage 0: scatter the NCHW input into the zero-padded flat scratch.
    xpad_ref[...] = jnp.zeros_like(xpad_ref)
    hpad_ref[...] = jnp.zeros_like(hpad_ref)
    for r in range(h):
        # image row r -> flat rows [(r+1)*Wp + 1, (r+1)*Wp + 1 + W)
        row = x_ref[0, :, r, :]             # (Cin, W) f32
        xpad_ref[pl.ds((r + 1) * wp + 1, w), :] = row.T.astype(cdt)

    # ---- Stage 1: conv1 + bias + ReLU -> padded hidden (stays in VMEM).
    b1 = b1_ref[...]                        # (1, Chid) f32
    for m0 in range(0, m, block_m):
        bm = min(block_m, m - m0)
        acc = jnp.zeros((bm, chid), jnp.float32)
        for t in range(9):                  # 9 shifted MXU matmuls
            xs = xpad_ref[pl.ds(m0 + offs[t], bm), :]        # (bm, Cin) bf16
            acc = acc + jnp.dot(xs, w1_ref[t],
                                preferred_element_type=jnp.float32)
        hid = jnp.maximum(acc + b1, 0.0)
        # zero the wrap columns so they become conv2's zero padding
        q = m0 + lax.broadcasted_iota(jnp.int32, (bm, 1), 0)
        hid = jnp.where((q % wp) < w, hid, 0.0)
        hpad_ref[pl.ds(wp + 1 + m0, bm), :] = hid.astype(cdt)

    # ---- Stage 2: conv2 -- all 9 taps packed along the MXU N dimension.
    y = jnp.dot(hpad_ref[...], w2_ref[...],
                preferred_element_type=jnp.float32)           # (L, 9*Cout)
    acc2 = jnp.zeros((m, cout), jnp.float32)
    for t in range(9):                      # cheap shifted slice-accumulates
        acc2 = acc2 + y[offs[t]:offs[t] + m, t * cout:(t + 1) * cout]
    acc2_t = (acc2 + b2_ref[...]).T         # (Cout, m)

    # ---- Stage 3: write NCHW output, W on the lane axis (no transpose pass).
    for r in range(h):
        o_ref[0, :, r, :] = acc2_t[:, r * wp:r * wp + w].astype(o_ref.dtype)


def flow_head(x, w1, b1, w2, b2, *, block_m=512):
    """FlowHead.forward: conv2(relu(conv1(x))).

    All arguments use PyTorch layouts: x (N,Cin,H,W), conv weights OIHW
    (Cout,Cin,3,3), biases (Cout,).  Returns (N,Cout,H,W) float32.
    """
    n, cin, h, w = x.shape
    chid = w1.shape[0]
    cout = w2.shape[0]
    hp, wp = h + 2, w + 2
    # flat scratch length: padded image + largest tap offset, lane-tile rounded
    l = _round_up(hp * wp + 2 * wp + 2, 128)

    # Tiny one-time weight re-packs (negligible next to activation traffic).
    w1r = jnp.transpose(w1, (2, 3, 1, 0)).reshape(9, cin, chid).astype(jnp.bfloat16)
    w2r = jnp.transpose(w2, (1, 2, 3, 0)).reshape(chid, 9 * cout).astype(jnp.bfloat16)
    b1r = b1.reshape(1, chid).astype(jnp.float32)
    b2r = b2.reshape(1, cout).astype(jnp.float32)

    kernel = functools.partial(_flow_head_kernel, block_m=block_m)
    return pl.pallas_call(
        kernel,
        out_shape=jax.ShapeDtypeStruct((n, cout, h, w), jnp.float32),
        grid_spec=pltpu.PrefetchScalarGridSpec(
            num_scalar_prefetch=0,
            grid=(n,),
            in_specs=[
                pl.BlockSpec((1, cin, h, w), lambda i: (i, 0, 0, 0)),
                pl.BlockSpec((9, cin, chid), lambda i: (0, 0, 0)),
                pl.BlockSpec((1, chid), lambda i: (0, 0)),
                pl.BlockSpec((chid, 9 * cout), lambda i: (0, 0)),
                pl.BlockSpec((1, cout), lambda i: (0, 0)),
            ],
            out_specs=pl.BlockSpec((1, cout, h, w), lambda i: (i, 0, 0, 0)),
            scratch_shapes=[
                pltpu.VMEM((l, cin), jnp.bfloat16),    # padded, flattened input
                pltpu.VMEM((l, chid), jnp.bfloat16),   # padded, flattened hidden
            ],
        ),
        compiler_params=pltpu.CompilerParams(
            dimension_semantics=("parallel",),         # shard batch over TCs
            vmem_limit_bytes=32 * 1024 * 1024,
        ),
    )(x, w1r, b1r, w2r, b2r)


def _reference_flow_head(x, w1, b1, w2, b2):
    """Pure-JAX reference (lax conv, f32) for correctness checking."""
    dn = ("NCHW", "OIHW", "NCHW")
    hdn = lax.conv_general_dilated(x, w1, (1, 1), "SAME", dimension_numbers=dn)
    hdn = jnp.maximum(hdn + b1[None, :, None, None], 0.0)
    y = lax.conv_general_dilated(hdn, w2, (1, 1), "SAME", dimension_numbers=dn)
    return y + b2[None, :, None, None]


if __name__ == "__main__":
    # Small shapes consistent with the module (scaled down from 128/256/2).
    N, C_IN, C_HID, C_OUT, H, W = 2, 32, 64, 2, 16, 16

    key = jax.random.PRNGKey(0)
    kx, kw1, kb1, kw2, kb2 = jax.random.split(key, 5)

    # Pre-round inputs/weights to bf16 precision so the kernel's internal
    # bf16 MXU casts are lossless; the remaining difference vs. the f32
    # reference is only the bf16 hidden cast + accumulation order.
    bf = lambda a: a.astype(jnp.bfloat16).astype(jnp.float32)
    x = bf(jax.random.normal(kx, (N, C_IN, H, W), dtype=jnp.float32))
    w1 = bf(0.05 * jax.random.normal(kw1, (C_HID, C_IN, 3, 3), dtype=jnp.float32))
    b1 = 0.05 * jax.random.normal(kb1, (C_HID,), dtype=jnp.float32)
    w2 = bf(0.05 * jax.random.normal(kw2, (C_OUT, C_HID, 3, 3), dtype=jnp.float32))
    b2 = 0.05 * jax.random.normal(kb2, (C_OUT,), dtype=jnp.float32)

    y = jax.block_until_ready(flow_head(x, w1, b1, w2, b2))
    assert y.shape == (N, C_OUT, H, W), y.shape

    y_ref = _reference_flow_head(x, w1, b1, w2, b2)
    max_err = float(jnp.max(jnp.abs(y - y_ref)))
    assert jnp.allclose(y, y_ref, atol=1e-2, rtol=1e-2), max_err

    print("KERNEL_OK")
</pallas_src>

<mosaic_0001>
module attributes {stable_mosaic.version = 11 : i64} {
  func.func @_flow_head_kernel(%arg0: i32, %arg1: memref<1x32x16x16xf32, #tpu.memory_space<vmem>>, %arg2: memref<9x32x64xbf16, #tpu.memory_space<vmem>>, %arg3: memref<1x64xf32, #tpu.memory_space<vmem>>, %arg4: memref<64x18xbf16, #tpu.memory_space<vmem>>, %arg5: memref<1x2xf32, #tpu.memory_space<vmem>>, %arg6: memref<1x2x16x16xf32, #tpu.memory_space<vmem>>, %arg7: memref<384x32xbf16, #tpu.memory_space<vmem>>, %arg8: memref<384x64xbf16, #tpu.memory_space<vmem>>) attributes {dimension_semantics = [#tpu.dimension_semantics<parallel>], iteration_bounds = array<i64: 2>, scalar_prefetch = 0 : i64, scratch_operands = 2 : i64, tpu.core_type = #tpu.core_type<tc>, window_params = [{transform_indices = @transform_0, window_bounds = array<i64: 1, 32, 16, 16>}, {pipeline_mode = #tpu.pipeline_mode<synchronous>, transform_indices = @transform_1, window_bounds = array<i64: 9, 32, 64>}, {pipeline_mode = #tpu.pipeline_mode<synchronous>, transform_indices = @transform_2, window_bounds = array<i64: 1, 64>}, {pipeline_mode = #tpu.pipeline_mode<synchronous>, transform_indices = @transform_3, window_bounds = array<i64: 64, 18>}, {pipeline_mode = #tpu.pipeline_mode<synchronous>, transform_indices = @transform_4, window_bounds = array<i64: 1, 2>}, {transform_indices = @transform_5, window_bounds = array<i64: 1, 2, 16, 16>}]} {
    %cst = arith.constant 0.000000e+00 : bf16
    %0 = vector.broadcast %cst : bf16 to vector<384x32xbf16>
    %c0 = arith.constant 0 : index
    %c0_0 = arith.constant 0 : index
    %1 = vector.load %arg7[%c0, %c0_0] : memref<384x32xbf16, #tpu.memory_space<vmem>>, vector<384x32xbf16>
    tpu.vector_store %arg7[%c0, %c0_0], %0 {strides = array<i32>} : memref<384x32xbf16, #tpu.memory_space<vmem>>, vector<384x32xbf16>,
    %cst_1 = arith.constant 0.000000e+00 : bf16
    %2 = vector.broadcast %cst_1 : bf16 to vector<384x64xbf16>
    %c0_2 = arith.constant 0 : index
    %c0_3 = arith.constant 0 : index
    %3 = vector.load %arg8[%c0_2, %c0_3] : memref<384x64xbf16, #tpu.memory_space<vmem>>, vector<384x64xbf16>
    tpu.vector_store %arg8[%c0_2, %c0_3], %2 {strides = array<i32>} : memref<384x64xbf16, #tpu.memory_space<vmem>>, vector<384x64xbf16>,
    %c0_4 = arith.constant 0 : index
    %c0_5 = arith.constant 0 : index
    %c0_6 = arith.constant 0 : index
    %c0_7 = arith.constant 0 : index
    %4 = vector.load %arg1[%c0_4, %c0_5, %c0_6, %c0_7] : memref<1x32x16x16xf32, #tpu.memory_space<vmem>>, vector<1x32x1x16xf32>
    %5 = vector.shape_cast %4 : vector<1x32x1x16xf32> to vector<32x16xf32>
    %6 = tpu.transpose %5, [1, 0] : vector<32x16xf32> -> vector<16x32xf32>
    %7 = arith.truncf %6 : vector<16x32xf32> to vector<16x32xbf16>
    %c19 = arith.constant 19 : index
    %c0_8 = arith.constant 0 : index
    %8 = vector.load %arg7[%c19, %c0_8] : memref<384x32xbf16, #tpu.memory_space<vmem>>, vector<16x32xbf16>
    tpu.vector_store %arg7[%c19, %c0_8], %7 {strides = array<i32>} : memref<384x32xbf16, #tpu.memory_space<vmem>>, vector<16x32xbf16>,
    %c0_9 = arith.constant 0 : index
    %c0_10 = arith.constant 0 : index
    %c1 = arith.constant 1 : index
    %c0_11 = arith.constant 0 : index
    %9 = vector.load %arg1[%c0_9, %c0_10, %c1, %c0_11] : memref<1x32x16x16xf32, #tpu.memory_space<vmem>>, vector<1x32x1x16xf32>
    %10 = vector.shape_cast %9 : vector<1x32x1x16xf32> to vector<32x16xf32>
    %11 = tpu.transpose %10, [1, 0] : vector<32x16xf32> -> vector<16x32xf32>
    %12 = arith.truncf %11 : vector<16x32xf32> to vector<16x32xbf16>
    %c37 = arith.constant 37 : index
    %c0_12 = arith.constant 0 : index
    %13 = vector.load %arg7[%c37, %c0_12] : memref<384x32xbf16, #tpu.memory_space<vmem>>, vector<16x32xbf16>
    tpu.vector_store %arg7[%c37, %c0_12], %12 {strides = array<i32>} : memref<384x32xbf16, #tpu.memory_space<vmem>>, vector<16x32xbf16>,
    %c0_13 = arith.constant 0 : index
    %c0_14 = arith.constant 0 : index
    %c2 = arith.constant 2 : index
    %c0_15 = arith.constant 0 : index
    %14 = vector.load %arg1[%c0_13, %c0_14, %c2, %c0_15] : memref<1x32x16x16xf32, #tpu.memory_space<vmem>>, vector<1x32x1x16xf32>
    %15 = vector.shape_cast %14 : vector<1x32x1x16xf32> to vector<32x16xf32>
    %16 = tpu.transpose %15, [1, 0] : vector<32x16xf32> -> vector<16x32xf32>
    %17 = arith.truncf %16 : vector<16x32xf32> to vector<16x32xbf16>
    %c55 = arith.constant 55 : index
    %c0_16 = arith.constant 0 : index
    %18 = vector.load %arg7[%c55, %c0_16] : memref<384x32xbf16, #tpu.memory_space<vmem>>, vector<16x32xbf16>
    tpu.vector_store %arg7[%c55, %c0_16], %17 {strides = array<i32>} : memref<384x32xbf16, #tpu.memory_space<vmem>>, vector<16x32xbf16>,
    %c0_17 = arith.constant 0 : index
    %c0_18 = arith.constant 0 : index
    %c3 = arith.constant 3 : index
    %c0_19 = arith.constant 0 : index
    %19 = vector.load %arg1[%c0_17, %c0_18, %c3, %c0_19] : memref<1x32x16x16xf32, #tpu.memory_space<vmem>>, vector<1x32x1x16xf32>
    %20 = vector.shape_cast %19 : vector<1x32x1x16xf32> to vector<32x16xf32>
    %21 = tpu.transpose %20, [1, 0] : vector<32x16xf32> -> vector<16x32xf32>
    %22 = arith.truncf %21 : vector<16x32xf32> to vector<16x32xbf16>
    %c73 = arith.constant 73 : index
    %c0_20 = arith.constant 0 : index
    %23 = vector.load %arg7[%c73, %c0_20] : memref<384x32xbf16, #tpu.memory_space<vmem>>, vector<16x32xbf16>
    tpu.vector_store %arg7[%c73, %c0_20], %22 {strides = array<i32>} : memref<384x32xbf16, #tpu.memory_space<vmem>>, vector<16x32xbf16>,
    %c0_21 = arith.constant 0 : index
    %c0_22 = arith.constant 0 : index
    %c4 = arith.constant 4 : index
    %c0_23 = arith.constant 0 : index
    %24 = vector.load %arg1[%c0_21, %c0_22, %c4, %c0_23] : memref<1x32x16x16xf32, #tpu.memory_space<vmem>>, vector<1x32x1x16xf32>
    %25 = vector.shape_cast %24 : vector<1x32x1x16xf32> to vector<32x16xf32>
    %26 = tpu.transpose %25, [1, 0] : vector<32x16xf32> -> vector<16x32xf32>
    %27 = arith.truncf %26 : vector<16x32xf32> to vector<16x32xbf16>
    %c91 = arith.constant 91 : index
    %c0_24 = arith.constant 0 : index
    %28 = vector.load %arg7[%c91, %c0_24] : memref<384x32xbf16, #tpu.memory_space<vmem>>, vector<16x32xbf16>
    tpu.vector_store %arg7[%c91, %c0_24], %27 {strides = array<i32>} : memref<384x32xbf16, #tpu.memory_space<vmem>>, vector<16x32xbf16>,
    %c0_25 = arith.constant 0 : index
    %c0_26 = arith.constant 0 : index
    %c5 = arith.constant 5 : index
    %c0_27 = arith.constant 0 : index
    %29 = vector.load %arg1[%c0_25, %c0_26, %c5, %c0_27] : memref<1x32x16x16xf32, #tpu.memory_space<vmem>>, vector<1x32x1x16xf32>
    %30 = vector.shape_cast %29 : vector<1x32x1x16xf32> to vector<32x16xf32>
    %31 = tpu.transpose %30, [1, 0] : vector<32x16xf32> -> vector<16x32xf32>
    %32 = arith.truncf %31 : vector<16x32xf32> to vector<16x32xbf16>
    %c109 = arith.constant 109 : index
    %c0_28 = arith.constant 0 : index
    %33 = vector.load %arg7[%c109, %c0_28] : memref<384x32xbf16, #tpu.memory_space<vmem>>, vector<16x32xbf16>
    tpu.vector_store %arg7[%c109, %c0_28], %32 {strides = array<i32>} : memref<384x32xbf16, #tpu.memory_space<vmem>>, vector<16x32xbf16>,
    %c0_29 = arith.constant 0 : index
    %c0_30 = arith.constant 0 : index
    %c6 = arith.constant 6 : index
    %c0_31 = arith.constant 0 : index
    %34 = vector.load %arg1[%c0_29, %c0_30, %c6, %c0_31] : memref<1x32x16x16xf32, #tpu.memory_space<vmem>>, vector<1x32x1x16xf32>
    %35 = vector.shape_cast %34 : vector<1x32x1x16xf32> to vector<32x16xf32>
    %36 = tpu.transpose %35, [1, 0] : vector<32x16xf32> -> vector<16x32xf32>
    %37 = arith.truncf %36 : vector<16x32xf32> to vector<16x32xbf16>
    %c127 = arith.constant 127 : index
    %c0_32 = arith.constant 0 : index
    %38 = vector.load %arg7[%c127, %c0_32] : memref<384x32xbf16, #tpu.memory_space<vmem>>, vector<16x32xbf16>
    tpu.vector_store %arg7[%c127, %c0_32], %37 {strides = array<i32>} : memref<384x32xbf16, #tpu.memory_space<vmem>>, vector<16x32xbf16>,
    %c0_33 = arith.constant 0 : index
    %c0_34 = arith.constant 0 : index
    %c7 = arith.constant 7 : index
    %c0_35 = arith.constant 0 : index
    %39 = vector.load %arg1[%c0_33, %c0_34, %c7, %c0_35] : memref<1x32x16x16xf32, #tpu.memory_space<vmem>>, vector<1x32x1x16xf32>
    %40 = vector.shape_cast %39 : vector<1x32x1x16xf32> to vector<32x16xf32>
    %41 = tpu.transpose %40, [1, 0] : vector<32x16xf32> -> vector<16x32xf32>
    %42 = arith.truncf %41 : vector<16x32xf32> to vector<16x32xbf16>
    %c145 = arith.constant 145 : index
    %c0_36 = arith.constant 0 : index
    %43 = vector.load %arg7[%c145, %c0_36] : memref<384x32xbf16, #tpu.memory_space<vmem>>, vector<16x32xbf16>
    tpu.vector_store %arg7[%c145, %c0_36], %42 {strides = array<i32>} : memref<384x32xbf16, #tpu.memory_space<vmem>>, vector<16x32xbf16>,
    %c0_37 = arith.constant 0 : index
    %c0_38 = arith.constant 0 : index
    %c8 = arith.constant 8 : index
    %c0_39 = arith.constant 0 : index
    %44 = vector.load %arg1[%c0_37, %c0_38, %c8, %c0_39] : memref<1x32x16x16xf32, #tpu.memory_space<vmem>>, vector<1x32x1x16xf32>
    %45 = vector.shape_cast %44 : vector<1x32x1x16xf32> to vector<32x16xf32>
    %46 = tpu.transpose %45, [1, 0] : vector<32x16xf32> -> vector<16x32xf32>
    %47 = arith.truncf %46 : vector<16x32xf32> to vector<16x32xbf16>
    %c163 = arith.constant 163 : index
    %c0_40 = arith.constant 0 : index
    %48 = vector.load %arg7[%c163, %c0_40] : memref<384x32xbf16, #tpu.memory_space<vmem>>, vector<16x32xbf16>
    tpu.vector_store %arg7[%c163, %c0_40], %47 {strides = array<i32>} : memref<384x32xbf16, #tpu.memory_space<vmem>>, vector<16x32xbf16>,
    %c0_41 = arith.constant 0 : index
    %c0_42 = arith.constant 0 : index
    %c9 = arith.constant 9 : index
    %c0_43 = arith.constant 0 : index
    %49 = vector.load %arg1[%c0_41, %c0_42, %c9, %c0_43] : memref<1x32x16x16xf32, #tpu.memory_space<vmem>>, vector<1x32x1x16xf32>
    %50 = vector.shape_cast %49 : vector<1x32x1x16xf32> to vector<32x16xf32>
    %51 = tpu.transpose %50, [1, 0] : vector<32x16xf32> -> vector<16x32xf32>
    %52 = arith.truncf %51 : vector<16x32xf32> to vector<16x32xbf16>
    %c181 = arith.constant 181 : index
    %c0_44 = arith.constant 0 : index
    %53 = vector.load %arg7[%c181, %c0_44] : memref<384x32xbf16, #tpu.memory_space<vmem>>, vector<16x32xbf16>
    tpu.vector_store %arg7[%c181, %c0_44], %52 {strides = array<i32>} : memref<384x32xbf16, #tpu.memory_space<vmem>>, vector<16x32xbf16>,
    %c0_45 = arith.constant 0 : index
    %c0_46 = arith.constant 0 : index
    %c10 = arith.constant 10 : index
    %c0_47 = arith.constant 0 : index
    %54 = vector.load %arg1[%c0_45, %c0_46, %c10, %c0_47] : memref<1x32x16x16xf32, #tpu.memory_space<vmem>>, vector<1x32x1x16xf32>
    %55 = vector.shape_cast %54 : vector<1x32x1x16xf32> to vector<32x16xf32>
    %56 = tpu.transpose %55, [1, 0] : vector<32x16xf32> -> vector<16x32xf32>
    %57 = arith.truncf %56 : vector<16x32xf32> to vector<16x32xbf16>
    %c199 = arith.constant 199 : index
    %c0_48 = arith.constant 0 : index
    %58 = vector.load %arg7[%c199, %c0_48] : memref<384x32xbf16, #tpu.memory_space<vmem>>, vector<16x32xbf16>
    tpu.vector_store %arg7[%c199, %c0_48], %57 {strides = array<i32>} : memref<384x32xbf16, #tpu.memory_space<vmem>>, vector<16x32xbf16>,
    %c0_49 = arith.constant 0 : index
    %c0_50 = arith.constant 0 : index
    %c11 = arith.constant 11 : index
    %c0_51 = arith.constant 0 : index
    %59 = vector.load %arg1[%c0_49, %c0_50, %c11, %c0_51] : memref<1x32x16x16xf32, #tpu.memory_space<vmem>>, vector<1x32x1x16xf32>
    %60 = vector.shape_cast %59 : vector<1x32x1x16xf32> to vector<32x16xf32>
    %61 = tpu.transpose %60, [1, 0] : vector<32x16xf32> -> vector<16x32xf32>
    %62 = arith.truncf %61 : vector<16x32xf32> to vector<16x32xbf16>
    %c217 = arith.constant 217 : index
    %c0_52 = arith.constant 0 : index
    %63 = vector.load %arg7[%c217, %c0_52] : memref<384x32xbf16, #tpu.memory_space<vmem>>, vector<16x32xbf16>
    tpu.vector_store %arg7[%c217, %c0_52], %62 {strides = array<i32>} : memref<384x32xbf16, #tpu.memory_space<vmem>>, vector<16x32xbf16>,
    %c0_53 = arith.constant 0 : index
    %c0_54 = arith.constant 0 : index
    %c12 = arith.constant 12 : index
    %c0_55 = arith.constant 0 : index
    %64 = vector.load %arg1[%c0_53, %c0_54, %c12, %c0_55] : memref<1x32x16x16xf32, #tpu.memory_space<vmem>>, vector<1x32x1x16xf32>
    %65 = vector.shape_cast %64 : vector<1x32x1x16xf32> to vector<32x16xf32>
    %66 = tpu.transpose %65, [1, 0] : vector<32x16xf32> -> vector<16x32xf32>
    %67 = arith.truncf %66 : vector<16x32xf32> to vector<16x32xbf16>
    %c235 = arith.constant 235 : index
    %c0_56 = arith.constant 0 : index
    %68 = vector.load %arg7[%c235, %c0_56] : memref<384x32xbf16, #tpu.memory_space<vmem>>, vector<16x32xbf16>
    tpu.vector_store %arg7[%c235, %c0_56], %67 {strides = array<i32>} : memref<384x32xbf16, #tpu.memory_space<vmem>>, vector<16x32xbf16>,
    %c0_57 = arith.constant 0 : index
    %c0_58 = arith.constant 0 : index
    %c13 = arith.constant 13 : index
    %c0_59 = arith.constant 0 : index
    %69 = vector.load %arg1[%c0_57, %c0_58, %c13, %c0_59] : memref<1x32x16x16xf32, #tpu.memory_space<vmem>>, vector<1x32x1x16xf32>
    %70 = vector.shape_cast %69 : vector<1x32x1x16xf32> to vector<32x16xf32>
    %71 = tpu.transpose %70, [1, 0] : vector<32x16xf32> -> vector<16x32xf32>
    %72 = arith.truncf %71 : vector<16x32xf32> to vector<16x32xbf16>
    %c253 = arith.constant 253 : index
    %c0_60 = arith.constant 0 : index
    %73 = vector.load %arg7[%c253, %c0_60] : memref<384x32xbf16, #tpu.memory_space<vmem>>, vector<16x32xbf16>
    tpu.vector_store %arg7[%c253, %c0_60], %72 {strides = array<i32>} : memref<384x32xbf16, #tpu.memory_space<vmem>>, vector<16x32xbf16>,
    %c0_61 = arith.constant 0 : index
    %c0_62 = arith.constant 0 : index
    %c14 = arith.constant 14 : index
    %c0_63 = arith.constant 0 : index
    %74 = vector.load %arg1[%c0_61, %c0_62, %c14, %c0_63] : memref<1x32x16x16xf32, #tpu.memory_space<vmem>>, vector<1x32x1x16xf32>
    %75 = vector.shape_cast %74 : vector<1x32x1x16xf32> to vector<32x16xf32>
    %76 = tpu.transpose %75, [1, 0] : vector<32x16xf32> -> vector<16x32xf32>
    %77 = arith.truncf %76 : vector<16x32xf32> to vector<16x32xbf16>
    %c271 = arith.constant 271 : index
    %c0_64 = arith.constant 0 : index
    %78 = vector.load %arg7[%c271, %c0_64] : memref<384x32xbf16, #tpu.memory_space<vmem>>, vector<16x32xbf16>
    tpu.vector_store %arg7[%c271, %c0_64], %77 {strides = array<i32>} : memref<384x32xbf16, #tpu.memory_space<vmem>>, vector<16x32xbf16>,
    %c0_65 = arith.constant 0 : index
    %c0_66 = arith.constant 0 : index
    %c15 = arith.constant 15 : index
    %c0_67 = arith.constant 0 : index
    %79 = vector.load %arg1[%c0_65, %c0_66, %c15, %c0_67] : memref<1x32x16x16xf32, #tpu.memory_space<vmem>>, vector<1x32x1x16xf32>
    %80 = vector.shape_cast %79 : vector<1x32x1x16xf32> to vector<32x16xf32>
    %81 = tpu.transpose %80, [1, 0] : vector<32x16xf32> -> vector<16x32xf32>
    %82 = arith.truncf %81 : vector<16x32xf32> to vector<16x32xbf16>
    %c289 = arith.constant 289 : index
    %c0_68 = arith.constant 0 : index
    %83 = vector.load %arg7[%c289, %c0_68] : memref<384x32xbf16, #tpu.memory_space<vmem>>, vector<16x32xbf16>
    tpu.vector_store %arg7[%c289, %c0_68], %82 {strides = array<i32>} : memref<384x32xbf16, #tpu.memory_space<vmem>>, vector<16x32xbf16>,
    %c0_69 = arith.constant 0 : index
    %c0_70 = arith.constant 0 : index
    %84 = vector.load %arg3[%c0_69, %c0_70] : memref<1x64xf32, #tpu.memory_space<vmem>>, vector<1x64xf32>
    %cst_71 = arith.constant 0.000000e+00 : f32
    %85 = vector.broadcast %cst_71 : f32 to vector<288x64xf32>
    %c0_72 = arith.constant 0 : index
    %c0_73 = arith.constant 0 : index
    %86 = vector.load %arg7[%c0_72, %c0_73] : memref<384x32xbf16, #tpu.memory_space<vmem>>, vector<288x32xbf16>
    %c0_74 = arith.constant 0 : index
    %c0_75 = arith.constant 0 : index
    %c0_76 = arith.constant 0 : index
    %87 = vector.load %arg2[%c0_74, %c0_75, %c0_76] : memref<9x32x64xbf16, #tpu.memory_space<vmem>>, vector<1x32x64xbf16>
    %88 = vector.shape_cast %87 : vector<1x32x64xbf16> to vector<32x64xbf16>
    %cst_77 = arith.constant dense<0.000000e+00> : vector<288x64xf32>
    %89 = tpu.matmul %86, %88, %cst_77 {dimension_numbers = #tpu.dot_dimension_numbers<[1], [0], [0], [1], [0, 0, 1, 1], [], []>} : vector<288x32xbf16>, vector<32x64xbf16>, vector<288x64xf32> -> vector<288x64xf32>
    %90 = arith.addf %85, %89 : vector<288x64xf32>
    %c1_78 = arith.constant 1 : index
    %c0_79 = arith.constant 0 : index
    %91 = vector.load %arg7[%c1_78, %c0_79] : memref<384x32xbf16, #tpu.memory_space<vmem>>, vector<288x32xbf16>
    %c1_80 = arith.constant 1 : index
    %c0_81 = arith.constant 0 : index
    %c0_82 = arith.constant 0 : index
    %92 = vector.load %arg2[%c1_80, %c0_81, %c0_82] : memref<9x32x64xbf16, #tpu.memory_space<vmem>>, vector<1x32x64xbf16>
    %93 = vector.shape_cast %92 : vector<1x32x64xbf16> to vector<32x64xbf16>
    %cst_83 = arith.constant dense<0.000000e+00> : vector<288x64xf32>
    %94 = tpu.matmul %91, %93, %cst_83 {dimension_numbers = #tpu.dot_dimension_numbers<[1], [0], [0], [1], [0, 0, 1, 1], [], []>} : vector<288x32xbf16>, vector<32x64xbf16>, vector<288x64xf32> -> vector<288x64xf32>
    %95 = arith.addf %90, %94 : vector<288x64xf32>
    %c2_84 = arith.constant 2 : index
    %c0_85 = arith.constant 0 : index
    %96 = vector.load %arg7[%c2_84, %c0_85] : memref<384x32xbf16, #tpu.memory_space<vmem>>, vector<288x32xbf16>
    %c2_86 = arith.constant 2 : index
    %c0_87 = arith.constant 0 : index
    %c0_88 = arith.constant 0 : index
    %97 = vector.load %arg2[%c2_86, %c0_87, %c0_88] : memref<9x32x64xbf16, #tpu.memory_space<vmem>>, vector<1x32x64xbf16>
    %98 = vector.shape_cast %97 : vector<1x32x64xbf16> to vector<32x64xbf16>
    %cst_89 = arith.constant dense<0.000000e+00> : vector<288x64xf32>
    %99 = tpu.matmul %96, %98, %cst_89 {dimension_numbers = #tpu.dot_dimension_numbers<[1], [0], [0], [1], [0, 0, 1, 1], [], []>} : vector<288x32xbf16>, vector<32x64xbf16>, vector<288x64xf32> -> vector<288x64xf32>
    %100 = arith.addf %95, %99 : vector<288x64xf32>
    %c18 = arith.constant 18 : index
    %c0_90 = arith.constant 0 : index
    %101 = vector.load %arg7[%c18, %c0_90] : memref<384x32xbf16, #tpu.memory_space<vmem>>, vector<288x32xbf16>
    %c3_91 = arith.constant 3 : index
    %c0_92 = arith.constant 0 : index
    %c0_93 = arith.constant 0 : index
    %102 = vector.load %arg2[%c3_91, %c0_92, %c0_93] : memref<9x32x64xbf16, #tpu.memory_space<vmem>>, vector<1x32x64xbf16>
    %103 = vector.shape_cast %102 : vector<1x32x64xbf16> to vector<32x64xbf16>
    %cst_94 = arith.constant dense<0.000000e+00> : vector<288x64xf32>
    %104 = tpu.matmul %101, %103, %cst_94 {dimension_numbers = #tpu.dot_dimension_numbers<[1], [0], [0], [1], [0, 0, 1, 1], [], []>} : vector<288x32xbf16>, vector<32x64xbf16>, vector<288x64xf32> -> vector<288x64xf32>
    %105 = arith.addf %100, %104 : vector<288x64xf32>
    %c19_95 = arith.constant 19 : index
    %c0_96 = arith.constant 0 : index
    %106 = vector.load %arg7[%c19_95, %c0_96] : memref<384x32xbf16, #tpu.memory_space<vmem>>, vector<288x32xbf16>
    %c4_97 = arith.constant 4 : index
    %c0_98 = arith.constant 0 : index
    %c0_99 = arith.constant 0 : index
    %107 = vector.load %arg2[%c4_97, %c0_98, %c0_99] : memref<9x32x64xbf16, #tpu.memory_space<vmem>>, vector<1x32x64xbf16>
    %108 = vector.shape_cast %107 : vector<1x32x64xbf16> to vector<32x64xbf16>
    %cst_100 = arith.constant dense<0.000000e+00> : vector<288x64xf32>
    %109 = tpu.matmul %106, %108, %cst_100 {dimension_numbers = #tpu.dot_dimension_numbers<[1], [0], [0], [1], [0, 0, 1, 1], [], []>} : vector<288x32xbf16>, vector<32x64xbf16>, vector<288x64xf32> -> vector<288x64xf32>
    %110 = arith.addf %105, %109 : vector<288x64xf32>
    %c20 = arith.constant 20 : index
    %c0_101 = arith.constant 0 : index
    %111 = vector.load %arg7[%c20, %c0_101] : memref<384x32xbf16, #tpu.memory_space<vmem>>, vector<288x32xbf16>
    %c5_102 = arith.constant 5 : index
    %c0_103 = arith.constant 0 : index
    %c0_104 = arith.constant 0 : index
    %112 = vector.load %arg2[%c5_102, %c0_103, %c0_104] : memref<9x32x64xbf16, #tpu.memory_space<vmem>>, vector<1x32x64xbf16>
    %113 = vector.shape_cast %112 : vector<1x32x64xbf16> to vector<32x64xbf16>
    %cst_105 = arith.constant dense<0.000000e+00> : vector<288x64xf32>
    %114 = tpu.matmul %111, %113, %cst_105 {dimension_numbers = #tpu.dot_dimension_numbers<[1], [0], [0], [1], [0, 0, 1, 1], [], []>} : vector<288x32xbf16>, vector<32x64xbf16>, vector<288x64xf32> -> vector<288x64xf32>
    %115 = arith.addf %110, %114 : vector<288x64xf32>
    %c36 = arith.constant 36 : index
    %c0_106 = arith.constant 0 : index
    %116 = vector.load %arg7[%c36, %c0_106] : memref<384x32xbf16, #tpu.memory_space<vmem>>, vector<288x32xbf16>
    %c6_107 = arith.constant 6 : index
    %c0_108 = arith.constant 0 : index
    %c0_109 = arith.constant 0 : index
    %117 = vector.load %arg2[%c6_107, %c0_108, %c0_109] : memref<9x32x64xbf16, #tpu.memory_space<vmem>>, vector<1x32x64xbf16>
    %118 = vector.shape_cast %117 : vector<1x32x64xbf16> to vector<32x64xbf16>
    %cst_110 = arith.constant dense<0.000000e+00> : vector<288x64xf32>
    %119 = tpu.matmul %116, %118, %cst_110 {dimension_numbers = #tpu.dot_dimension_numbers<[1], [0], [0], [1], [0, 0, 1, 1], [], []>} : vector<288x32xbf16>, vector<32x64xbf16>, vector<288x64xf32> -> vector<288x64xf32>
    %120 = arith.addf %115, %119 : vector<288x64xf32>
    %c37_111 = arith.constant 37 : index
    %c0_112 = arith.constant 0 : index
    %121 = vector.load %arg7[%c37_111, %c0_112] : memref<384x32xbf16, #tpu.memory_space<vmem>>, vector<288x32xbf16>
    %c7_113 = arith.constant 7 : index
    %c0_114 = arith.constant 0 : index
    %c0_115 = arith.constant 0 : index
    %122 = vector.load %arg2[%c7_113, %c0_114, %c0_115] : memref<9x32x64xbf16, #tpu.memory_space<vmem>>, vector<1x32x64xbf16>
    %123 = vector.shape_cast %122 : vector<1x32x64xbf16> to vector<32x64xbf16>
    %cst_116 = arith.constant dense<0.000000e+00> : vector<288x64xf32>
    %124 = tpu.matmul %121, %123, %cst_116 {dimension_numbers = #tpu.dot_dimension_numbers<[1], [0], [0], [1], [0, 0, 1, 1], [], []>} : vector<288x32xbf16>, vector<32x64xbf16>, vector<288x64xf32> -> vector<288x64xf32>
    %125 = arith.addf %120, %124 : vector<288x64xf32>
    %c38 = arith.constant 38 : index
    %c0_117 = arith.constant 0 : index
    %126 = vector.load %arg7[%c38, %c0_117] : memref<384x32xbf16, #tpu.memory_space<vmem>>, vector<288x32xbf16>
    %c8_118 = arith.constant 8 : index
    %c0_119 = arith.constant 0 : index
    %c0_120 = arith.constant 0 : index
    %127 = vector.load %arg2[%c8_118, %c0_119, %c0_120] : memref<9x32x64xbf16, #tpu.memory_space<vmem>>, vector<1x32x64xbf16>
    %128 = vector.shape_cast %127 : vector<1x32x64xbf16> to vector<32x64xbf16>
    %cst_121 = arith.constant dense<0.000000e+00> : vector<288x64xf32>
    %129 = tpu.matmul %126, %128, %cst_121 {dimension_numbers = #tpu.dot_dimension_numbers<[1], [0], [0], [1], [0, 0, 1, 1], [], []>} : vector<288x32xbf16>, vector<32x64xbf16>, vector<288x64xf32> -> vector<288x64xf32>
    %130 = arith.addf %125, %129 : vector<288x64xf32>
    %131 = vector.broadcast %84 : vector<1x64xf32> to vector<288x64xf32>
    %132 = arith.addf %130, %131 : vector<288x64xf32>
    %cst_122 = arith.constant 0.000000e+00 : f32
    %133 = vector.broadcast %cst_122 : f32 to vector<288x64xf32>
    %134 = arith.maximumf %132, %133 : vector<288x64xf32>
    %135 = tpu.iota {dimensions = array<i32: 0>} : vector<288x1xi32>
    %c0_i32 = arith.constant 0 : i32
    %136 = vector.broadcast %c0_i32 : i32 to vector<288x1xi32>
    %137 = arith.addi %136, %135 : vector<288x1xi32>
    %c18_i32 = arith.constant 18 : i32
    %c0_i32_123 = arith.constant 0 : i32
    %138 = arith.cmpi eq, %c18_i32, %c0_i32_123 : i32
    %c1_i32 = arith.constant 1 : i32
    %139 = arith.select %138, %c1_i32, %c18_i32 : i32
    %140 = vector.broadcast %139 : i32 to vector<288x1xi32>
    %141 = arith.remsi %137, %140 : vector<288x1xi32>
    %c0_i32_124 = arith.constant 0 : i32
    %142 = vector.broadcast %c0_i32_124 : i32 to vector<288x1xi32>
    %143 = arith.cmpi ne, %141, %142 : vector<288x1xi32>
    %c0_i32_125 = arith.constant 0 : i32
    %144 = vector.broadcast %c0_i32_125 : i32 to vector<288x1xi32>
    %145 = arith.cmpi slt, %141, %144 : vector<288x1xi32>
    %c0_i32_126 = arith.constant 0 : i32
    %146 = arith.cmpi slt, %139, %c0_i32_126 : i32
    %147 = vector.broadcast %146 : i1 to vector<288x1xi1>
    %148 = vector.broadcast %147 : vector<288x1xi1> to vector<288x1xi1>
    %149 = arith.xori %145, %148 : vector<288x1xi1>
    %150 = arith.andi %149, %143 : vector<288x1xi1>
    %151 = vector.broadcast %139 : i32 to vector<288x1xi32>
    %152 = arith.addi %141, %151 : vector<288x1xi32>
    %153 = arith.select %150, %152, %141 : vector<288x1xi1>, vector<288x1xi32>
    %c16_i32 = arith.constant 16 : i32
    %154 = vector.broadcast %c16_i32 : i32 to vector<288x1xi32>
    %155 = arith.cmpi slt, %153, %154 : vector<288x1xi32>
    %cst_127 = arith.constant 0.000000e+00 : f32
    %156 = vector.shape_cast %155 : vector<288x1xi1> to vector<288x1xi1>
    %157 = vector.broadcast %156 : vector<288x1xi1> to vector<288x64xi1>
    %158 = vector.broadcast %cst_127 : f32 to vector<288x64xf32>
    %159 = arith.select %157, %134, %158 : vector<288x64xi1>, vector<288x64xf32>
    %160 = arith.truncf %159 : vector<288x64xf32> to vector<288x64xbf16>
    %c19_128 = arith.constant 19 : index
    %c0_129 = arith.constant 0 : index
    %161 = vector.load %arg8[%c19_128, %c0_129] : memref<384x64xbf16, #tpu.memory_space<vmem>>, vector<288x64xbf16>
    tpu.vector_store %arg8[%c19_128, %c0_129], %160 {strides = array<i32>} : memref<384x64xbf16, #tpu.memory_space<vmem>>, vector<288x64xbf16>,
    %c0_130 = arith.constant 0 : index
    %c0_131 = arith.constant 0 : index
    %162 = vector.load %arg8[%c0_130, %c0_131] : memref<384x64xbf16, #tpu.memory_space<vmem>>, vector<384x64xbf16>
    %c0_132 = arith.constant 0 : index
    %c0_133 = arith.constant 0 : index
    %163 = vector.load %arg4[%c0_132, %c0_133] : memref<64x18xbf16, #tpu.memory_space<vmem>>, vector<64x18xbf16>
    %cst_134 = arith.constant dense<0.000000e+00> : vector<384x18xf32>
    %164 = tpu.matmul %162, %163, %cst_134 {dimension_numbers = #tpu.dot_dimension_numbers<[1], [0], [0], [1], [0, 0, 1, 1], [], []>} : vector<384x64xbf16>, vector<64x18xbf16>, vector<384x18xf32> -> vector<384x18xf32>
    %cst_135 = arith.constant 0.000000e+00 : f32
    %165 = vector.broadcast %cst_135 : f32 to vector<288x2xf32>
    %166 = vector.extract_strided_slice %164 {offsets = [0, 0], sizes = [288, 2], strides = [1, 1]} : vector<384x18xf32> to vector<288x2xf32>
    %167 = arith.addf %165, %166 : vector<288x2xf32>
    %168 = vector.extract_strided_slice %164 {offsets = [1, 2], sizes = [288, 2], strides = [1, 1]} : vector<384x18xf32> to vector<288x2xf32>
    %169 = arith.addf %167, %168 : vector<288x2xf32>
    %170 = vector.extract_strided_slice %164 {offsets = [2, 4], sizes = [288, 2], strides = [1, 1]} : vector<384x18xf32> to vector<288x2xf32>
    %171 = arith.addf %169, %170 : vector<288x2xf32>
    %172 = vector.extract_strided_slice %164 {offsets = [18, 6], sizes = [288, 2], strides = [1, 1]} : vector<384x18xf32> to vector<288x2xf32>
    %173 = arith.addf %171, %172 : vector<288x2xf32>
    %174 = vector.extract_strided_slice %164 {offsets = [19, 8], sizes = [288, 2], strides = [1, 1]} : vector<384x18xf32> to vector<288x2xf32>
    %175 = arith.addf %173, %174 : vector<288x2xf32>
    %176 = vector.extract_strided_slice %164 {offsets = [20, 10], sizes = [288, 2], strides = [1, 1]} : vector<384x18xf32> to vector<288x2xf32>
    %177 = arith.addf %175, %176 : vector<288x2xf32>
    %178 = vector.extract_strided_slice %164 {offsets = [36, 12], sizes = [288, 2], strides = [1, 1]} : vector<384x18xf32> to vector<288x2xf32>
    %179 = arith.addf %177, %178 : vector<288x2xf32>
    %180 = vector.extract_strided_slice %164 {offsets = [37, 14], sizes = [288, 2], strides = [1, 1]} : vector<384x18xf32> to vector<288x2xf32>
    %181 = arith.addf %179, %180 : vector<288x2xf32>
    %182 = vector.extract_strided_slice %164 {offsets = [38, 16], sizes = [288, 2], strides = [1, 1]} : vector<384x18xf32> to vector<288x2xf32>
    %183 = arith.addf %181, %182 : vector<288x2xf32>
    %c0_136 = arith.constant 0 : index
    %c0_137 = arith.constant 0 : index
    %184 = vector.load %arg5[%c0_136, %c0_137] : memref<1x2xf32, #tpu.memory_space<vmem>>, vector<1x2xf32>
    %185 = vector.broadcast %184 : vector<1x2xf32> to vector<288x2xf32>
    %186 = arith.addf %183, %185 : vector<288x2xf32>
    %187 = tpu.transpose %186, [1, 0] : vector<288x2xf32> -> vector<2x288xf32>
    %188 = vector.extract_strided_slice %187 {offsets = [0, 0], sizes = [2, 16], strides = [1, 1]} : vector<2x288xf32> to vector<2x16xf32>
    %c0_138 = arith.constant 0 : index
    %c0_139 = arith.constant 0 : index
    %c0_140 = arith.constant 0 : index
    %c0_141 = arith.constant 0 : index
    %189 = vector.load %arg6[%c0_138, %c0_139, %c0_140, %c0_141] : memref<1x2x16x16xf32, #tpu.memory_space<vmem>>, vector<1x2x1x16xf32>
    %190 = vector.shape_cast %189 : vector<1x2x1x16xf32> to vector<2x16xf32>
    %191 = vector.shape_cast %188 : vector<2x16xf32> to vector<1x2x1x16xf32>
    tpu.vector_store %arg6[%c0_138, %c0_139, %c0_140, %c0_141], %191 {strides = array<i32>} : memref<1x2x16x16xf32, #tpu.memory_space<vmem>>, vector<1x2x1x16xf32>,
    %192 = vector.extract_strided_slice %187 {offsets = [0, 18], sizes = [2, 16], strides = [1, 1]} : vector<2x288xf32> to vector<2x16xf32>
    %c0_142 = arith.constant 0 : index
    %c0_143 = arith.constant 0 : index
    %c1_144 = arith.constant 1 : index
    %c0_145 = arith.constant 0 : index
    %193 = vector.load %arg6[%c0_142, %c0_143, %c1_144, %c0_145] : memref<1x2x16x16xf32, #tpu.memory_space<vmem>>, vector<1x2x1x16xf32>
    %194 = vector.shape_cast %193 : vector<1x2x1x16xf32> to vector<2x16xf32>
    %195 = vector.shape_cast %192 : vector<2x16xf32> to vector<1x2x1x16xf32>
    tpu.vector_store %arg6[%c0_142, %c0_143, %c1_144, %c0_145], %195 {strides = array<i32>} : memref<1x2x16x16xf32, #tpu.memory_space<vmem>>, vector<1x2x1x16xf32>,
    %196 = vector.extract_strided_slice %187 {offsets = [0, 36], sizes = [2, 16], strides = [1, 1]} : vector<2x288xf32> to vector<2x16xf32>
    %c0_146 = arith.constant 0 : index
    %c0_147 = arith.constant 0 : index
    %c2_148 = arith.constant 2 : index
    %c0_149 = arith.constant 0 : index
    %197 = vector.load %arg6[%c0_146, %c0_147, %c2_148, %c0_149] : memref<1x2x16x16xf32, #tpu.memory_space<vmem>>, vector<1x2x1x16xf32>
    %198 = vector.shape_cast %197 : vector<1x2x1x16xf32> to vector<2x16xf32>
    %199 = vector.shape_cast %196 : vector<2x16xf32> to vector<1x2x1x16xf32>
    tpu.vector_store %arg6[%c0_146, %c0_147, %c2_148, %c0_149], %199 {strides = array<i32>} : memref<1x2x16x16xf32, #tpu.memory_space<vmem>>, vector<1x2x1x16xf32>,
    %200 = vector.extract_strided_slice %187 {offsets = [0, 54], sizes = [2, 16], strides = [1, 1]} : vector<2x288xf32> to vector<2x16xf32>
    %c0_150 = arith.constant 0 : index
    %c0_151 = arith.constant 0 : index
    %c3_152 = arith.constant 3 : index
    %c0_153 = arith.constant 0 : index
    %201 = vector.load %arg6[%c0_150, %c0_151, %c3_152, %c0_153] : memref<1x2x16x16xf32, #tpu.memory_space<vmem>>, vector<1x2x1x16xf32>
    %202 = vector.shape_cast %201 : vector<1x2x1x16xf32> to vector<2x16xf32>
    %203 = vector.shape_cast %200 : vector<2x16xf32> to vector<1x2x1x16xf32>
    tpu.vector_store %arg6[%c0_150, %c0_151, %c3_152, %c0_153], %203 {strides = array<i32>} : memref<1x2x16x16xf32, #tpu.memory_space<vmem>>, vector<1x2x1x16xf32>,
    %204 = vector.extract_strided_slice %187 {offsets = [0, 72], sizes = [2, 16], strides = [1, 1]} : vector<2x288xf32> to vector<2x16xf32>
    %c0_154 = arith.constant 0 : index
    %c0_155 = arith.constant 0 : index
    %c4_156 = arith.constant 4 : index
    %c0_157 = arith.constant 0 : index
    %205 = vector.load %arg6[%c0_154, %c0_155, %c4_156, %c0_157] : memref<1x2x16x16xf32, #tpu.memory_space<vmem>>, vector<1x2x1x16xf32>
    %206 = vector.shape_cast %205 : vector<1x2x1x16xf32> to vector<2x16xf32>
    %207 = vector.shape_cast %204 : vector<2x16xf32> to vector<1x2x1x16xf32>
    tpu.vector_store %arg6[%c0_154, %c0_155, %c4_156, %c0_157], %207 {strides = array<i32>} : memref<1x2x16x16xf32, #tpu.memory_space<vmem>>, vector<1x2x1x16xf32>,
    %208 = vector.extract_strided_slice %187 {offsets = [0, 90], sizes = [2, 16], strides = [1, 1]} : vector<2x288xf32> to vector<2x16xf32>
    %c0_158 = arith.constant 0 : index
    %c0_159 = arith.constant 0 : index
    %c5_160 = arith.constant 5 : index
    %c0_161 = arith.constant 0 : index
    %209 = vector.load %arg6[%c0_158, %c0_159, %c5_160, %c0_161] : memref<1x2x16x16xf32, #tpu.memory_space<vmem>>, vector<1x2x1x16xf32>
    %210 = vector.shape_cast %209 : vector<1x2x1x16xf32> to vector<2x16xf32>
    %211 = vector.shape_cast %208 : vector<2x16xf32> to vector<1x2x1x16xf32>
    tpu.vector_store %arg6[%c0_158, %c0_159, %c5_160, %c0_161], %211 {strides = array<i32>} : memref<1x2x16x16xf32, #tpu.memory_space<vmem>>, vector<1x2x1x16xf32>,
    %212 = vector.extract_strided_slice %187 {offsets = [0, 108], sizes = [2, 16], strides = [1, 1]} : vector<2x288xf32> to vector<2x16xf32>
    %c0_162 = arith.constant 0 : index
    %c0_163 = arith.constant 0 : index
    %c6_164 = arith.constant 6 : index
    %c0_165 = arith.constant 0 : index
    %213 = vector.load %arg6[%c0_162, %c0_163, %c6_164, %c0_165] : memref<1x2x16x16xf32, #tpu.memory_space<vmem>>, vector<1x2x1x16xf32>
    %214 = vector.shape_cast %213 : vector<1x2x1x16xf32> to vector<2x16xf32>
    %215 = vector.shape_cast %212 : vector<2x16xf32> to vector<1x2x1x16xf32>
    tpu.vector_store %arg6[%c0_162, %c0_163, %c6_164, %c0_165], %215 {strides = array<i32>} : memref<1x2x16x16xf32, #tpu.memory_space<vmem>>, vector<1x2x1x16xf32>,
    %216 = vector.extract_strided_slice %187 {offsets = [0, 126], sizes = [2, 16], strides = [1, 1]} : vector<2x288xf32> to vector<2x16xf32>
    %c0_166 = arith.constant 0 : index
    %c0_167 = arith.constant 0 : index
    %c7_168 = arith.constant 7 : index
    %c0_169 = arith.constant 0 : index
    %217 = vector.load %arg6[%c0_166, %c0_167, %c7_168, %c0_169] : memref<1x2x16x16xf32, #tpu.memory_space<vmem>>, vector<1x2x1x16xf32>
    %218 = vector.shape_cast %217 : vector<1x2x1x16xf32> to vector<2x16xf32>
    %219 = vector.shape_cast %216 : vector<2x16xf32> to vector<1x2x1x16xf32>
    tpu.vector_store %arg6[%c0_166, %c0_167, %c7_168, %c0_169], %219 {strides = array<i32>} : memref<1x2x16x16xf32, #tpu.memory_space<vmem>>, vector<1x2x1x16xf32>,
    %220 = vector.extract_strided_slice %187 {offsets = [0, 144], sizes = [2, 16], strides = [1, 1]} : vector<2x288xf32> to vector<2x16xf32>
    %c0_170 = arith.constant 0 : index
    %c0_171 = arith.constant 0 : index
    %c8_172 = arith.constant 8 : index
    %c0_173 = arith.constant 0 : index
    %221 = vector.load %arg6[%c0_170, %c0_171, %c8_172, %c0_173] : memref<1x2x16x16xf32, #tpu.memory_space<vmem>>, vector<1x2x1x16xf32>
    %222 = vector.shape_cast %221 : vector<1x2x1x16xf32> to vector<2x16xf32>
    %223 = vector.shape_cast %220 : vector<2x16xf32> to vector<1x2x1x16xf32>
    tpu.vector_store %arg6[%c0_170, %c0_171, %c8_172, %c0_173], %223 {strides = array<i32>} : memref<1x2x16x16xf32, #tpu.memory_space<vmem>>, vector<1x2x1x16xf32>,
    %224 = vector.extract_strided_slice %187 {offsets = [0, 162], sizes = [2, 16], strides = [1, 1]} : vector<2x288xf32> to vector<2x16xf32>
    %c0_174 = arith.constant 0 : index
    %c0_175 = arith.constant 0 : index
    %c9_176 = arith.constant 9 : index
    %c0_177 = arith.constant 0 : index
    %225 = vector.load %arg6[%c0_174, %c0_175, %c9_176, %c0_177] : memref<1x2x16x16xf32, #tpu.memory_space<vmem>>, vector<1x2x1x16xf32>
    %226 = vector.shape_cast %225 : vector<1x2x1x16xf32> to vector<2x16xf32>
    %227 = vector.shape_cast %224 : vector<2x16xf32> to vector<1x2x1x16xf32>
    tpu.vector_store %arg6[%c0_174, %c0_175, %c9_176, %c0_177], %227 {strides = array<i32>} : memref<1x2x16x16xf32, #tpu.memory_space<vmem>>, vector<1x2x1x16xf32>,
    %228 = vector.extract_strided_slice %187 {offsets = [0, 180], sizes = [2, 16], strides = [1, 1]} : vector<2x288xf32> to vector<2x16xf32>
    %c0_178 = arith.constant 0 : index
    %c0_179 = arith.constant 0 : index
    %c10_180 = arith.constant 10 : index
    %c0_181 = arith.constant 0 : index
    %229 = vector.load %arg6[%c0_178, %c0_179, %c10_180, %c0_181] : memref<1x2x16x16xf32, #tpu.memory_space<vmem>>, vector<1x2x1x16xf32>
    %230 = vector.shape_cast %229 : vector<1x2x1x16xf32> to vector<2x16xf32>
    %231 = vector.shape_cast %228 : vector<2x16xf32> to vector<1x2x1x16xf32>
    tpu.vector_store %arg6[%c0_178, %c0_179, %c10_180, %c0_181], %231 {strides = array<i32>} : memref<1x2x16x16xf32, #tpu.memory_space<vmem>>, vector<1x2x1x16xf32>,
    %232 = vector.extract_strided_slice %187 {offsets = [0, 198], sizes = [2, 16], strides = [1, 1]} : vector<2x288xf32> to vector<2x16xf32>
    %c0_182 = arith.constant 0 : index
    %c0_183 = arith.constant 0 : index
    %c11_184 = arith.constant 11 : index
    %c0_185 = arith.constant 0 : index
    %233 = vector.load %arg6[%c0_182, %c0_183, %c11_184, %c0_185] : memref<1x2x16x16xf32, #tpu.memory_space<vmem>>, vector<1x2x1x16xf32>
    %234 = vector.shape_cast %233 : vector<1x2x1x16xf32> to vector<2x16xf32>
    %235 = vector.shape_cast %232 : vector<2x16xf32> to vector<1x2x1x16xf32>
    tpu.vector_store %arg6[%c0_182, %c0_183, %c11_184, %c0_185], %235 {strides = array<i32>} : memref<1x2x16x16xf32, #tpu.memory_space<vmem>>, vector<1x2x1x16xf32>,
    %236 = vector.extract_strided_slice %187 {offsets = [0, 216], sizes = [2, 16], strides = [1, 1]} : vector<2x288xf32> to vector<2x16xf32>
    %c0_186 = arith.constant 0 : index
    %c0_187 = arith.constant 0 : index
    %c12_188 = arith.constant 12 : index
    %c0_189 = arith.constant 0 : index
    %237 = vector.load %arg6[%c0_186, %c0_187, %c12_188, %c0_189] : memref<1x2x16x16xf32, #tpu.memory_space<vmem>>, vector<1x2x1x16xf32>
    %238 = vector.shape_cast %237 : vector<1x2x1x16xf32> to vector<2x16xf32>
    %239 = vector.shape_cast %236 : vector<2x16xf32> to vector<1x2x1x16xf32>
    tpu.vector_store %arg6[%c0_186, %c0_187, %c12_188, %c0_189], %239 {strides = array<i32>} : memref<1x2x16x16xf32, #tpu.memory_space<vmem>>, vector<1x2x1x16xf32>,
    %240 = vector.extract_strided_slice %187 {offsets = [0, 234], sizes = [2, 16], strides = [1, 1]} : vector<2x288xf32> to vector<2x16xf32>
    %c0_190 = arith.constant 0 : index
    %c0_191 = arith.constant 0 : index
    %c13_192 = arith.constant 13 : index
    %c0_193 = arith.constant 0 : index
    %241 = vector.load %arg6[%c0_190, %c0_191, %c13_192, %c0_193] : memref<1x2x16x16xf32, #tpu.memory_space<vmem>>, vector<1x2x1x16xf32>
    %242 = vector.shape_cast %241 : vector<1x2x1x16xf32> to vector<2x16xf32>
    %243 = vector.shape_cast %240 : vector<2x16xf32> to vector<1x2x1x16xf32>
    tpu.vector_store %arg6[%c0_190, %c0_191, %c13_192, %c0_193], %243 {strides = array<i32>} : memref<1x2x16x16xf32, #tpu.memory_space<vmem>>, vector<1x2x1x16xf32>,
    %244 = vector.extract_strided_slice %187 {offsets = [0, 252], sizes = [2, 16], strides = [1, 1]} : vector<2x288xf32> to vector<2x16xf32>
    %c0_194 = arith.constant 0 : index
    %c0_195 = arith.constant 0 : index
    %c14_196 = arith.constant 14 : index
    %c0_197 = arith.constant 0 : index
    %245 = vector.load %arg6[%c0_194, %c0_195, %c14_196, %c0_197] : memref<1x2x16x16xf32, #tpu.memory_space<vmem>>, vector<1x2x1x16xf32>
    %246 = vector.shape_cast %245 : vector<1x2x1x16xf32> to vector<2x16xf32>
    %247 = vector.shape_cast %244 : vector<2x16xf32> to vector<1x2x1x16xf32>
    tpu.vector_store %arg6[%c0_194, %c0_195, %c14_196, %c0_197], %247 {strides = array<i32>} : memref<1x2x16x16xf32, #tpu.memory_space<vmem>>, vector<1x2x1x16xf32>,
    %248 = vector.extract_strided_slice %187 {offsets = [0, 270], sizes = [2, 16], strides = [1, 1]} : vector<2x288xf32> to vector<2x16xf32>
    %c0_198 = arith.constant 0 : index
    %c0_199 = arith.constant 0 : index
    %c15_200 = arith.constant 15 : index
    %c0_201 = arith.constant 0 : index
    %249 = vector.load %arg6[%c0_198, %c0_199, %c15_200, %c0_201] : memref<1x2x16x16xf32, #tpu.memory_space<vmem>>, vector<1x2x1x16xf32>
    %250 = vector.shape_cast %249 : vector<1x2x1x16xf32> to vector<2x16xf32>
    %251 = vector.shape_cast %248 : vector<2x16xf32> to vector<1x2x1x16xf32>
    tpu.vector_store %arg6[%c0_198, %c0_199, %c15_200, %c0_201], %251 {strides = array<i32>} : memref<1x2x16x16xf32, #tpu.memory_space<vmem>>, vector<1x2x1x16xf32>,
    return
  }
  func.func @transform_0(%arg0: i32) -> (i32, i32, i32, i32) {
    %c0_i32 = arith.constant 0 : i32
    %c0_i32_0 = arith.constant 0 : i32
    %c0_i32_1 = arith.constant 0 : i32
    %c0_i32_2 = arith.constant 0 : i32
    return %arg0, %c0_i32, %c0_i32_0, %c0_i32_1 : i32, i32, i32, i32
  }
  func.func @transform_1(%arg0: i32) -> (i32, i32, i32) {
    %c0_i32 = arith.constant 0 : i32
    %c0_i32_0 = arith.constant 0 : i32
    %c0_i32_1 = arith.constant 0 : i32
    %c0_i32_2 = arith.constant 0 : i32
    return %c0_i32, %c0_i32_0, %c0_i32_1 : i32, i32, i32
  }
  func.func @transform_2(%arg0: i32) -> (i32, i32) {
    %c0_i32 = arith.constant 0 : i32
    %c0_i32_0 = arith.constant 0 : i32
    %c0_i32_1 = arith.constant 0 : i32
    return %c0_i32, %c0_i32_0 : i32, i32
  }
  func.func @transform_3(%arg0: i32) -> (i32, i32) {
    %c0_i32 = arith.constant 0 : i32
    %c0_i32_0 = arith.constant 0 : i32
    %c0_i32_1 = arith.constant 0 : i32
    return %c0_i32, %c0_i32_0 : i32, i32
  }
  func.func @transform_4(%arg0: i32) -> (i32, i32) {
    %c0_i32 = arith.constant 0 : i32
    %c0_i32_0 = arith.constant 0 : i32
    %c0_i32_1 = arith.constant 0 : i32
    return %c0_i32, %c0_i32_0 : i32, i32
  }
  func.func @transform_5(%arg0: i32) -> (i32, i32, i32, i32) {
    %c0_i32 = arith.constant 0 : i32
    %c0_i32_0 = arith.constant 0 : i32
    %c0_i32_1 = arith.constant 0 : i32
    %c0_i32_2 = arith.constant 0 : i32
    return %arg0, %c0_i32, %c0_i32_0, %c0_i32_1 : i32, i32, i32, i32
  }
}

</mosaic_0001>

<llo_original>
// kernel: tpu_custom_call.1
$region0: #{tpu_custom_call.1}
  #allocation0 [shape = 'u32[]', space=smem, size = 0x4, offset = 0x4, fixed_abs, tag = 'smem constant byte address 0x4 - core index']
  #allocation1 [shape = 'u32[72,128]{1,0:T(1,128)}', space=vmem, size = 0x9000, scoped, tag = 'internal scratch']
  #allocation2 [shape = 'bf16[384,32]{1,0:T(8,128)(2,1)}', space=vmem, size = 0x18000, scoped, tag = 'scratch operand']
  #allocation3 [shape = 'bf16[384,64]{1,0:T(8,128)(2,1)}', space=vmem, size = 0x18000, scoped, tag = 'scratch operand']
  %s0 = inlined_call_operand.vmem [shape: f32[2,32,16,16], index: 0, kind: input, shape index: {}]
  %s1 = inlined_call_operand.vmem [shape: bf16[9,32,64], index: 1, kind: input, shape index: {}]
  %s2 = inlined_call_operand.vmem [shape: f32[1,64], index: 2, kind: input, shape index: {}]
  %s3 = inlined_call_operand.vmem [shape: bf16[64,18], index: 3, kind: input, shape index: {}]
  %s4 = inlined_call_operand.vmem [shape: f32[1,2], index: 4, kind: input, shape index: {}]
  %s5 = inlined_call_operand.hbm [shape: f32[2,2,16,16], index: 5, kind: output, shape index: {}]
  %s6 = sld [smem:[#allocation0]]
  $region53: #{tpu_custom_call.1} parent=0
    _
  %s8 = ssub.s32 1, %s6
  %s9 = scalar_select 0, %s8, %s6
  $region1: #{tpu_custom_call.1} parent=0
    #allocation4 [shape = 'u8[32768]{0}', space=vmem, size = 0x8000, scoped, tag = 'output window, operand 0']
    #allocation5 [shape = 's32[2]{0}', space=sflag, size = 0x8, scoped, tag = 'scoped memory for tpu_custom_call.1']
    %10 = vsyncpa [#allocation5], 0
    %s11 = scalar_lea.sflag [#allocation5], 1
    %12 = vsyncpa %s11, 0
    loop: start=0, step=1, limit=4
    $region2: #{tpu_custom_call.1} parent=1 // loop_pre_header
      _
    $region3: #{tpu_custom_call.1} parent=1 // loop_header
      %s14 = sphi 0, %s18
      %p15 = scmp.ge.s32.totalorder %s14, 4
      %s24 = sphi 0, %s26
      %s27 = sphi 0, %s24
      %s28 = sphi 0, %s27
      %s44 = sphi 0, %s28
      %s48 = sphi 0, %s48
      %s50 = sphi 0, %s48
      %s51 = sphi 0, %s50
      %s65 = sphi 0, %s51
      %s69 = sphi 0, %s69
      %s71 = sphi 0, %s69
      %s72 = sphi 0, %s71
      %s86 = sphi 0, %s72
      %s90 = sphi 0, %s90
      %s92 = sphi 0, %s90
      %s93 = sphi 0, %s92
      %s107 = sphi 0, %s93
      %s111 = sphi 0, %s111
      %s113 = sphi 0, %s111
      %s114 = sphi 0, %s113
      %s128 = sphi 0, %s114
      %s134 = sphi 0, %s136
      %s137 = sphi 0, %s134
      %s138 = sphi 0, %s137
      %s154 = sphi 0, %s138
    $region4: #{tpu_custom_call.1} parent=1 // loop_header_branch
      %17 = sbr.rel (%p15) target = $region8
    $region5: #{tpu_custom_call.1} parent=1 // loop_body
      %s19 = ssub.s32 %s14, 1
      %s20 = ssub.s32 %s14, 2
      %s21 = sadd.s32 %s14, 1
      %s22 = ssub.s32 %s14, %s21
      %p23 = scmp.eq.s32.totalorder %s22, 0
      %s25 = sadd.s32 %s24, 1
      %s26 = scalar_select %p23, %s24, %s25
      %p29 = pneg %p23
      %p30 = scmp.eq.s32.totalorder %s14, 1
      %p31 = por %p29, %p30
      %p32 = scmp.ne.s32.totalorder %s24, %s27
      %p33 = scmp.eq.s32.totalorder %s14, 0
      %p34 = por %p32, %p33
      %p35 = scmp.ne.s32.totalorder %s24, %s27
      %p36 = scmp.eq.s32.totalorder %s19, 1
      %p37 = por %p35, %p36
      %p38 = scmp.ne.s32.totalorder %s27, %s28
      %p39 = scmp.eq.s32.totalorder %s19, 0
      %p40 = por %p38, %p39
      %p41 = scmp.ne.s32.totalorder %s27, %s28
      %p42 = scmp.eq.s32.totalorder %s20, 1
      %p43 = por %p41, %p42
      %p45 = scmp.ne.s32.totalorder %s28, %s44
      %p46 = scmp.eq.s32.totalorder %s20, 0
      %p47 = por %p45, %p46
      %s49 = sadd.s32 %s48, 1
      %p52 = scmp.eq.s32.totalorder %s14, 1
      %p53 = scmp.ne.s32.totalorder %s48, %s50
      %p54 = scmp.eq.s32.totalorder %s14, 0
      %p55 = por %p53, %p54
      %p56 = scmp.ne.s32.totalorder %s48, %s50
      %p57 = scmp.eq.s32.totalorder %s19, 1
      %p58 = por %p56, %p57
      %p59 = scmp.ne.s32.totalorder %s50, %s51
      %p60 = scmp.eq.s32.totalorder %s19, 0
      %p61 = por %p59, %p60
      %p62 = scmp.ne.s32.totalorder %s50, %s51
      %p63 = scmp.eq.s32.totalorder %s20, 1
      %p64 = por %p62, %p63
      %p66 = scmp.ne.s32.totalorder %s51, %s65
      %p67 = scmp.eq.s32.totalorder %s20, 0
      %p68 = por %p66, %p67
      %s70 = sadd.s32 %s69, 1
      %p73 = scmp.eq.s32.totalorder %s14, 1
      %p74 = scmp.ne.s32.totalorder %s69, %s71
      %p75 = scmp.eq.s32.totalorder %s14, 0
      %p76 = por %p74, %p75
      %p77 = scmp.ne.s32.totalorder %s69, %s71
      %p78 = scmp.eq.s32.totalorder %s19, 1
      %p79 = por %p77, %p78
      %p80 = scmp.ne.s32.totalorder %s71, %s72
      %p81 = scmp.eq.s32.totalorder %s19, 0
      %p82 = por %p80, %p81
      %p83 = scmp.ne.s32.totalorder %s71, %s72
      %p84 = scmp.eq.s32.totalorder %s20, 1
      %p85 = por %p83, %p84
      %p87 = scmp.ne.s32.totalorder %s72, %s86
      %p88 = scmp.eq.s32.totalorder %s20, 0
      %p89 = por %p87, %p88
      %s91 = sadd.s32 %s90, 1
      %p94 = scmp.eq.s32.totalorder %s14, 1
      %p95 = scmp.ne.s32.totalorder %s90, %s92
      %p96 = scmp.eq.s32.totalorder %s14, 0
      %p97 = por %p95, %p96
      %p98 = scmp.ne.s32.totalorder %s90, %s92
      %p99 = scmp.eq.s32.totalorder %s19, 1
      %p100 = por %p98, %p99
      %p101 = scmp.ne.s32.totalorder %s92, %s93
      %p102 = scmp.eq.s32.totalorder %s19, 0
      %p103 = por %p101, %p102
      %p104 = scmp.ne.s32.totalorder %s92, %s93
      %p105 = scmp.eq.s32.totalorder %s20, 1
      %p106 = por %p104, %p105
      %p108 = scmp.ne.s32.totalorder %s93, %s107
      %p109 = scmp.eq.s32.totalorder %s20, 0
      %p110 = por %p108, %p109
      %s112 = sadd.s32 %s111, 1
      %p115 = scmp.eq.s32.totalorder %s14, 1
      %p116 = scmp.ne.s32.totalorder %s111, %s113
      %p117 = scmp.eq.s32.totalorder %s14, 0
      %p118 = por %p116, %p117
      %p119 = scmp.ne.s32.totalorder %s111, %s113
      %p120 = scmp.eq.s32.totalorder %s19, 1
      %p121 = por %p119, %p120
      %p122 = scmp.ne.s32.totalorder %s113, %s114
      %p123 = scmp.eq.s32.totalorder %s19, 0
      %p124 = por %p122, %p123
      %p125 = scmp.ne.s32.totalorder %s113, %s114
      %p126 = scmp.eq.s32.totalorder %s20, 1
      %p127 = por %p125, %p126
      %p129 = scmp.ne.s32.totalorder %s114, %s128
      %p130 = scmp.eq.s32.totalorder %s20, 0
      %p131 = por %p129, %p130
      %s132 = ssub.s32 %s14, %s21
      %p133 = scmp.eq.s32.totalorder %s132, 0
      %s135 = sadd.s32 %s134, 1
      %s136 = scalar_select %p133, %s134, %s135
      %p139 = pneg %p133
      %p140 = scmp.eq.s32.totalorder %s14, 1
      %p141 = por %p139, %p140
      %p142 = scmp.ne.s32.totalorder %s134, %s137
      %p143 = scmp.eq.s32.totalorder %s14, 0
      %p144 = por %p142, %p143
      %p145 = scmp.ne.s32.totalorder %s134, %s137
      %p146 = scmp.eq.s32.totalorder %s19, 1
      %p147 = por %p145, %p146
      %p148 = scmp.ne.s32.totalorder %s137, %s138
      %p149 = scmp.eq.s32.totalorder %s19, 0
      %p150 = por %p148, %p149
      %p151 = scmp.ne.s32.totalorder %s137, %s138
      %p152 = scmp.eq.s32.totalorder %s20, 1
      %p153 = por %p151, %p152
      %p155 = scmp.ne.s32.totalorder %s138, %s154
      %p156 = scmp.eq.s32.totalorder %s20, 0
      %p157 = por %p155, %p156
      %p158 = scmp.le.s32.totalorder 1, %s14
      %p159 = scmp.lt.s32.totalorder %s14, 3
      %p160 = pnand %p158, %p159
      %p161 = pneg %p160
      // Predicated region
      $region9: #{tpu_custom_call.1} parent=5 // pred_check
        _
      $region10: #{tpu_custom_call.1} parent=5 // pred_check_branch
        %163 = sbr.rel (%p160) target = $region12
      $region11: #{tpu_custom_call.1} parent=5 // pred_region
        %s164 = ssub.s32 %s14, 1
        // Predicated region
        $region13: #{tpu_custom_call.1} parent=11 // pred_check
          %p165 = pneg %p61
        $region14: #{tpu_custom_call.1} parent=11 // pred_check_branch
          %167 = sbr.rel (%p165) target = $region16
        $region15: #{tpu_custom_call.1} parent=11 // pred_region
          _
        $region16: #{tpu_custom_call.1} parent=11 // pred_fallthru
          _
        // Predicated region
        $region17: #{tpu_custom_call.1} parent=11 // pred_check
          %p168 = pneg %p82
        $region18: #{tpu_custom_call.1} parent=11 // pred_check_branch
          %170 = sbr.rel (%p168) target = $region20
        $region19: #{tpu_custom_call.1} parent=11 // pred_region
          _
        $region20: #{tpu_custom_call.1} parent=11 // pred_fallthru
          _
        // Predicated region
        $region21: #{tpu_custom_call.1} parent=11 // pred_check
          %p171 = pneg %p103
        $region22: #{tpu_custom_call.1} parent=11 // pred_check_branch
          %173 = sbr.rel (%p171) target = $region24
        $region23: #{tpu_custom_call.1} parent=11 // pred_region
          _
        $region24: #{tpu_custom_call.1} parent=11 // pred_fallthru
          _
        // Predicated region
        $region25: #{tpu_custom_call.1} parent=11 // pred_check
          %p174 = pneg %p124
        $region26: #{tpu_custom_call.1} parent=11 // pred_check_branch
          %176 = sbr.rel (%p174) target = $region28
        $region27: #{tpu_custom_call.1} parent=11 // pred_region
          _
        $region28: #{tpu_custom_call.1} parent=11 // pred_fallthru
          _
      $region12: #{tpu_custom_call.1} parent=5 // pred_fallthru
        _
      %p177 = scmp.lt.s32.totalorder %s14, 2
      // Predicated region
      $region29: #{tpu_custom_call.1} parent=5 // pred_check
        %p178 = pneg %p177
      $region30: #{tpu_custom_call.1} parent=5 // pred_check_branch
        %180 = sbr.rel (%p178) target = $region32
      $region31: #{tpu_custom_call.1} parent=5 // pred_region
        // Predicated region
        $region33: #{tpu_custom_call.1} parent=31 // pred_check
          %p181 = pneg %p34
        $region34: #{tpu_custom_call.1} parent=31 // pred_check_branch
          %183 = sbr.rel (%p181) target = $region36
        $region35: #{tpu_custom_call.1} parent=31 // pred_region
          %p184 = scmp.lt.s32.totalorder %s14, 1
          %s185 = scalar_select %p184, %s14, 1
          %s186 = smul.addr %s185, 64
          %s187 = smul.addr %s186, 8
          %s188 = scalar_lea.vmem %s0, %s187
        $region36: #{tpu_custom_call.1} parent=31 // pred_fallthru
          _
      $region32: #{tpu_custom_call.1} parent=5 // pred_fallthru
        _
      %p189 = scmp.le.s32.totalorder 1, %s14
      %p190 = scmp.lt.s32.totalorder %s14, 3
      %p191 = pnand %p189, %p190
      %p192 = pneg %p191
      // Predicated region
      $region37: #{tpu_custom_call.1} parent=5 // pred_check
        _
      $region38: #{tpu_custom_call.1} parent=5 // pred_check_branch
        %194 = sbr.rel (%p191) target = $region40
      $region39: #{tpu_custom_call.1} parent=5 // pred_region
        %s195 = ssub.s32 %s14, 1
        %p196 = scmp.lt.s32.totalorder %s19, 1
        %s197 = scalar_select %p196, %s19, 1
        %s198 = smul.addr %s197, 64
        %s199 = smul.addr %s198, 8
        %s200 = scalar_lea.vmem %s0, %s199
        %p201 = pneg %p40
        %p202 = pneg %p37
        %p203 = pneg %p61
        %p204 = pneg %p58
        %p205 = pneg %p82
        %p206 = pneg %p79
        %p207 = pneg %p103
        %p208 = pneg %p100
        %p209 = pneg %p124
        %p210 = pneg %p121
        %p211 = pneg %p150
        %p212 = pneg %p147
        %s213 = sand.u32 %s137, 1
        %s214 = scalar_lea.sflag [#allocation5], %s213
        %s215 = sand.u32 %s137, 1
        %s216 = smul.addr %s215, 32
        %s217 = scalar_lea.vmem [#allocation4], %s216
        %p218 = scmp.lt.s32.totalorder %s19, 1
        %s219 = scalar_select %p218, %s19, 1
        %s220 = smul.addr %s219, 64
        %s221 = smul.addr %s220, 8
        %s222 = scalar_lea.vmem %s0, %s221
        %vm224 = vcmask 257024
        %225 = vst.msk [vmem:[#allocation2] sm:$0xf] %vm224, 0
        %226 = vst.msk [vmem:[#allocation2 + $0x4] sm:$0xf] %vm224, 0
        %227 = vst.msk [vmem:[#allocation2 + $0x8] sm:$0xf] %vm224, 0
        %228 = vst.msk [vmem:[#allocation2 + $0xc] sm:$0xf] %vm224, 0
        %229 = vst.msk [vmem:[#allocation2 + $0x10] sm:$0xf] %vm224, 0
        %230 = vst.msk [vmem:[#allocation2 + $0x14] sm:$0xf] %vm224, 0
        %231 = vst.msk [vmem:[#allocation2 + $0x18] sm:$0xf] %vm224, 0
        %232 = vst.msk [vmem:[#allocation2 + $0x1c] sm:$0xf] %vm224, 0
        %233 = vst.msk [vmem:[#allocation2 + $0x20] sm:$0xf] %vm224, 0
        %234 = vst.msk [vmem:[#allocation2 + $0x24] sm:$0xf] %vm224, 0
        %235 = vst.msk [vmem:[#allocation2 + $0x28] sm:$0xf] %vm224, 0
        %236 = vst.msk [vmem:[#allocation2 + $0x2c] sm:$0xf] %vm224, 0
        %237 = vst.msk [vmem:[#allocation2 + $0x30] sm:$0xf] %vm224, 0
        %238 = vst.msk [vmem:[#allocation2 + $0x34] sm:$0xf] %vm224, 0
        %239 = vst.msk [vmem:[#allocation2 + $0x38] sm:$0xf] %vm224, 0
        %240 = vst.msk [vmem:[#allocation2 + $0x3c] sm:$0xf] %vm224, 0
        %241 = vst.msk [vmem:[#allocation2 + $0x40] sm:$0xf] %vm224, 0
        %242 = vst.msk [vmem:[#allocation2 + $0x44] sm:$0xf] %vm224, 0
        %243 = vst.msk [vmem:[#allocation2 + $0x48] sm:$0xf] %vm224, 0
        %244 = vst.msk [vmem:[#allocation2 + $0x4c] sm:$0xf] %vm224, 0
        %245 = vst.msk [vmem:[#allocation2 + $0x50] sm:$0xf] %vm224, 0
        %246 = vst.msk [vmem:[#allocation2 + $0x54] sm:$0xf] %vm224, 0
        %247 = vst.msk [vmem:[#allocation2 + $0x58] sm:$0xf] %vm224, 0
        %248 = vst.msk [vmem:[#allocation2 + $0x5c] sm:$0xf] %vm224, 0
        %249 = vst.msk [vmem:[#allocation2 + $0x60] sm:$0xf] %vm224, 0
        %250 = vst.msk [vmem:[#allocation2 + $0x64] sm:$0xf] %vm224, 0
        %251 = vst.msk [vmem:[#allocation2 + $0x68] sm:$0xf] %vm224, 0
        %252 = vst.msk [vmem:[#allocation2 + $0x6c] sm:$0xf] %vm224, 0
        %253 = vst.msk [vmem:[#allocation2 + $0x70] sm:$0xf] %vm224, 0
        %254 = vst.msk [vmem:[#allocation2 + $0x74] sm:$0xf] %vm224, 0
        %255 = vst.msk [vmem:[#allocation2 + $0x78] sm:$0xf] %vm224, 0
        %256 = vst.msk [vmem:[#allocation2 + $0x7c] sm:$0xf] %vm224, 0
        %257 = vst.msk [vmem:[#allocation2 + $0x80] sm:$0xf] %vm224, 0
        %258 = vst.msk [vmem:[#allocation2 + $0x84] sm:$0xf] %vm224, 0
        %259 = vst.msk [vmem:[#allocation2 + $0x88] sm:$0xf] %vm224, 0
        %260 = vst.msk [vmem:[#allocation2 + $0x8c] sm:$0xf] %vm224, 0
        %261 = vst.msk [vmem:[#allocation2 + $0x90] sm:$0xf] %vm224, 0
        %262 = vst.msk [vmem:[#allocation2 + $0x94] sm:$0xf] %vm224, 0
        %263 = vst.msk [vmem:[#allocation2 + $0x98] sm:$0xf] %vm224, 0
        %264 = vst.msk [vmem:[#allocation2 + $0x9c] sm:$0xf] %vm224, 0
        %265 = vst.msk [vmem:[#allocation2 + $0xa0] sm:$0xf] %vm224, 0
        %266 = vst.msk [vmem:[#allocation2 + $0xa4] sm:$0xf] %vm224, 0
        %267 = vst.msk [vmem:[#allocation2 + $0xa8] sm:$0xf] %vm224, 0
        %268 = vst.msk [vmem:[#allocation2 + $0xac] sm:$0xf] %vm224, 0
        %269 = vst.msk [vmem:[#allocation2 + $0xb0] sm:$0xf] %vm224, 0
        %270 = vst.msk [vmem:[#allocation2 + $0xb4] sm:$0xf] %vm224, 0
        %271 = vst.msk [vmem:[#allocation2 + $0xb8] sm:$0xf] %vm224, 0
        %272 = vst.msk [vmem:[#allocation2 + $0xbc] sm:$0xf] %vm224, 0
        %vm273 = vcmask 519168
        %274 = vst.msk [vmem:[#allocation3] sm:$0xf] %vm273, 0
        %275 = vst.msk [vmem:[#allocation3 + $0x4] sm:$0xf] %vm273, 0
        %276 = vst.msk [vmem:[#allocation3 + $0x8] sm:$0xf] %vm273, 0
        %277 = vst.msk [vmem:[#allocation3 + $0xc] sm:$0xf] %vm273, 0
        %278 = vst.msk [vmem:[#allocation3 + $0x10] sm:$0xf] %vm273, 0
        %279 = vst.msk [vmem:[#allocation3 + $0x14] sm:$0xf] %vm273, 0
        %280 = vst.msk [vmem:[#allocation3 + $0x18] sm:$0xf] %vm273, 0
        %281 = vst.msk [vmem:[#allocation3 + $0x1c] sm:$0xf] %vm273, 0
        %282 = vst.msk [vmem:[#allocation3 + $0x20] sm:$0xf] %vm273, 0
        %283 = vst.msk [vmem:[#allocation3 + $0x24] sm:$0xf] %vm273, 0
        %284 = vst.msk [vmem:[#allocation3 + $0x28] sm:$0xf] %vm273, 0
        %285 = vst.msk [vmem:[#allocation3 + $0x2c] sm:$0xf] %vm273, 0
        %286 = vst.msk [vmem:[#allocation3 + $0x30] sm:$0xf] %vm273, 0
        %287 = vst.msk [vmem:[#allocation3 + $0x34] sm:$0xf] %vm273, 0
        %288 = vst.msk [vmem:[#allocation3 + $0x38] sm:$0xf] %vm273, 0
        %289 = vst.msk [vmem:[#allocation3 + $0x3c] sm:$0xf] %vm273, 0
        %290 = vst.msk [vmem:[#allocation3 + $0x40] sm:$0xf] %vm273, 0
        %291 = vst.msk [vmem:[#allocation3 + $0x44] sm:$0xf] %vm273, 0
        %292 = vst.msk [vmem:[#allocation3 + $0x48] sm:$0xf] %vm273, 0
        %293 = vst.msk [vmem:[#allocation3 + $0x4c] sm:$0xf] %vm273, 0
        %294 = vst.msk [vmem:[#allocation3 + $0x50] sm:$0xf] %vm273, 0
        %295 = vst.msk [vmem:[#allocation3 + $0x54] sm:$0xf] %vm273, 0
        %296 = vst.msk [vmem:[#allocation3 + $0x58] sm:$0xf] %vm273, 0
        %297 = vst.msk [vmem:[#allocation3 + $0x5c] sm:$0xf] %vm273, 0
        %298 = vst.msk [vmem:[#allocation3 + $0x60] sm:$0xf] %vm273, 0
        %299 = vst.msk [vmem:[#allocation3 + $0x64] sm:$0xf] %vm273, 0
        %300 = vst.msk [vmem:[#allocation3 + $0x68] sm:$0xf] %vm273, 0
        %301 = vst.msk [vmem:[#allocation3 + $0x6c] sm:$0xf] %vm273, 0
        %302 = vst.msk [vmem:[#allocation3 + $0x70] sm:$0xf] %vm273, 0
        %303 = vst.msk [vmem:[#allocation3 + $0x74] sm:$0xf] %vm273, 0
        %304 = vst.msk [vmem:[#allocation3 + $0x78] sm:$0xf] %vm273, 0
        %305 = vst.msk [vmem:[#allocation3 + $0x7c] sm:$0xf] %vm273, 0
        %306 = vst.msk [vmem:[#allocation3 + $0x80] sm:$0xf] %vm273, 0
        %307 = vst.msk [vmem:[#allocation3 + $0x84] sm:$0xf] %vm273, 0
        %308 = vst.msk [vmem:[#allocation3 + $0x88] sm:$0xf] %vm273, 0
        %309 = vst.msk [vmem:[#allocation3 + $0x8c] sm:$0xf] %vm273, 0
        %310 = vst.msk [vmem:[#allocation3 + $0x90] sm:$0xf] %vm273, 0
        %311 = vst.msk [vmem:[#allocation3 + $0x94] sm:$0xf] %vm273, 0
        %312 = vst.msk [vmem:[#allocation3 + $0x98] sm:$0xf] %vm273, 0
        %313 = vst.msk [vmem:[#allocation3 + $0x9c] sm:$0xf] %vm273, 0
        %314 = vst.msk [vmem:[#allocation3 + $0xa0] sm:$0xf] %vm273, 0
        %315 = vst.msk [vmem:[#allocation3 + $0xa4] sm:$0xf] %vm273, 0
        %316 = vst.msk [vmem:[#allocation3 + $0xa8] sm:$0xf] %vm273, 0
        %317 = vst.msk [vmem:[#allocation3 + $0xac] sm:$0xf] %vm273, 0
        %318 = vst.msk [vmem:[#allocation3 + $0xb0] sm:$0xf] %vm273, 0
        %319 = vst.msk [vmem:[#allocation3 + $0xb4] sm:$0xf] %vm273, 0
        %320 = vst.msk [vmem:[#allocation3 + $0xb8] sm:$0xf] %vm273, 0
        %321 = vst.msk [vmem:[#allocation3 + $0xbc] sm:$0xf] %vm273, 0
        %v322 = vld [vmem:[%s222] sm:$0x1]
        %v323 = vld [vmem:[%s222 + $0x10] sm:$0x1]
        %v324 = vld [vmem:[%s222 + $0x20] sm:$0x1]
        %v325 = vld [vmem:[%s222 + $0x30] sm:$0x1]
        %v326 = vld [vmem:[%s222 + $0x40] sm:$0x1]
        %v327 = vld [vmem:[%s222 + $0x50] sm:$0x1]
        %v328 = vld [vmem:[%s222 + $0x60] sm:$0x1]
        %v329 = vld [vmem:[%s222 + $0x70] sm:$0x1]
        %v330 = vld [vmem:[%s222 + $0x80] sm:$0x1]
        %v331 = vld [vmem:[%s222 + $0x90] sm:$0x1]
        %v332 = vld [vmem:[%s222 + $0xa0] sm:$0x1]
        %v333 = vld [vmem:[%s222 + $0xb0] sm:$0x1]
        %v334 = vld [vmem:[%s222 + $0xc0] sm:$0x1]
        %v335 = vld [vmem:[%s222 + $0xd0] sm:$0x1]
        %v336 = vld [vmem:[%s222 + $0xe0] sm:$0x1]
        %v337 = vld [vmem:[%s222 + $0xf0] sm:$0x1]
        %v338 = vld [vmem:[%s222 + $0x100] sm:$0x1]
        %v339 = vld [vmem:[%s222 + $0x110] sm:$0x1]
        %v340 = vld [vmem:[%s222 + $0x120] sm:$0x1]
        %v341 = vld [vmem:[%s222 + $0x130] sm:$0x1]
        %v342 = vld [vmem:[%s222 + $0x140] sm:$0x1]
        %v343 = vld [vmem:[%s222 + $0x150] sm:$0x1]
        %v344 = vld [vmem:[%s222 + $0x160] sm:$0x1]
        %v345 = vld [vmem:[%s222 + $0x170] sm:$0x1]
        %v346 = vld [vmem:[%s222 + $0x180] sm:$0x1]
        %v347 = vld [vmem:[%s222 + $0x190] sm:$0x1]
        %v348 = vld [vmem:[%s222 + $0x1a0] sm:$0x1]
        %v349 = vld [vmem:[%s222 + $0x1b0] sm:$0x1]
        %v350 = vld [vmem:[%s222 + $0x1c0] sm:$0x1]
        %v351 = vld [vmem:[%s222 + $0x1d0] sm:$0x1]
        %v352 = vld [vmem:[%s222 + $0x1e0] sm:$0x1]
        %v353 = vld [vmem:[%s222 + $0x1f0] sm:$0x1]
        %v386 = vrot.slane %v323, 7
        %vm387 = vcmask 1041409
        %v388 = vsel %vm387, %v386, %v322
        %v389 = vrot.slane %v324, 6
        %vm390 = vcmask 1042434
        %v391 = vsel %vm390, %v389, %v388
        %v392 = vrot.slane %v325, 5
        %vm393 = vcmask 1043459
        %v394 = vsel %vm393, %v392, %v391
        %v395 = vrot.slane %v326, 4
        %vm396 = vcmask 1044484
        %v397 = vsel %vm396, %v395, %v394
        %v398 = vrot.slane %v327, 3
        %vm399 = vcmask 1045509
        %v400 = vsel %vm399, %v398, %v397
        %v401 = vrot.slane %v328, 2
        %vm402 = vcmask 1046534
        %v403 = vsel %vm402, %v401, %v400
        %v404 = vrot.slane %v329, 1
        %vm405 = vcmask 1047559
        %v406 = vsel %vm405, %v404, %v403
        %v407 = vrot.slane %v331, 7
        %v408 = vsel %vm387, %v407, %v330
        %v409 = vrot.slane %v332, 6
        %v410 = vsel %vm390, %v409, %v408
        %v411 = vrot.slane %v333, 5
        %v412 = vsel %vm393, %v411, %v410
        %v413 = vrot.slane %v334, 4
        %v414 = vsel %vm396, %v413, %v412
        %v415 = vrot.slane %v335, 3
        %v416 = vsel %vm399, %v415, %v414
        %v417 = vrot.slane %v336, 2
        %v418 = vsel %vm402, %v417, %v416
        %v419 = vrot.slane %v337, 1
        %v420 = vsel %vm405, %v419, %v418
        %v421 = vrot.slane %v339, 7
        %v422 = vsel %vm387, %v421, %v338
        %v423 = vrot.slane %v340, 6
        %v424 = vsel %vm390, %v423, %v422
        %v425 = vrot.slane %v341, 5
        %v426 = vsel %vm393, %v425, %v424
        %v427 = vrot.slane %v342, 4
        %v428 = vsel %vm396, %v427, %v426
        %v429 = vrot.slane %v343, 3
        %v430 = vsel %vm399, %v429, %v428
        %v431 = vrot.slane %v344, 2
        %v432 = vsel %vm402, %v431, %v430
        %v433 = vrot.slane %v345, 1
        %v434 = vsel %vm405, %v433, %v432
        %v435 = vrot.slane %v347, 7
        %v436 = vsel %vm387, %v435, %v346
        %v437 = vrot.slane %v348, 6
        %v438 = vsel %vm390, %v437, %v436
        %v439 = vrot.slane %v349, 5
        %v440 = vsel %vm393, %v439, %v438
        %v441 = vrot.slane %v350, 4
        %v442 = vsel %vm396, %v441, %v440
        %v443 = vrot.slane %v351, 3
        %v444 = vsel %vm399, %v443, %v442
        %v445 = vrot.slane %v352, 2
        %v446 = vsel %vm402, %v445, %v444
        %v447 = vrot.slane %v353, 1
        %v448 = vsel %vm405, %v447, %v446
        %453 = vxpose.xlu0.b32.start [1/16] %v406, 128
        %454 = vxpose.xlu0.b32.cont [2/16] %v420, 128
        %455 = vxpose.xlu0.b32.cont [3/16] %v434, 128
        %456 = vxpose.xlu0.b32.cont [4/16] %v448, 128
        %457 = vxpose.xlu0.b32.cont [5/16] 0.0, 128
        %458 = vxpose.xlu0.b32.cont [6/16] 0.0, 128
        %459 = vxpose.xlu0.b32.cont [7/16] 0.0, 128
        %460 = vxpose.xlu0.b32.cont [8/16] 0.0, 128
        %461 = vxpose.xlu0.b32.cont [9/16] 0.0, 128
        %462 = vxpose.xlu0.b32.cont [10/16] 0.0, 128
        %463 = vxpose.xlu0.b32.cont [11/16] 0.0, 128
        %464 = vxpose.xlu0.b32.cont [12/16] 0.0, 128
        %465 = vxpose.xlu0.b32.cont [13/16] 0.0, 128
        %466 = vxpose.xlu0.b32.cont [14/16] 0.0, 128
        %467 = vxpose.xlu0.b32.cont [15/16] 0.0, 128
        %468 = vxpose.xlu0.b32.end [16/16] 0.0, 128
        %v469 = vpop.trf.xlu0
        %v470 = vpop.trf.xlu0
        %v471 = vpop.trf.xlu0
        %v472 = vpop.trf.xlu0
        %v473 = vpop.trf.xlu0
        %v474 = vpop.trf.xlu0
        %v475 = vpop.trf.xlu0
        %v476 = vpop.trf.xlu0
        %v477 = vpop.trf.xlu0
        %v478 = vpop.trf.xlu0
        %v479 = vpop.trf.xlu0
        %v480 = vpop.trf.xlu0
        %v481 = vpop.trf.xlu0
        %v482 = vpop.trf.xlu0
        %v483 = vpop.trf.xlu0
        %v484 = vpop.trf.xlu0
        %v485 = vpack.c.bf16 %v469, %v469
        %v486 = vpack.c.bf16 %v470, %v470
        %vm487 = vsmask.f32 1280
        %vm488 = vsmask.f32 5392
        %vm489 = vmor %vm487, %vm488
        %v491 = vshrl.u32 %v485, 16
        %v493 = vrot.slane %v491, 6
        %v494 = vshll.u32 %v485, 16
        %v496 = vrot.slane %v494, 7
        %v497 = vor.u32 %v493, %v496
        %v498 = vrot.slane %v497, 4
        %v500 = vshrl.u32 %v486, 16
        %v502 = vrot.slane %v500, 6
        %v503 = vshll.u32 %v486, 16
        %v505 = vrot.slane %v503, 7
        %v506 = vor.u32 %v502, %v505
        %v507 = vsel %vm489, %v498, %v506
        %v508 = vrot.slane %v506, 4
        %vm512 = vcmask 257025
        %vm513 = vsmask.f32 7942
        %vm514 = vmand %vm512, %vm513
        %v515 = vld [vmem:[#allocation2 + $0x8] sm:$0xe]
        %v516 = vsel %vm514, %v497, %v515
        %517 = vst [vmem:[#allocation2 + $0x8] sm:$0xe] %v516
        %518 = vst.msk [vmem:[#allocation2 + $0xc] sm:$0xf] %vm224, %v507
        %vm519 = vcmask 254976
        %vm520 = vmand %vm519, %vm487
        %v521 = vld [vmem:[#allocation2 + $0x10] sm:$0x3]
        %v522 = vsel %vm520, %v508, %v521
        %523 = vst [vmem:[#allocation2 + $0x10] sm:$0x3] %v522
        %v524 = vld [vmem:[%s222 + $0x1] sm:$0x1]
        %v525 = vld [vmem:[%s222 + $0x11] sm:$0x1]
        %v526 = vld [vmem:[%s222 + $0x21] sm:$0x1]
        %v527 = vld [vmem:[%s222 + $0x31] sm:$0x1]
        %v528 = vld [vmem:[%s222 + $0x41] sm:$0x1]
        %v529 = vld [vmem:[%s222 + $0x51] sm:$0x1]
        %v530 = vld [vmem:[%s222 + $0x61] sm:$0x1]
        %v531 = vld [vmem:[%s222 + $0x71] sm:$0x1]
        %v532 = vld [vmem:[%s222 + $0x81] sm:$0x1]
        %v533 = vld [vmem:[%s222 + $0x91] sm:$0x1]
        %v534 = vld [vmem:[%s222 + $0xa1] sm:$0x1]
        %v535 = vld [vmem:[%s222 + $0xb1] sm:$0x1]
        %v536 = vld [vmem:[%s222 + $0xc1] sm:$0x1]
        %v537 = vld [vmem:[%s222 + $0xd1] sm:$0x1]
        %v538 = vld [vmem:[%s222 + $0xe1] sm:$0x1]
        %v539 = vld [vmem:[%s222 + $0xf1] sm:$0x1]
        %v540 = vld [vmem:[%s222 + $0x101] sm:$0x1]
        %v541 = vld [vmem:[%s222 + $0x111] sm:$0x1]
        %v542 = vld [vmem:[%s222 + $0x121] sm:$0x1]
        %v543 = vld [vmem:[%s222 + $0x131] sm:$0x1]
        %v544 = vld [vmem:[%s222 + $0x141] sm:$0x1]
        %v545 = vld [vmem:[%s222 + $0x151] sm:$0x1]
        %v546 = vld [vmem:[%s222 + $0x161] sm:$0x1]
        %v547 = vld [vmem:[%s222 + $0x171] sm:$0x1]
        %v548 = vld [vmem:[%s222 + $0x181] sm:$0x1]
        %v549 = vld [vmem:[%s222 + $0x191] sm:$0x1]
        %v550 = vld [vmem:[%s222 + $0x1a1] sm:$0x1]
        %v551 = vld [vmem:[%s222 + $0x1b1] sm:$0x1]
        %v552 = vld [vmem:[%s222 + $0x1c1] sm:$0x1]
        %v553 = vld [vmem:[%s222 + $0x1d1] sm:$0x1]
        %v554 = vld [vmem:[%s222 + $0x1e1] sm:$0x1]
        %v555 = vld [vmem:[%s222 + $0x1f1] sm:$0x1]
        %v588 = vrot.slane %v525, 7
        %v589 = vsel %vm387, %v588, %v524
        %v590 = vrot.slane %v526, 6
        %v591 = vsel %vm390, %v590, %v589
        %v592 = vrot.slane %v527, 5
        %v593 = vsel %vm393, %v592, %v591
        %v594 = vrot.slane %v528, 4
        %v595 = vsel %vm396, %v594, %v593
        %v596 = vrot.slane %v529, 3
        %v597 = vsel %vm399, %v596, %v595
        %v598 = vrot.slane %v530, 2
        %v599 = vsel %vm402, %v598, %v597
        %v600 = vrot.slane %v531, 1
        %v601 = vsel %vm405, %v600, %v599
        %v602 = vrot.slane %v533, 7
        %v603 = vsel %vm387, %v602, %v532
        %v604 = vrot.slane %v534, 6
        %v605 = vsel %vm390, %v604, %v603
        %v606 = vrot.slane %v535, 5
        %v607 = vsel %vm393, %v606, %v605
        %v608 = vrot.slane %v536, 4
        %v609 = vsel %vm396, %v608, %v607
        %v610 = vrot.slane %v537, 3
        %v611 = vsel %vm399, %v610, %v609
        %v612 = vrot.slane %v538, 2
        %v613 = vsel %vm402, %v612, %v611
        %v614 = vrot.slane %v539, 1
        %v615 = vsel %vm405, %v614, %v613
        %v616 = vrot.slane %v541, 7
        %v617 = vsel %vm387, %v616, %v540
        %v618 = vrot.slane %v542, 6
        %v619 = vsel %vm390, %v618, %v617
        %v620 = vrot.slane %v543, 5
        %v621 = vsel %vm393, %v620, %v619
        %v622 = vrot.slane %v544, 4
        %v623 = vsel %vm396, %v622, %v621
        %v624 = vrot.slane %v545, 3
        %v625 = vsel %vm399, %v624, %v623
        %v626 = vrot.slane %v546, 2
        %v627 = vsel %vm402, %v626, %v625
        %v628 = vrot.slane %v547, 1
        %v629 = vsel %vm405, %v628, %v627
        %v630 = vrot.slane %v549, 7
        %v631 = vsel %vm387, %v630, %v548
        %v632 = vrot.slane %v550, 6
        %v633 = vsel %vm390, %v632, %v631
        %v634 = vrot.slane %v551, 5
        %v635 = vsel %vm393, %v634, %v633
        %v636 = vrot.slane %v552, 4
        %v637 = vsel %vm396, %v636, %v635
        %v638 = vrot.slane %v553, 3
        %v639 = vsel %vm399, %v638, %v637
        %v640 = vrot.slane %v554, 2
        %v641 = vsel %vm402, %v640, %v639
        %v642 = vrot.slane %v555, 1
        %v643 = vsel %vm405, %v642, %v641
        %648 = vxpose.xlu0.b32.start [1/16] %v601, 128
        %649 = vxpose.xlu0.b32.cont [2/16] %v615, 128
        %650 = vxpose.xlu0.b32.cont [3/16] %v629, 128
        %651 = vxpose.xlu0.b32.cont [4/16] %v643, 128
        %652 = vxpose.xlu0.b32.cont [5/16] 0.0, 128
        %653 = vxpose.xlu0.b32.cont [6/16] 0.0, 128
        %654 = vxpose.xlu0.b32.cont [7/16] 0.0, 128
        %655 = vxpose.xlu0.b32.cont [8/16] 0.0, 128
        %656 = vxpose.xlu0.b32.cont [9/16] 0.0, 128
        %657 = vxpose.xlu0.b32.cont [10/16] 0.0, 128
        %658 = vxpose.xlu0.b32.cont [11/16] 0.0, 128
        %659 = vxpose.xlu0.b32.cont [12/16] 0.0, 128
        %660 = vxpose.xlu0.b32.cont [13/16] 0.0, 128
        %661 = vxpose.xlu0.b32.cont [14/16] 0.0, 128
        %662 = vxpose.xlu0.b32.cont [15/16] 0.0, 128
        %663 = vxpose.xlu0.b32.end [16/16] 0.0, 128
        %v664 = vpop.trf.xlu0
        %v665 = vpop.trf.xlu0
        %v666 = vpop.trf.xlu0
        %v667 = vpop.trf.xlu0
        %v668 = vpop.trf.xlu0
        %v669 = vpop.trf.xlu0
        %v670 = vpop.trf.xlu0
        %v671 = vpop.trf.xlu0
        %v672 = vpop.trf.xlu0
        %v673 = vpop.trf.xlu0
        %v674 = vpop.trf.xlu0
        %v675 = vpop.trf.xlu0
        %v676 = vpop.trf.xlu0
        %v677 = vpop.trf.xlu0
        %v678 = vpop.trf.xlu0
        %v679 = vpop.trf.xlu0
        %v680 = vpack.c.bf16 %v664, %v664
        %v681 = vpack.c.bf16 %v665, %v665
        %vm682 = vsmask.f32 2304
        %vm683 = vsmask.f32 6416
        %vm684 = vmor %vm682, %vm683
        %v686 = vshrl.u32 %v680, 16
        %v688 = vrot.slane %v686, 5
        %v689 = vshll.u32 %v680, 16
        %v691 = vrot.slane %v689, 6
        %v692 = vor.u32 %v688, %v691
        %v693 = vrot.slane %v692, 4
        %v695 = vshrl.u32 %v681, 16
        %v697 = vrot.slane %v695, 5
        %v698 = vshll.u32 %v681, 16
        %v700 = vrot.slane %v698, 6
        %v701 = vor.u32 %v697, %v700
        %v702 = vsel %vm684, %v693, %v701
        %v703 = vrot.slane %v701, 4
        %vm707 = vcmask 257026
        %vm708 = vsmask.f32 7946
        %vm709 = vmand %vm707, %vm708
        %v710 = vld [vmem:[#allocation2 + $0x10] sm:$0xc]
        %v711 = vsel %vm709, %v692, %v710
        %712 = vst [vmem:[#allocation2 + $0x10] sm:$0xc] %v711
        %713 = vst.msk [vmem:[#allocation2 + $0x14] sm:$0xf] %vm224, %v702
        %vm714 = vcmask 256000
        %vm715 = vmand %vm714, %vm682
        %v716 = vld [vmem:[#allocation2 + $0x18] sm:$0x7]
        %v717 = vsel %vm715, %v703, %v716
        %718 = vst [vmem:[#allocation2 + $0x18] sm:$0x7] %v717
        %v719 = vld [vmem:[%s222 + $0x2] sm:$0x1]
        %v720 = vld [vmem:[%s222 + $0x12] sm:$0x1]
        %v721 = vld [vmem:[%s222 + $0x22] sm:$0x1]
        %v722 = vld [vmem:[%s222 + $0x32] sm:$0x1]
        %v723 = vld [vmem:[%s222 + $0x42] sm:$0x1]
        %v724 = vld [vmem:[%s222 + $0x52] sm:$0x1]
        %v725 = vld [vmem:[%s222 + $0x62] sm:$0x1]
        %v726 = vld [vmem:[%s222 + $0x72] sm:$0x1]
        %v727 = vld [vmem:[%s222 + $0x82] sm:$0x1]
        %v728 = vld [vmem:[%s222 + $0x92] sm:$0x1]
        %v729 = vld [vmem:[%s222 + $0xa2] sm:$0x1]
        %v730 = vld [vmem:[%s222 + $0xb2] sm:$0x1]
        %v731 = vld [vmem:[%s222 + $0xc2] sm:$0x1]
        %v732 = vld [vmem:[%s222 + $0xd2] sm:$0x1]
        %v733 = vld [vmem:[%s222 + $0xe2] sm:$0x1]
        %v734 = vld [vmem:[%s222 + $0xf2] sm:$0x1]
        %v735 = vld [vmem:[%s222 + $0x102] sm:$0x1]
        %v736 = vld [vmem:[%s222 + $0x112] sm:$0x1]
        %v737 = vld [vmem:[%s222 + $0x122] sm:$0x1]
        %v738 = vld [vmem:[%s222 + $0x132] sm:$0x1]
        %v739 = vld [vmem:[%s222 + $0x142] sm:$0x1]
        %v740 = vld [vmem:[%s222 + $0x152] sm:$0x1]
        %v741 = vld [vmem:[%s222 + $0x162] sm:$0x1]
        %v742 = vld [vmem:[%s222 + $0x172] sm:$0x1]
        %v743 = vld [vmem:[%s222 + $0x182] sm:$0x1]
        %v744 = vld [vmem:[%s222 + $0x192] sm:$0x1]
        %v745 = vld [vmem:[%s222 + $0x1a2] sm:$0x1]
        %v746 = vld [vmem:[%s222 + $0x1b2] sm:$0x1]
        %v747 = vld [vmem:[%s222 + $0x1c2] sm:$0x1]
        %v748 = vld [vmem:[%s222 + $0x1d2] sm:$0x1]
        %v749 = vld [vmem:[%s222 + $0x1e2] sm:$0x1]
        %v750 = vld [vmem:[%s222 + $0x1f2] sm:$0x1]
        %v783 = vrot.slane %v720, 7
        %v784 = vsel %vm387, %v783, %v719
        %v785 = vrot.slane %v721, 6
        %v786 = vsel %vm390, %v785, %v784
        %v787 = vrot.slane %v722, 5
        %v788 = vsel %vm393, %v787, %v786
        %v789 = vrot.slane %v723, 4
        %v790 = vsel %vm396, %v789, %v788
        %v791 = vrot.slane %v724, 3
        %v792 = vsel %vm399, %v791, %v790
        %v793 = vrot.slane %v725, 2
        %v794 = vsel %vm402, %v793, %v792
        %v795 = vrot.slane %v726, 1
        %v796 = vsel %vm405, %v795, %v794
        %v797 = vrot.slane %v728, 7
        %v798 = vsel %vm387, %v797, %v727
        %v799 = vrot.slane %v729, 6
        %v800 = vsel %vm390, %v799, %v798
        %v801 = vrot.slane %v730, 5
        %v802 = vsel %vm393, %v801, %v800
        %v803 = vrot.slane %v731, 4
        %v804 = vsel %vm396, %v803, %v802
        %v805 = vrot.slane %v732, 3
        %v806 = vsel %vm399, %v805, %v804
        %v807 = vrot.slane %v733, 2
        %v808 = vsel %vm402, %v807, %v806
        %v809 = vrot.slane %v734, 1
        %v810 = vsel %vm405, %v809, %v808
        %v811 = vrot.slane %v736, 7
        %v812 = vsel %vm387, %v811, %v735
        %v813 = vrot.slane %v737, 6
        %v814 = vsel %vm390, %v813, %v812
        %v815 = vrot.slane %v738, 5
        %v816 = vsel %vm393, %v815, %v814
        %v817 = vrot.slane %v739, 4
        %v818 = vsel %vm396, %v817, %v816
        %v819 = vrot.slane %v740, 3
        %v820 = vsel %vm399, %v819, %v818
        %v821 = vrot.slane %v741, 2
        %v822 = vsel %vm402, %v821, %v820
        %v823 = vrot.slane %v742, 1
        %v824 = vsel %vm405, %v823, %v822
        %v825 = vrot.slane %v744, 7
        %v826 = vsel %vm387, %v825, %v743
        %v827 = vrot.slane %v745, 6
        %v828 = vsel %vm390, %v827, %v826
        %v829 = vrot.slane %v746, 5
        %v830 = vsel %vm393, %v829, %v828
        %v831 = vrot.slane %v747, 4
        %v832 = vsel %vm396, %v831, %v830
        %v833 = vrot.slane %v748, 3
        %v834 = vsel %vm399, %v833, %v832
        %v835 = vrot.slane %v749, 2
        %v836 = vsel %vm402, %v835, %v834
        %v837 = vrot.slane %v750, 1
        %v838 = vsel %vm405, %v837, %v836
        %843 = vxpose.xlu0.b32.start [1/16] %v796, 128
        %844 = vxpose.xlu0.b32.cont [2/16] %v810, 128
        %845 = vxpose.xlu0.b32.cont [3/16] %v824, 128
        %846 = vxpose.xlu0.b32.cont [4/16] %v838, 128
        %847 = vxpose.xlu0.b32.cont [5/16] 0.0, 128
        %848 = vxpose.xlu0.b32.cont [6/16] 0.0, 128
        %849 = vxpose.xlu0.b32.cont [7/16] 0.0, 128
        %850 = vxpose.xlu0.b32.cont [8/16] 0.0, 128
        %851 = vxpose.xlu0.b32.cont [9/16] 0.0, 128
        %852 = vxpose.xlu0.b32.cont [10/16] 0.0, 128
        %853 = vxpose.xlu0.b32.cont [11/16] 0.0, 128
        %854 = vxpose.xlu0.b32.cont [12/16] 0.0, 128
        %855 = vxpose.xlu0.b32.cont [13/16] 0.0, 128
        %856 = vxpose.xlu0.b32.cont [14/16] 0.0, 128
        %857 = vxpose.xlu0.b32.cont [15/16] 0.0, 128
        %858 = vxpose.xlu0.b32.end [16/16] 0.0, 128
        %v859 = vpop.trf.xlu0
        %v860 = vpop.trf.xlu0
        %v861 = vpop.trf.xlu0
        %v862 = vpop.trf.xlu0
        %v863 = vpop.trf.xlu0
        %v864 = vpop.trf.xlu0
        %v865 = vpop.trf.xlu0
        %v866 = vpop.trf.xlu0
        %v867 = vpop.trf.xlu0
        %v868 = vpop.trf.xlu0
        %v869 = vpop.trf.xlu0
        %v870 = vpop.trf.xlu0
        %v871 = vpop.trf.xlu0
        %v872 = vpop.trf.xlu0
        %v873 = vpop.trf.xlu0
        %v874 = vpop.trf.xlu0
        %v875 = vpack.c.bf16 %v859, %v859
        %v876 = vpack.c.bf16 %v860, %v860
        %vm877 = vsmask.f32 3328
        %vm878 = vsmask.f32 7440
        %vm879 = vmor %vm877, %vm878
        %v881 = vshll.u32 %v875, 16
        %v883 = vrot.slane %v881, 5
        %v884 = vshrl.u32 %v875, 16
        %v886 = vrot.slane %v884, 4
        %v887 = vor.u32 %v886, %v883
        %v888 = vrot.slane %v887, 4
        %v890 = vshll.u32 %v876, 16
        %v892 = vrot.slane %v890, 5
        %v893 = vsel %vm879, %v888, %v892
        %v894 = vshrl.u32 %v876, 16
        %v896 = vrot.slane %v894, 4
        %v897 = vor.u32 %v896, %v892
        %v898 = vrot.slane %v897, 4
        %vm902 = vcmask 257027
        %vm903 = vsmask.f32 7950
        %vm904 = vmand %vm902, %vm903
        %v905 = vld [vmem:[#allocation2 + $0x18] sm:$0x8]
        %v906 = vsel %vm904, %v883, %v905
        %907 = vst [vmem:[#allocation2 + $0x18] sm:$0x8] %v906
        %908 = vst.msk [vmem:[#allocation2 + $0x1c] sm:$0xf] %vm224, %v893
        %vm909 = vcmask 257024
        %vm910 = vmand %vm909, %vm877
        %v911 = vld [vmem:[#allocation2 + $0x20] sm:$0xf]
        %v912 = vsel %vm910, %v898, %v911
        %913 = vst [vmem:[#allocation2 + $0x20] sm:$0xf] %v912
        %v914 = vld [vmem:[%s222 + $0x3] sm:$0x1]
        %v915 = vld [vmem:[%s222 + $0x13] sm:$0x1]
        %v916 = vld [vmem:[%s222 + $0x23] sm:$0x1]
        %v917 = vld [vmem:[%s222 + $0x33] sm:$0x1]
        %v918 = vld [vmem:[%s222 + $0x43] sm:$0x1]
        %v919 = vld [vmem:[%s222 + $0x53] sm:$0x1]
        %v920 = vld [vmem:[%s222 + $0x63] sm:$0x1]
        %v921 = vld [vmem:[%s222 + $0x73] sm:$0x1]
        %v922 = vld [vmem:[%s222 + $0x83] sm:$0x1]
        %v923 = vld [vmem:[%s222 + $0x93] sm:$0x1]
        %v924 = vld [vmem:[%s222 + $0xa3] sm:$0x1]
        %v925 = vld [vmem:[%s222 + $0xb3] sm:$0x1]
        %v926 = vld [vmem:[%s222 + $0xc3] sm:$0x1]
        %v927 = vld [vmem:[%s222 + $0xd3] sm:$0x1]
        %v928 = vld [vmem:[%s222 + $0xe3] sm:$0x1]
        %v929 = vld [vmem:[%s222 + $0xf3] sm:$0x1]
        %v930 = vld [vmem:[%s222 + $0x103] sm:$0x1]
        %v931 = vld [vmem:[%s222 + $0x113] sm:$0x1]
        %v932 = vld [vmem:[%s222 + $0x123] sm:$0x1]
        %v933 = vld [vmem:[%s222 + $0x133] sm:$0x1]
        %v934 = vld [vmem:[%s222 + $0x143] sm:$0x1]
        %v935 = vld [vmem:[%s222 + $0x153] sm:$0x1]
        %v936 = vld [vmem:[%s222 + $0x163] sm:$0x1]
        %v937 = vld [vmem:[%s222 + $0x173] sm:$0x1]
        %v938 = vld [vmem:[%s222 + $0x183] sm:$0x1]
        %v939 = vld [vmem:[%s222 + $0x193] sm:$0x1]
        %v940 = vld [vmem:[%s222 + $0x1a3] sm:$0x1]
        %v941 = vld [vmem:[%s222 + $0x1b3] sm:$0x1]
        %v942 = vld [vmem:[%s222 + $0x1c3] sm:$0x1]
        %v943 = vld [vmem:[%s222 + $0x1d3] sm:$0x1]
        %v944 = vld [vmem:[%s222 + $0x1e3] sm:$0x1]
        %v945 = vld [vmem:[%s222 + $0x1f3] sm:$0x1]
        %v978 = vrot.slane %v915, 7
        %v979 = vsel %vm387, %v978, %v914
        %v980 = vrot.slane %v916, 6
        %v981 = vsel %vm390, %v980, %v979
        %v982 = vrot.slane %v917, 5
        %v983 = vsel %vm393, %v982, %v981
        %v984 = vrot.slane %v918, 4
        %v985 = vsel %vm396, %v984, %v983
        %v986 = vrot.slane %v919, 3
        %v987 = vsel %vm399, %v986, %v985
        %v988 = vrot.slane %v920, 2
        %v989 = vsel %vm402, %v988, %v987
        %v990 = vrot.slane %v921, 1
        %v991 = vsel %vm405, %v990, %v989
        %v992 = vrot.slane %v923, 7
        %v993 = vsel %vm387, %v992, %v922
        %v994 = vrot.slane %v924, 6
        %v995 = vsel %vm390, %v994, %v993
        %v996 = vrot.slane %v925, 5
        %v997 = vsel %vm393, %v996, %v995
        %v998 = vrot.slane %v926, 4
        %v999 = vsel %vm396, %v998, %v997
        %v1000 = vrot.slane %v927, 3
        %v1001 = vsel %vm399, %v1000, %v999
        %v1002 = vrot.slane %v928, 2
        %v1003 = vsel %vm402, %v1002, %v1001
        %v1004 = vrot.slane %v929, 1
        %v1005 = vsel %vm405, %v1004, %v1003
        %v1006 = vrot.slane %v931, 7
        %v1007 = vsel %vm387, %v1006, %v930
        %v1008 = vrot.slane %v932, 6
        %v1009 = vsel %vm390, %v1008, %v1007
        %v1010 = vrot.slane %v933, 5
        %v1011 = vsel %vm393, %v1010, %v1009
        %v1012 = vrot.slane %v934, 4
        %v1013 = vsel %vm396, %v1012, %v1011
        %v1014 = vrot.slane %v935, 3
        %v1015 = vsel %vm399, %v1014, %v1013
        %v1016 = vrot.slane %v936, 2
        %v1017 = vsel %vm402, %v1016, %v1015
        %v1018 = vrot.slane %v937, 1
        %v1019 = vsel %vm405, %v1018, %v1017
        %v1020 = vrot.slane %v939, 7
        %v1021 = vsel %vm387, %v1020, %v938
        %v1022 = vrot.slane %v940, 6
        %v1023 = vsel %vm390, %v1022, %v1021
        %v1024 = vrot.slane %v941, 5
        %v1025 = vsel %vm393, %v1024, %v1023
        %v1026 = vrot.slane %v942, 4
        %v1027 = vsel %vm396, %v1026, %v1025
        %v1028 = vrot.slane %v943, 3
        %v1029 = vsel %vm399, %v1028, %v1027
        %v1030 = vrot.slane %v944, 2
        %v1031 = vsel %vm402, %v1030, %v1029
        %v1032 = vrot.slane %v945, 1
        %v1033 = vsel %vm405, %v1032, %v1031
        %1038 = vxpose.xlu0.b32.start [1/16] %v991, 128
        %1039 = vxpose.xlu0.b32.cont [2/16] %v1005, 128
        %1040 = vxpose.xlu0.b32.cont [3/16] %v1019, 128
        %1041 = vxpose.xlu0.b32.cont [4/16] %v1033, 128
        %1042 = vxpose.xlu0.b32.cont [5/16] 0.0, 128
        %1043 = vxpose.xlu0.b32.cont [6/16] 0.0, 128
        %1044 = vxpose.xlu0.b32.cont [7/16] 0.0, 128
        %1045 = vxpose.xlu0.b32.cont [8/16] 0.0, 128
        %1046 = vxpose.xlu0.b32.cont [9/16] 0.0, 128
        %1047 = vxpose.xlu0.b32.cont [10/16] 0.0, 128
        %1048 = vxpose.xlu0.b32.cont [11/16] 0.0, 128
        %1049 = vxpose.xlu0.b32.cont [12/16] 0.0, 128
        %1050 = vxpose.xlu0.b32.cont [13/16] 0.0, 128
        %1051 = vxpose.xlu0.b32.cont [14/16] 0.0, 128
        %1052 = vxpose.xlu0.b32.cont [15/16] 0.0, 128
        %1053 = vxpose.xlu0.b32.end [16/16] 0.0, 128
        %v1054 = vpop.trf.xlu0
        %v1055 = vpop.trf.xlu0
        %v1056 = vpop.trf.xlu0
        %v1057 = vpop.trf.xlu0
        %v1058 = vpop.trf.xlu0
        %v1059 = vpop.trf.xlu0
        %v1060 = vpop.trf.xlu0
        %v1061 = vpop.trf.xlu0
        %v1062 = vpop.trf.xlu0
        %v1063 = vpop.trf.xlu0
        %v1064 = vpop.trf.xlu0
        %v1065 = vpop.trf.xlu0
        %v1066 = vpop.trf.xlu0
        %v1067 = vpop.trf.xlu0
        %v1068 = vpop.trf.xlu0
        %v1069 = vpop.trf.xlu0
        %v1070 = vpack.c.bf16 %v1054, %v1054
        %v1071 = vpack.c.bf16 %v1055, %v1055
        %vm1072 = vsmask.f32 256
        %vm1073 = vsmask.f32 4368
        %vm1074 = vmor %vm1072, %vm1073
        %v1076 = vshrl.u32 %v1070, 16
        %v1078 = vrot.slane %v1076, 7
        %v1079 = vshll.u32 %v1070, 16
        %v1081 = vor.u32 %v1078, %v1079
        %v1082 = vrot.slane %v1078, 4
        %v1084 = vshrl.u32 %v1071, 16
        %v1086 = vrot.slane %v1084, 7
        %v1087 = vshll.u32 %v1071, 16
        %v1089 = vor.u32 %v1086, %v1087
        %v1090 = vsel %vm1074, %v1082, %v1089
        %v1091 = vrot.slane %v1086, 4
        %vm1095 = vsmask.f32 7938
        %vm1096 = vmand %vm909, %vm1095
        %v1097 = vld [vmem:[#allocation2 + $0x24] sm:$0xf]
        %v1098 = vsel %vm1096, %v1081, %v1097
        %1099 = vst [vmem:[#allocation2 + $0x24] sm:$0xf] %v1098
        %1100 = vst.msk [vmem:[#allocation2 + $0x28] sm:$0xf] %vm224, %v1090
        %vm1101 = vcmask 253952
        %vm1102 = vmand %vm1101, %vm1072
        %v1103 = vld [vmem:[#allocation2 + $0x2c] sm:$0x1]
        %v1104 = vsel %vm1102, %v1091, %v1103
        %1105 = vst [vmem:[#allocation2 + $0x2c] sm:$0x1] %v1104
        %v1106 = vld [vmem:[%s222 + $0x4] sm:$0x1]
        %v1107 = vld [vmem:[%s222 + $0x14] sm:$0x1]
        %v1108 = vld [vmem:[%s222 + $0x24] sm:$0x1]
        %v1109 = vld [vmem:[%s222 + $0x34] sm:$0x1]
        %v1110 = vld [vmem:[%s222 + $0x44] sm:$0x1]
        %v1111 = vld [vmem:[%s222 + $0x54] sm:$0x1]
        %v1112 = vld [vmem:[%s222 + $0x64] sm:$0x1]
        %v1113 = vld [vmem:[%s222 + $0x74] sm:$0x1]
        %v1114 = vld [vmem:[%s222 + $0x84] sm:$0x1]
        %v1115 = vld [vmem:[%s222 + $0x94] sm:$0x1]
        %v1116 = vld [vmem:[%s222 + $0xa4] sm:$0x1]
        %v1117 = vld [vmem:[%s222 + $0xb4] sm:$0x1]
        %v1118 = vld [vmem:[%s222 + $0xc4] sm:$0x1]
        %v1119 = vld [vmem:[%s222 + $0xd4] sm:$0x1]
        %v1120 = vld [vmem:[%s222 + $0xe4] sm:$0x1]
        %v1121 = vld [vmem:[%s222 + $0xf4] sm:$0x1]
        %v1122 = vld [vmem:[%s222 + $0x104] sm:$0x1]
        %v1123 = vld [vmem:[%s222 + $0x114] sm:$0x1]
        %v1124 = vld [vmem:[%s222 + $0x124] sm:$0x1]
        %v1125 = vld [vmem:[%s222 + $0x134] sm:$0x1]
        %v1126 = vld [vmem:[%s222 + $0x144] sm:$0x1]
        %v1127 = vld [vmem:[%s222 + $0x154] sm:$0x1]
        %v1128 = vld [vmem:[%s222 + $0x164] sm:$0x1]
        %v1129 = vld [vmem:[%s222 + $0x174] sm:$0x1]
        %v1130 = vld [vmem:[%s222 + $0x184] sm:$0x1]
        %v1131 = vld [vmem:[%s222 + $0x194] sm:$0x1]
        %v1132 = vld [vmem:[%s222 + $0x1a4] sm:$0x1]
        %v1133 = vld [vmem:[%s222 + $0x1b4] sm:$0x1]
        %v1134 = vld [vmem:[%s222 + $0x1c4] sm:$0x1]
        %v1135 = vld [vmem:[%s222 + $0x1d4] sm:$0x1]
        %v1136 = vld [vmem:[%s222 + $0x1e4] sm:$0x1]
        %v1137 = vld [vmem:[%s222 + $0x1f4] sm:$0x1]
        %v1170 = vrot.slane %v1107, 7
        %v1171 = vsel %vm387, %v1170, %v1106
        %v1172 = vrot.slane %v1108, 6
        %v1173 = vsel %vm390, %v1172, %v1171
        %v1174 = vrot.slane %v1109, 5
        %v1175 = vsel %vm393, %v1174, %v1173
        %v1176 = vrot.slane %v1110, 4
        %v1177 = vsel %vm396, %v1176, %v1175
        %v1178 = vrot.slane %v1111, 3
        %v1179 = vsel %vm399, %v1178, %v1177
        %v1180 = vrot.slane %v1112, 2
        %v1181 = vsel %vm402, %v1180, %v1179
        %v1182 = vrot.slane %v1113, 1
        %v1183 = vsel %vm405, %v1182, %v1181
        %v1184 = vrot.slane %v1115, 7
        %v1185 = vsel %vm387, %v1184, %v1114
        %v1186 = vrot.slane %v1116, 6
        %v1187 = vsel %vm390, %v1186, %v1185
        %v1188 = vrot.slane %v1117, 5
        %v1189 = vsel %vm393, %v1188, %v1187
        %v1190 = vrot.slane %v1118, 4
        %v1191 = vsel %vm396, %v1190, %v1189
        %v1192 = vrot.slane %v1119, 3
        %v1193 = vsel %vm399, %v1192, %v1191
        %v1194 = vrot.slane %v1120, 2
        %v1195 = vsel %vm402, %v1194, %v1193
        %v1196 = vrot.slane %v1121, 1
        %v1197 = vsel %vm405, %v1196, %v1195
        %v1198 = vrot.slane %v1123, 7
        %v1199 = vsel %vm387, %v1198, %v1122
        %v1200 = vrot.slane %v1124, 6
        %v1201 = vsel %vm390, %v1200, %v1199
        %v1202 = vrot.slane %v1125, 5
        %v1203 = vsel %vm393, %v1202, %v1201
        %v1204 = vrot.slane %v1126, 4
        %v1205 = vsel %vm396, %v1204, %v1203
        %v1206 = vrot.slane %v1127, 3
        %v1207 = vsel %vm399, %v1206, %v1205
        %v1208 = vrot.slane %v1128, 2
        %v1209 = vsel %vm402, %v1208, %v1207
        %v1210 = vrot.slane %v1129, 1
        %v1211 = vsel %vm405, %v1210, %v1209
        %v1212 = vrot.slane %v1131, 7
        %v1213 = vsel %vm387, %v1212, %v1130
        %v1214 = vrot.slane %v1132, 6
        %v1215 = vsel %vm390, %v1214, %v1213
        %v1216 = vrot.slane %v1133, 5
        %v1217 = vsel %vm393, %v1216, %v1215
        %v1218 = vrot.slane %v1134, 4
        %v1219 = vsel %vm396, %v1218, %v1217
        %v1220 = vrot.slane %v1135, 3
        %v1221 = vsel %vm399, %v1220, %v1219
        %v1222 = vrot.slane %v1136, 2
        %v1223 = vsel %vm402, %v1222, %v1221
        %v1224 = vrot.slane %v1137, 1
        %v1225 = vsel %vm405, %v1224, %v1223
        %1230 = vxpose.xlu0.b32.start [1/16] %v1183, 128
        %1231 = vxpose.xlu0.b32.cont [2/16] %v1197, 128
        %1232 = vxpose.xlu0.b32.cont [3/16] %v1211, 128
        %1233 = vxpose.xlu0.b32.cont [4/16] %v1225, 128
        %1234 = vxpose.xlu0.b32.cont [5/16] 0.0, 128
        %1235 = vxpose.xlu0.b32.cont [6/16] 0.0, 128
        %1236 = vxpose.xlu0.b32.cont [7/16] 0.0, 128
        %1237 = vxpose.xlu0.b32.cont [8/16] 0.0, 128
        %1238 = vxpose.xlu0.b32.cont [9/16] 0.0, 128
        %1239 = vxpose.xlu0.b32.cont [10/16] 0.0, 128
        %1240 = vxpose.xlu0.b32.cont [11/16] 0.0, 128
        %1241 = vxpose.xlu0.b32.cont [12/16] 0.0, 128
        %1242 = vxpose.xlu0.b32.cont [13/16] 0.0, 128
        %1243 = vxpose.xlu0.b32.cont [14/16] 0.0, 128
        %1244 = vxpose.xlu0.b32.cont [15/16] 0.0, 128
        %1245 = vxpose.xlu0.b32.end [16/16] 0.0, 128
        %v1246 = vpop.trf.xlu0
        %v1247 = vpop.trf.xlu0
        %v1248 = vpop.trf.xlu0
        %v1249 = vpop.trf.xlu0
        %v1250 = vpop.trf.xlu0
        %v1251 = vpop.trf.xlu0
        %v1252 = vpop.trf.xlu0
        %v1253 = vpop.trf.xlu0
        %v1254 = vpop.trf.xlu0
        %v1255 = vpop.trf.xlu0
        %v1256 = vpop.trf.xlu0
        %v1257 = vpop.trf.xlu0
        %v1258 = vpop.trf.xlu0
        %v1259 = vpop.trf.xlu0
        %v1260 = vpop.trf.xlu0
        %v1261 = vpop.trf.xlu0
        %v1262 = vpack.c.bf16 %v1246, %v1246
        %v1263 = vpack.c.bf16 %v1247, %v1247
        %v1265 = vshrl.u32 %v1262, 16
        %v1267 = vrot.slane %v1265, 6
        %v1268 = vshll.u32 %v1262, 16
        %v1270 = vrot.slane %v1268, 7
        %v1271 = vor.u32 %v1267, %v1270
        %v1272 = vrot.slane %v1271, 4
        %v1274 = vshrl.u32 %v1263, 16
        %v1276 = vrot.slane %v1274, 6
        %v1277 = vshll.u32 %v1263, 16
        %v1279 = vrot.slane %v1277, 7
        %v1280 = vor.u32 %v1276, %v1279
        %v1281 = vsel %vm489, %v1272, %v1280
        %v1282 = vrot.slane %v1280, 4
        %v1286 = vld [vmem:[#allocation2 + $0x2c] sm:$0xe]
        %v1287 = vsel %vm514, %v1271, %v1286
        %1288 = vst [vmem:[#allocation2 + $0x2c] sm:$0xe] %v1287
        %1289 = vst.msk [vmem:[#allocation2 + $0x30] sm:$0xf] %vm224, %v1281
        %v1290 = vld [vmem:[#allocation2 + $0x34] sm:$0x3]
        %v1291 = vsel %vm520, %v1282, %v1290
        %1292 = vst [vmem:[#allocation2 + $0x34] sm:$0x3] %v1291
        %v1293 = vld [vmem:[%s222 + $0x5] sm:$0x1]
        %v1294 = vld [vmem:[%s222 + $0x15] sm:$0x1]
        %v1295 = vld [vmem:[%s222 + $0x25] sm:$0x1]
        %v1296 = vld [vmem:[%s222 + $0x35] sm:$0x1]
        %v1297 = vld [vmem:[%s222 + $0x45] sm:$0x1]
        %v1298 = vld [vmem:[%s222 + $0x55] sm:$0x1]
        %v1299 = vld [vmem:[%s222 + $0x65] sm:$0x1]
        %v1300 = vld [vmem:[%s222 + $0x75] sm:$0x1]
        %v1301 = vld [vmem:[%s222 + $0x85] sm:$0x1]
        %v1302 = vld [vmem:[%s222 + $0x95] sm:$0x1]
        %v1303 = vld [vmem:[%s222 + $0xa5] sm:$0x1]
        %v1304 = vld [vmem:[%s222 + $0xb5] sm:$0x1]
        %v1305 = vld [vmem:[%s222 + $0xc5] sm:$0x1]
        %v1306 = vld [vmem:[%s222 + $0xd5] sm:$0x1]
        %v1307 = vld [vmem:[%s222 + $0xe5] sm:$0x1]
        %v1308 = vld [vmem:[%s222 + $0xf5] sm:$0x1]
        %v1309 = vld [vmem:[%s222 + $0x105] sm:$0x1]
        %v1310 = vld [vmem:[%s222 + $0x115] sm:$0x1]
        %v1311 = vld [vmem:[%s222 + $0x125] sm:$0x1]
        %v1312 = vld [vmem:[%s222 + $0x135] sm:$0x1]
        %v1313 = vld [vmem:[%s222 + $0x145] sm:$0x1]
        %v1314 = vld [vmem:[%s222 + $0x155] sm:$0x1]
        %v1315 = vld [vmem:[%s222 + $0x165] sm:$0x1]
        %v1316 = vld [vmem:[%s222 + $0x175] sm:$0x1]
        %v1317 = vld [vmem:[%s222 + $0x185] sm:$0x1]
        %v1318 = vld [vmem:[%s222 + $0x195] sm:$0x1]
        %v1319 = vld [vmem:[%s222 + $0x1a5] sm:$0x1]
        %v1320 = vld [vmem:[%s222 + $0x1b5] sm:$0x1]
        %v1321 = vld [vmem:[%s222 + $0x1c5] sm:$0x1]
        %v1322 = vld [vmem:[%s222 + $0x1d5] sm:$0x1]
        %v1323 = vld [vmem:[%s222 + $0x1e5] sm:$0x1]
        %v1324 = vld [vmem:[%s222 + $0x1f5] sm:$0x1]
        %v1357 = vrot.slane %v1294, 7
        %v1358 = vsel %vm387, %v1357, %v1293
        %v1359 = vrot.slane %v1295, 6
        %v1360 = vsel %vm390, %v1359, %v1358
        %v1361 = vrot.slane %v1296, 5
        %v1362 = vsel %vm393, %v1361, %v1360
        %v1363 = vrot.slane %v1297, 4
        %v1364 = vsel %vm396, %v1363, %v1362
        %v1365 = vrot.slane %v1298, 3
        %v1366 = vsel %vm399, %v1365, %v1364
        %v1367 = vrot.slane %v1299, 2
        %v1368 = vsel %vm402, %v1367, %v1366
        %v1369 = vrot.slane %v1300, 1
        %v1370 = vsel %vm405, %v1369, %v1368
        %v1371 = vrot.slane %v1302, 7
        %v1372 = vsel %vm387, %v1371, %v1301
        %v1373 = vrot.slane %v1303, 6
        %v1374 = vsel %vm390, %v1373, %v1372
        %v1375 = vrot.slane %v1304, 5
        %v1376 = vsel %vm393, %v1375, %v1374
        %v1377 = vrot.slane %v1305, 4
        %v1378 = vsel %vm396, %v1377, %v1376
        %v1379 = vrot.slane %v1306, 3
        %v1380 = vsel %vm399, %v1379, %v1378
        %v1381 = vrot.slane %v1307, 2
        %v1382 = vsel %vm402, %v1381, %v1380
        %v1383 = vrot.slane %v1308, 1
        %v1384 = vsel %vm405, %v1383, %v1382
        %v1385 = vrot.slane %v1310, 7
        %v1386 = vsel %vm387, %v1385, %v1309
        %v1387 = vrot.slane %v1311, 6
        %v1388 = vsel %vm390, %v1387, %v1386
        %v1389 = vrot.slane %v1312, 5
        %v1390 = vsel %vm393, %v1389, %v1388
        %v1391 = vrot.slane %v1313, 4
        %v1392 = vsel %vm396, %v1391, %v1390
        %v1393 = vrot.slane %v1314, 3
        %v1394 = vsel %vm399, %v1393, %v1392
        %v1395 = vrot.slane %v1315, 2
        %v1396 = vsel %vm402, %v1395, %v1394
        %v1397 = vrot.slane %v1316, 1
        %v1398 = vsel %vm405, %v1397, %v1396
        %v1399 = vrot.slane %v1318, 7
        %v1400 = vsel %vm387, %v1399, %v1317
        %v1401 = vrot.slane %v1319, 6
        %v1402 = vsel %vm390, %v1401, %v1400
        %v1403 = vrot.slane %v1320, 5
        %v1404 = vsel %vm393, %v1403, %v1402
        %v1405 = vrot.slane %v1321, 4
        %v1406 = vsel %vm396, %v1405, %v1404
        %v1407 = vrot.slane %v1322, 3
        %v1408 = vsel %vm399, %v1407, %v1406
        %v1409 = vrot.slane %v1323, 2
        %v1410 = vsel %vm402, %v1409, %v1408
        %v1411 = vrot.slane %v1324, 1
        %v1412 = vsel %vm405, %v1411, %v1410
        %1417 = vxpose.xlu0.b32.start [1/16] %v1370, 128
        %1418 = vxpose.xlu0.b32.cont [2/16] %v1384, 128
        %1419 = vxpose.xlu0.b32.cont [3/16] %v1398, 128
        %1420 = vxpose.xlu0.b32.cont [4/16] %v1412, 128
        %1421 = vxpose.xlu0.b32.cont [5/16] 0.0, 128
        %1422 = vxpose.xlu0.b32.cont [6/16] 0.0, 128
        %1423 = vxpose.xlu0.b32.cont [7/16] 0.0, 128
        %1424 = vxpose.xlu0.b32.cont [8/16] 0.0, 128
        %1425 = vxpose.xlu0.b32.cont [9/16] 0.0, 128
        %1426 = vxpose.xlu0.b32.cont [10/16] 0.0, 128
        %1427 = vxpose.xlu0.b32.cont [11/16] 0.0, 128
        %1428 = vxpose.xlu0.b32.cont [12/16] 0.0, 128
        %1429 = vxpose.xlu0.b32.cont [13/16] 0.0, 128
        %1430 = vxpose.xlu0.b32.cont [14/16] 0.0, 128
        %1431 = vxpose.xlu0.b32.cont [15/16] 0.0, 128
        %1432 = vxpose.xlu0.b32.end [16/16] 0.0, 128
        %v1433 = vpop.trf.xlu0
        %v1434 = vpop.trf.xlu0
        %v1435 = vpop.trf.xlu0
        %v1436 = vpop.trf.xlu0
        %v1437 = vpop.trf.xlu0
        %v1438 = vpop.trf.xlu0
        %v1439 = vpop.trf.xlu0
        %v1440 = vpop.trf.xlu0
        %v1441 = vpop.trf.xlu0
        %v1442 = vpop.trf.xlu0
        %v1443 = vpop.trf.xlu0
        %v1444 = vpop.trf.xlu0
        %v1445 = vpop.trf.xlu0
        %v1446 = vpop.trf.xlu0
        %v1447 = vpop.trf.xlu0
        %v1448 = vpop.trf.xlu0
        %v1449 = vpack.c.bf16 %v1433, %v1433
        %v1450 = vpack.c.bf16 %v1434, %v1434
        %v1452 = vshrl.u32 %v1449, 16
        %v1454 = vrot.slane %v1452, 5
        %v1455 = vshll.u32 %v1449, 16
        %v1457 = vrot.slane %v1455, 6
        %v1458 = vor.u32 %v1454, %v1457
        %v1459 = vrot.slane %v1458, 4
        %v1461 = vshrl.u32 %v1450, 16
        %v1463 = vrot.slane %v1461, 5
        %v1464 = vshll.u32 %v1450, 16
        %v1466 = vrot.slane %v1464, 6
        %v1467 = vor.u32 %v1463, %v1466
        %v1468 = vsel %vm684, %v1459, %v1467
        %v1469 = vrot.slane %v1467, 4
        %v1473 = vld [vmem:[#allocation2 + $0x34] sm:$0xc]
        %v1474 = vsel %vm709, %v1458, %v1473
        %1475 = vst [vmem:[#allocation2 + $0x34] sm:$0xc] %v1474
        %1476 = vst.msk [vmem:[#allocation2 + $0x38] sm:$0xf] %vm224, %v1468
        %v1477 = vld [vmem:[#allocation2 + $0x3c] sm:$0x7]
        %v1478 = vsel %vm715, %v1469, %v1477
        %1479 = vst [vmem:[#allocation2 + $0x3c] sm:$0x7] %v1478
        %v1480 = vld [vmem:[%s222 + $0x6] sm:$0x1]
        %v1481 = vld [vmem:[%s222 + $0x16] sm:$0x1]
        %v1482 = vld [vmem:[%s222 + $0x26] sm:$0x1]
        %v1483 = vld [vmem:[%s222 + $0x36] sm:$0x1]
        %v1484 = vld [vmem:[%s222 + $0x46] sm:$0x1]
        %v1485 = vld [vmem:[%s222 + $0x56] sm:$0x1]
        %v1486 = vld [vmem:[%s222 + $0x66] sm:$0x1]
        %v1487 = vld [vmem:[%s222 + $0x76] sm:$0x1]
        %v1488 = vld [vmem:[%s222 + $0x86] sm:$0x1]
        %v1489 = vld [vmem:[%s222 + $0x96] sm:$0x1]
        %v1490 = vld [vmem:[%s222 + $0xa6] sm:$0x1]
        %v1491 = vld [vmem:[%s222 + $0xb6] sm:$0x1]
        %v1492 = vld [vmem:[%s222 + $0xc6] sm:$0x1]
        %v1493 = vld [vmem:[%s222 + $0xd6] sm:$0x1]
        %v1494 = vld [vmem:[%s222 + $0xe6] sm:$0x1]
        %v1495 = vld [vmem:[%s222 + $0xf6] sm:$0x1]
        %v1496 = vld [vmem:[%s222 + $0x106] sm:$0x1]
        %v1497 = vld [vmem:[%s222 + $0x116] sm:$0x1]
        %v1498 = vld [vmem:[%s222 + $0x126] sm:$0x1]
        %v1499 = vld [vmem:[%s222 + $0x136] sm:$0x1]
        %v1500 = vld [vmem:[%s222 + $0x146] sm:$0x1]
        %v1501 = vld [vmem:[%s222 + $0x156] sm:$0x1]
        %v1502 = vld [vmem:[%s222 + $0x166] sm:$0x1]
        %v1503 = vld [vmem:[%s222 + $0x176] sm:$0x1]
        %v1504 = vld [vmem:[%s222 + $0x186] sm:$0x1]
        %v1505 = vld [vmem:[%s222 + $0x196] sm:$0x1]
        %v1506 = vld [vmem:[%s222 + $0x1a6] sm:$0x1]
        %v1507 = vld [vmem:[%s222 + $0x1b6] sm:$0x1]
        %v1508 = vld [vmem:[%s222 + $0x1c6] sm:$0x1]
        %v1509 = vld [vmem:[%s222 + $0x1d6] sm:$0x1]
        %v1510 = vld [vmem:[%s222 + $0x1e6] sm:$0x1]
        %v1511 = vld [vmem:[%s222 + $0x1f6] sm:$0x1]
        %v1544 = vrot.slane %v1481, 7
        %v1545 = vsel %vm387, %v1544, %v1480
        %v1546 = vrot.slane %v1482, 6
        %v1547 = vsel %vm390, %v1546, %v1545
        %v1548 = vrot.slane %v1483, 5
        %v1549 = vsel %vm393, %v1548, %v1547
        %v1550 = vrot.slane %v1484, 4
        %v1551 = vsel %vm396, %v1550, %v1549
        %v1552 = vrot.slane %v1485, 3
        %v1553 = vsel %vm399, %v1552, %v1551
        %v1554 = vrot.slane %v1486, 2
        %v1555 = vsel %vm402, %v1554, %v1553
        %v1556 = vrot.slane %v1487, 1
        %v1557 = vsel %vm405, %v1556, %v1555
        %v1558 = vrot.slane %v1489, 7
        %v1559 = vsel %vm387, %v1558, %v1488
        %v1560 = vrot.slane %v1490, 6
        %v1561 = vsel %vm390, %v1560, %v1559
        %v1562 = vrot.slane %v1491, 5
        %v1563 = vsel %vm393, %v1562, %v1561
        %v1564 = vrot.slane %v1492, 4
        %v1565 = vsel %vm396, %v1564, %v1563
        %v1566 = vrot.slane %v1493, 3
        %v1567 = vsel %vm399, %v1566, %v1565
        %v1568 = vrot.slane %v1494, 2
        %v1569 = vsel %vm402, %v1568, %v1567
        %v1570 = vrot.slane %v1495, 1
        %v1571 = vsel %vm405, %v1570, %v1569
        %v1572 = vrot.slane %v1497, 7
        %v1573 = vsel %vm387, %v1572, %v1496
        %v1574 = vrot.slane %v1498, 6
        %v1575 = vsel %vm390, %v1574, %v1573
        %v1576 = vrot.slane %v1499, 5
        %v1577 = vsel %vm393, %v1576, %v1575
        %v1578 = vrot.slane %v1500, 4
        %v1579 = vsel %vm396, %v1578, %v1577
        %v1580 = vrot.slane %v1501, 3
        %v1581 = vsel %vm399, %v1580, %v1579
        %v1582 = vrot.slane %v1502, 2
        %v1583 = vsel %vm402, %v1582, %v1581
        %v1584 = vrot.slane %v1503, 1
        %v1585 = vsel %vm405, %v1584, %v1583
        %v1586 = vrot.slane %v1505, 7
        %v1587 = vsel %vm387, %v1586, %v1504
        %v1588 = vrot.slane %v1506, 6
        %v1589 = vsel %vm390, %v1588, %v1587
        %v1590 = vrot.slane %v1507, 5
        %v1591 = vsel %vm393, %v1590, %v1589
        %v1592 = vrot.slane %v1508, 4
        %v1593 = vsel %vm396, %v1592, %v1591
        %v1594 = vrot.slane %v1509, 3
        %v1595 = vsel %vm399, %v1594, %v1593
        %v1596 = vrot.slane %v1510, 2
        %v1597 = vsel %vm402, %v1596, %v1595
        %v1598 = vrot.slane %v1511, 1
        %v1599 = vsel %vm405, %v1598, %v1597
        %1604 = vxpose.xlu0.b32.start [1/16] %v1557, 128
        %1605 = vxpose.xlu0.b32.cont [2/16] %v1571, 128
        %1606 = vxpose.xlu0.b32.cont [3/16] %v1585, 128
        %1607 = vxpose.xlu0.b32.cont [4/16] %v1599, 128
        %1608 = vxpose.xlu0.b32.cont [5/16] 0.0, 128
        %1609 = vxpose.xlu0.b32.cont [6/16] 0.0, 128
        %1610 = vxpose.xlu0.b32.cont [7/16] 0.0, 128
        %1611 = vxpose.xlu0.b32.cont [8/16] 0.0, 128
        %1612 = vxpose.xlu0.b32.cont [9/16] 0.0, 128
        %1613 = vxpose.xlu0.b32.cont [10/16] 0.0, 128
        %1614 = vxpose.xlu0.b32.cont [11/16] 0.0, 128
        %1615 = vxpose.xlu0.b32.cont [12/16] 0.0, 128
        %1616 = vxpose.xlu0.b32.cont [13/16] 0.0, 128
        %1617 = vxpose.xlu0.b32.cont [14/16] 0.0, 128
        %1618 = vxpose.xlu0.b32.cont [15/16] 0.0, 128
        %1619 = vxpose.xlu0.b32.end [16/16] 0.0, 128
        %v1620 = vpop.trf.xlu0
        %v1621 = vpop.trf.xlu0
        %v1622 = vpop.trf.xlu0
        %v1623 = vpop.trf.xlu0
        %v1624 = vpop.trf.xlu0
        %v1625 = vpop.trf.xlu0
        %v1626 = vpop.trf.xlu0
        %v1627 = vpop.trf.xlu0
        %v1628 = vpop.trf.xlu0
        %v1629 = vpop.trf.xlu0
        %v1630 = vpop.trf.xlu0
        %v1631 = vpop.trf.xlu0
        %v1632 = vpop.trf.xlu0
        %v1633 = vpop.trf.xlu0
        %v1634 = vpop.trf.xlu0
        %v1635 = vpop.trf.xlu0
        %v1636 = vpack.c.bf16 %v1620, %v1620
        %v1637 = vpack.c.bf16 %v1621, %v1621
        %v1639 = vshll.u32 %v1636, 16
        %v1641 = vrot.slane %v1639, 5
        %v1642 = vshrl.u32 %v1636, 16
        %v1644 = vrot.slane %v1642, 4
        %v1645 = vor.u32 %v1644, %v1641
        %v1646 = vrot.slane %v1645, 4
        %v1648 = vshll.u32 %v1637, 16
        %v1650 = vrot.slane %v1648, 5
        %v1651 = vsel %vm879, %v1646, %v1650
        %v1652 = vshrl.u32 %v1637, 16
        %v1654 = vrot.slane %v1652, 4
        %v1655 = vor.u32 %v1654, %v1650
        %v1656 = vrot.slane %v1655, 4
        %v1660 = vld [vmem:[#allocation2 + $0x3c] sm:$0x8]
        %v1661 = vsel %vm904, %v1641, %v1660
        %1662 = vst [vmem:[#allocation2 + $0x3c] sm:$0x8] %v1661
        %1663 = vst.msk [vmem:[#allocation2 + $0x40] sm:$0xf] %vm224, %v1651
        %v1664 = vld [vmem:[#allocation2 + $0x44] sm:$0xf]
        %v1665 = vsel %vm910, %v1656, %v1664
        %1666 = vst [vmem:[#allocation2 + $0x44] sm:$0xf] %v1665
        %v1667 = vld [vmem:[%s222 + $0x7] sm:$0x1]
        %v1668 = vld [vmem:[%s222 + $0x17] sm:$0x1]
        %v1669 = vld [vmem:[%s222 + $0x27] sm:$0x1]
        %v1670 = vld [vmem:[%s222 + $0x37] sm:$0x1]
        %v1671 = vld [vmem:[%s222 + $0x47] sm:$0x1]
        %v1672 = vld [vmem:[%s222 + $0x57] sm:$0x1]
        %v1673 = vld [vmem:[%s222 + $0x67] sm:$0x1]
        %v1674 = vld [vmem:[%s222 + $0x77] sm:$0x1]
        %v1675 = vld [vmem:[%s222 + $0x87] sm:$0x1]
        %v1676 = vld [vmem:[%s222 + $0x97] sm:$0x1]
        %v1677 = vld [vmem:[%s222 + $0xa7] sm:$0x1]
        %v1678 = vld [vmem:[%s222 + $0xb7] sm:$0x1]
        %v1679 = vld [vmem:[%s222 + $0xc7] sm:$0x1]
        %v1680 = vld [vmem:[%s222 + $0xd7] sm:$0x1]
        %v1681 = vld [vmem:[%s222 + $0xe7] sm:$0x1]
        %v1682 = vld [vmem:[%s222 + $0xf7] sm:$0x1]
        %v1683 = vld [vmem:[%s222 + $0x107] sm:$0x1]
        %v1684 = vld [vmem:[%s222 + $0x117] sm:$0x1]
        %v1685 = vld [vmem:[%s222 + $0x127] sm:$0x1]
        %v1686 = vld [vmem:[%s222 + $0x137] sm:$0x1]
        %v1687 = vld [vmem:[%s222 + $0x147] sm:$0x1]
        %v1688 = vld [vmem:[%s222 + $0x157] sm:$0x1]
        %v1689 = vld [vmem:[%s222 + $0x167] sm:$0x1]
        %v1690 = vld [vmem:[%s222 + $0x177] sm:$0x1]
        %v1691 = vld [vmem:[%s222 + $0x187] sm:$0x1]
        %v1692 = vld [vmem:[%s222 + $0x197] sm:$0x1]
        %v1693 = vld [vmem:[%s222 + $0x1a7] sm:$0x1]
        %v1694 = vld [vmem:[%s222 + $0x1b7] sm:$0x1]
        %v1695 = vld [vmem:[%s222 + $0x1c7] sm:$0x1]
        %v1696 = vld [vmem:[%s222 + $0x1d7] sm:$0x1]
        %v1697 = vld [vmem:[%s222 + $0x1e7] sm:$0x1]
        %v1698 = vld [vmem:[%s222 + $0x1f7] sm:$0x1]
        %v1731 = vrot.slane %v1668, 7
        %v1732 = vsel %vm387, %v1731, %v1667
        %v1733 = vrot.slane %v1669, 6
        %v1734 = vsel %vm390, %v1733, %v1732
        %v1735 = vrot.slane %v1670, 5
        %v1736 = vsel %vm393, %v1735, %v1734
        %v1737 = vrot.slane %v1671, 4
        %v1738 = vsel %vm396, %v1737, %v1736
        %v1739 = vrot.slane %v1672, 3
        %v1740 = vsel %vm399, %v1739, %v1738
        %v1741 = vrot.slane %v1673, 2
        %v1742 = vsel %vm402, %v1741, %v1740
        %v1743 = vrot.slane %v1674, 1
        %v1744 = vsel %vm405, %v1743, %v1742
        %v1745 = vrot.slane %v1676, 7
        %v1746 = vsel %vm387, %v1745, %v1675
        %v1747 = vrot.slane %v1677, 6
        %v1748 = vsel %vm390, %v1747, %v1746
        %v1749 = vrot.slane %v1678, 5
        %v1750 = vsel %vm393, %v1749, %v1748
        %v1751 = vrot.slane %v1679, 4
        %v1752 = vsel %vm396, %v1751, %v1750
        %v1753 = vrot.slane %v1680, 3
        %v1754 = vsel %vm399, %v1753, %v1752
        %v1755 = vrot.slane %v1681, 2
        %v1756 = vsel %vm402, %v1755, %v1754
        %v1757 = vrot.slane %v1682, 1
        %v1758 = vsel %vm405, %v1757, %v1756
        %v1759 = vrot.slane %v1684, 7
        %v1760 = vsel %vm387, %v1759, %v1683
        %v1761 = vrot.slane %v1685, 6
        %v1762 = vsel %vm390, %v1761, %v1760
        %v1763 = vrot.slane %v1686, 5
        %v1764 = vsel %vm393, %v1763, %v1762
        %v1765 = vrot.slane %v1687, 4
        %v1766 = vsel %vm396, %v1765, %v1764
        %v1767 = vrot.slane %v1688, 3
        %v1768 = vsel %vm399, %v1767, %v1766
        %v1769 = vrot.slane %v1689, 2
        %v1770 = vsel %vm402, %v1769, %v1768
        %v1771 = vrot.slane %v1690, 1
        %v1772 = vsel %vm405, %v1771, %v1770
        %v1773 = vrot.slane %v1692, 7
        %v1774 = vsel %vm387, %v1773, %v1691
        %v1775 = vrot.slane %v1693, 6
        %v1776 = vsel %vm390, %v1775, %v1774
        %v1777 = vrot.slane %v1694, 5
        %v1778 = vsel %vm393, %v1777, %v1776
        %v1779 = vrot.slane %v1695, 4
        %v1780 = vsel %vm396, %v1779, %v1778
        %v1781 = vrot.slane %v1696, 3
        %v1782 = vsel %vm399, %v1781, %v1780
        %v1783 = vrot.slane %v1697, 2
        %v1784 = vsel %vm402, %v1783, %v1782
        %v1785 = vrot.slane %v1698, 1
        %v1786 = vsel %vm405, %v1785, %v1784
        %1791 = vxpose.xlu0.b32.start [1/16] %v1744, 128
        %1792 = vxpose.xlu0.b32.cont [2/16] %v1758, 128
        %1793 = vxpose.xlu0.b32.cont [3/16] %v1772, 128
        %1794 = vxpose.xlu0.b32.cont [4/16] %v1786, 128
        %1795 = vxpose.xlu0.b32.cont [5/16] 0.0, 128
        %1796 = vxpose.xlu0.b32.cont [6/16] 0.0, 128
        %1797 = vxpose.xlu0.b32.cont [7/16] 0.0, 128
        %1798 = vxpose.xlu0.b32.cont [8/16] 0.0, 128
        %1799 = vxpose.xlu0.b32.cont [9/16] 0.0, 128
        %1800 = vxpose.xlu0.b32.cont [10/16] 0.0, 128
        %1801 = vxpose.xlu0.b32.cont [11/16] 0.0, 128
        %1802 = vxpose.xlu0.b32.cont [12/16] 0.0, 128
        %1803 = vxpose.xlu0.b32.cont [13/16] 0.0, 128
        %1804 = vxpose.xlu0.b32.cont [14/16] 0.0, 128
        %1805 = vxpose.xlu0.b32.cont [15/16] 0.0, 128
        %1806 = vxpose.xlu0.b32.end [16/16] 0.0, 128
        %v1807 = vpop.trf.xlu0
        %v1808 = vpop.trf.xlu0
        %v1809 = vpop.trf.xlu0
        %v1810 = vpop.trf.xlu0
        %v1811 = vpop.trf.xlu0
        %v1812 = vpop.trf.xlu0
        %v1813 = vpop.trf.xlu0
        %v1814 = vpop.trf.xlu0
        %v1815 = vpop.trf.xlu0
        %v1816 = vpop.trf.xlu0
        %v1817 = vpop.trf.xlu0
        %v1818 = vpop.trf.xlu0
        %v1819 = vpop.trf.xlu0
        %v1820 = vpop.trf.xlu0
        %v1821 = vpop.trf.xlu0
        %v1822 = vpop.trf.xlu0
        %v1823 = vpack.c.bf16 %v1807, %v1807
        %v1824 = vpack.c.bf16 %v1808, %v1808
        %v1826 = vshrl.u32 %v1823, 16
        %v1828 = vrot.slane %v1826, 7
        %v1829 = vshll.u32 %v1823, 16
        %v1831 = vor.u32 %v1828, %v1829
        %v1832 = vrot.slane %v1828, 4
        %v1834 = vshrl.u32 %v1824, 16
        %v1836 = vrot.slane %v1834, 7
        %v1837 = vshll.u32 %v1824, 16
        %v1839 = vor.u32 %v1836, %v1837
        %v1840 = vsel %vm1074, %v1832, %v1839
        %v1841 = vrot.slane %v1836, 4
        %v1845 = vld [vmem:[#allocation2 + $0x48] sm:$0xf]
        %v1846 = vsel %vm1096, %v1831, %v1845
        %1847 = vst [vmem:[#allocation2 + $0x48] sm:$0xf] %v1846
        %1848 = vst.msk [vmem:[#allocation2 + $0x4c] sm:$0xf] %vm224, %v1840
        %v1849 = vld [vmem:[#allocation2 + $0x50] sm:$0x1]
        %v1850 = vsel %vm1102, %v1841, %v1849
        %1851 = vst [vmem:[#allocation2 + $0x50] sm:$0x1] %v1850
        %v1852 = vld [vmem:[%s222 + $0x8] sm:$0x1]
        %v1853 = vld [vmem:[%s222 + $0x18] sm:$0x1]
        %v1854 = vld [vmem:[%s222 + $0x28] sm:$0x1]
        %v1855 = vld [vmem:[%s222 + $0x38] sm:$0x1]
        %v1856 = vld [vmem:[%s222 + $0x48] sm:$0x1]
        %v1857 = vld [vmem:[%s222 + $0x58] sm:$0x1]
        %v1858 = vld [vmem:[%s222 + $0x68] sm:$0x1]
        %v1859 = vld [vmem:[%s222 + $0x78] sm:$0x1]
        %v1860 = vld [vmem:[%s222 + $0x88] sm:$0x1]
        %v1861 = vld [vmem:[%s222 + $0x98] sm:$0x1]
        %v1862 = vld [vmem:[%s222 + $0xa8] sm:$0x1]
        %v1863 = vld [vmem:[%s222 + $0xb8] sm:$0x1]
        %v1864 = vld [vmem:[%s222 + $0xc8] sm:$0x1]
        %v1865 = vld [vmem:[%s222 + $0xd8] sm:$0x1]
        %v1866 = vld [vmem:[%s222 + $0xe8] sm:$0x1]
        %v1867 = vld [vmem:[%s222 + $0xf8] sm:$0x1]
        %v1868 = vld [vmem:[%s222 + $0x108] sm:$0x1]
        %v1869 = vld [vmem:[%s222 + $0x118] sm:$0x1]
        %v1870 = vld [vmem:[%s222 + $0x128] sm:$0x1]
        %v1871 = vld [vmem:[%s222 + $0x138] sm:$0x1]
        %v1872 = vld [vmem:[%s222 + $0x148] sm:$0x1]
        %v1873 = vld [vmem:[%s222 + $0x158] sm:$0x1]
        %v1874 = vld [vmem:[%s222 + $0x168] sm:$0x1]
        %v1875 = vld [vmem:[%s222 + $0x178] sm:$0x1]
        %v1876 = vld [vmem:[%s222 + $0x188] sm:$0x1]
        %v1877 = vld [vmem:[%s222 + $0x198] sm:$0x1]
        %v1878 = vld [vmem:[%s222 + $0x1a8] sm:$0x1]
        %v1879 = vld [vmem:[%s222 + $0x1b8] sm:$0x1]
        %v1880 = vld [vmem:[%s222 + $0x1c8] sm:$0x1]
        %v1881 = vld [vmem:[%s222 + $0x1d8] sm:$0x1]
        %v1882 = vld [vmem:[%s222 + $0x1e8] sm:$0x1]
        %v1883 = vld [vmem:[%s222 + $0x1f8] sm:$0x1]
        %v1916 = vrot.slane %v1853, 7
        %v1917 = vsel %vm387, %v1916, %v1852
        %v1918 = vrot.slane %v1854, 6
        %v1919 = vsel %vm390, %v1918, %v1917
        %v1920 = vrot.slane %v1855, 5
        %v1921 = vsel %vm393, %v1920, %v1919
        %v1922 = vrot.slane %v1856, 4
        %v1923 = vsel %vm396, %v1922, %v1921
        %v1924 = vrot.slane %v1857, 3
        %v1925 = vsel %vm399, %v1924, %v1923
        %v1926 = vrot.slane %v1858, 2
        %v1927 = vsel %vm402, %v1926, %v1925
        %v1928 = vrot.slane %v1859, 1
        %v1929 = vsel %vm405, %v1928, %v1927
        %v1930 = vrot.slane %v1861, 7
        %v1931 = vsel %vm387, %v1930, %v1860
        %v1932 = vrot.slane %v1862, 6
        %v1933 = vsel %vm390, %v1932, %v1931
        %v1934 = vrot.slane %v1863, 5
        %v1935 = vsel %vm393, %v1934, %v1933
        %v1936 = vrot.slane %v1864, 4
        %v1937 = vsel %vm396, %v1936, %v1935
        %v1938 = vrot.slane %v1865, 3
        %v1939 = vsel %vm399, %v1938, %v1937
        %v1940 = vrot.slane %v1866, 2
        %v1941 = vsel %vm402, %v1940, %v1939
        %v1942 = vrot.slane %v1867, 1
        %v1943 = vsel %vm405, %v1942, %v1941
        %v1944 = vrot.slane %v1869, 7
        %v1945 = vsel %vm387, %v1944, %v1868
        %v1946 = vrot.slane %v1870, 6
        %v1947 = vsel %vm390, %v1946, %v1945
        %v1948 = vrot.slane %v1871, 5
        %v1949 = vsel %vm393, %v1948, %v1947
        %v1950 = vrot.slane %v1872, 4
        %v1951 = vsel %vm396, %v1950, %v1949
        %v1952 = vrot.slane %v1873, 3
        %v1953 = vsel %vm399, %v1952, %v1951
        %v1954 = vrot.slane %v1874, 2
        %v1955 = vsel %vm402, %v1954, %v1953
        %v1956 = vrot.slane %v1875, 1
        %v1957 = vsel %vm405, %v1956, %v1955
        %v1958 = vrot.slane %v1877, 7
        %v1959 = vsel %vm387, %v1958, %v1876
        %v1960 = vrot.slane %v1878, 6
        %v1961 = vsel %vm390, %v1960, %v1959
        %v1962 = vrot.slane %v1879, 5
        %v1963 = vsel %vm393, %v1962, %v1961
        %v1964 = vrot.slane %v1880, 4
        %v1965 = vsel %vm396, %v1964, %v1963
        %v1966 = vrot.slane %v1881, 3
        %v1967 = vsel %vm399, %v1966, %v1965
        %v1968 = vrot.slane %v1882, 2
        %v1969 = vsel %vm402, %v1968, %v1967
        %v1970 = vrot.slane %v1883, 1
        %v1971 = vsel %vm405, %v1970, %v1969
        %1976 = vxpose.xlu0.b32.start [1/16] %v1929, 128
        %1977 = vxpose.xlu0.b32.cont [2/16] %v1943, 128
        %1978 = vxpose.xlu0.b32.cont [3/16] %v1957, 128
        %1979 = vxpose.xlu0.b32.cont [4/16] %v1971, 128
        %1980 = vxpose.xlu0.b32.cont [5/16] 0.0, 128
        %1981 = vxpose.xlu0.b32.cont [6/16] 0.0, 128
        %1982 = vxpose.xlu0.b32.cont [7/16] 0.0, 128
        %1983 = vxpose.xlu0.b32.cont [8/16] 0.0, 128
        %1984 = vxpose.xlu0.b32.cont [9/16] 0.0, 128
        %1985 = vxpose.xlu0.b32.cont [10/16] 0.0, 128
        %1986 = vxpose.xlu0.b32.cont [11/16] 0.0, 128
        %1987 = vxpose.xlu0.b32.cont [12/16] 0.0, 128
        %1988 = vxpose.xlu0.b32.cont [13/16] 0.0, 128
        %1989 = vxpose.xlu0.b32.cont [14/16] 0.0, 128
        %1990 = vxpose.xlu0.b32.cont [15/16] 0.0, 128
        %1991 = vxpose.xlu0.b32.end [16/16] 0.0, 128
        %v1992 = vpop.trf.xlu0
        %v1993 = vpop.trf.xlu0
        %v1994 = vpop.trf.xlu0
        %v1995 = vpop.trf.xlu0
        %v1996 = vpop.trf.xlu0
        %v1997 = vpop.trf.xlu0
        %v1998 = vpop.trf.xlu0
        %v1999 = vpop.trf.xlu0
        %v2000 = vpop.trf.xlu0
        %v2001 = vpop.trf.xlu0
        %v2002 = vpop.trf.xlu0
        %v2003 = vpop.trf.xlu0
        %v2004 = vpop.trf.xlu0
        %v2005 = vpop.trf.xlu0
        %v2006 = vpop.trf.xlu0
        %v2007 = vpop.trf.xlu0
        %v2008 = vpack.c.bf16 %v1992, %v1992
        %v2009 = vpack.c.bf16 %v1993, %v1993
        %v2011 = vshrl.u32 %v2008, 16
        %v2013 = vrot.slane %v2011, 6
        %v2014 = vshll.u32 %v2008, 16
        %v2016 = vrot.slane %v2014, 7
        %v2017 = vor.u32 %v2013, %v2016
        %v2018 = vrot.slane %v2017, 4
        %v2020 = vshrl.u32 %v2009, 16
        %v2022 = vrot.slane %v2020, 6
        %v2023 = vshll.u32 %v2009, 16
        %v2025 = vrot.slane %v2023, 7
        %v2026 = vor.u32 %v2022, %v2025
        %v2027 = vsel %vm489, %v2018, %v2026
        %v2028 = vrot.slane %v2026, 4
        %v2032 = vld [vmem:[#allocation2 + $0x50] sm:$0xe]
        %v2033 = vsel %vm514, %v2017, %v2032
        %2034 = vst [vmem:[#allocation2 + $0x50] sm:$0xe] %v2033
        %2035 = vst.msk [vmem:[#allocation2 + $0x54] sm:$0xf] %vm224, %v2027
        %v2036 = vld [vmem:[#allocation2 + $0x58] sm:$0x3]
        %v2037 = vsel %vm520, %v2028, %v2036
        %2038 = vst [vmem:[#allocation2 + $0x58] sm:$0x3] %v2037
        %v2039 = vld [vmem:[%s222 + $0x9] sm:$0x1]
        %v2040 = vld [vmem:[%s222 + $0x19] sm:$0x1]
        %v2041 = vld [vmem:[%s222 + $0x29] sm:$0x1]
        %v2042 = vld [vmem:[%s222 + $0x39] sm:$0x1]
        %v2043 = vld [vmem:[%s222 + $0x49] sm:$0x1]
        %v2044 = vld [vmem:[%s222 + $0x59] sm:$0x1]
        %v2045 = vld [vmem:[%s222 + $0x69] sm:$0x1]
        %v2046 = vld [vmem:[%s222 + $0x79] sm:$0x1]
        %v2047 = vld [vmem:[%s222 + $0x89] sm:$0x1]
        %v2048 = vld [vmem:[%s222 + $0x99] sm:$0x1]
        %v2049 = vld [vmem:[%s222 + $0xa9] sm:$0x1]
        %v2050 = vld [vmem:[%s222 + $0xb9] sm:$0x1]
        %v2051 = vld [vmem:[%s222 + $0xc9] sm:$0x1]
        %v2052 = vld [vmem:[%s222 + $0xd9] sm:$0x1]
        %v2053 = vld [vmem:[%s222 + $0xe9] sm:$0x1]
        %v2054 = vld [vmem:[%s222 + $0xf9] sm:$0x1]
        %v2055 = vld [vmem:[%s222 + $0x109] sm:$0x1]
        %v2056 = vld [vmem:[%s222 + $0x119] sm:$0x1]
        %v2057 = vld [vmem:[%s222 + $0x129] sm:$0x1]
        %v2058 = vld [vmem:[%s222 + $0x139] sm:$0x1]
        %v2059 = vld [vmem:[%s222 + $0x149] sm:$0x1]
        %v2060 = vld [vmem:[%s222 + $0x159] sm:$0x1]
        %v2061 = vld [vmem:[%s222 + $0x169] sm:$0x1]
        %v2062 = vld [vmem:[%s222 + $0x179] sm:$0x1]
        %v2063 = vld [vmem:[%s222 + $0x189] sm:$0x1]
        %v2064 = vld [vmem:[%s222 + $0x199] sm:$0x1]
        %v2065 = vld [vmem:[%s222 + $0x1a9] sm:$0x1]
        %v2066 = vld [vmem:[%s222 + $0x1b9] sm:$0x1]
        %v2067 = vld [vmem:[%s222 + $0x1c9] sm:$0x1]
        %v2068 = vld [vmem:[%s222 + $0x1d9] sm:$0x1]
        %v2069 = vld [vmem:[%s222 + $0x1e9] sm:$0x1]
        %v2070 = vld [vmem:[%s222 + $0x1f9] sm:$0x1]
        %v2103 = vrot.slane %v2040, 7
        %v2104 = vsel %vm387, %v2103, %v2039
        %v2105 = vrot.slane %v2041, 6
        %v2106 = vsel %vm390, %v2105, %v2104
        %v2107 = vrot.slane %v2042, 5
        %v2108 = vsel %vm393, %v2107, %v2106
        %v2109 = vrot.slane %v2043, 4
        %v2110 = vsel %vm396, %v2109, %v2108
        %v2111 = vrot.slane %v2044, 3
        %v2112 = vsel %vm399, %v2111, %v2110
        %v2113 = vrot.slane %v2045, 2
        %v2114 = vsel %vm402, %v2113, %v2112
        %v2115 = vrot.slane %v2046, 1
        %v2116 = vsel %vm405, %v2115, %v2114
        %v2117 = vrot.slane %v2048, 7
        %v2118 = vsel %vm387, %v2117, %v2047
        %v2119 = vrot.slane %v2049, 6
        %v2120 = vsel %vm390, %v2119, %v2118
        %v2121 = vrot.slane %v2050, 5
        %v2122 = vsel %vm393, %v2121, %v2120
        %v2123 = vrot.slane %v2051, 4
        %v2124 = vsel %vm396, %v2123, %v2122
        %v2125 = vrot.slane %v2052, 3
        %v2126 = vsel %vm399, %v2125, %v2124
        %v2127 = vrot.slane %v2053, 2
        %v2128 = vsel %vm402, %v2127, %v2126
        %v2129 = vrot.slane %v2054, 1
        %v2130 = vsel %vm405, %v2129, %v2128
        %v2131 = vrot.slane %v2056, 7
        %v2132 = vsel %vm387, %v2131, %v2055
        %v2133 = vrot.slane %v2057, 6
        %v2134 = vsel %vm390, %v2133, %v2132
        %v2135 = vrot.slane %v2058, 5
        %v2136 = vsel %vm393, %v2135, %v2134
        %v2137 = vrot.slane %v2059, 4
        %v2138 = vsel %vm396, %v2137, %v2136
        %v2139 = vrot.slane %v2060, 3
        %v2140 = vsel %vm399, %v2139, %v2138
        %v2141 = vrot.slane %v2061, 2
        %v2142 = vsel %vm402, %v2141, %v2140
        %v2143 = vrot.slane %v2062, 1
        %v2144 = vsel %vm405, %v2143, %v2142
        %v2145 = vrot.slane %v2064, 7
        %v2146 = vsel %vm387, %v2145, %v2063
        %v2147 = vrot.slane %v2065, 6
        %v2148 = vsel %vm390, %v2147, %v2146
        %v2149 = vrot.slane %v2066, 5
        %v2150 = vsel %vm393, %v2149, %v2148
        %v2151 = vrot.slane %v2067, 4
        %v2152 = vsel %vm396, %v2151, %v2150
        %v2153 = vrot.slane %v2068, 3
        %v2154 = vsel %vm399, %v2153, %v2152
        %v2155 = vrot.slane %v2069, 2
        %v2156 = vsel %vm402, %v2155, %v2154
        %v2157 = vrot.slane %v2070, 1
        %v2158 = vsel %vm405, %v2157, %v2156
        %2163 = vxpose.xlu0.b32.start [1/16] %v2116, 128
        %2164 = vxpose.xlu0.b32.cont [2/16] %v2130, 128
        %2165 = vxpose.xlu0.b32.cont [3/16] %v2144, 128
        %2166 = vxpose.xlu0.b32.cont [4/16] %v2158, 128
        %2167 = vxpose.xlu0.b32.cont [5/16] 0.0, 128
        %2168 = vxpose.xlu0.b32.cont [6/16] 0.0, 128
        %2169 = vxpose.xlu0.b32.cont [7/16] 0.0, 128
        %2170 = vxpose.xlu0.b32.cont [8/16] 0.0, 128
        %2171 = vxpose.xlu0.b32.cont [9/16] 0.0, 128
        %2172 = vxpose.xlu0.b32.cont [10/16] 0.0, 128
        %2173 = vxpose.xlu0.b32.cont [11/16] 0.0, 128
        %2174 = vxpose.xlu0.b32.cont [12/16] 0.0, 128
        %2175 = vxpose.xlu0.b32.cont [13/16] 0.0, 128
        %2176 = vxpose.xlu0.b32.cont [14/16] 0.0, 128
        %2177 = vxpose.xlu0.b32.cont [15/16] 0.0, 128
        %2178 = vxpose.xlu0.b32.end [16/16] 0.0, 128
        %v2179 = vpop.trf.xlu0
        %v2180 = vpop.trf.xlu0
        %v2181 = vpop.trf.xlu0
        %v2182 = vpop.trf.xlu0
        %v2183 = vpop.trf.xlu0
        %v2184 = vpop.trf.xlu0
        %v2185 = vpop.trf.xlu0
        %v2186 = vpop.trf.xlu0
        %v2187 = vpop.trf.xlu0
        %v2188 = vpop.trf.xlu0
        %v2189 = vpop.trf.xlu0
        %v2190 = vpop.trf.xlu0
        %v2191 = vpop.trf.xlu0
        %v2192 = vpop.trf.xlu0
        %v2193 = vpop.trf.xlu0
        %v2194 = vpop.trf.xlu0
        %v2195 = vpack.c.bf16 %v2179, %v2179
        %v2196 = vpack.c.bf16 %v2180, %v2180
        %v2198 = vshrl.u32 %v2195, 16
        %v2200 = vrot.slane %v2198, 5
        %v2201 = vshll.u32 %v2195, 16
        %v2203 = vrot.slane %v2201, 6
        %v2204 = vor.u32 %v2200, %v2203
        %v2205 = vrot.slane %v2204, 4
        %v2207 = vshrl.u32 %v2196, 16
        %v2209 = vrot.slane %v2207, 5
        %v2210 = vshll.u32 %v2196, 16
        %v2212 = vrot.slane %v2210, 6
        %v2213 = vor.u32 %v2209, %v2212
        %v2214 = vsel %vm684, %v2205, %v2213
        %v2215 = vrot.slane %v2213, 4
        %v2219 = vld [vmem:[#allocation2 + $0x58] sm:$0xc]
        %v2220 = vsel %vm709, %v2204, %v2219
        %2221 = vst [vmem:[#allocation2 + $0x58] sm:$0xc] %v2220
        %2222 = vst.msk [vmem:[#allocation2 + $0x5c] sm:$0xf] %vm224, %v2214
        %v2223 = vld [vmem:[#allocation2 + $0x60] sm:$0x7]
        %v2224 = vsel %vm715, %v2215, %v2223
        %2225 = vst [vmem:[#allocation2 + $0x60] sm:$0x7] %v2224
        %v2226 = vld [vmem:[%s222 + $0xa] sm:$0x1]
        %v2227 = vld [vmem:[%s222 + $0x1a] sm:$0x1]
        %v2228 = vld [vmem:[%s222 + $0x2a] sm:$0x1]
        %v2229 = vld [vmem:[%s222 + $0x3a] sm:$0x1]
        %v2230 = vld [vmem:[%s222 + $0x4a] sm:$0x1]
        %v2231 = vld [vmem:[%s222 + $0x5a] sm:$0x1]
        %v2232 = vld [vmem:[%s222 + $0x6a] sm:$0x1]
        %v2233 = vld [vmem:[%s222 + $0x7a] sm:$0x1]
        %v2234 = vld [vmem:[%s222 + $0x8a] sm:$0x1]
        %v2235 = vld [vmem:[%s222 + $0x9a] sm:$0x1]
        %v2236 = vld [vmem:[%s222 + $0xaa] sm:$0x1]
        %v2237 = vld [vmem:[%s222 + $0xba] sm:$0x1]
        %v2238 = vld [vmem:[%s222 + $0xca] sm:$0x1]
        %v2239 = vld [vmem:[%s222 + $0xda] sm:$0x1]
        %v2240 = vld [vmem:[%s222 + $0xea] sm:$0x1]
        %v2241 = vld [vmem:[%s222 + $0xfa] sm:$0x1]
        %v2242 = vld [vmem:[%s222 + $0x10a] sm:$0x1]
        %v2243 = vld [vmem:[%s222 + $0x11a] sm:$0x1]
        %v2244 = vld [vmem:[%s222 + $0x12a] sm:$0x1]
        %v2245 = vld [vmem:[%s222 + $0x13a] sm:$0x1]
        %v2246 = vld [vmem:[%s222 + $0x14a] sm:$0x1]
        %v2247 = vld [vmem:[%s222 + $0x15a] sm:$0x1]
        %v2248 = vld [vmem:[%s222 + $0x16a] sm:$0x1]
        %v2249 = vld [vmem:[%s222 + $0x17a] sm:$0x1]
        %v2250 = vld [vmem:[%s222 + $0x18a] sm:$0x1]
        %v2251 = vld [vmem:[%s222 + $0x19a] sm:$0x1]
        %v2252 = vld [vmem:[%s222 + $0x1aa] sm:$0x1]
        %v2253 = vld [vmem:[%s222 + $0x1ba] sm:$0x1]
        %v2254 = vld [vmem:[%s222 + $0x1ca] sm:$0x1]
        %v2255 = vld [vmem:[%s222 + $0x1da] sm:$0x1]
        %v2256 = vld [vmem:[%s222 + $0x1ea] sm:$0x1]
        %v2257 = vld [vmem:[%s222 + $0x1fa] sm:$0x1]
        %v2290 = vrot.slane %v2227, 7
        %v2291 = vsel %vm387, %v2290, %v2226
        %v2292 = vrot.slane %v2228, 6
        %v2293 = vsel %vm390, %v2292, %v2291
        %v2294 = vrot.slane %v2229, 5
        %v2295 = vsel %vm393, %v2294, %v2293
        %v2296 = vrot.slane %v2230, 4
        %v2297 = vsel %vm396, %v2296, %v2295
        %v2298 = vrot.slane %v2231, 3
        %v2299 = vsel %vm399, %v2298, %v2297
        %v2300 = vrot.slane %v2232, 2
        %v2301 = vsel %vm402, %v2300, %v2299
        %v2302 = vrot.slane %v2233, 1
        %v2303 = vsel %vm405, %v2302, %v2301
        %v2304 = vrot.slane %v2235, 7
        %v2305 = vsel %vm387, %v2304, %v2234
        %v2306 = vrot.slane %v2236, 6
        %v2307 = vsel %vm390, %v2306, %v2305
        %v2308 = vrot.slane %v2237, 5
        %v2309 = vsel %vm393, %v2308, %v2307
        %v2310 = vrot.slane %v2238, 4
        %v2311 = vsel %vm396, %v2310, %v2309
        %v2312 = vrot.slane %v2239, 3
        %v2313 = vsel %vm399, %v2312, %v2311
        %v2314 = vrot.slane %v2240, 2
        %v2315 = vsel %vm402, %v2314, %v2313
        %v2316 = vrot.slane %v2241, 1
        %v2317 = vsel %vm405, %v2316, %v2315
        %v2318 = vrot.slane %v2243, 7
        %v2319 = vsel %vm387, %v2318, %v2242
        %v2320 = vrot.slane %v2244, 6
        %v2321 = vsel %vm390, %v2320, %v2319
        %v2322 = vrot.slane %v2245, 5
        %v2323 = vsel %vm393, %v2322, %v2321
        %v2324 = vrot.slane %v2246, 4
        %v2325 = vsel %vm396, %v2324, %v2323
        %v2326 = vrot.slane %v2247, 3
        %v2327 = vsel %vm399, %v2326, %v2325
        %v2328 = vrot.slane %v2248, 2
        %v2329 = vsel %vm402, %v2328, %v2327
        %v2330 = vrot.slane %v2249, 1
        %v2331 = vsel %vm405, %v2330, %v2329
        %v2332 = vrot.slane %v2251, 7
        %v2333 = vsel %vm387, %v2332, %v2250
        %v2334 = vrot.slane %v2252, 6
        %v2335 = vsel %vm390, %v2334, %v2333
        %v2336 = vrot.slane %v2253, 5
        %v2337 = vsel %vm393, %v2336, %v2335
        %v2338 = vrot.slane %v2254, 4
        %v2339 = vsel %vm396, %v2338, %v2337
        %v2340 = vrot.slane %v2255, 3
        %v2341 = vsel %vm399, %v2340, %v2339
        %v2342 = vrot.slane %v2256, 2
        %v2343 = vsel %vm402, %v2342, %v2341
        %v2344 = vrot.slane %v2257, 1
        %v2345 = vsel %vm405, %v2344, %v2343
        %2350 = vxpose.xlu0.b32.start [1/16] %v2303, 128
        %2351 = vxpose.xlu0.b32.cont [2/16] %v2317, 128
        %2352 = vxpose.xlu0.b32.cont [3/16] %v2331, 128
        %2353 = vxpose.xlu0.b32.cont [4/16] %v2345, 128
        %2354 = vxpose.xlu0.b32.cont [5/16] 0.0, 128
        %2355 = vxpose.xlu0.b32.cont [6/16] 0.0, 128
        %2356 = vxpose.xlu0.b32.cont [7/16] 0.0, 128
        %2357 = vxpose.xlu0.b32.cont [8/16] 0.0, 128
        %2358 = vxpose.xlu0.b32.cont [9/16] 0.0, 128
        %2359 = vxpose.xlu0.b32.cont [10/16] 0.0, 128
        %2360 = vxpose.xlu0.b32.cont [11/16] 0.0, 128
        %2361 = vxpose.xlu0.b32.cont [12/16] 0.0, 128
        %2362 = vxpose.xlu0.b32.cont [13/16] 0.0, 128
        %2363 = vxpose.xlu0.b32.cont [14/16] 0.0, 128
        %2364 = vxpose.xlu0.b32.cont [15/16] 0.0, 128
        %2365 = vxpose.xlu0.b32.end [16/16] 0.0, 128
        %v2366 = vpop.trf.xlu0
        %v2367 = vpop.trf.xlu0
        %v2368 = vpop.trf.xlu0
        %v2369 = vpop.trf.xlu0
        %v2370 = vpop.trf.xlu0
        %v2371 = vpop.trf.xlu0
        %v2372 = vpop.trf.xlu0
        %v2373 = vpop.trf.xlu0
        %v2374 = vpop.trf.xlu0
        %v2375 = vpop.trf.xlu0
        %v2376 = vpop.trf.xlu0
        %v2377 = vpop.trf.xlu0
        %v2378 = vpop.trf.xlu0
        %v2379 = vpop.trf.xlu0
        %v2380 = vpop.trf.xlu0
        %v2381 = vpop.trf.xlu0
        %v2382 = vpack.c.bf16 %v2366, %v2366
        %v2383 = vpack.c.bf16 %v2367, %v2367
        %v2385 = vshll.u32 %v2382, 16
        %v2387 = vrot.slane %v2385, 5
        %v2388 = vshrl.u32 %v2382, 16
        %v2390 = vrot.slane %v2388, 4
        %v2391 = vor.u32 %v2390, %v2387
        %v2392 = vrot.slane %v2391, 4
        %v2394 = vshll.u32 %v2383, 16
        %v2396 = vrot.slane %v2394, 5
        %v2397 = vsel %vm879, %v2392, %v2396
        %v2398 = vshrl.u32 %v2383, 16
        %v2400 = vrot.slane %v2398, 4
        %v2401 = vor.u32 %v2400, %v2396
        %v2402 = vrot.slane %v2401, 4
        %v2406 = vld [vmem:[#allocation2 + $0x60] sm:$0x8]
        %v2407 = vsel %vm904, %v2387, %v2406
        %2408 = vst [vmem:[#allocation2 + $0x60] sm:$0x8] %v2407
        %2409 = vst.msk [vmem:[#allocation2 + $0x64] sm:$0xf] %vm224, %v2397
        %v2410 = vld [vmem:[#allocation2 + $0x68] sm:$0xf]
        %v2411 = vsel %vm910, %v2402, %v2410
        %2412 = vst [vmem:[#allocation2 + $0x68] sm:$0xf] %v2411
        %v2413 = vld [vmem:[%s222 + $0xb] sm:$0x1]
        %v2414 = vld [vmem:[%s222 + $0x1b] sm:$0x1]
        %v2415 = vld [vmem:[%s222 + $0x2b] sm:$0x1]
        %v2416 = vld [vmem:[%s222 + $0x3b] sm:$0x1]
        %v2417 = vld [vmem:[%s222 + $0x4b] sm:$0x1]
        %v2418 = vld [vmem:[%s222 + $0x5b] sm:$0x1]
        %v2419 = vld [vmem:[%s222 + $0x6b] sm:$0x1]
        %v2420 = vld [vmem:[%s222 + $0x7b] sm:$0x1]
        %v2421 = vld [vmem:[%s222 + $0x8b] sm:$0x1]
        %v2422 = vld [vmem:[%s222 + $0x9b] sm:$0x1]
        %v2423 = vld [vmem:[%s222 + $0xab] sm:$0x1]
        %v2424 = vld [vmem:[%s222 + $0xbb] sm:$0x1]
        %v2425 = vld [vmem:[%s222 + $0xcb] sm:$0x1]
        %v2426 = vld [vmem:[%s222 + $0xdb] sm:$0x1]
        %v2427 = vld [vmem:[%s222 + $0xeb] sm:$0x1]
        %v2428 = vld [vmem:[%s222 + $0xfb] sm:$0x1]
        %v2429 = vld [vmem:[%s222 + $0x10b] sm:$0x1]
        %v2430 = vld [vmem:[%s222 + $0x11b] sm:$0x1]
        %v2431 = vld [vmem:[%s222 + $0x12b] sm:$0x1]
        %v2432 = vld [vmem:[%s222 + $0x13b] sm:$0x1]
        %v2433 = vld [vmem:[%s222 + $0x14b] sm:$0x1]
        %v2434 = vld [vmem:[%s222 + $0x15b] sm:$0x1]
        %v2435 = vld [vmem:[%s222 + $0x16b] sm:$0x1]
        %v2436 = vld [vmem:[%s222 + $0x17b] sm:$0x1]
        %v2437 = vld [vmem:[%s222 + $0x18b] sm:$0x1]
        %v2438 = vld [vmem:[%s222 + $0x19b] sm:$0x1]
        %v2439 = vld [vmem:[%s222 + $0x1ab] sm:$0x1]
        %v2440 = vld [vmem:[%s222 + $0x1bb] sm:$0x1]
        %v2441 = vld [vmem:[%s222 + $0x1cb] sm:$0x1]
        %v2442 = vld [vmem:[%s222 + $0x1db] sm:$0x1]
        %v2443 = vld [vmem:[%s222 + $0x1eb] sm:$0x1]
        %v2444 = vld [vmem:[%s222 + $0x1fb] sm:$0x1]
        %v2477 = vrot.slane %v2414, 7
        %v2478 = vsel %vm387, %v2477, %v2413
        %v2479 = vrot.slane %v2415, 6
        %v2480 = vsel %vm390, %v2479, %v2478
        %v2481 = vrot.slane %v2416, 5
        %v2482 = vsel %vm393, %v2481, %v2480
        %v2483 = vrot.slane %v2417, 4
        %v2484 = vsel %vm396, %v2483, %v2482
        %v2485 = vrot.slane %v2418, 3
        %v2486 = vsel %vm399, %v2485, %v2484
        %v2487 = vrot.slane %v2419, 2
        %v2488 = vsel %vm402, %v2487, %v2486
        %v2489 = vrot.slane %v2420, 1
        %v2490 = vsel %vm405, %v2489, %v2488
        %v2491 = vrot.slane %v2422, 7
        %v2492 = vsel %vm387, %v2491, %v2421
        %v2493 = vrot.slane %v2423, 6
        %v2494 = vsel %vm390, %v2493, %v2492
        %v2495 = vrot.slane %v2424, 5
        %v2496 = vsel %vm393, %v2495, %v2494
        %v2497 = vrot.slane %v2425, 4
        %v2498 = vsel %vm396, %v2497, %v2496
        %v2499 = vrot.slane %v2426, 3
        %v2500 = vsel %vm399, %v2499, %v2498
        %v2501 = vrot.slane %v2427, 2
        %v2502 = vsel %vm402, %v2501, %v2500
        %v2503 = vrot.slane %v2428, 1
        %v2504 = vsel %vm405, %v2503, %v2502
        %v2505 = vrot.slane %v2430, 7
        %v2506 = vsel %vm387, %v2505, %v2429
        %v2507 = vrot.slane %v2431, 6
        %v2508 = vsel %vm390, %v2507, %v2506
        %v2509 = vrot.slane %v2432, 5
        %v2510 = vsel %vm393, %v2509, %v2508
        %v2511 = vrot.slane %v2433, 4
        %v2512 = vsel %vm396, %v2511, %v2510
        %v2513 = vrot.slane %v2434, 3
        %v2514 = vsel %vm399, %v2513, %v2512
        %v2515 = vrot.slane %v2435, 2
        %v2516 = vsel %vm402, %v2515, %v2514
        %v2517 = vrot.slane %v2436, 1
        %v2518 = vsel %vm405, %v2517, %v2516
        %v2519 = vrot.slane %v2438, 7
        %v2520 = vsel %vm387, %v2519, %v2437
        %v2521 = vrot.slane %v2439, 6
        %v2522 = vsel %vm390, %v2521, %v2520
        %v2523 = vrot.slane %v2440, 5
        %v2524 = vsel %vm393, %v2523, %v2522
        %v2525 = vrot.slane %v2441, 4
        %v2526 = vsel %vm396, %v2525, %v2524
        %v2527 = vrot.slane %v2442, 3
        %v2528 = vsel %vm399, %v2527, %v2526
        %v2529 = vrot.slane %v2443, 2
        %v2530 = vsel %vm402, %v2529, %v2528
        %v2531 = vrot.slane %v2444, 1
        %v2532 = vsel %vm405, %v2531, %v2530
        %2537 = vxpose.xlu0.b32.start [1/16] %v2490, 128
        %2538 = vxpose.xlu0.b32.cont [2/16] %v2504, 128
        %2539 = vxpose.xlu0.b32.cont [3/16] %v2518, 128
        %2540 = vxpose.xlu0.b32.cont [4/16] %v2532, 128
        %2541 = vxpose.xlu0.b32.cont [5/16] 0.0, 128
        %2542 = vxpose.xlu0.b32.cont [6/16] 0.0, 128
        %2543 = vxpose.xlu0.b32.cont [7/16] 0.0, 128
        %2544 = vxpose.xlu0.b32.cont [8/16] 0.0, 128
        %2545 = vxpose.xlu0.b32.cont [9/16] 0.0, 128
        %2546 = vxpose.xlu0.b32.cont [10/16] 0.0, 128
        %2547 = vxpose.xlu0.b32.cont [11/16] 0.0, 128
        %2548 = vxpose.xlu0.b32.cont [12/16] 0.0, 128
        %2549 = vxpose.xlu0.b32.cont [13/16] 0.0, 128
        %2550 = vxpose.xlu0.b32.cont [14/16] 0.0, 128
        %2551 = vxpose.xlu0.b32.cont [15/16] 0.0, 128
        %2552 = vxpose.xlu0.b32.end [16/16] 0.0, 128
        %v2553 = vpop.trf.xlu0
        %v2554 = vpop.trf.xlu0
        %v2555 = vpop.trf.xlu0
        %v2556 = vpop.trf.xlu0
        %v2557 = vpop.trf.xlu0
        %v2558 = vpop.trf.xlu0
        %v2559 = vpop.trf.xlu0
        %v2560 = vpop.trf.xlu0
        %v2561 = vpop.trf.xlu0
        %v2562 = vpop.trf.xlu0
        %v2563 = vpop.trf.xlu0
        %v2564 = vpop.trf.xlu0
        %v2565 = vpop.trf.xlu0
        %v2566 = vpop.trf.xlu0
        %v2567 = vpop.trf.xlu0
        %v2568 = vpop.trf.xlu0
        %v2569 = vpack.c.bf16 %v2553, %v2553
        %v2570 = vpack.c.bf16 %v2554, %v2554
        %v2572 = vshrl.u32 %v2569, 16
        %v2574 = vrot.slane %v2572, 7
        %v2575 = vshll.u32 %v2569, 16
        %v2577 = vor.u32 %v2574, %v2575
        %v2578 = vrot.slane %v2574, 4
        %v2580 = vshrl.u32 %v2570, 16
        %v2582 = vrot.slane %v2580, 7
        %v2583 = vshll.u32 %v2570, 16
        %v2585 = vor.u32 %v2582, %v2583
        %v2586 = vsel %vm1074, %v2578, %v2585
        %v2587 = vrot.slane %v2582, 4
        %v2591 = vld [vmem:[#allocation2 + $0x6c] sm:$0xf]
        %v2592 = vsel %vm1096, %v2577, %v2591
        %2593 = vst [vmem:[#allocation2 + $0x6c] sm:$0xf] %v2592
        %2594 = vst.msk [vmem:[#allocation2 + $0x70] sm:$0xf] %vm224, %v2586
        %v2595 = vld [vmem:[#allocation2 + $0x74] sm:$0x1]
        %v2596 = vsel %vm1102, %v2587, %v2595
        %2597 = vst [vmem:[#allocation2 + $0x74] sm:$0x1] %v2596
        %v2598 = vld [vmem:[%s222 + $0xc] sm:$0x1]
        %v2599 = vld [vmem:[%s222 + $0x1c] sm:$0x1]
        %v2600 = vld [vmem:[%s222 + $0x2c] sm:$0x1]
        %v2601 = vld [vmem:[%s222 + $0x3c] sm:$0x1]
        %v2602 = vld [vmem:[%s222 + $0x4c] sm:$0x1]
        %v2603 = vld [vmem:[%s222 + $0x5c] sm:$0x1]
        %v2604 = vld [vmem:[%s222 + $0x6c] sm:$0x1]
        %v2605 = vld [vmem:[%s222 + $0x7c] sm:$0x1]
        %v2606 = vld [vmem:[%s222 + $0x8c] sm:$0x1]
        %v2607 = vld [vmem:[%s222 + $0x9c] sm:$0x1]
        %v2608 = vld [vmem:[%s222 + $0xac] sm:$0x1]
        %v2609 = vld [vmem:[%s222 + $0xbc] sm:$0x1]
        %v2610 = vld [vmem:[%s222 + $0xcc] sm:$0x1]
        %v2611 = vld [vmem:[%s222 + $0xdc] sm:$0x1]
        %v2612 = vld [vmem:[%s222 + $0xec] sm:$0x1]
        %v2613 = vld [vmem:[%s222 + $0xfc] sm:$0x1]
        %v2614 = vld [vmem:[%s222 + $0x10c] sm:$0x1]
        %v2615 = vld [vmem:[%s222 + $0x11c] sm:$0x1]
        %v2616 = vld [vmem:[%s222 + $0x12c] sm:$0x1]
        %v2617 = vld [vmem:[%s222 + $0x13c] sm:$0x1]
        %v2618 = vld [vmem:[%s222 + $0x14c] sm:$0x1]
        %v2619 = vld [vmem:[%s222 + $0x15c] sm:$0x1]
        %v2620 = vld [vmem:[%s222 + $0x16c] sm:$0x1]
        %v2621 = vld [vmem:[%s222 + $0x17c] sm:$0x1]
        %v2622 = vld [vmem:[%s222 + $0x18c] sm:$0x1]
        %v2623 = vld [vmem:[%s222 + $0x19c] sm:$0x1]
        %v2624 = vld [vmem:[%s222 + $0x1ac] sm:$0x1]
        %v2625 = vld [vmem:[%s222 + $0x1bc] sm:$0x1]
        %v2626 = vld [vmem:[%s222 + $0x1cc] sm:$0x1]
        %v2627 = vld [vmem:[%s222 + $0x1dc] sm:$0x1]
        %v2628 = vld [vmem:[%s222 + $0x1ec] sm:$0x1]
        %v2629 = vld [vmem:[%s222 + $0x1fc] sm:$0x1]
        %v2662 = vrot.slane %v2599, 7
        %v2663 = vsel %vm387, %v2662, %v2598
        %v2664 = vrot.slane %v2600, 6
        %v2665 = vsel %vm390, %v2664, %v2663
        %v2666 = vrot.slane %v2601, 5
        %v2667 = vsel %vm393, %v2666, %v2665
        %v2668 = vrot.slane %v2602, 4
        %v2669 = vsel %vm396, %v2668, %v2667
        %v2670 = vrot.slane %v2603, 3
        %v2671 = vsel %vm399, %v2670, %v2669
        %v2672 = vrot.slane %v2604, 2
        %v2673 = vsel %vm402, %v2672, %v2671
        %v2674 = vrot.slane %v2605, 1
        %v2675 = vsel %vm405, %v2674, %v2673
        %v2676 = vrot.slane %v2607, 7
        %v2677 = vsel %vm387, %v2676, %v2606
        %v2678 = vrot.slane %v2608, 6
        %v2679 = vsel %vm390, %v2678, %v2677
        %v2680 = vrot.slane %v2609, 5
        %v2681 = vsel %vm393, %v2680, %v2679
        %v2682 = vrot.slane %v2610, 4
        %v2683 = vsel %vm396, %v2682, %v2681
        %v2684 = vrot.slane %v2611, 3
        %v2685 = vsel %vm399, %v2684, %v2683
        %v2686 = vrot.slane %v2612, 2
        %v2687 = vsel %vm402, %v2686, %v2685
        %v2688 = vrot.slane %v2613, 1
        %v2689 = vsel %vm405, %v2688, %v2687
        %v2690 = vrot.slane %v2615, 7
        %v2691 = vsel %vm387, %v2690, %v2614
        %v2692 = vrot.slane %v2616, 6
        %v2693 = vsel %vm390, %v2692, %v2691
        %v2694 = vrot.slane %v2617, 5
        %v2695 = vsel %vm393, %v2694, %v2693
        %v2696 = vrot.slane %v2618, 4
        %v2697 = vsel %vm396, %v2696, %v2695
        %v2698 = vrot.slane %v2619, 3
        %v2699 = vsel %vm399, %v2698, %v2697
        %v2700 = vrot.slane %v2620, 2
        %v2701 = vsel %vm402, %v2700, %v2699
        %v2702 = vrot.slane %v2621, 1
        %v2703 = vsel %vm405, %v2702, %v2701
        %v2704 = vrot.slane %v2623, 7
        %v2705 = vsel %vm387, %v2704, %v2622
        %v2706 = vrot.slane %v2624, 6
        %v2707 = vsel %vm390, %v2706, %v2705
        %v2708 = vrot.slane %v2625, 5
        %v2709 = vsel %vm393, %v2708, %v2707
        %v2710 = vrot.slane %v2626, 4
        %v2711 = vsel %vm396, %v2710, %v2709
        %v2712 = vrot.slane %v2627, 3
        %v2713 = vsel %vm399, %v2712, %v2711
        %v2714 = vrot.slane %v2628, 2
        %v2715 = vsel %vm402, %v2714, %v2713
        %v2716 = vrot.slane %v2629, 1
        %v2717 = vsel %vm405, %v2716, %v2715
        %2722 = vxpose.xlu0.b32.start [1/16] %v2675, 128
        %2723 = vxpose.xlu0.b32.cont [2/16] %v2689, 128
        %2724 = vxpose.xlu0.b32.cont [3/16] %v2703, 128
        %2725 = vxpose.xlu0.b32.cont [4/16] %v2717, 128
        %2726 = vxpose.xlu0.b32.cont [5/16] 0.0, 128
        %2727 = vxpose.xlu0.b32.cont [6/16] 0.0, 128
        %2728 = vxpose.xlu0.b32.cont [7/16] 0.0, 128
        %2729 = vxpose.xlu0.b32.cont [8/16] 0.0, 128
        %2730 = vxpose.xlu0.b32.cont [9/16] 0.0, 128
        %2731 = vxpose.xlu0.b32.cont [10/16] 0.0, 128
        %2732 = vxpose.xlu0.b32.cont [11/16] 0.0, 128
        %2733 = vxpose.xlu0.b32.cont [12/16] 0.0, 128
        %2734 = vxpose.xlu0.b32.cont [13/16] 0.0, 128
        %2735 = vxpose.xlu0.b32.cont [14/16] 0.0, 128
        %2736 = vxpose.xlu0.b32.cont [15/16] 0.0, 128
        %2737 = vxpose.xlu0.b32.end [16/16] 0.0, 128
        %v2738 = vpop.trf.xlu0
        %v2739 = vpop.trf.xlu0
        %v2740 = vpop.trf.xlu0
        %v2741 = vpop.trf.xlu0
        %v2742 = vpop.trf.xlu0
        %v2743 = vpop.trf.xlu0
        %v2744 = vpop.trf.xlu0
        %v2745 = vpop.trf.xlu0
        %v2746 = vpop.trf.xlu0
        %v2747 = vpop.trf.xlu0
        %v2748 = vpop.trf.xlu0
        %v2749 = vpop.trf.xlu0
        %v2750 = vpop.trf.xlu0
        %v2751 = vpop.trf.xlu0
        %v2752 = vpop.trf.xlu0
        %v2753 = vpop.trf.xlu0
        %v2754 = vpack.c.bf16 %v2738, %v2738
        %v2755 = vpack.c.bf16 %v2739, %v2739
        %v2757 = vshrl.u32 %v2754, 16
        %v2759 = vrot.slane %v2757, 6
        %v2760 = vshll.u32 %v2754, 16
        %v2762 = vrot.slane %v2760, 7
        %v2763 = vor.u32 %v2759, %v2762
        %v2764 = vrot.slane %v2763, 4
        %v2766 = vshrl.u32 %v2755, 16
        %v2768 = vrot.slane %v2766, 6
        %v2769 = vshll.u32 %v2755, 16
        %v2771 = vrot.slane %v2769, 7
        %v2772 = vor.u32 %v2768, %v2771
        %v2773 = vsel %vm489, %v2764, %v2772
        %v2774 = vrot.slane %v2772, 4
        %v2778 = vld [vmem:[#allocation2 + $0x74] sm:$0xe]
        %v2779 = vsel %vm514, %v2763, %v2778
        %2780 = vst [vmem:[#allocation2 + $0x74] sm:$0xe] %v2779
        %2781 = vst.msk [vmem:[#allocation2 + $0x78] sm:$0xf] %vm224, %v2773
        %v2782 = vld [vmem:[#allocation2 + $0x7c] sm:$0x3]
        %v2783 = vsel %vm520, %v2774, %v2782
        %2784 = vst [vmem:[#allocation2 + $0x7c] sm:$0x3] %v2783
        %v2785 = vld [vmem:[%s222 + $0xd] sm:$0x1]
        %v2786 = vld [vmem:[%s222 + $0x1d] sm:$0x1]
        %v2787 = vld [vmem:[%s222 + $0x2d] sm:$0x1]
        %v2788 = vld [vmem:[%s222 + $0x3d] sm:$0x1]
        %v2789 = vld [vmem:[%s222 + $0x4d] sm:$0x1]
        %v2790 = vld [vmem:[%s222 + $0x5d] sm:$0x1]
        %v2791 = vld [vmem:[%s222 + $0x6d] sm:$0x1]
        %v2792 = vld [vmem:[%s222 + $0x7d] sm:$0x1]
        %v2793 = vld [vmem:[%s222 + $0x8d] sm:$0x1]
        %v2794 = vld [vmem:[%s222 + $0x9d] sm:$0x1]
        %v2795 = vld [vmem:[%s222 + $0xad] sm:$0x1]
        %v2796 = vld [vmem:[%s222 + $0xbd] sm:$0x1]
        %v2797 = vld [vmem:[%s222 + $0xcd] sm:$0x1]
        %v2798 = vld [vmem:[%s222 + $0xdd] sm:$0x1]
        %v2799 = vld [vmem:[%s222 + $0xed] sm:$0x1]
        %v2800 = vld [vmem:[%s222 + $0xfd] sm:$0x1]
        %v2801 = vld [vmem:[%s222 + $0x10d] sm:$0x1]
        %v2802 = vld [vmem:[%s222 + $0x11d] sm:$0x1]
        %v2803 = vld [vmem:[%s222 + $0x12d] sm:$0x1]
        %v2804 = vld [vmem:[%s222 + $0x13d] sm:$0x1]
        %v2805 = vld [vmem:[%s222 + $0x14d] sm:$0x1]
        %v2806 = vld [vmem:[%s222 + $0x15d] sm:$0x1]
        %v2807 = vld [vmem:[%s222 + $0x16d] sm:$0x1]
        %v2808 = vld [vmem:[%s222 + $0x17d] sm:$0x1]
        %v2809 = vld [vmem:[%s222 + $0x18d] sm:$0x1]
        %v2810 = vld [vmem:[%s222 + $0x19d] sm:$0x1]
        %v2811 = vld [vmem:[%s222 + $0x1ad] sm:$0x1]
        %v2812 = vld [vmem:[%s222 + $0x1bd] sm:$0x1]
        %v2813 = vld [vmem:[%s222 + $0x1cd] sm:$0x1]
        %v2814 = vld [vmem:[%s222 + $0x1dd] sm:$0x1]
        %v2815 = vld [vmem:[%s222 + $0x1ed] sm:$0x1]
        %v2816 = vld [vmem:[%s222 + $0x1fd] sm:$0x1]
        %v2849 = vrot.slane %v2786, 7
        %v2850 = vsel %vm387, %v2849, %v2785
        %v2851 = vrot.slane %v2787, 6
        %v2852 = vsel %vm390, %v2851, %v2850
        %v2853 = vrot.slane %v2788, 5
        %v2854 = vsel %vm393, %v2853, %v2852
        %v2855 = vrot.slane %v2789, 4
        %v2856 = vsel %vm396, %v2855, %v2854
        %v2857 = vrot.slane %v2790, 3
        %v2858 = vsel %vm399, %v2857, %v2856
        %v2859 = vrot.slane %v2791, 2
        %v2860 = vsel %vm402, %v2859, %v2858
        %v2861 = vrot.slane %v2792, 1
        %v2862 = vsel %vm405, %v2861, %v2860
        %v2863 = vrot.slane %v2794, 7
        %v2864 = vsel %vm387, %v2863, %v2793
        %v2865 = vrot.slane %v2795, 6
        %v2866 = vsel %vm390, %v2865, %v2864
        %v2867 = vrot.slane %v2796, 5
        %v2868 = vsel %vm393, %v2867, %v2866
        %v2869 = vrot.slane %v2797, 4
        %v2870 = vsel %vm396, %v2869, %v2868
        %v2871 = vrot.slane %v2798, 3
        %v2872 = vsel %vm399, %v2871, %v2870
        %v2873 = vrot.slane %v2799, 2
        %v2874 = vsel %vm402, %v2873, %v2872
        %v2875 = vrot.slane %v2800, 1
        %v2876 = vsel %vm405, %v2875, %v2874
        %v2877 = vrot.slane %v2802, 7
        %v2878 = vsel %vm387, %v2877, %v2801
        %v2879 = vrot.slane %v2803, 6
        %v2880 = vsel %vm390, %v2879, %v2878
        %v2881 = vrot.slane %v2804, 5
        %v2882 = vsel %vm393, %v2881, %v2880
        %v2883 = vrot.slane %v2805, 4
        %v2884 = vsel %vm396, %v2883, %v2882
        %v2885 = vrot.slane %v2806, 3
        %v2886 = vsel %vm399, %v2885, %v2884
        %v2887 = vrot.slane %v2807, 2
        %v2888 = vsel %vm402, %v2887, %v2886
        %v2889 = vrot.slane %v2808, 1
        %v2890 = vsel %vm405, %v2889, %v2888
        %v2891 = vrot.slane %v2810, 7
        %v2892 = vsel %vm387, %v2891, %v2809
        %v2893 = vrot.slane %v2811, 6
        %v2894 = vsel %vm390, %v2893, %v2892
        %v2895 = vrot.slane %v2812, 5
        %v2896 = vsel %vm393, %v2895, %v2894
        %v2897 = vrot.slane %v2813, 4
        %v2898 = vsel %vm396, %v2897, %v2896
        %v2899 = vrot.slane %v2814, 3
        %v2900 = vsel %vm399, %v2899, %v2898
        %v2901 = vrot.slane %v2815, 2
        %v2902 = vsel %vm402, %v2901, %v2900
        %v2903 = vrot.slane %v2816, 1
        %v2904 = vsel %vm405, %v2903, %v2902
        %2909 = vxpose.xlu0.b32.start [1/16] %v2862, 128
        %2910 = vxpose.xlu0.b32.cont [2/16] %v2876, 128
        %2911 = vxpose.xlu0.b32.cont [3/16] %v2890, 128
        %2912 = vxpose.xlu0.b32.cont [4/16] %v2904, 128
        %2913 = vxpose.xlu0.b32.cont [5/16] 0.0, 128
        %2914 = vxpose.xlu0.b32.cont [6/16] 0.0, 128
        %2915 = vxpose.xlu0.b32.cont [7/16] 0.0, 128
        %2916 = vxpose.xlu0.b32.cont [8/16] 0.0, 128
        %2917 = vxpose.xlu0.b32.cont [9/16] 0.0, 128
        %2918 = vxpose.xlu0.b32.cont [10/16] 0.0, 128
        %2919 = vxpose.xlu0.b32.cont [11/16] 0.0, 128
        %2920 = vxpose.xlu0.b32.cont [12/16] 0.0, 128
        %2921 = vxpose.xlu0.b32.cont [13/16] 0.0, 128
        %2922 = vxpose.xlu0.b32.cont [14/16] 0.0, 128
        %2923 = vxpose.xlu0.b32.cont [15/16] 0.0, 128
        %2924 = vxpose.xlu0.b32.end [16/16] 0.0, 128
        %v2925 = vpop.trf.xlu0
        %v2926 = vpop.trf.xlu0
        %v2927 = vpop.trf.xlu0
        %v2928 = vpop.trf.xlu0
        %v2929 = vpop.trf.xlu0
        %v2930 = vpop.trf.xlu0
        %v2931 = vpop.trf.xlu0
        %v2932 = vpop.trf.xlu0
        %v2933 = vpop.trf.xlu0
        %v2934 = vpop.trf.xlu0
        %v2935 = vpop.trf.xlu0
        %v2936 = vpop.trf.xlu0
        %v2937 = vpop.trf.xlu0
        %v2938 = vpop.trf.xlu0
        %v2939 = vpop.trf.xlu0
        %v2940 = vpop.trf.xlu0
        %v2941 = vpack.c.bf16 %v2925, %v2925
        %v2942 = vpack.c.bf16 %v2926, %v2926
        %v2944 = vshrl.u32 %v2941, 16
        %v2946 = vrot.slane %v2944, 5
        %v2947 = vshll.u32 %v2941, 16
        %v2949 = vrot.slane %v2947, 6
        %v2950 = vor.u32 %v2946, %v2949
        %v2951 = vrot.slane %v2950, 4
        %v2953 = vshrl.u32 %v2942, 16
        %v2955 = vrot.slane %v2953, 5
        %v2956 = vshll.u32 %v2942, 16
        %v2958 = vrot.slane %v2956, 6
        %v2959 = vor.u32 %v2955, %v2958
        %v2960 = vsel %vm684, %v2951, %v2959
        %v2961 = vrot.slane %v2959, 4
        %v2965 = vld [vmem:[#allocation2 + $0x7c] sm:$0xc]
        %v2966 = vsel %vm709, %v2950, %v2965
        %2967 = vst [vmem:[#allocation2 + $0x7c] sm:$0xc] %v2966
        %2968 = vst.msk [vmem:[#allocation2 + $0x80] sm:$0xf] %vm224, %v2960
        %v2969 = vld [vmem:[#allocation2 + $0x84] sm:$0x7]
        %v2970 = vsel %vm715, %v2961, %v2969
        %2971 = vst [vmem:[#allocation2 + $0x84] sm:$0x7] %v2970
        %v2972 = vld [vmem:[%s222 + $0xe] sm:$0x1]
        %v2973 = vld [vmem:[%s222 + $0x1e] sm:$0x1]
        %v2974 = vld [vmem:[%s222 + $0x2e] sm:$0x1]
        %v2975 = vld [vmem:[%s222 + $0x3e] sm:$0x1]
        %v2976 = vld [vmem:[%s222 + $0x4e] sm:$0x1]
        %v2977 = vld [vmem:[%s222 + $0x5e] sm:$0x1]
        %v2978 = vld [vmem:[%s222 + $0x6e] sm:$0x1]
        %v2979 = vld [vmem:[%s222 + $0x7e] sm:$0x1]
        %v2980 = vld [vmem:[%s222 + $0x8e] sm:$0x1]
        %v2981 = vld [vmem:[%s222 + $0x9e] sm:$0x1]
        %v2982 = vld [vmem:[%s222 + $0xae] sm:$0x1]
        %v2983 = vld [vmem:[%s222 + $0xbe] sm:$0x1]
        %v2984 = vld [vmem:[%s222 + $0xce] sm:$0x1]
        %v2985 = vld [vmem:[%s222 + $0xde] sm:$0x1]
        %v2986 = vld [vmem:[%s222 + $0xee] sm:$0x1]
        %v2987 = vld [vmem:[%s222 + $0xfe] sm:$0x1]
        %v2988 = vld [vmem:[%s222 + $0x10e] sm:$0x1]
        %v2989 = vld [vmem:[%s222 + $0x11e] sm:$0x1]
        %v2990 = vld [vmem:[%s222 + $0x12e] sm:$0x1]
        %v2991 = vld [vmem:[%s222 + $0x13e] sm:$0x1]
        %v2992 = vld [vmem:[%s222 + $0x14e] sm:$0x1]
        %v2993 = vld [vmem:[%s222 + $0x15e] sm:$0x1]
        %v2994 = vld [vmem:[%s222 + $0x16e] sm:$0x1]
        %v2995 = vld [vmem:[%s222 + $0x17e] sm:$0x1]
        %v2996 = vld [vmem:[%s222 + $0x18e] sm:$0x1]
        %v2997 = vld [vmem:[%s222 + $0x19e] sm:$0x1]
        %v2998 = vld [vmem:[%s222 + $0x1ae] sm:$0x1]
        %v2999 = vld [vmem:[%s222 + $0x1be] sm:$0x1]
        %v3000 = vld [vmem:[%s222 + $0x1ce] sm:$0x1]
        %v3001 = vld [vmem:[%s222 + $0x1de] sm:$0x1]
        %v3002 = vld [vmem:[%s222 + $0x1ee] sm:$0x1]
        %v3003 = vld [vmem:[%s222 + $0x1fe] sm:$0x1]
        %v3036 = vrot.slane %v2973, 7
        %v3037 = vsel %vm387, %v3036, %v2972
        %v3038 = vrot.slane %v2974, 6
        %v3039 = vsel %vm390, %v3038, %v3037
        %v3040 = vrot.slane %v2975, 5
        %v3041 = vsel %vm393, %v3040, %v3039
        %v3042 = vrot.slane %v2976, 4
        %v3043 = vsel %vm396, %v3042, %v3041
        %v3044 = vrot.slane %v2977, 3
        %v3045 = vsel %vm399, %v3044, %v3043
        %v3046 = vrot.slane %v2978, 2
        %v3047 = vsel %vm402, %v3046, %v3045
        %v3048 = vrot.slane %v2979, 1
        %v3049 = vsel %vm405, %v3048, %v3047
        %v3050 = vrot.slane %v2981, 7
        %v3051 = vsel %vm387, %v3050, %v2980
        %v3052 = vrot.slane %v2982, 6
        %v3053 = vsel %vm390, %v3052, %v3051
        %v3054 = vrot.slane %v2983, 5
        %v3055 = vsel %vm393, %v3054, %v3053
        %v3056 = vrot.slane %v2984, 4
        %v3057 = vsel %vm396, %v3056, %v3055
        %v3058 = vrot.slane %v2985, 3
        %v3059 = vsel %vm399, %v3058, %v3057
        %v3060 = vrot.slane %v2986, 2
        %v3061 = vsel %vm402, %v3060, %v3059
        %v3062 = vrot.slane %v2987, 1
        %v3063 = vsel %vm405, %v3062, %v3061
        %v3064 = vrot.slane %v2989, 7
        %v3065 = vsel %vm387, %v3064, %v2988
        %v3066 = vrot.slane %v2990, 6
        %v3067 = vsel %vm390, %v3066, %v3065
        %v3068 = vrot.slane %v2991, 5
        %v3069 = vsel %vm393, %v3068, %v3067
        %v3070 = vrot.slane %v2992, 4
        %v3071 = vsel %vm396, %v3070, %v3069
        %v3072 = vrot.slane %v2993, 3
        %v3073 = vsel %vm399, %v3072, %v3071
        %v3074 = vrot.slane %v2994, 2
        %v3075 = vsel %vm402, %v3074, %v3073
        %v3076 = vrot.slane %v2995, 1
        %v3077 = vsel %vm405, %v3076, %v3075
        %v3078 = vrot.slane %v2997, 7
        %v3079 = vsel %vm387, %v3078, %v2996
        %v3080 = vrot.slane %v2998, 6
        %v3081 = vsel %vm390, %v3080, %v3079
        %v3082 = vrot.slane %v2999, 5
        %v3083 = vsel %vm393, %v3082, %v3081
        %v3084 = vrot.slane %v3000, 4
        %v3085 = vsel %vm396, %v3084, %v3083
        %v3086 = vrot.slane %v3001, 3
        %v3087 = vsel %vm399, %v3086, %v3085
        %v3088 = vrot.slane %v3002, 2
        %v3089 = vsel %vm402, %v3088, %v3087
        %v3090 = vrot.slane %v3003, 1
        %v3091 = vsel %vm405, %v3090, %v3089
        %3096 = vxpose.xlu0.b32.start [1/16] %v3049, 128
        %3097 = vxpose.xlu0.b32.cont [2/16] %v3063, 128
        %3098 = vxpose.xlu0.b32.cont [3/16] %v3077, 128
        %3099 = vxpose.xlu0.b32.cont [4/16] %v3091, 128
        %3100 = vxpose.xlu0.b32.cont [5/16] 0.0, 128
        %3101 = vxpose.xlu0.b32.cont [6/16] 0.0, 128
        %3102 = vxpose.xlu0.b32.cont [7/16] 0.0, 128
        %3103 = vxpose.xlu0.b32.cont [8/16] 0.0, 128
        %3104 = vxpose.xlu0.b32.cont [9/16] 0.0, 128
        %3105 = vxpose.xlu0.b32.cont [10/16] 0.0, 128
        %3106 = vxpose.xlu0.b32.cont [11/16] 0.0, 128
        %3107 = vxpose.xlu0.b32.cont [12/16] 0.0, 128
        %3108 = vxpose.xlu0.b32.cont [13/16] 0.0, 128
        %3109 = vxpose.xlu0.b32.cont [14/16] 0.0, 128
        %3110 = vxpose.xlu0.b32.cont [15/16] 0.0, 128
        %3111 = vxpose.xlu0.b32.end [16/16] 0.0, 128
        %v3112 = vpop.trf.xlu0
        %v3113 = vpop.trf.xlu0
        %v3114 = vpop.trf.xlu0
        %v3115 = vpop.trf.xlu0
        %v3116 = vpop.trf.xlu0
        %v3117 = vpop.trf.xlu0
        %v3118 = vpop.trf.xlu0
        %v3119 = vpop.trf.xlu0
        %v3120 = vpop.trf.xlu0
        %v3121 = vpop.trf.xlu0
        %v3122 = vpop.trf.xlu0
        %v3123 = vpop.trf.xlu0
        %v3124 = vpop.trf.xlu0
        %v3125 = vpop.trf.xlu0
        %v3126 = vpop.trf.xlu0
        %v3127 = vpop.trf.xlu0
        %v3128 = vpack.c.bf16 %v3112, %v3112
        %v3129 = vpack.c.bf16 %v3113, %v3113
        %v3131 = vshll.u32 %v3128, 16
        %v3133 = vrot.slane %v3131, 5
        %v3134 = vshrl.u32 %v3128, 16
        %v3136 = vrot.slane %v3134, 4
        %v3137 = vor.u32 %v3136, %v3133
        %v3138 = vrot.slane %v3137, 4
        %v3140 = vshll.u32 %v3129, 16
        %v3142 = vrot.slane %v3140, 5
        %v3143 = vsel %vm879, %v3138, %v3142
        %v3144 = vshrl.u32 %v3129, 16
        %v3146 = vrot.slane %v3144, 4
        %v3147 = vor.u32 %v3146, %v3142
        %v3148 = vrot.slane %v3147, 4
        %v3152 = vld [vmem:[#allocation2 + $0x84] sm:$0x8]
        %v3153 = vsel %vm904, %v3133, %v3152
        %3154 = vst [vmem:[#allocation2 + $0x84] sm:$0x8] %v3153
        %3155 = vst.msk [vmem:[#allocation2 + $0x88] sm:$0xf] %vm224, %v3143
        %v3156 = vld [vmem:[#allocation2 + $0x8c] sm:$0xf]
        %v3157 = vsel %vm910, %v3148, %v3156
        %3158 = vst [vmem:[#allocation2 + $0x8c] sm:$0xf] %v3157
        %v3159 = vld [vmem:[%s222 + $0xf] sm:$0x1]
        %v3160 = vld [vmem:[%s222 + $0x1f] sm:$0x1]
        %v3161 = vld [vmem:[%s222 + $0x2f] sm:$0x1]
        %v3162 = vld [vmem:[%s222 + $0x3f] sm:$0x1]
        %v3163 = vld [vmem:[%s222 + $0x4f] sm:$0x1]
        %v3164 = vld [vmem:[%s222 + $0x5f] sm:$0x1]
        %v3165 = vld [vmem:[%s222 + $0x6f] sm:$0x1]
        %v3166 = vld [vmem:[%s222 + $0x7f] sm:$0x1]
        %v3167 = vld [vmem:[%s222 + $0x8f] sm:$0x1]
        %v3168 = vld [vmem:[%s222 + $0x9f] sm:$0x1]
        %v3169 = vld [vmem:[%s222 + $0xaf] sm:$0x1]
        %v3170 = vld [vmem:[%s222 + $0xbf] sm:$0x1]
        %v3171 = vld [vmem:[%s222 + $0xcf] sm:$0x1]
        %v3172 = vld [vmem:[%s222 + $0xdf] sm:$0x1]
        %v3173 = vld [vmem:[%s222 + $0xef] sm:$0x1]
        %v3174 = vld [vmem:[%s222 + $0xff] sm:$0x1]
        %v3175 = vld [vmem:[%s222 + $0x10f] sm:$0x1]
        %v3176 = vld [vmem:[%s222 + $0x11f] sm:$0x1]
        %v3177 = vld [vmem:[%s222 + $0x12f] sm:$0x1]
        %v3178 = vld [vmem:[%s222 + $0x13f] sm:$0x1]
        %v3179 = vld [vmem:[%s222 + $0x14f] sm:$0x1]
        %v3180 = vld [vmem:[%s222 + $0x15f] sm:$0x1]
        %v3181 = vld [vmem:[%s222 + $0x16f] sm:$0x1]
        %v3182 = vld [vmem:[%s222 + $0x17f] sm:$0x1]
        %v3183 = vld [vmem:[%s222 + $0x18f] sm:$0x1]
        %v3184 = vld [vmem:[%s222 + $0x19f] sm:$0x1]
        %v3185 = vld [vmem:[%s222 + $0x1af] sm:$0x1]
        %v3186 = vld [vmem:[%s222 + $0x1bf] sm:$0x1]
        %v3187 = vld [vmem:[%s222 + $0x1cf] sm:$0x1]
        %v3188 = vld [vmem:[%s222 + $0x1df] sm:$0x1]
        %v3189 = vld [vmem:[%s222 + $0x1ef] sm:$0x1]
        %v3190 = vld [vmem:[%s222 + $0x1ff] sm:$0x1]
        %v3223 = vrot.slane %v3160, 7
        %v3224 = vsel %vm387, %v3223, %v3159
        %v3225 = vrot.slane %v3161, 6
        %v3226 = vsel %vm390, %v3225, %v3224
        %v3227 = vrot.slane %v3162, 5
        %v3228 = vsel %vm393, %v3227, %v3226
        %v3229 = vrot.slane %v3163, 4
        %v3230 = vsel %vm396, %v3229, %v3228
        %v3231 = vrot.slane %v3164, 3
        %v3232 = vsel %vm399, %v3231, %v3230
        %v3233 = vrot.slane %v3165, 2
        %v3234 = vsel %vm402, %v3233, %v3232
        %v3235 = vrot.slane %v3166, 1
        %v3236 = vsel %vm405, %v3235, %v3234
        %v3237 = vrot.slane %v3168, 7
        %v3238 = vsel %vm387, %v3237, %v3167
        %v3239 = vrot.slane %v3169, 6
        %v3240 = vsel %vm390, %v3239, %v3238
        %v3241 = vrot.slane %v3170, 5
        %v3242 = vsel %vm393, %v3241, %v3240
        %v3243 = vrot.slane %v3171, 4
        %v3244 = vsel %vm396, %v3243, %v3242
        %v3245 = vrot.slane %v3172, 3
        %v3246 = vsel %vm399, %v3245, %v3244
        %v3247 = vrot.slane %v3173, 2
        %v3248 = vsel %vm402, %v3247, %v3246
        %v3249 = vrot.slane %v3174, 1
        %v3250 = vsel %vm405, %v3249, %v3248
        %v3251 = vrot.slane %v3176, 7
        %v3252 = vsel %vm387, %v3251, %v3175
        %v3253 = vrot.slane %v3177, 6
        %v3254 = vsel %vm390, %v3253, %v3252
        %v3255 = vrot.slane %v3178, 5
        %v3256 = vsel %vm393, %v3255, %v3254
        %v3257 = vrot.slane %v3179, 4
        %v3258 = vsel %vm396, %v3257, %v3256
        %v3259 = vrot.slane %v3180, 3
        %v3260 = vsel %vm399, %v3259, %v3258
        %v3261 = vrot.slane %v3181, 2
        %v3262 = vsel %vm402, %v3261, %v3260
        %v3263 = vrot.slane %v3182, 1
        %v3264 = vsel %vm405, %v3263, %v3262
        %v3265 = vrot.slane %v3184, 7
        %v3266 = vsel %vm387, %v3265, %v3183
        %v3267 = vrot.slane %v3185, 6
        %v3268 = vsel %vm390, %v3267, %v3266
        %v3269 = vrot.slane %v3186, 5
        %v3270 = vsel %vm393, %v3269, %v3268
        %v3271 = vrot.slane %v3187, 4
        %v3272 = vsel %vm396, %v3271, %v3270
        %v3273 = vrot.slane %v3188, 3
        %v3274 = vsel %vm399, %v3273, %v3272
        %v3275 = vrot.slane %v3189, 2
        %v3276 = vsel %vm402, %v3275, %v3274
        %v3277 = vrot.slane %v3190, 1
        %v3278 = vsel %vm405, %v3277, %v3276
        %3283 = vxpose.xlu0.b32.start [1/16] %v3236, 128
        %3284 = vxpose.xlu0.b32.cont [2/16] %v3250, 128
        %3285 = vxpose.xlu0.b32.cont [3/16] %v3264, 128
        %3286 = vxpose.xlu0.b32.cont [4/16] %v3278, 128
        %3287 = vxpose.xlu0.b32.cont [5/16] 0.0, 128
        %3288 = vxpose.xlu0.b32.cont [6/16] 0.0, 128
        %3289 = vxpose.xlu0.b32.cont [7/16] 0.0, 128
        %3290 = vxpose.xlu0.b32.cont [8/16] 0.0, 128
        %3291 = vxpose.xlu0.b32.cont [9/16] 0.0, 128
        %3292 = vxpose.xlu0.b32.cont [10/16] 0.0, 128
        %3293 = vxpose.xlu0.b32.cont [11/16] 0.0, 128
        %3294 = vxpose.xlu0.b32.cont [12/16] 0.0, 128
        %3295 = vxpose.xlu0.b32.cont [13/16] 0.0, 128
        %3296 = vxpose.xlu0.b32.cont [14/16] 0.0, 128
        %3297 = vxpose.xlu0.b32.cont [15/16] 0.0, 128
        %3298 = vxpose.xlu0.b32.end [16/16] 0.0, 128
        %v3299 = vpop.trf.xlu0
        %v3300 = vpop.trf.xlu0
        %v3301 = vpop.trf.xlu0
        %v3302 = vpop.trf.xlu0
        %v3303 = vpop.trf.xlu0
        %v3304 = vpop.trf.xlu0
        %v3305 = vpop.trf.xlu0
        %v3306 = vpop.trf.xlu0
        %v3307 = vpop.trf.xlu0
        %v3308 = vpop.trf.xlu0
        %v3309 = vpop.trf.xlu0
        %v3310 = vpop.trf.xlu0
        %v3311 = vpop.trf.xlu0
        %v3312 = vpop.trf.xlu0
        %v3313 = vpop.trf.xlu0
        %v3314 = vpop.trf.xlu0
        %v3315 = vpack.c.bf16 %v3299, %v3299
        %v3316 = vpack.c.bf16 %v3300, %v3300
        %v3318 = vshrl.u32 %v3315, 16
        %v3320 = vrot.slane %v3318, 7
        %v3321 = vshll.u32 %v3315, 16
        %v3323 = vor.u32 %v3320, %v3321
        %v3324 = vrot.slane %v3320, 4
        %v3326 = vshrl.u32 %v3316, 16
        %v3328 = vrot.slane %v3326, 7
        %v3329 = vshll.u32 %v3316, 16
        %v3331 = vor.u32 %v3328, %v3329
        %v3332 = vsel %vm1074, %v3324, %v3331
        %v3333 = vrot.slane %v3328, 4
        %v3337 = vld [vmem:[#allocation2 + $0x90] sm:$0xf]
        %v3338 = vsel %vm1096, %v3323, %v3337
        %3339 = vst [vmem:[#allocation2 + $0x90] sm:$0xf] %v3338
        %3340 = vst.msk [vmem:[#allocation2 + $0x94] sm:$0xf] %vm224, %v3332
        %v3341 = vld [vmem:[#allocation2 + $0x98] sm:$0x1]
        %v3342 = vsel %vm1102, %v3333, %v3341
        %3343 = vst [vmem:[#allocation2 + $0x98] sm:$0x1] %v3342
        %v3344 = vld [vmem:[%s2] sm:$0x1]
        %v3345 = vld [vmem:[#allocation2] sm:$0xf]
        %v3346 = vld [vmem:[#allocation2 + $0x4] sm:$0xf]
        %v3347 = vld [vmem:[#allocation2 + $0x8] sm:$0xf]
        %v3348 = vld [vmem:[#allocation2 + $0xc] sm:$0xf]
        %v3349 = vld [vmem:[#allocation2 + $0x10] sm:$0xf]
        %v3350 = vld [vmem:[#allocation2 + $0x14] sm:$0xf]
        %v3351 = vld [vmem:[#allocation2 + $0x18] sm:$0xf]
        %v3352 = vld [vmem:[#allocation2 + $0x1c] sm:$0xf]
        %v3353 = vld [vmem:[#allocation2 + $0x20] sm:$0xf]
        %v3354 = vld [vmem:[#allocation2 + $0x24] sm:$0xf]
        %v3355 = vld [vmem:[#allocation2 + $0x28] sm:$0xf]
        %v3356 = vld [vmem:[#allocation2 + $0x2c] sm:$0xf]
        %v3357 = vld [vmem:[#allocation2 + $0x30] sm:$0xf]
        %v3358 = vld [vmem:[#allocation2 + $0x34] sm:$0xf]
        %v3359 = vld [vmem:[#allocation2 + $0x38] sm:$0xf]
        %v3360 = vld [vmem:[#allocation2 + $0x3c] sm:$0xf]
        %v3361 = vld [vmem:[#allocation2 + $0x40] sm:$0xf]
        %v3362 = vld [vmem:[#allocation2 + $0x44] sm:$0xf]
        %v3363 = vld [vmem:[#allocation2 + $0x48] sm:$0xf]
        %v3364 = vld [vmem:[#allocation2 + $0x4c] sm:$0xf]
        %v3365 = vld [vmem:[#allocation2 + $0x50] sm:$0xf]
        %v3366 = vld [vmem:[#allocation2 + $0x54] sm:$0xf]
        %v3367 = vld [vmem:[#allocation2 + $0x58] sm:$0xf]
        %v3368 = vld [vmem:[#allocation2 + $0x5c] sm:$0xf]
        %v3369 = vld [vmem:[#allocation2 + $0x60] sm:$0xf]
        %v3370 = vld [vmem:[#allocation2 + $0x64] sm:$0xf]
        %v3371 = vld [vmem:[#allocation2 + $0x68] sm:$0xf]
        %v3372 = vld [vmem:[#allocation2 + $0x6c] sm:$0xf]
        %v3373 = vld [vmem:[#allocation2 + $0x70] sm:$0xf]
        %v3374 = vld [vmem:[#allocation2 + $0x74] sm:$0xf]
        %v3375 = vld [vmem:[#allocation2 + $0x78] sm:$0xf]
        %v3376 = vld [vmem:[#allocation2 + $0x7c] sm:$0xf]
        %v3377 = vld [vmem:[#allocation2 + $0x80] sm:$0xf]
        %v3378 = vld [vmem:[#allocation2 + $0x84] sm:$0xf]
        %v3379 = vld [vmem:[#allocation2 + $0x88] sm:$0xf]
        %v3380 = vld [vmem:[#allocation2 + $0x8c] sm:$0xf]
        %v3381 = vld [vmem:[%s1] sm:$0xf]
        %v3382 = vld [vmem:[%s1 + $0x4] sm:$0xf]
        %v3383 = vld [vmem:[%s1 + $0x8] sm:$0xf]
        %v3384 = vld [vmem:[%s1 + $0xc] sm:$0xf]
        %v3385 = vld [vmem:[#allocation2 + $0x90] sm:$0x1]
        %s3386 = scalar_lea.vmem %s1, 16
        %v3387 = vld [vmem:[%s3386] sm:$0xf]
        %v3388 = vld [vmem:[%s3386 + $0x4] sm:$0xf]
        %v3389 = vld [vmem:[%s3386 + $0x8] sm:$0xf]
        %v3390 = vld [vmem:[%s3386 + $0xc] sm:$0xf]
        %v3428 = vunpack.c.l.b16 %v3345
        %v3429 = vunpack.c.l.b16 %v3346
        %v3430 = vunpack.c.l.b16 %v3347
        %v3431 = vunpack.c.l.b16 %v3348
        %v3432 = vunpack.c.l.b16 %v3349
        %v3433 = vunpack.c.l.b16 %v3350
        %v3434 = vunpack.c.l.b16 %v3351
        %v3435 = vunpack.c.l.b16 %v3352
        %v3436 = vunpack.c.l.b16 %v3353
        %v3437 = vunpack.c.l.b16 %v3354
        %v3438 = vunpack.c.l.b16 %v3355
        %v3439 = vunpack.c.l.b16 %v3356
        %v3440 = vunpack.c.l.b16 %v3357
        %v3441 = vunpack.c.l.b16 %v3358
        %v3442 = vunpack.c.l.b16 %v3359
        %v3443 = vunpack.c.l.b16 %v3360
        %v3444 = vunpack.c.l.b16 %v3361
        %v3445 = vunpack.c.l.b16 %v3362
        %v3446 = vunpack.c.l.b16 %v3363
        %v3447 = vunpack.c.l.b16 %v3364
        %v3448 = vunpack.c.l.b16 %v3365
        %v3449 = vunpack.c.l.b16 %v3366
        %v3450 = vunpack.c.l.b16 %v3367
        %v3451 = vunpack.c.l.b16 %v3368
        %v3452 = vunpack.c.l.b16 %v3369
        %v3453 = vunpack.c.l.b16 %v3370
        %v3454 = vunpack.c.l.b16 %v3371
        %v3455 = vunpack.c.l.b16 %v3372
        %v3456 = vunpack.c.l.b16 %v3373
        %v3457 = vunpack.c.l.b16 %v3374
        %v3458 = vunpack.c.l.b16 %v3375
        %v3459 = vunpack.c.l.b16 %v3376
        %v3460 = vunpack.c.l.b16 %v3377
        %v3461 = vunpack.c.l.b16 %v3378
        %v3462 = vunpack.c.l.b16 %v3379
        %v3463 = vunpack.c.l.b16 %v3380
        %v3464 = vunpack.c.l.b16 %v3385
        %v3465 = vpack.c.b16 %v3429, %v3428
        %v3466 = vpack.c.b16 %v3431, %v3430
        %v3467 = vpack.c.b16 %v3433, %v3432
        %v3468 = vpack.c.b16 %v3435, %v3434
        %v3469 = vpack.c.b16 %v3437, %v3436
        %v3470 = vpack.c.b16 %v3439, %v3438
        %v3471 = vpack.c.b16 %v3441, %v3440
        %v3472 = vpack.c.b16 %v3443, %v3442
        %v3473 = vpack.c.b16 %v3445, %v3444
        %v3474 = vpack.c.b16 %v3447, %v3446
        %v3475 = vpack.c.b16 %v3449, %v3448
        %v3476 = vpack.c.b16 %v3451, %v3450
        %v3477 = vpack.c.b16 %v3453, %v3452
        %v3478 = vpack.c.b16 %v3455, %v3454
        %v3479 = vpack.c.b16 %v3457, %v3456
        %v3480 = vpack.c.b16 %v3459, %v3458
        %v3481 = vpack.c.b16 %v3461, %v3460
        %v3482 = vpack.c.b16 %v3463, %v3462
        %v3483 = vpack.c.b16 %v3464, %v3464
        %vm3484 = vsmask.f32 7424
        %v3486 = vshrl.u32 %v3465, 16
        %v3488 = vshll.u32 %v3465, 16
        %v3490 = vrot.slane %v3488, 1
        %v3491 = vor.u32 %v3486, %v3490
        %v3493 = vshll.u32 %v3466, 16
        %v3495 = vrot.slane %v3493, 1
        %v3496 = vsel %vm3484, %v3491, %v3495
        %v3497 = vshrl.u32 %v3466, 16
        %v3499 = vor.u32 %v3497, %v3495
        %v3501 = vshll.u32 %v3467, 16
        %v3503 = vrot.slane %v3501, 1
        %v3504 = vsel %vm3484, %v3499, %v3503
        %v3505 = vshrl.u32 %v3467, 16
        %v3507 = vor.u32 %v3505, %v3503
        %v3509 = vshll.u32 %v3468, 16
        %v3511 = vrot.slane %v3509, 1
        %v3512 = vsel %vm3484, %v3507, %v3511
        %v3513 = vshrl.u32 %v3468, 16
        %v3515 = vor.u32 %v3513, %v3511
        %v3517 = vshll.u32 %v3469, 16
        %v3519 = vrot.slane %v3517, 1
        %v3520 = vsel %vm3484, %v3515, %v3519
        %v3521 = vshrl.u32 %v3469, 16
        %v3523 = vor.u32 %v3521, %v3519
        %v3525 = vshll.u32 %v3470, 16
        %v3527 = vrot.slane %v3525, 1
        %v3528 = vsel %vm3484, %v3523, %v3527
        %v3529 = vshrl.u32 %v3470, 16
        %v3531 = vor.u32 %v3529, %v3527
        %v3533 = vshll.u32 %v3471, 16
        %v3535 = vrot.slane %v3533, 1
        %v3536 = vsel %vm3484, %v3531, %v3535
        %v3537 = vshrl.u32 %v3471, 16
        %v3539 = vor.u32 %v3537, %v3535
        %v3541 = vshll.u32 %v3472, 16
        %v3543 = vrot.slane %v3541, 1
        %v3544 = vsel %vm3484, %v3539, %v3543
        %v3545 = vshrl.u32 %v3472, 16
        %v3547 = vor.u32 %v3545, %v3543
        %v3549 = vshll.u32 %v3473, 16
        %v3551 = vrot.slane %v3549, 1
        %v3552 = vsel %vm3484, %v3547, %v3551
        %v3553 = vshrl.u32 %v3473, 16
        %v3555 = vor.u32 %v3553, %v3551
        %v3557 = vshll.u32 %v3474, 16
        %v3559 = vrot.slane %v3557, 1
        %v3560 = vsel %vm3484, %v3555, %v3559
        %v3561 = vshrl.u32 %v3474, 16
        %v3563 = vor.u32 %v3561, %v3559
        %v3565 = vshll.u32 %v3475, 16
        %v3567 = vrot.slane %v3565, 1
        %v3568 = vsel %vm3484, %v3563, %v3567
        %v3569 = vshrl.u32 %v3475, 16
        %v3571 = vor.u32 %v3569, %v3567
        %v3573 = vshll.u32 %v3476, 16
        %v3575 = vrot.slane %v3573, 1
        %v3576 = vsel %vm3484, %v3571, %v3575
        %v3577 = vshrl.u32 %v3476, 16
        %v3579 = vor.u32 %v3577, %v3575
        %v3581 = vshll.u32 %v3477, 16
        %v3583 = vrot.slane %v3581, 1
        %v3584 = vsel %vm3484, %v3579, %v3583
        %v3585 = vshrl.u32 %v3477, 16
        %v3587 = vor.u32 %v3585, %v3583
        %v3589 = vshll.u32 %v3478, 16
        %v3591 = vrot.slane %v3589, 1
        %v3592 = vsel %vm3484, %v3587, %v3591
        %v3593 = vshrl.u32 %v3478, 16
        %v3595 = vor.u32 %v3593, %v3591
        %v3597 = vshll.u32 %v3479, 16
        %v3599 = vrot.slane %v3597, 1
        %v3600 = vsel %vm3484, %v3595, %v3599
        %v3601 = vshrl.u32 %v3479, 16
        %v3603 = vor.u32 %v3601, %v3599
        %v3605 = vshll.u32 %v3480, 16
        %v3607 = vrot.slane %v3605, 1
        %v3608 = vsel %vm3484, %v3603, %v3607
        %v3609 = vshrl.u32 %v3480, 16
        %v3611 = vor.u32 %v3609, %v3607
        %v3613 = vshll.u32 %v3481, 16
        %v3615 = vrot.slane %v3613, 1
        %v3616 = vsel %vm3484, %v3611, %v3615
        %v3617 = vshrl.u32 %v3481, 16
        %v3619 = vor.u32 %v3617, %v3615
        %v3621 = vshll.u32 %v3482, 16
        %v3623 = vrot.slane %v3621, 1
        %v3624 = vsel %vm3484, %v3619, %v3623
        %v3625 = vshrl.u32 %v3482, 16
        %v3627 = vor.u32 %v3625, %v3623
        %v3629 = vshll.u32 %v3483, 16
        %v3631 = vrot.slane %v3629, 1
        %v3632 = vsel %vm3484, %v3627, %v3631
        %v3637 = vunpack.c.l.b16 %v3387
        %v3638 = vunpack.c.l.b16 %v3388
        %v3639 = vunpack.c.l.b16 %v3389
        %v3640 = vunpack.c.l.b16 %v3390
        %v3641 = vpack.c.b16 %v3638, %v3637
        %v3642 = vpack.c.b16 %v3640, %v3639
        %vm3645 = vcmask 261120
        %v3647 = vsel %vm3645, %v3496, 0
        %v3650 = vsel %vm3645, %v3504, 0
        %v3653 = vsel %vm3645, %v3512, 0
        %v3656 = vsel %vm3645, %v3520, 0
        %v3659 = vsel %vm3645, %v3528, 0
        %v3662 = vsel %vm3645, %v3536, 0
        %v3665 = vsel %vm3645, %v3544, 0
        %v3668 = vsel %vm3645, %v3552, 0
        %v3671 = vsel %vm3645, %v3560, 0
        %v3674 = vsel %vm3645, %v3568, 0
        %v3677 = vsel %vm3645, %v3576, 0
        %v3680 = vsel %vm3645, %v3584, 0
        %v3683 = vsel %vm3645, %v3592, 0
        %v3686 = vsel %vm3645, %v3600, 0
        %v3689 = vsel %vm3645, %v3608, 0
        %v3692 = vsel %vm3645, %v3616, 0
        %v3695 = vsel %vm3645, %v3624, 0
        %v3698 = vsel %vm3645, %v3632, 0
        %3700 = vmatpush.bf16.msra.mxu0 0
        %3701 = vmatpush.bf16.msra.mxu0 0
        %3702 = vmatpush.bf16.msra.mxu0 0
        %3703 = vmatpush.bf16.msra.mxu0 0
        %3704 = vmatpush.bf16.msra.mxu0 0
        %3705 = vmatpush.bf16.msra.mxu0 0
        %3706 = vmatpush.bf16.msra.mxu0 %v3642
        %3707 = vmatpush.bf16.msra.mxu0 %v3641
        %3708 = vmatmul.bf16.gmra.mxu0 %v3647
        %v3709 = vpop.f32.mrf.mxu0
        %v3710 = vadd.f32 0.0, %v3709
        %v3711 = vpop.f32.mrf.mxu0
        %v3712 = vadd.f32 0.0, %v3711
        %3713 = vmatmul.bf16.gmra.mxu0 %v3650
        %v3714 = vpop.f32.mrf.mxu0
        %v3715 = vadd.f32 0.0, %v3714
        %v3716 = vpop.f32.mrf.mxu0
        %v3717 = vadd.f32 0.0, %v3716
        %3718 = vmatmul.bf16.gmra.mxu0 %v3653
        %v3719 = vpop.f32.mrf.mxu0
        %v3720 = vadd.f32 0.0, %v3719
        %v3721 = vpop.f32.mrf.mxu0
        %v3722 = vadd.f32 0.0, %v3721
        %3723 = vmatmul.bf16.gmra.mxu0 %v3656
        %v3724 = vpop.f32.mrf.mxu0
        %v3725 = vadd.f32 0.0, %v3724
        %v3726 = vpop.f32.mrf.mxu0
        %v3727 = vadd.f32 0.0, %v3726
        %3728 = vmatmul.bf16.gmra.mxu0 %v3659
        %v3729 = vpop.f32.mrf.mxu0
        %v3730 = vadd.f32 0.0, %v3729
        %v3731 = vpop.f32.mrf.mxu0
        %v3732 = vadd.f32 0.0, %v3731
        %3733 = vmatmul.bf16.gmra.mxu0 %v3662
        %v3734 = vpop.f32.mrf.mxu0
        %v3735 = vadd.f32 0.0, %v3734
        %v3736 = vpop.f32.mrf.mxu0
        %v3737 = vadd.f32 0.0, %v3736
        %3738 = vmatmul.bf16.gmra.mxu0 %v3665
        %v3739 = vpop.f32.mrf.mxu0
        %v3740 = vadd.f32 0.0, %v3739
        %v3741 = vpop.f32.mrf.mxu0
        %v3742 = vadd.f32 0.0, %v3741
        %3743 = vmatmul.bf16.gmra.mxu0 %v3668
        %v3744 = vpop.f32.mrf.mxu0
        %v3745 = vadd.f32 0.0, %v3744
        %v3746 = vpop.f32.mrf.mxu0
        %v3747 = vadd.f32 0.0, %v3746
        %3748 = vmatmul.bf16.gmra.mxu0 %v3671
        %v3749 = vpop.f32.mrf.mxu0
        %v3750 = vadd.f32 0.0, %v3749
        %v3751 = vpop.f32.mrf.mxu0
        %v3752 = vadd.f32 0.0, %v3751
        %3753 = vmatmul.bf16.gmra.mxu0 %v3674
        %v3754 = vpop.f32.mrf.mxu0
        %v3755 = vadd.f32 0.0, %v3754
        %v3756 = vpop.f32.mrf.mxu0
        %v3757 = vadd.f32 0.0, %v3756
        %3758 = vmatmul.bf16.gmra.mxu0 %v3677
        %v3759 = vpop.f32.mrf.mxu0
        %v3760 = vadd.f32 0.0, %v3759
        %v3761 = vpop.f32.mrf.mxu0
        %v3762 = vadd.f32 0.0, %v3761
        %3763 = vmatmul.bf16.gmra.mxu0 %v3680
        %v3764 = vpop.f32.mrf.mxu0
        %v3765 = vadd.f32 0.0, %v3764
        %v3766 = vpop.f32.mrf.mxu0
        %v3767 = vadd.f32 0.0, %v3766
        %3768 = vmatmul.bf16.gmra.mxu0 %v3683
        %v3769 = vpop.f32.mrf.mxu0
        %v3770 = vadd.f32 0.0, %v3769
        %v3771 = vpop.f32.mrf.mxu0
        %v3772 = vadd.f32 0.0, %v3771
        %3773 = vmatmul.bf16.gmra.mxu0 %v3686
        %v3774 = vpop.f32.mrf.mxu0
        %v3775 = vadd.f32 0.0, %v3774
        %v3776 = vpop.f32.mrf.mxu0
        %v3777 = vadd.f32 0.0, %v3776
        %3778 = vmatmul.bf16.gmra.mxu0 %v3689
        %v3779 = vpop.f32.mrf.mxu0
        %v3780 = vadd.f32 0.0, %v3779
        %v3781 = vpop.f32.mrf.mxu0
        %v3782 = vadd.f32 0.0, %v3781
        %3783 = vmatmul.bf16.gmra.mxu0 %v3692
        %v3784 = vpop.f32.mrf.mxu0
        %v3785 = vadd.f32 0.0, %v3784
        %v3786 = vpop.f32.mrf.mxu0
        %v3787 = vadd.f32 0.0, %v3786
        %3788 = vmatmul.bf16.gmra.mxu0 %v3695
        %v3789 = vpop.f32.mrf.mxu0
        %v3790 = vadd.f32 0.0, %v3789
        %v3791 = vpop.f32.mrf.mxu0
        %v3792 = vadd.f32 0.0, %v3791
        %3793 = vmatmul.bf16.gmra.mxu0 %v3698
        %v3794 = vpop.f32.mrf.mxu0
        %v3795 = vadd.f32 0.0, %v3794
        %v3796 = vpop.f32.mrf.mxu0
        %v3797 = vadd.f32 0.0, %v3796
        %3798 = vdwg.mxu0
        %v3803 = vunpack.c.l.b16 %v3381
        %v3804 = vunpack.c.l.b16 %v3382
        %v3805 = vunpack.c.l.b16 %v3383
        %v3806 = vunpack.c.l.b16 %v3384
        %v3807 = vpack.c.b16 %v3804, %v3803
        %v3808 = vpack.c.b16 %v3806, %v3805
        %v3811 = vsel %vm3645, %v3465, 0
        %v3813 = vsel %vm3645, %v3466, 0
        %v3815 = vsel %vm3645, %v3467, 0
        %v3817 = vsel %vm3645, %v3468, 0
        %v3819 = vsel %vm3645, %v3469, 0
        %v3821 = vsel %vm3645, %v3470, 0
        %v3823 = vsel %vm3645, %v3471, 0
        %v3825 = vsel %vm3645, %v3472, 0
        %v3827 = vsel %vm3645, %v3473, 0
        %v3829 = vsel %vm3645, %v3474, 0
        %v3831 = vsel %vm3645, %v3475, 0
        %v3833 = vsel %vm3645, %v3476, 0
        %v3835 = vsel %vm3645, %v3477, 0
        %v3837 = vsel %vm3645, %v3478, 0
        %v3839 = vsel %vm3645, %v3479, 0
        %v3841 = vsel %vm3645, %v3480, 0
        %v3843 = vsel %vm3645, %v3481, 0
        %v3845 = vsel %vm3645, %v3482, 0
        %3847 = vmatpush.bf16.msra.mxu0 0
        %3848 = vmatpush.bf16.msra.mxu0 0
        %3849 = vmatpush.bf16.msra.mxu0 0
        %3850 = vmatpush.bf16.msra.mxu0 0
        %3851 = vmatpush.bf16.msra.mxu0 0
        %3852 = vmatpush.bf16.msra.mxu0 0
        %3853 = vmatpush.bf16.msra.mxu0 %v3808
        %3854 = vmatpush.bf16.msra.mxu0 %v3807
        %3855 = vmatmul.bf16.gmra.mxu0 %v3811
        %v3856 = vpop.f32.mrf.mxu0
        %v3857 = vadd.f32 %v3710, %v3856
        %v3858 = vpop.f32.mrf.mxu0
        %v3859 = vadd.f32 %v3712, %v3858
        %3860 = vmatmul.bf16.gmra.mxu0 %v3813
        %v3861 = vpop.f32.mrf.mxu0
        %v3862 = vadd.f32 %v3715, %v3861
        %v3863 = vpop.f32.mrf.mxu0
        %v3864 = vadd.f32 %v3717, %v3863
        %3865 = vmatmul.bf16.gmra.mxu0 %v3815
        %v3866 = vpop.f32.mrf.mxu0
        %v3867 = vadd.f32 %v3720, %v3866
        %v3868 = vpop.f32.mrf.mxu0
        %v3869 = vadd.f32 %v3722, %v3868
        %3870 = vmatmul.bf16.gmra.mxu0 %v3817
        %v3871 = vpop.f32.mrf.mxu0
        %v3872 = vadd.f32 %v3725, %v3871
        %v3873 = vpop.f32.mrf.mxu0
        %v3874 = vadd.f32 %v3727, %v3873
        %3875 = vmatmul.bf16.gmra.mxu0 %v3819
        %v3876 = vpop.f32.mrf.mxu0
        %v3877 = vadd.f32 %v3730, %v3876
        %v3878 = vpop.f32.mrf.mxu0
        %v3879 = vadd.f32 %v3732, %v3878
        %3880 = vmatmul.bf16.gmra.mxu0 %v3821
        %v3881 = vpop.f32.mrf.mxu0
        %v3882 = vadd.f32 %v3735, %v3881
        %v3883 = vpop.f32.mrf.mxu0
        %v3884 = vadd.f32 %v3737, %v3883
        %3885 = vmatmul.bf16.gmra.mxu0 %v3823
        %v3886 = vpop.f32.mrf.mxu0
        %v3887 = vadd.f32 %v3740, %v3886
        %v3888 = vpop.f32.mrf.mxu0
        %v3889 = vadd.f32 %v3742, %v3888
        %3890 = vmatmul.bf16.gmra.mxu0 %v3825
        %v3891 = vpop.f32.mrf.mxu0
        %v3892 = vadd.f32 %v3745, %v3891
        %v3893 = vpop.f32.mrf.mxu0
        %v3894 = vadd.f32 %v3747, %v3893
        %3895 = vmatmul.bf16.gmra.mxu0 %v3827
        %v3896 = vpop.f32.mrf.mxu0
        %v3897 = vadd.f32 %v3750, %v3896
        %v3898 = vpop.f32.mrf.mxu0
        %v3899 = vadd.f32 %v3752, %v3898
        %3900 = vmatmul.bf16.gmra.mxu0 %v3829
        %v3901 = vpop.f32.mrf.mxu0
        %v3902 = vadd.f32 %v3755, %v3901
        %v3903 = vpop.f32.mrf.mxu0
        %v3904 = vadd.f32 %v3757, %v3903
        %3905 = vmatmul.bf16.gmra.mxu0 %v3831
        %v3906 = vpop.f32.mrf.mxu0
        %v3907 = vadd.f32 %v3760, %v3906
        %v3908 = vpop.f32.mrf.mxu0
        %v3909 = vadd.f32 %v3762, %v3908
        %3910 = vmatmul.bf16.gmra.mxu0 %v3833
        %v3911 = vpop.f32.mrf.mxu0
        %v3912 = vadd.f32 %v3765, %v3911
        %v3913 = vpop.f32.mrf.mxu0
        %v3914 = vadd.f32 %v3767, %v3913
        %3915 = vmatmul.bf16.gmra.mxu0 %v3835
        %v3916 = vpop.f32.mrf.mxu0
        %v3917 = vadd.f32 %v3770, %v3916
        %v3918 = vpop.f32.mrf.mxu0
        %v3919 = vadd.f32 %v3772, %v3918
        %3920 = vmatmul.bf16.gmra.mxu0 %v3837
        %v3921 = vpop.f32.mrf.mxu0
        %v3922 = vadd.f32 %v3775, %v3921
        %v3923 = vpop.f32.mrf.mxu0
        %v3924 = vadd.f32 %v3777, %v3923
        %3925 = vmatmul.bf16.gmra.mxu0 %v3839
        %v3926 = vpop.f32.mrf.mxu0
        %v3927 = vadd.f32 %v3780, %v3926
        %v3928 = vpop.f32.mrf.mxu0
        %v3929 = vadd.f32 %v3782, %v3928
        %3930 = vmatmul.bf16.gmra.mxu0 %v3841
        %v3931 = vpop.f32.mrf.mxu0
        %v3932 = vadd.f32 %v3785, %v3931
        %v3933 = vpop.f32.mrf.mxu0
        %v3934 = vadd.f32 %v3787, %v3933
        %3935 = vmatmul.bf16.gmra.mxu0 %v3843
        %v3936 = vpop.f32.mrf.mxu0
        %v3937 = vadd.f32 %v3790, %v3936
        %v3938 = vpop.f32.mrf.mxu0
        %v3939 = vadd.f32 %v3792, %v3938
        %3940 = vmatmul.bf16.gmra.mxu0 %v3845
        %v3941 = vpop.f32.mrf.mxu0
        %v3942 = vadd.f32 %v3795, %v3941
        %v3943 = vpop.f32.mrf.mxu0
        %v3944 = vadd.f32 %v3797, %v3943
        %3945 = vdwg.mxu0
        %v3946 = vld [vmem:[#allocation2] sm:$0xe]
        %s3947 = scalar_lea.vmem %s1, 32
        %v3948 = vld [vmem:[%s3947] sm:$0xf]
        %v3949 = vld [vmem:[%s3947 + $0x4] sm:$0xf]
        %v3950 = vld [vmem:[%s3947 + $0x8] sm:$0xf]
        %v3951 = vld [vmem:[%s3947 + $0xc] sm:$0xf]
        %v3953 = vunpack.c.l.b16 %v3946
        %v3954 = vpack.c.b16 %v3429, %v3953
        %vm3955 = vcmask 1046528
        %v3956 = vrot.slane %v3954, 1
        %v3957 = vrot.slane %v3466, 1
        %v3958 = vsel %vm3955, %v3956, %v3957
        %v3959 = vrot.slane %v3467, 1
        %v3960 = vsel %vm3955, %v3957, %v3959
        %v3961 = vrot.slane %v3468, 1
        %v3962 = vsel %vm3955, %v3959, %v3961
        %v3963 = vrot.slane %v3469, 1
        %v3964 = vsel %vm3955, %v3961, %v3963
        %v3965 = vrot.slane %v3470, 1
        %v3966 = vsel %vm3955, %v3963, %v3965
        %v3967 = vrot.slane %v3471, 1
        %v3968 = vsel %vm3955, %v3965, %v3967
        %v3969 = vrot.slane %v3472, 1
        %v3970 = vsel %vm3955, %v3967, %v3969
        %v3971 = vrot.slane %v3473, 1
        %v3972 = vsel %vm3955, %v3969, %v3971
        %v3973 = vrot.slane %v3474, 1
        %v3974 = vsel %vm3955, %v3971, %v3973
        %v3975 = vrot.slane %v3475, 1
        %v3976 = vsel %vm3955, %v3973, %v3975
        %v3977 = vrot.slane %v3476, 1
        %v3978 = vsel %vm3955, %v3975, %v3977
        %v3979 = vrot.slane %v3477, 1
        %v3980 = vsel %vm3955, %v3977, %v3979
        %v3981 = vrot.slane %v3478, 1
        %v3982 = vsel %vm3955, %v3979, %v3981
        %v3983 = vrot.slane %v3479, 1
        %v3984 = vsel %vm3955, %v3981, %v3983
        %v3985 = vrot.slane %v3480, 1
        %v3986 = vsel %vm3955, %v3983, %v3985
        %v3987 = vrot.slane %v3481, 1
        %v3988 = vsel %vm3955, %v3985, %v3987
        %v3989 = vrot.slane %v3482, 1
        %v3990 = vsel %vm3955, %v3987, %v3989
        %v3991 = vrot.slane %v3483, 1
        %v3992 = vsel %vm3955, %v3989, %v3991
        %v3997 = vunpack.c.l.b16 %v3948
        %v3998 = vunpack.c.l.b16 %v3949
        %v3999 = vunpack.c.l.b16 %v3950
        %v4000 = vunpack.c.l.b16 %v3951
        %v4001 = vpack.c.b16 %v3998, %v3997
        %v4002 = vpack.c.b16 %v4000, %v3999
        %v4006 = vsel %vm3645, %v3958, 0
        %v4009 = vsel %vm3645, %v3960, 0
        %v4012 = vsel %vm3645, %v3962, 0
        %v4015 = vsel %vm3645, %v3964, 0
        %v4018 = vsel %vm3645, %v3966, 0
        %v4021 = vsel %vm3645, %v3968, 0
        %v4024 = vsel %vm3645, %v3970, 0
        %v4027 = vsel %vm3645, %v3972, 0
        %v4030 = vsel %vm3645, %v3974, 0
        %v4033 = vsel %vm3645, %v3976, 0
        %v4036 = vsel %vm3645, %v3978, 0
        %v4039 = vsel %vm3645, %v3980, 0
        %v4042 = vsel %vm3645, %v3982, 0
        %v4045 = vsel %vm3645, %v3984, 0
        %v4048 = vsel %vm3645, %v3986, 0
        %v4051 = vsel %vm3645, %v3988, 0
        %v4054 = vsel %vm3645, %v3990, 0
        %v4057 = vsel %vm3645, %v3992, 0
        %4059 = vmatpush.bf16.msra.mxu0 0
        %4060 = vmatpush.bf16.msra.mxu0 0
        %4061 = vmatpush.bf16.msra.mxu0 0
        %4062 = vmatpush.bf16.msra.mxu0 0
        %4063 = vmatpush.bf16.msra.mxu0 0
        %4064 = vmatpush.bf16.msra.mxu0 0
        %4065 = vmatpush.bf16.msra.mxu0 %v4002
        %4066 = vmatpush.bf16.msra.mxu0 %v4001
        %4067 = vmatmul.bf16.gmra.mxu0 %v4006
        %v4068 = vpop.f32.mrf.mxu0
        %v4069 = vadd.f32 0.0, %v4068
        %v4070 = vpop.f32.mrf.mxu0
        %v4071 = vadd.f32 0.0, %v4070
        %4072 = vmatmul.bf16.gmra.mxu0 %v4009
        %v4073 = vpop.f32.mrf.mxu0
        %v4074 = vadd.f32 0.0, %v4073
        %v4075 = vpop.f32.mrf.mxu0
        %v4076 = vadd.f32 0.0, %v4075
        %4077 = vmatmul.bf16.gmra.mxu0 %v4012
        %v4078 = vpop.f32.mrf.mxu0
        %v4079 = vadd.f32 0.0, %v4078
        %v4080 = vpop.f32.mrf.mxu0
        %v4081 = vadd.f32 0.0, %v4080
        %4082 = vmatmul.bf16.gmra.mxu0 %v4015
        %v4083 = vpop.f32.mrf.mxu0
        %v4084 = vadd.f32 0.0, %v4083
        %v4085 = vpop.f32.mrf.mxu0
        %v4086 = vadd.f32 0.0, %v4085
        %4087 = vmatmul.bf16.gmra.mxu0 %v4018
        %v4088 = vpop.f32.mrf.mxu0
        %v4089 = vadd.f32 0.0, %v4088
        %v4090 = vpop.f32.mrf.mxu0
        %v4091 = vadd.f32 0.0, %v4090
        %4092 = vmatmul.bf16.gmra.mxu0 %v4021
        %v4093 = vpop.f32.mrf.mxu0
        %v4094 = vadd.f32 0.0, %v4093
        %v4095 = vpop.f32.mrf.mxu0
        %v4096 = vadd.f32 0.0, %v4095
        %4097 = vmatmul.bf16.gmra.mxu0 %v4024
        %v4098 = vpop.f32.mrf.mxu0
        %v4099 = vadd.f32 0.0, %v4098
        %v4100 = vpop.f32.mrf.mxu0
        %v4101 = vadd.f32 0.0, %v4100
        %4102 = vmatmul.bf16.gmra.mxu0 %v4027
        %v4103 = vpop.f32.mrf.mxu0
        %v4104 = vadd.f32 0.0, %v4103
        %v4105 = vpop.f32.mrf.mxu0
        %v4106 = vadd.f32 0.0, %v4105
        %4107 = vmatmul.bf16.gmra.mxu0 %v4030
        %v4108 = vpop.f32.mrf.mxu0
        %v4109 = vadd.f32 0.0, %v4108
        %v4110 = vpop.f32.mrf.mxu0
        %v4111 = vadd.f32 0.0, %v4110
        %4112 = vmatmul.bf16.gmra.mxu0 %v4033
        %v4113 = vpop.f32.mrf.mxu0
        %v4114 = vadd.f32 0.0, %v4113
        %v4115 = vpop.f32.mrf.mxu0
        %v4116 = vadd.f32 0.0, %v4115
        %4117 = vmatmul.bf16.gmra.mxu0 %v4036
        %v4118 = vpop.f32.mrf.mxu0
        %v4119 = vadd.f32 0.0, %v4118
        %v4120 = vpop.f32.mrf.mxu0
        %v4121 = vadd.f32 0.0, %v4120
        %4122 = vmatmul.bf16.gmra.mxu0 %v4039
        %v4123 = vpop.f32.mrf.mxu0
        %v4124 = vadd.f32 0.0, %v4123
        %v4125 = vpop.f32.mrf.mxu0
        %v4126 = vadd.f32 0.0, %v4125
        %4127 = vmatmul.bf16.gmra.mxu0 %v4042
        %v4128 = vpop.f32.mrf.mxu0
        %v4129 = vadd.f32 0.0, %v4128
        %v4130 = vpop.f32.mrf.mxu0
        %v4131 = vadd.f32 0.0, %v4130
        %4132 = vmatmul.bf16.gmra.mxu0 %v4045
        %v4133 = vpop.f32.mrf.mxu0
        %v4134 = vadd.f32 0.0, %v4133
        %v4135 = vpop.f32.mrf.mxu0
        %v4136 = vadd.f32 0.0, %v4135
        %4137 = vmatmul.bf16.gmra.mxu0 %v4048
        %v4138 = vpop.f32.mrf.mxu0
        %v4139 = vadd.f32 0.0, %v4138
        %v4140 = vpop.f32.mrf.mxu0
        %v4141 = vadd.f32 0.0, %v4140
        %4142 = vmatmul.bf16.gmra.mxu0 %v4051
        %v4143 = vpop.f32.mrf.mxu0
        %v4144 = vadd.f32 0.0, %v4143
        %v4145 = vpop.f32.mrf.mxu0
        %v4146 = vadd.f32 0.0, %v4145
        %4147 = vmatmul.bf16.gmra.mxu0 %v4054
        %v4148 = vpop.f32.mrf.mxu0
        %v4149 = vadd.f32 0.0, %v4148
        %v4150 = vpop.f32.mrf.mxu0
        %v4151 = vadd.f32 0.0, %v4150
        %4152 = vmatmul.bf16.gmra.mxu0 %v4057
        %v4153 = vpop.f32.mrf.mxu0
        %v4154 = vadd.f32 0.0, %v4153
        %v4155 = vpop.f32.mrf.mxu0
        %v4156 = vadd.f32 0.0, %v4155
        %4157 = vdwg.mxu0
        %v4158 = vadd.f32 %v3857, %v4069
        %v4159 = vadd.f32 %v3859, %v4071
        %v4160 = vadd.f32 %v3862, %v4074
        %v4161 = vadd.f32 %v3864, %v4076
        %v4162 = vadd.f32 %v3867, %v4079
        %v4163 = vadd.f32 %v3869, %v4081
        %v4164 = vadd.f32 %v3872, %v4084
        %v4165 = vadd.f32 %v3874, %v4086
        %v4166 = vadd.f32 %v3877, %v4089
        %v4167 = vadd.f32 %v3879, %v4091
        %v4168 = vadd.f32 %v3882, %v4094
        %v4169 = vadd.f32 %v3884, %v4096
        %v4170 = vadd.f32 %v3887, %v4099
        %v4171 = vadd.f32 %v3889, %v4101
        %v4172 = vadd.f32 %v3892, %v4104
        %v4173 = vadd.f32 %v3894, %v4106
        %v4174 = vadd.f32 %v3897, %v4109
        %v4175 = vadd.f32 %v3899, %v4111
        %v4176 = vadd.f32 %v3902, %v4114
        %v4177 = vadd.f32 %v3904, %v4116
        %v4178 = vadd.f32 %v3907, %v4119
        %v4179 = vadd.f32 %v3909, %v4121
        %v4180 = vadd.f32 %v3912, %v4124
        %v4181 = vadd.f32 %v3914, %v4126
        %v4182 = vadd.f32 %v3917, %v4129
        %v4183 = vadd.f32 %v3919, %v4131
        %v4184 = vadd.f32 %v3922, %v4134
        %v4185 = vadd.f32 %v3924, %v4136
        %v4186 = vadd.f32 %v3927, %v4139
        %v4187 = vadd.f32 %v3929, %v4141
        %v4188 = vadd.f32 %v3932, %v4144
        %v4189 = vadd.f32 %v3934, %v4146
        %v4190 = vadd.f32 %v3937, %v4149
        %v4191 = vadd.f32 %v3939, %v4151
        %v4192 = vadd.f32 %v3942, %v4154
        %v4193 = vadd.f32 %v3944, %v4156
        %v4194 = vld [vmem:[#allocation2 + $0x8] sm:$0xe]
        %v4195 = vld [vmem:[#allocation2 + $0xc] sm:$0xf]
        %v4196 = vld [vmem:[#allocation2 + $0x10] sm:$0xf]
        %v4197 = vld [vmem:[#allocation2 + $0x14] sm:$0xf]
        %v4198 = vld [vmem:[#allocation2 + $0x18] sm:$0xf]
        %v4199 = vld [vmem:[#allocation2 + $0x1c] sm:$0xf]
        %v4200 = vld [vmem:[#allocation2 + $0x20] sm:$0xf]
        %v4201 = vld [vmem:[#allocation2 + $0x24] sm:$0xf]
        %v4202 = vld [vmem:[#allocation2 + $0x28] sm:$0xf]
        %v4203 = vld [vmem:[#allocation2 + $0x2c] sm:$0xf]
        %v4204 = vld [vmem:[#allocation2 + $0x30] sm:$0xf]
        %v4205 = vld [vmem:[#allocation2 + $0x34] sm:$0xf]
        %v4206 = vld [vmem:[#allocation2 + $0x38] sm:$0xf]
        %v4207 = vld [vmem:[#allocation2 + $0x3c] sm:$0xf]
        %v4208 = vld [vmem:[#allocation2 + $0x40] sm:$0xf]
        %v4209 = vld [vmem:[#allocation2 + $0x44] sm:$0xf]
        %v4210 = vld [vmem:[#allocation2 + $0x48] sm:$0xf]
        %v4211 = vld [vmem:[#allocation2 + $0x4c] sm:$0xf]
        %v4212 = vld [vmem:[#allocation2 + $0x50] sm:$0xf]
        %v4213 = vld [vmem:[#allocation2 + $0x54] sm:$0xf]
        %v4214 = vld [vmem:[#allocation2 + $0x58] sm:$0xf]
        %v4215 = vld [vmem:[#allocation2 + $0x5c] sm:$0xf]
        %v4216 = vld [vmem:[#allocation2 + $0x60] sm:$0xf]
        %v4217 = vld [vmem:[#allocation2 + $0x64] sm:$0xf]
        %v4218 = vld [vmem:[#allocation2 + $0x68] sm:$0xf]
        %v4219 = vld [vmem:[#allocation2 + $0x6c] sm:$0xf]
        %v4220 = vld [vmem:[#allocation2 + $0x70] sm:$0xf]
        %v4221 = vld [vmem:[#allocation2 + $0x74] sm:$0xf]
        %v4222 = vld [vmem:[#allocation2 + $0x78] sm:$0xf]
        %v4223 = vld [vmem:[#allocation2 + $0x7c] sm:$0xf]
        %v4224 = vld [vmem:[#allocation2 + $0x80] sm:$0xf]
        %v4225 = vld [vmem:[#allocation2 + $0x84] sm:$0xf]
        %v4226 = vld [vmem:[#allocation2 + $0x88] sm:$0xf]
        %v4227 = vld [vmem:[#allocation2 + $0x8c] sm:$0xf]
        %v4228 = vld [vmem:[#allocation2 + $0x90] sm:$0xf]
        %v4229 = vld [vmem:[#allocation2 + $0x94] sm:$0xf]
        %v4230 = vld [vmem:[#allocation2 + $0x98] sm:$0x1]
        %s4231 = scalar_lea.vmem %s1, 48
        %v4232 = vld [vmem:[%s4231] sm:$0xf]
        %v4233 = vld [vmem:[%s4231 + $0x4] sm:$0xf]
        %v4234 = vld [vmem:[%s4231 + $0x8] sm:$0xf]
        %v4235 = vld [vmem:[%s4231 + $0xc] sm:$0xf]
        %v4273 = vunpack.c.l.b16 %v4194
        %v4274 = vunpack.c.l.b16 %v4195
        %v4275 = vunpack.c.l.b16 %v4196
        %v4276 = vunpack.c.l.b16 %v4197
        %v4277 = vunpack.c.l.b16 %v4198
        %v4278 = vunpack.c.l.b16 %v4199
        %v4279 = vunpack.c.l.b16 %v4200
        %v4280 = vunpack.c.l.b16 %v4201
        %v4281 = vunpack.c.l.b16 %v4202
        %v4282 = vunpack.c.l.b16 %v4203
        %v4283 = vunpack.c.l.b16 %v4204
        %v4284 = vunpack.c.l.b16 %v4205
        %v4285 = vunpack.c.l.b16 %v4206
        %v4286 = vunpack.c.l.b16 %v4207
        %v4287 = vunpack.c.l.b16 %v4208
        %v4288 = vunpack.c.l.b16 %v4209
        %v4289 = vunpack.c.l.b16 %v4210
        %v4290 = vunpack.c.l.b16 %v4211
        %v4291 = vunpack.c.l.b16 %v4212
        %v4292 = vunpack.c.l.b16 %v4213
        %v4293 = vunpack.c.l.b16 %v4214
        %v4294 = vunpack.c.l.b16 %v4215
        %v4295 = vunpack.c.l.b16 %v4216
        %v4296 = vunpack.c.l.b16 %v4217
        %v4297 = vunpack.c.l.b16 %v4218
        %v4298 = vunpack.c.l.b16 %v4219
        %v4299 = vunpack.c.l.b16 %v4220
        %v4300 = vunpack.c.l.b16 %v4221
        %v4301 = vunpack.c.l.b16 %v4222
        %v4302 = vunpack.c.l.b16 %v4223
        %v4303 = vunpack.c.l.b16 %v4224
        %v4304 = vunpack.c.l.b16 %v4225
        %v4305 = vunpack.c.l.b16 %v4226
        %v4306 = vunpack.c.l.b16 %v4227
        %v4307 = vunpack.c.l.b16 %v4228
        %v4308 = vunpack.c.l.b16 %v4229
        %v4309 = vunpack.c.l.b16 %v4230
        %v4310 = vpack.c.b16 %v4274, %v4273
        %v4311 = vpack.c.b16 %v4276, %v4275
        %v4312 = vpack.c.b16 %v4278, %v4277
        %v4313 = vpack.c.b16 %v4280, %v4279
        %v4314 = vpack.c.b16 %v4282, %v4281
        %v4315 = vpack.c.b16 %v4284, %v4283
        %v4316 = vpack.c.b16 %v4286, %v4285
        %v4317 = vpack.c.b16 %v4288, %v4287
        %v4318 = vpack.c.b16 %v4290, %v4289
        %v4319 = vpack.c.b16 %v4292, %v4291
        %v4320 = vpack.c.b16 %v4294, %v4293
        %v4321 = vpack.c.b16 %v4296, %v4295
        %v4322 = vpack.c.b16 %v4298, %v4297
        %v4323 = vpack.c.b16 %v4300, %v4299
        %v4324 = vpack.c.b16 %v4302, %v4301
        %v4325 = vpack.c.b16 %v4304, %v4303
        %v4326 = vpack.c.b16 %v4306, %v4305
        %v4327 = vpack.c.b16 %v4308, %v4307
        %v4328 = vpack.c.b16 %v4309, %v4309
        %v4329 = vrot.slane %v4310, 1
        %v4330 = vrot.slane %v4311, 1
        %v4331 = vsel %vm3955, %v4329, %v4330
        %v4332 = vrot.slane %v4312, 1
        %v4333 = vsel %vm3955, %v4330, %v4332
        %v4334 = vrot.slane %v4313, 1
        %v4335 = vsel %vm3955, %v4332, %v4334
        %v4336 = vrot.slane %v4314, 1
        %v4337 = vsel %vm3955, %v4334, %v4336
        %v4338 = vrot.slane %v4315, 1
        %v4339 = vsel %vm3955, %v4336, %v4338
        %v4340 = vrot.slane %v4316, 1
        %v4341 = vsel %vm3955, %v4338, %v4340
        %v4342 = vrot.slane %v4317, 1
        %v4343 = vsel %vm3955, %v4340, %v4342
        %v4344 = vrot.slane %v4318, 1
        %v4345 = vsel %vm3955, %v4342, %v4344
        %v4346 = vrot.slane %v4319, 1
        %v4347 = vsel %vm3955, %v4344, %v4346
        %v4348 = vrot.slane %v4320, 1
        %v4349 = vsel %vm3955, %v4346, %v4348
        %v4350 = vrot.slane %v4321, 1
        %v4351 = vsel %vm3955, %v4348, %v4350
        %v4352 = vrot.slane %v4322, 1
        %v4353 = vsel %vm3955, %v4350, %v4352
        %v4354 = vrot.slane %v4323, 1
        %v4355 = vsel %vm3955, %v4352, %v4354
        %v4356 = vrot.slane %v4324, 1
        %v4357 = vsel %vm3955, %v4354, %v4356
        %v4358 = vrot.slane %v4325, 1
        %v4359 = vsel %vm3955, %v4356, %v4358
        %v4360 = vrot.slane %v4326, 1
        %v4361 = vsel %vm3955, %v4358, %v4360
        %v4362 = vrot.slane %v4327, 1
        %v4363 = vsel %vm3955, %v4360, %v4362
        %v4364 = vrot.slane %v4328, 1
        %v4365 = vsel %vm3955, %v4362, %v4364
        %v4370 = vunpack.c.l.b16 %v4232
        %v4371 = vunpack.c.l.b16 %v4233
        %v4372 = vunpack.c.l.b16 %v4234
        %v4373 = vunpack.c.l.b16 %v4235
        %v4374 = vpack.c.b16 %v4371, %v4370
        %v4375 = vpack.c.b16 %v4373, %v4372
        %v4379 = vsel %vm3645, %v4331, 0
        %v4382 = vsel %vm3645, %v4333, 0
        %v4385 = vsel %vm3645, %v4335, 0
        %v4388 = vsel %vm3645, %v4337, 0
        %v4391 = vsel %vm3645, %v4339, 0
        %v4394 = vsel %vm3645, %v4341, 0
        %v4397 = vsel %vm3645, %v4343, 0
        %v4400 = vsel %vm3645, %v4345, 0
        %v4403 = vsel %vm3645, %v4347, 0
        %v4406 = vsel %vm3645, %v4349, 0
        %v4409 = vsel %vm3645, %v4351, 0
        %v4412 = vsel %vm3645, %v4353, 0
        %v4415 = vsel %vm3645, %v4355, 0
        %v4418 = vsel %vm3645, %v4357, 0
        %v4421 = vsel %vm3645, %v4359, 0
        %v4424 = vsel %vm3645, %v4361, 0
        %v4427 = vsel %vm3645, %v4363, 0
        %v4430 = vsel %vm3645, %v4365, 0
        %4432 = vmatpush.bf16.msra.mxu0 0
        %4433 = vmatpush.bf16.msra.mxu0 0
        %4434 = vmatpush.bf16.msra.mxu0 0
        %4435 = vmatpush.bf16.msra.mxu0 0
        %4436 = vmatpush.bf16.msra.mxu0 0
        %4437 = vmatpush.bf16.msra.mxu0 0
        %4438 = vmatpush.bf16.msra.mxu0 %v4375
        %4439 = vmatpush.bf16.msra.mxu0 %v4374
        %4440 = vmatmul.bf16.gmra.mxu0 %v4379
        %v4441 = vpop.f32.mrf.mxu0
        %v4442 = vadd.f32 0.0, %v4441
        %v4443 = vpop.f32.mrf.mxu0
        %v4444 = vadd.f32 0.0, %v4443
        %4445 = vmatmul.bf16.gmra.mxu0 %v4382
        %v4446 = vpop.f32.mrf.mxu0
        %v4447 = vadd.f32 0.0, %v4446
        %v4448 = vpop.f32.mrf.mxu0
        %v4449 = vadd.f32 0.0, %v4448
        %4450 = vmatmul.bf16.gmra.mxu0 %v4385
        %v4451 = vpop.f32.mrf.mxu0
        %v4452 = vadd.f32 0.0, %v4451
        %v4453 = vpop.f32.mrf.mxu0
        %v4454 = vadd.f32 0.0, %v4453
        %4455 = vmatmul.bf16.gmra.mxu0 %v4388
        %v4456 = vpop.f32.mrf.mxu0
        %v4457 = vadd.f32 0.0, %v4456
        %v4458 = vpop.f32.mrf.mxu0
        %v4459 = vadd.f32 0.0, %v4458
        %4460 = vmatmul.bf16.gmra.mxu0 %v4391
        %v4461 = vpop.f32.mrf.mxu0
        %v4462 = vadd.f32 0.0, %v4461
        %v4463 = vpop.f32.mrf.mxu0
        %v4464 = vadd.f32 0.0, %v4463
        %4465 = vmatmul.bf16.gmra.mxu0 %v4394
        %v4466 = vpop.f32.mrf.mxu0
        %v4467 = vadd.f32 0.0, %v4466
        %v4468 = vpop.f32.mrf.mxu0
        %v4469 = vadd.f32 0.0, %v4468
        %4470 = vmatmul.bf16.gmra.mxu0 %v4397
        %v4471 = vpop.f32.mrf.mxu0
        %v4472 = vadd.f32 0.0, %v4471
        %v4473 = vpop.f32.mrf.mxu0
        %v4474 = vadd.f32 0.0, %v4473
        %4475 = vmatmul.bf16.gmra.mxu0 %v4400
        %v4476 = vpop.f32.mrf.mxu0
        %v4477 = vadd.f32 0.0, %v4476
        %v4478 = vpop.f32.mrf.mxu0
        %v4479 = vadd.f32 0.0, %v4478
        %4480 = vmatmul.bf16.gmra.mxu0 %v4403
        %v4481 = vpop.f32.mrf.mxu0
        %v4482 = vadd.f32 0.0, %v4481
        %v4483 = vpop.f32.mrf.mxu0
        %v4484 = vadd.f32 0.0, %v4483
        %4485 = vmatmul.bf16.gmra.mxu0 %v4406
        %v4486 = vpop.f32.mrf.mxu0
        %v4487 = vadd.f32 0.0, %v4486
        %v4488 = vpop.f32.mrf.mxu0
        %v4489 = vadd.f32 0.0, %v4488
        %4490 = vmatmul.bf16.gmra.mxu0 %v4409
        %v4491 = vpop.f32.mrf.mxu0
        %v4492 = vadd.f32 0.0, %v4491
        %v4493 = vpop.f32.mrf.mxu0
        %v4494 = vadd.f32 0.0, %v4493
        %4495 = vmatmul.bf16.gmra.mxu0 %v4412
        %v4496 = vpop.f32.mrf.mxu0
        %v4497 = vadd.f32 0.0, %v4496
        %v4498 = vpop.f32.mrf.mxu0
        %v4499 = vadd.f32 0.0, %v4498
        %4500 = vmatmul.bf16.gmra.mxu0 %v4415
        %v4501 = vpop.f32.mrf.mxu0
        %v4502 = vadd.f32 0.0, %v4501
        %v4503 = vpop.f32.mrf.mxu0
        %v4504 = vadd.f32 0.0, %v4503
        %4505 = vmatmul.bf16.gmra.mxu0 %v4418
        %v4506 = vpop.f32.mrf.mxu0
        %v4507 = vadd.f32 0.0, %v4506
        %v4508 = vpop.f32.mrf.mxu0
        %v4509 = vadd.f32 0.0, %v4508
        %4510 = vmatmul.bf16.gmra.mxu0 %v4421
        %v4511 = vpop.f32.mrf.mxu0
        %v4512 = vadd.f32 0.0, %v4511
        %v4513 = vpop.f32.mrf.mxu0
        %v4514 = vadd.f32 0.0, %v4513
        %4515 = vmatmul.bf16.gmra.mxu0 %v4424
        %v4516 = vpop.f32.mrf.mxu0
        %v4517 = vadd.f32 0.0, %v4516
        %v4518 = vpop.f32.mrf.mxu0
        %v4519 = vadd.f32 0.0, %v4518
        %4520 = vmatmul.bf16.gmra.mxu0 %v4427
        %v4521 = vpop.f32.mrf.mxu0
        %v4522 = vadd.f32 0.0, %v4521
        %v4523 = vpop.f32.mrf.mxu0
        %v4524 = vadd.f32 0.0, %v4523
        %4525 = vmatmul.bf16.gmra.mxu0 %v4430
        %v4526 = vpop.f32.mrf.mxu0
        %v4527 = vadd.f32 0.0, %v4526
        %v4528 = vpop.f32.mrf.mxu0
        %v4529 = vadd.f32 0.0, %v4528
        %4530 = vdwg.mxu0
        %v4531 = vadd.f32 %v4158, %v4442
        %v4532 = vadd.f32 %v4159, %v4444
        %v4533 = vadd.f32 %v4160, %v4447
        %v4534 = vadd.f32 %v4161, %v4449
        %v4535 = vadd.f32 %v4162, %v4452
        %v4536 = vadd.f32 %v4163, %v4454
        %v4537 = vadd.f32 %v4164, %v4457
        %v4538 = vadd.f32 %v4165, %v4459
        %v4539 = vadd.f32 %v4166, %v4462
        %v4540 = vadd.f32 %v4167, %v4464
        %v4541 = vadd.f32 %v4168, %v4467
        %v4542 = vadd.f32 %v4169, %v4469
        %v4543 = vadd.f32 %v4170, %v4472
        %v4544 = vadd.f32 %v4171, %v4474
        %v4545 = vadd.f32 %v4172, %v4477
        %v4546 = vadd.f32 %v4173, %v4479
        %v4547 = vadd.f32 %v4174, %v4482
        %v4548 = vadd.f32 %v4175, %v4484
        %v4549 = vadd.f32 %v4176, %v4487
        %v4550 = vadd.f32 %v4177, %v4489
        %v4551 = vadd.f32 %v4178, %v4492
        %v4552 = vadd.f32 %v4179, %v4494
        %v4553 = vadd.f32 %v4180, %v4497
        %v4554 = vadd.f32 %v4181, %v4499
        %v4555 = vadd.f32 %v4182, %v4502
        %v4556 = vadd.f32 %v4183, %v4504
        %v4557 = vadd.f32 %v4184, %v4507
        %v4558 = vadd.f32 %v4185, %v4509
        %v4559 = vadd.f32 %v4186, %v4512
        %v4560 = vadd.f32 %v4187, %v4514
        %v4561 = vadd.f32 %v4188, %v4517
        %v4562 = vadd.f32 %v4189, %v4519
        %v4563 = vadd.f32 %v4190, %v4522
        %v4564 = vadd.f32 %v4191, %v4524
        %v4565 = vadd.f32 %v4192, %v4527
        %v4566 = vadd.f32 %v4193, %v4529
        %v4567 = vld [vmem:[#allocation2 + $0x98] sm:$0x3]
        %s4568 = scalar_lea.vmem %s1, 64
        %v4569 = vld [vmem:[%s4568] sm:$0xf]
        %v4570 = vld [vmem:[%s4568 + $0x4] sm:$0xf]
        %v4571 = vld [vmem:[%s4568 + $0x8] sm:$0xf]
        %v4572 = vld [vmem:[%s4568 + $0xc] sm:$0xf]
        %v4574 = vunpack.c.l.b16 %v4567
        %v4575 = vpack.c.b16 %v4574, %v4574
        %vm4576 = vsmask.f32 6400
        %v4578 = vshrl.u32 %v4310, 16
        %v4580 = vrot.slane %v4578, 1
        %v4581 = vshll.u32 %v4310, 16
        %v4583 = vrot.slane %v4581, 2
        %v4584 = vor.u32 %v4580, %v4583
        %v4586 = vshrl.u32 %v4311, 16
        %v4588 = vrot.slane %v4586, 1
        %v4589 = vshll.u32 %v4311, 16
        %v4591 = vrot.slane %v4589, 2
        %v4592 = vor.u32 %v4588, %v4591
        %v4593 = vsel %vm4576, %v4584, %v4592
        %v4595 = vshrl.u32 %v4312, 16
        %v4597 = vrot.slane %v4595, 1
        %v4598 = vshll.u32 %v4312, 16
        %v4600 = vrot.slane %v4598, 2
        %v4601 = vor.u32 %v4597, %v4600
        %v4602 = vsel %vm4576, %v4592, %v4601
        %v4604 = vshrl.u32 %v4313, 16
        %v4606 = vrot.slane %v4604, 1
        %v4607 = vshll.u32 %v4313, 16
        %v4609 = vrot.slane %v4607, 2
        %v4610 = vor.u32 %v4606, %v4609
        %v4611 = vsel %vm4576, %v4601, %v4610
        %v4613 = vshrl.u32 %v4314, 16
        %v4615 = vrot.slane %v4613, 1
        %v4616 = vshll.u32 %v4314, 16
        %v4618 = vrot.slane %v4616, 2
        %v4619 = vor.u32 %v4615, %v4618
        %v4620 = vsel %vm4576, %v4610, %v4619
        %v4622 = vshrl.u32 %v4315, 16
        %v4624 = vrot.slane %v4622, 1
        %v4625 = vshll.u32 %v4315, 16
        %v4627 = vrot.slane %v4625, 2
        %v4628 = vor.u32 %v4624, %v4627
        %v4629 = vsel %vm4576, %v4619, %v4628
        %v4631 = vshrl.u32 %v4316, 16
        %v4633 = vrot.slane %v4631, 1
        %v4634 = vshll.u32 %v4316, 16
        %v4636 = vrot.slane %v4634, 2
        %v4637 = vor.u32 %v4633, %v4636
        %v4638 = vsel %vm4576, %v4628, %v4637
        %v4640 = vshrl.u32 %v4317, 16
        %v4642 = vrot.slane %v4640, 1
        %v4643 = vshll.u32 %v4317, 16
        %v4645 = vrot.slane %v4643, 2
        %v4646 = vor.u32 %v4642, %v4645
        %v4647 = vsel %vm4576, %v4637, %v4646
        %v4649 = vshrl.u32 %v4318, 16
        %v4651 = vrot.slane %v4649, 1
        %v4652 = vshll.u32 %v4318, 16
        %v4654 = vrot.slane %v4652, 2
        %v4655 = vor.u32 %v4651, %v4654
        %v4656 = vsel %vm4576, %v4646, %v4655
        %v4658 = vshrl.u32 %v4319, 16
        %v4660 = vrot.slane %v4658, 1
        %v4661 = vshll.u32 %v4319, 16
        %v4663 = vrot.slane %v4661, 2
        %v4664 = vor.u32 %v4660, %v4663
        %v4665 = vsel %vm4576, %v4655, %v4664
        %v4667 = vshrl.u32 %v4320, 16
        %v4669 = vrot.slane %v4667, 1
        %v4670 = vshll.u32 %v4320, 16
        %v4672 = vrot.slane %v4670, 2
        %v4673 = vor.u32 %v4669, %v4672
        %v4674 = vsel %vm4576, %v4664, %v4673
        %v4676 = vshrl.u32 %v4321, 16
        %v4678 = vrot.slane %v4676, 1
        %v4679 = vshll.u32 %v4321, 16
        %v4681 = vrot.slane %v4679, 2
        %v4682 = vor.u32 %v4678, %v4681
        %v4683 = vsel %vm4576, %v4673, %v4682
        %v4685 = vshrl.u32 %v4322, 16
        %v4687 = vrot.slane %v4685, 1
        %v4688 = vshll.u32 %v4322, 16
        %v4690 = vrot.slane %v4688, 2
        %v4691 = vor.u32 %v4687, %v4690
        %v4692 = vsel %vm4576, %v4682, %v4691
        %v4694 = vshrl.u32 %v4323, 16
        %v4696 = vrot.slane %v4694, 1
        %v4697 = vshll.u32 %v4323, 16
        %v4699 = vrot.slane %v4697, 2
        %v4700 = vor.u32 %v4696, %v4699
        %v4701 = vsel %vm4576, %v4691, %v4700
        %v4703 = vshrl.u32 %v4324, 16
        %v4705 = vrot.slane %v4703, 1
        %v4706 = vshll.u32 %v4324, 16
        %v4708 = vrot.slane %v4706, 2
        %v4709 = vor.u32 %v4705, %v4708
        %v4710 = vsel %vm4576, %v4700, %v4709
        %v4712 = vshrl.u32 %v4325, 16
        %v4714 = vrot.slane %v4712, 1
        %v4715 = vshll.u32 %v4325, 16
        %v4717 = vrot.slane %v4715, 2
        %v4718 = vor.u32 %v4714, %v4717
        %v4719 = vsel %vm4576, %v4709, %v4718
        %v4721 = vshrl.u32 %v4326, 16
        %v4723 = vrot.slane %v4721, 1
        %v4724 = vshll.u32 %v4326, 16
        %v4726 = vrot.slane %v4724, 2
        %v4727 = vor.u32 %v4723, %v4726
        %v4728 = vsel %vm4576, %v4718, %v4727
        %v4730 = vshrl.u32 %v4327, 16
        %v4732 = vrot.slane %v4730, 1
        %v4733 = vshll.u32 %v4327, 16
        %v4735 = vrot.slane %v4733, 2
        %v4736 = vor.u32 %v4732, %v4735
        %v4737 = vsel %vm4576, %v4727, %v4736
        %v4739 = vshrl.u32 %v4575, 16
        %v4741 = vrot.slane %v4739, 1
        %v4742 = vshll.u32 %v4575, 16
        %v4744 = vrot.slane %v4742, 2
        %v4745 = vor.u32 %v4741, %v4744
        %v4746 = vsel %vm4576, %v4736, %v4745
        %v4751 = vunpack.c.l.b16 %v4569
        %v4752 = vunpack.c.l.b16 %v4570
        %v4753 = vunpack.c.l.b16 %v4571
        %v4754 = vunpack.c.l.b16 %v4572
        %v4755 = vpack.c.b16 %v4752, %v4751
        %v4756 = vpack.c.b16 %v4754, %v4753
        %v4760 = vsel %vm3645, %v4593, 0
        %v4763 = vsel %vm3645, %v4602, 0
        %v4766 = vsel %vm3645, %v4611, 0
        %v4769 = vsel %vm3645, %v4620, 0
        %v4772 = vsel %vm3645, %v4629, 0
        %v4775 = vsel %vm3645, %v4638, 0
        %v4778 = vsel %vm3645, %v4647, 0
        %v4781 = vsel %vm3645, %v4656, 0
        %v4784 = vsel %vm3645, %v4665, 0
        %v4787 = vsel %vm3645, %v4674, 0
        %v4790 = vsel %vm3645, %v4683, 0
        %v4793 = vsel %vm3645, %v4692, 0
        %v4796 = vsel %vm3645, %v4701, 0
        %v4799 = vsel %vm3645, %v4710, 0
        %v4802 = vsel %vm3645, %v4719, 0
        %v4805 = vsel %vm3645, %v4728, 0
        %v4808 = vsel %vm3645, %v4737, 0
        %v4811 = vsel %vm3645, %v4746, 0
        %4813 = vmatpush.bf16.msra.mxu0 0
        %4814 = vmatpush.bf16.msra.mxu0 0
        %4815 = vmatpush.bf16.msra.mxu0 0
        %4816 = vmatpush.bf16.msra.mxu0 0
        %4817 = vmatpush.bf16.msra.mxu0 0
        %4818 = vmatpush.bf16.msra.mxu0 0
        %4819 = vmatpush.bf16.msra.mxu0 %v4756
        %4820 = vmatpush.bf16.msra.mxu0 %v4755
        %4821 = vmatmul.bf16.gmra.mxu0 %v4760
        %v4822 = vpop.f32.mrf.mxu0
        %v4823 = vadd.f32 0.0, %v4822
        %v4824 = vpop.f32.mrf.mxu0
        %v4825 = vadd.f32 0.0, %v4824
        %4826 = vmatmul.bf16.gmra.mxu0 %v4763
        %v4827 = vpop.f32.mrf.mxu0
        %v4828 = vadd.f32 0.0, %v4827
        %v4829 = vpop.f32.mrf.mxu0
        %v4830 = vadd.f32 0.0, %v4829
        %4831 = vmatmul.bf16.gmra.mxu0 %v4766
        %v4832 = vpop.f32.mrf.mxu0
        %v4833 = vadd.f32 0.0, %v4832
        %v4834 = vpop.f32.mrf.mxu0
        %v4835 = vadd.f32 0.0, %v4834
        %4836 = vmatmul.bf16.gmra.mxu0 %v4769
        %v4837 = vpop.f32.mrf.mxu0
        %v4838 = vadd.f32 0.0, %v4837
        %v4839 = vpop.f32.mrf.mxu0
        %v4840 = vadd.f32 0.0, %v4839
        %4841 = vmatmul.bf16.gmra.mxu0 %v4772
        %v4842 = vpop.f32.mrf.mxu0
        %v4843 = vadd.f32 0.0, %v4842
        %v4844 = vpop.f32.mrf.mxu0
        %v4845 = vadd.f32 0.0, %v4844
        %4846 = vmatmul.bf16.gmra.mxu0 %v4775
        %v4847 = vpop.f32.mrf.mxu0
        %v4848 = vadd.f32 0.0, %v4847
        %v4849 = vpop.f32.mrf.mxu0
        %v4850 = vadd.f32 0.0, %v4849
        %4851 = vmatmul.bf16.gmra.mxu0 %v4778
        %v4852 = vpop.f32.mrf.mxu0
        %v4853 = vadd.f32 0.0, %v4852
        %v4854 = vpop.f32.mrf.mxu0
        %v4855 = vadd.f32 0.0, %v4854
        %4856 = vmatmul.bf16.gmra.mxu0 %v4781
        %v4857 = vpop.f32.mrf.mxu0
        %v4858 = vadd.f32 0.0, %v4857
        %v4859 = vpop.f32.mrf.mxu0
        %v4860 = vadd.f32 0.0, %v4859
        %4861 = vmatmul.bf16.gmra.mxu0 %v4784
        %v4862 = vpop.f32.mrf.mxu0
        %v4863 = vadd.f32 0.0, %v4862
        %v4864 = vpop.f32.mrf.mxu0
        %v4865 = vadd.f32 0.0, %v4864
        %4866 = vmatmul.bf16.gmra.mxu0 %v4787
        %v4867 = vpop.f32.mrf.mxu0
        %v4868 = vadd.f32 0.0, %v4867
        %v4869 = vpop.f32.mrf.mxu0
        %v4870 = vadd.f32 0.0, %v4869
        %4871 = vmatmul.bf16.gmra.mxu0 %v4790
        %v4872 = vpop.f32.mrf.mxu0
        %v4873 = vadd.f32 0.0, %v4872
        %v4874 = vpop.f32.mrf.mxu0
        %v4875 = vadd.f32 0.0, %v4874
        %4876 = vmatmul.bf16.gmra.mxu0 %v4793
        %v4877 = vpop.f32.mrf.mxu0
        %v4878 = vadd.f32 0.0, %v4877
        %v4879 = vpop.f32.mrf.mxu0
        %v4880 = vadd.f32 0.0, %v4879
        %4881 = vmatmul.bf16.gmra.mxu0 %v4796
        %v4882 = vpop.f32.mrf.mxu0
        %v4883 = vadd.f32 0.0, %v4882
        %v4884 = vpop.f32.mrf.mxu0
        %v4885 = vadd.f32 0.0, %v4884
        %4886 = vmatmul.bf16.gmra.mxu0 %v4799
        %v4887 = vpop.f32.mrf.mxu0
        %v4888 = vadd.f32 0.0, %v4887
        %v4889 = vpop.f32.mrf.mxu0
        %v4890 = vadd.f32 0.0, %v4889
        %4891 = vmatmul.bf16.gmra.mxu0 %v4802
        %v4892 = vpop.f32.mrf.mxu0
        %v4893 = vadd.f32 0.0, %v4892
        %v4894 = vpop.f32.mrf.mxu0
        %v4895 = vadd.f32 0.0, %v4894
        %4896 = vmatmul.bf16.gmra.mxu0 %v4805
        %v4897 = vpop.f32.mrf.mxu0
        %v4898 = vadd.f32 0.0, %v4897
        %v4899 = vpop.f32.mrf.mxu0
        %v4900 = vadd.f32 0.0, %v4899
        %4901 = vmatmul.bf16.gmra.mxu0 %v4808
        %v4902 = vpop.f32.mrf.mxu0
        %v4903 = vadd.f32 0.0, %v4902
        %v4904 = vpop.f32.mrf.mxu0
        %v4905 = vadd.f32 0.0, %v4904
        %4906 = vmatmul.bf16.gmra.mxu0 %v4811
        %v4907 = vpop.f32.mrf.mxu0
        %v4908 = vadd.f32 0.0, %v4907
        %v4909 = vpop.f32.mrf.mxu0
        %v4910 = vadd.f32 0.0, %v4909
        %4911 = vdwg.mxu0
        %v4912 = vadd.f32 %v4531, %v4823
        %v4913 = vadd.f32 %v4532, %v4825
        %v4914 = vadd.f32 %v4533, %v4828
        %v4915 = vadd.f32 %v4534, %v4830
        %v4916 = vadd.f32 %v4535, %v4833
        %v4917 = vadd.f32 %v4536, %v4835
        %v4918 = vadd.f32 %v4537, %v4838
        %v4919 = vadd.f32 %v4538, %v4840
        %v4920 = vadd.f32 %v4539, %v4843
        %v4921 = vadd.f32 %v4540, %v4845
        %v4922 = vadd.f32 %v4541, %v4848
        %v4923 = vadd.f32 %v4542, %v4850
        %v4924 = vadd.f32 %v4543, %v4853
        %v4925 = vadd.f32 %v4544, %v4855
        %v4926 = vadd.f32 %v4545, %v4858
        %v4927 = vadd.f32 %v4546, %v4860
        %v4928 = vadd.f32 %v4547, %v4863
        %v4929 = vadd.f32 %v4548, %v4865
        %v4930 = vadd.f32 %v4549, %v4868
        %v4931 = vadd.f32 %v4550, %v4870
        %v4932 = vadd.f32 %v4551, %v4873
        %v4933 = vadd.f32 %v4552, %v4875
        %v4934 = vadd.f32 %v4553, %v4878
        %v4935 = vadd.f32 %v4554, %v4880
        %v4936 = vadd.f32 %v4555, %v4883
        %v4937 = vadd.f32 %v4556, %v4885
        %v4938 = vadd.f32 %v4557, %v4888
        %v4939 = vadd.f32 %v4558, %v4890
        %v4940 = vadd.f32 %v4559, %v4893
        %v4941 = vadd.f32 %v4560, %v4895
        %v4942 = vadd.f32 %v4561, %v4898
        %v4943 = vadd.f32 %v4562, %v4900
        %v4944 = vadd.f32 %v4563, %v4903
        %v4945 = vadd.f32 %v4564, %v4905
        %v4946 = vadd.f32 %v4565, %v4908
        %v4947 = vadd.f32 %v4566, %v4910
        %v4948 = vld [vmem:[#allocation2 + $0x8] sm:$0xc]
        %s4949 = scalar_lea.vmem %s1, 80
        %v4950 = vld [vmem:[%s4949] sm:$0xf]
        %v4951 = vld [vmem:[%s4949 + $0x4] sm:$0xf]
        %v4952 = vld [vmem:[%s4949 + $0x8] sm:$0xf]
        %v4953 = vld [vmem:[%s4949 + $0xc] sm:$0xf]
        %v4955 = vunpack.c.l.b16 %v4948
        %v4956 = vpack.c.b16 %v4274, %v4955
        %vm4957 = vcmask 1045504
        %v4958 = vrot.slane %v4956, 2
        %v4959 = vrot.slane %v4311, 2
        %v4960 = vsel %vm4957, %v4958, %v4959
        %v4961 = vrot.slane %v4312, 2
        %v4962 = vsel %vm4957, %v4959, %v4961
        %v4963 = vrot.slane %v4313, 2
        %v4964 = vsel %vm4957, %v4961, %v4963
        %v4965 = vrot.slane %v4314, 2
        %v4966 = vsel %vm4957, %v4963, %v4965
        %v4967 = vrot.slane %v4315, 2
        %v4968 = vsel %vm4957, %v4965, %v4967
        %v4969 = vrot.slane %v4316, 2
        %v4970 = vsel %vm4957, %v4967, %v4969
        %v4971 = vrot.slane %v4317, 2
        %v4972 = vsel %vm4957, %v4969, %v4971
        %v4973 = vrot.slane %v4318, 2
        %v4974 = vsel %vm4957, %v4971, %v4973
        %v4975 = vrot.slane %v4319, 2
        %v4976 = vsel %vm4957, %v4973, %v4975
        %v4977 = vrot.slane %v4320, 2
        %v4978 = vsel %vm4957, %v4975, %v4977
        %v4979 = vrot.slane %v4321, 2
        %v4980 = vsel %vm4957, %v4977, %v4979
        %v4981 = vrot.slane %v4322, 2
        %v4982 = vsel %vm4957, %v4979, %v4981
        %v4983 = vrot.slane %v4323, 2
        %v4984 = vsel %vm4957, %v4981, %v4983
        %v4985 = vrot.slane %v4324, 2
        %v4986 = vsel %vm4957, %v4983, %v4985
        %v4987 = vrot.slane %v4325, 2
        %v4988 = vsel %vm4957, %v4985, %v4987
        %v4989 = vrot.slane %v4326, 2
        %v4990 = vsel %vm4957, %v4987, %v4989
        %v4991 = vrot.slane %v4327, 2
        %v4992 = vsel %vm4957, %v4989, %v4991
        %v4993 = vrot.slane %v4575, 2
        %v4994 = vsel %vm4957, %v4991, %v4993
        %v4999 = vunpack.c.l.b16 %v4950
        %v5000 = vunpack.c.l.b16 %v4951
        %v5001 = vunpack.c.l.b16 %v4952
        %v5002 = vunpack.c.l.b16 %v4953
        %v5003 = vpack.c.b16 %v5000, %v4999
        %v5004 = vpack.c.b16 %v5002, %v5001
        %v5008 = vsel %vm3645, %v4960, 0
        %v5011 = vsel %vm3645, %v4962, 0
        %v5014 = vsel %vm3645, %v4964, 0
        %v5017 = vsel %vm3645, %v4966, 0
        %v5020 = vsel %vm3645, %v4968, 0
        %v5023 = vsel %vm3645, %v4970, 0
        %v5026 = vsel %vm3645, %v4972, 0
        %v5029 = vsel %vm3645, %v4974, 0
        %v5032 = vsel %vm3645, %v4976, 0
        %v5035 = vsel %vm3645, %v4978, 0
        %v5038 = vsel %vm3645, %v4980, 0
        %v5041 = vsel %vm3645, %v4982, 0
        %v5044 = vsel %vm3645, %v4984, 0
        %v5047 = vsel %vm3645, %v4986, 0
        %v5050 = vsel %vm3645, %v4988, 0
        %v5053 = vsel %vm3645, %v4990, 0
        %v5056 = vsel %vm3645, %v4992, 0
        %v5059 = vsel %vm3645, %v4994, 0
        %5061 = vmatpush.bf16.msra.mxu0 0
        %5062 = vmatpush.bf16.msra.mxu0 0
        %5063 = vmatpush.bf16.msra.mxu0 0
        %5064 = vmatpush.bf16.msra.mxu0 0
        %5065 = vmatpush.bf16.msra.mxu0 0
        %5066 = vmatpush.bf16.msra.mxu0 0
        %5067 = vmatpush.bf16.msra.mxu0 %v5004
        %5068 = vmatpush.bf16.msra.mxu0 %v5003
        %5069 = vmatmul.bf16.gmra.mxu0 %v5008
        %v5070 = vpop.f32.mrf.mxu0
        %v5071 = vadd.f32 0.0, %v5070
        %v5072 = vpop.f32.mrf.mxu0
        %v5073 = vadd.f32 0.0, %v5072
        %5074 = vmatmul.bf16.gmra.mxu0 %v5011
        %v5075 = vpop.f32.mrf.mxu0
        %v5076 = vadd.f32 0.0, %v5075
        %v5077 = vpop.f32.mrf.mxu0
        %v5078 = vadd.f32 0.0, %v5077
        %5079 = vmatmul.bf16.gmra.mxu0 %v5014
        %v5080 = vpop.f32.mrf.mxu0
        %v5081 = vadd.f32 0.0, %v5080
        %v5082 = vpop.f32.mrf.mxu0
        %v5083 = vadd.f32 0.0, %v5082
        %5084 = vmatmul.bf16.gmra.mxu0 %v5017
        %v5085 = vpop.f32.mrf.mxu0
        %v5086 = vadd.f32 0.0, %v5085
        %v5087 = vpop.f32.mrf.mxu0
        %v5088 = vadd.f32 0.0, %v5087
        %5089 = vmatmul.bf16.gmra.mxu0 %v5020
        %v5090 = vpop.f32.mrf.mxu0
        %v5091 = vadd.f32 0.0, %v5090
        %v5092 = vpop.f32.mrf.mxu0
        %v5093 = vadd.f32 0.0, %v5092
        %5094 = vmatmul.bf16.gmra.mxu0 %v5023
        %v5095 = vpop.f32.mrf.mxu0
        %v5096 = vadd.f32 0.0, %v5095
        %v5097 = vpop.f32.mrf.mxu0
        %v5098 = vadd.f32 0.0, %v5097
        %5099 = vmatmul.bf16.gmra.mxu0 %v5026
        %v5100 = vpop.f32.mrf.mxu0
        %v5101 = vadd.f32 0.0, %v5100
        %v5102 = vpop.f32.mrf.mxu0
        %v5103 = vadd.f32 0.0, %v5102
        %5104 = vmatmul.bf16.gmra.mxu0 %v5029
        %v5105 = vpop.f32.mrf.mxu0
        %v5106 = vadd.f32 0.0, %v5105
        %v5107 = vpop.f32.mrf.mxu0
        %v5108 = vadd.f32 0.0, %v5107
        %5109 = vmatmul.bf16.gmra.mxu0 %v5032
        %v5110 = vpop.f32.mrf.mxu0
        %v5111 = vadd.f32 0.0, %v5110
        %v5112 = vpop.f32.mrf.mxu0
        %v5113 = vadd.f32 0.0, %v5112
        %5114 = vmatmul.bf16.gmra.mxu0 %v5035
        %v5115 = vpop.f32.mrf.mxu0
        %v5116 = vadd.f32 0.0, %v5115
        %v5117 = vpop.f32.mrf.mxu0
        %v5118 = vadd.f32 0.0, %v5117
        %5119 = vmatmul.bf16.gmra.mxu0 %v5038
        %v5120 = vpop.f32.mrf.mxu0
        %v5121 = vadd.f32 0.0, %v5120
        %v5122 = vpop.f32.mrf.mxu0
        %v5123 = vadd.f32 0.0, %v5122
        %5124 = vmatmul.bf16.gmra.mxu0 %v5041
        %v5125 = vpop.f32.mrf.mxu0
        %v5126 = vadd.f32 0.0, %v5125
        %v5127 = vpop.f32.mrf.mxu0
        %v5128 = vadd.f32 0.0, %v5127
        %5129 = vmatmul.bf16.gmra.mxu0 %v5044
        %v5130 = vpop.f32.mrf.mxu0
        %v5131 = vadd.f32 0.0, %v5130
        %v5132 = vpop.f32.mrf.mxu0
        %v5133 = vadd.f32 0.0, %v5132
        %5134 = vmatmul.bf16.gmra.mxu0 %v5047
        %v5135 = vpop.f32.mrf.mxu0
        %v5136 = vadd.f32 0.0, %v5135
        %v5137 = vpop.f32.mrf.mxu0
        %v5138 = vadd.f32 0.0, %v5137
        %5139 = vmatmul.bf16.gmra.mxu0 %v5050
        %v5140 = vpop.f32.mrf.mxu0
        %v5141 = vadd.f32 0.0, %v5140
        %v5142 = vpop.f32.mrf.mxu0
        %v5143 = vadd.f32 0.0, %v5142
        %5144 = vmatmul.bf16.gmra.mxu0 %v5053
        %v5145 = vpop.f32.mrf.mxu0
        %v5146 = vadd.f32 0.0, %v5145
        %v5147 = vpop.f32.mrf.mxu0
        %v5148 = vadd.f32 0.0, %v5147
        %5149 = vmatmul.bf16.gmra.mxu0 %v5056
        %v5150 = vpop.f32.mrf.mxu0
        %v5151 = vadd.f32 0.0, %v5150
        %v5152 = vpop.f32.mrf.mxu0
        %v5153 = vadd.f32 0.0, %v5152
        %5154 = vmatmul.bf16.gmra.mxu0 %v5059
        %v5155 = vpop.f32.mrf.mxu0
        %v5156 = vadd.f32 0.0, %v5155
        %v5157 = vpop.f32.mrf.mxu0
        %v5158 = vadd.f32 0.0, %v5157
        %5159 = vdwg.mxu0
        %v5160 = vadd.f32 %v4912, %v5071
        %v5161 = vadd.f32 %v4913, %v5073
        %v5162 = vadd.f32 %v4914, %v5076
        %v5163 = vadd.f32 %v4915, %v5078
        %v5164 = vadd.f32 %v4916, %v5081
        %v5165 = vadd.f32 %v4917, %v5083
        %v5166 = vadd.f32 %v4918, %v5086
        %v5167 = vadd.f32 %v4919, %v5088
        %v5168 = vadd.f32 %v4920, %v5091
        %v5169 = vadd.f32 %v4921, %v5093
        %v5170 = vadd.f32 %v4922, %v5096
        %v5171 = vadd.f32 %v4923, %v5098
        %v5172 = vadd.f32 %v4924, %v5101
        %v5173 = vadd.f32 %v4925, %v5103
        %v5174 = vadd.f32 %v4926, %v5106
        %v5175 = vadd.f32 %v4927, %v5108
        %v5176 = vadd.f32 %v4928, %v5111
        %v5177 = vadd.f32 %v4929, %v5113
        %v5178 = vadd.f32 %v4930, %v5116
        %v5179 = vadd.f32 %v4931, %v5118
        %v5180 = vadd.f32 %v4932, %v5121
        %v5181 = vadd.f32 %v4933, %v5123
        %v5182 = vadd.f32 %v4934, %v5126
        %v5183 = vadd.f32 %v4935, %v5128
        %v5184 = vadd.f32 %v4936, %v5131
        %v5185 = vadd.f32 %v4937, %v5133
        %v5186 = vadd.f32 %v4938, %v5136
        %v5187 = vadd.f32 %v4939, %v5138
        %v5188 = vadd.f32 %v4940, %v5141
        %v5189 = vadd.f32 %v4941, %v5143
        %v5190 = vadd.f32 %v4942, %v5146
        %v5191 = vadd.f32 %v4943, %v5148
        %v5192 = vadd.f32 %v4944, %v5151
        %v5193 = vadd.f32 %v4945, %v5153
        %v5194 = vadd.f32 %v4946, %v5156
        %v5195 = vadd.f32 %v4947, %v5158
        %v5196 = vld [vmem:[#allocation2 + $0x10] sm:$0xc]
        %v5197 = vld [vmem:[#allocation2 + $0x14] sm:$0xf]
        %v5198 = vld [vmem:[#allocation2 + $0x18] sm:$0xf]
        %v5199 = vld [vmem:[#allocation2 + $0x1c] sm:$0xf]
        %v5200 = vld [vmem:[#allocation2 + $0x20] sm:$0xf]
        %v5201 = vld [vmem:[#allocation2 + $0x24] sm:$0xf]
        %v5202 = vld [vmem:[#allocation2 + $0x28] sm:$0xf]
        %v5203 = vld [vmem:[#allocation2 + $0x2c] sm:$0xf]
        %v5204 = vld [vmem:[#allocation2 + $0x30] sm:$0xf]
        %v5205 = vld [vmem:[#allocation2 + $0x34] sm:$0xf]
        %v5206 = vld [vmem:[#allocation2 + $0x38] sm:$0xf]
        %v5207 = vld [vmem:[#allocation2 + $0x3c] sm:$0xf]
        %v5208 = vld [vmem:[#allocation2 + $0x40] sm:$0xf]
        %v5209 = vld [vmem:[#allocation2 + $0x44] sm:$0xf]
        %v5210 = vld [vmem:[#allocation2 + $0x48] sm:$0xf]
        %v5211 = vld [vmem:[#allocation2 + $0x4c] sm:$0xf]
        %v5212 = vld [vmem:[#allocation2 + $0x50] sm:$0xf]
        %v5213 = vld [vmem:[#allocation2 + $0x54] sm:$0xf]
        %v5214 = vld [vmem:[#allocation2 + $0x58] sm:$0xf]
        %v5215 = vld [vmem:[#allocation2 + $0x5c] sm:$0xf]
        %v5216 = vld [vmem:[#allocation2 + $0x60] sm:$0xf]
        %v5217 = vld [vmem:[#allocation2 + $0x64] sm:$0xf]
        %v5218 = vld [vmem:[#allocation2 + $0x68] sm:$0xf]
        %v5219 = vld [vmem:[#allocation2 + $0x6c] sm:$0xf]
        %v5220 = vld [vmem:[#allocation2 + $0x70] sm:$0xf]
        %v5221 = vld [vmem:[#allocation2 + $0x74] sm:$0xf]
        %v5222 = vld [vmem:[#allocation2 + $0x78] sm:$0xf]
        %v5223 = vld [vmem:[#allocation2 + $0x7c] sm:$0xf]
        %v5224 = vld [vmem:[#allocation2 + $0x80] sm:$0xf]
        %v5225 = vld [vmem:[#allocation2 + $0x84] sm:$0xf]
        %v5226 = vld [vmem:[#allocation2 + $0x88] sm:$0xf]
        %v5227 = vld [vmem:[#allocation2 + $0x8c] sm:$0xf]
        %v5228 = vld [vmem:[#allocation2 + $0x90] sm:$0xf]
        %v5229 = vld [vmem:[#allocation2 + $0x94] sm:$0xf]
        %v5230 = vld [vmem:[#allocation2 + $0x98] sm:$0xf]
        %v5231 = vld [vmem:[#allocation2 + $0x9c] sm:$0xf]
        %v5232 = vld [vmem:[#allocation2 + $0xa0] sm:$0x3]
        %s5233 = scalar_lea.vmem %s1, 96
        %v5234 = vld [vmem:[%s5233] sm:$0xf]
        %v5235 = vld [vmem:[%s5233 + $0x4] sm:$0xf]
        %v5236 = vld [vmem:[%s5233 + $0x8] sm:$0xf]
        %v5237 = vld [vmem:[%s5233 + $0xc] sm:$0xf]
        %v5275 = vunpack.c.l.b16 %v5196
        %v5276 = vunpack.c.l.b16 %v5197
        %v5277 = vunpack.c.l.b16 %v5198
        %v5278 = vunpack.c.l.b16 %v5199
        %v5279 = vunpack.c.l.b16 %v5200
        %v5280 = vunpack.c.l.b16 %v5201
        %v5281 = vunpack.c.l.b16 %v5202
        %v5282 = vunpack.c.l.b16 %v5203
        %v5283 = vunpack.c.l.b16 %v5204
        %v5284 = vunpack.c.l.b16 %v5205
        %v5285 = vunpack.c.l.b16 %v5206
        %v5286 = vunpack.c.l.b16 %v5207
        %v5287 = vunpack.c.l.b16 %v5208
        %v5288 = vunpack.c.l.b16 %v5209
        %v5289 = vunpack.c.l.b16 %v5210
        %v5290 = vunpack.c.l.b16 %v5211
        %v5291 = vunpack.c.l.b16 %v5212
        %v5292 = vunpack.c.l.b16 %v5213
        %v5293 = vunpack.c.l.b16 %v5214
        %v5294 = vunpack.c.l.b16 %v5215
        %v5295 = vunpack.c.l.b16 %v5216
        %v5296 = vunpack.c.l.b16 %v5217
        %v5297 = vunpack.c.l.b16 %v5218
        %v5298 = vunpack.c.l.b16 %v5219
        %v5299 = vunpack.c.l.b16 %v5220
        %v5300 = vunpack.c.l.b16 %v5221
        %v5301 = vunpack.c.l.b16 %v5222
        %v5302 = vunpack.c.l.b16 %v5223
        %v5303 = vunpack.c.l.b16 %v5224
        %v5304 = vunpack.c.l.b16 %v5225
        %v5305 = vunpack.c.l.b16 %v5226
        %v5306 = vunpack.c.l.b16 %v5227
        %v5307 = vunpack.c.l.b16 %v5228
        %v5308 = vunpack.c.l.b16 %v5229
        %v5309 = vunpack.c.l.b16 %v5230
        %v5310 = vunpack.c.l.b16 %v5231
        %v5311 = vunpack.c.l.b16 %v5232
        %v5312 = vpack.c.b16 %v5276, %v5275
        %v5313 = vpack.c.b16 %v5278, %v5277
        %v5314 = vpack.c.b16 %v5280, %v5279
        %v5315 = vpack.c.b16 %v5282, %v5281
        %v5316 = vpack.c.b16 %v5284, %v5283
        %v5317 = vpack.c.b16 %v5286, %v5285
        %v5318 = vpack.c.b16 %v5288, %v5287
        %v5319 = vpack.c.b16 %v5290, %v5289
        %v5320 = vpack.c.b16 %v5292, %v5291
        %v5321 = vpack.c.b16 %v5294, %v5293
        %v5322 = vpack.c.b16 %v5296, %v5295
        %v5323 = vpack.c.b16 %v5298, %v5297
        %v5324 = vpack.c.b16 %v5300, %v5299
        %v5325 = vpack.c.b16 %v5302, %v5301
        %v5326 = vpack.c.b16 %v5304, %v5303
        %v5327 = vpack.c.b16 %v5306, %v5305
        %v5328 = vpack.c.b16 %v5308, %v5307
        %v5329 = vpack.c.b16 %v5310, %v5309
        %v5330 = vpack.c.b16 %v5311, %v5311
        %v5331 = vrot.slane %v5312, 2
        %v5332 = vrot.slane %v5313, 2
        %v5333 = vsel %vm4957, %v5331, %v5332
        %v5334 = vrot.slane %v5314, 2
        %v5335 = vsel %vm4957, %v5332, %v5334
        %v5336 = vrot.slane %v5315, 2
        %v5337 = vsel %vm4957, %v5334, %v5336
        %v5338 = vrot.slane %v5316, 2
        %v5339 = vsel %vm4957, %v5336, %v5338
        %v5340 = vrot.slane %v5317, 2
        %v5341 = vsel %vm4957, %v5338, %v5340
        %v5342 = vrot.slane %v5318, 2
        %v5343 = vsel %vm4957, %v5340, %v5342
        %v5344 = vrot.slane %v5319, 2
        %v5345 = vsel %vm4957, %v5342, %v5344
        %v5346 = vrot.slane %v5320, 2
        %v5347 = vsel %vm4957, %v5344, %v5346
        %v5348 = vrot.slane %v5321, 2
        %v5349 = vsel %vm4957, %v5346, %v5348
        %v5350 = vrot.slane %v5322, 2
        %v5351 = vsel %vm4957, %v5348, %v5350
        %v5352 = vrot.slane %v5323, 2
        %v5353 = vsel %vm4957, %v5350, %v5352
        %v5354 = vrot.slane %v5324, 2
        %v5355 = vsel %vm4957, %v5352, %v5354
        %v5356 = vrot.slane %v5325, 2
        %v5357 = vsel %vm4957, %v5354, %v5356
        %v5358 = vrot.slane %v5326, 2
        %v5359 = vsel %vm4957, %v5356, %v5358
        %v5360 = vrot.slane %v5327, 2
        %v5361 = vsel %vm4957, %v5358, %v5360
        %v5362 = vrot.slane %v5328, 2
        %v5363 = vsel %vm4957, %v5360, %v5362
        %v5364 = vrot.slane %v5329, 2
        %v5365 = vsel %vm4957, %v5362, %v5364
        %v5366 = vrot.slane %v5330, 2
        %v5367 = vsel %vm4957, %v5364, %v5366
        %v5372 = vunpack.c.l.b16 %v5234
        %v5373 = vunpack.c.l.b16 %v5235
        %v5374 = vunpack.c.l.b16 %v5236
        %v5375 = vunpack.c.l.b16 %v5237
        %v5376 = vpack.c.b16 %v5373, %v5372
        %v5377 = vpack.c.b16 %v5375, %v5374
        %v5381 = vsel %vm3645, %v5333, 0
        %v5384 = vsel %vm3645, %v5335, 0
        %v5387 = vsel %vm3645, %v5337, 0
        %v5390 = vsel %vm3645, %v5339, 0
        %v5393 = vsel %vm3645, %v5341, 0
        %v5396 = vsel %vm3645, %v5343, 0
        %v5399 = vsel %vm3645, %v5345, 0
        %v5402 = vsel %vm3645, %v5347, 0
        %v5405 = vsel %vm3645, %v5349, 0
        %v5408 = vsel %vm3645, %v5351, 0
        %v5411 = vsel %vm3645, %v5353, 0
        %v5414 = vsel %vm3645, %v5355, 0
        %v5417 = vsel %vm3645, %v5357, 0
        %v5420 = vsel %vm3645, %v5359, 0
        %v5423 = vsel %vm3645, %v5361, 0
        %v5426 = vsel %vm3645, %v5363, 0
        %v5429 = vsel %vm3645, %v5365, 0
        %v5432 = vsel %vm3645, %v5367, 0
        %5434 = vmatpush.bf16.msra.mxu0 0
        %5435 = vmatpush.bf16.msra.mxu0 0
        %5436 = vmatpush.bf16.msra.mxu0 0
        %5437 = vmatpush.bf16.msra.mxu0 0
        %5438 = vmatpush.bf16.msra.mxu0 0
        %5439 = vmatpush.bf16.msra.mxu0 0
        %5440 = vmatpush.bf16.msra.mxu0 %v5377
        %5441 = vmatpush.bf16.msra.mxu0 %v5376
        %5442 = vmatmul.bf16.gmra.mxu0 %v5381
        %v5443 = vpop.f32.mrf.mxu0
        %v5444 = vadd.f32 0.0, %v5443
        %v5445 = vpop.f32.mrf.mxu0
        %v5446 = vadd.f32 0.0, %v5445
        %5447 = vmatmul.bf16.gmra.mxu0 %v5384
        %v5448 = vpop.f32.mrf.mxu0
        %v5449 = vadd.f32 0.0, %v5448
        %v5450 = vpop.f32.mrf.mxu0
        %v5451 = vadd.f32 0.0, %v5450
        %5452 = vmatmul.bf16.gmra.mxu0 %v5387
        %v5453 = vpop.f32.mrf.mxu0
        %v5454 = vadd.f32 0.0, %v5453
        %v5455 = vpop.f32.mrf.mxu0
        %v5456 = vadd.f32 0.0, %v5455
        %5457 = vmatmul.bf16.gmra.mxu0 %v5390
        %v5458 = vpop.f32.mrf.mxu0
        %v5459 = vadd.f32 0.0, %v5458
        %v5460 = vpop.f32.mrf.mxu0
        %v5461 = vadd.f32 0.0, %v5460
        %5462 = vmatmul.bf16.gmra.mxu0 %v5393
        %v5463 = vpop.f32.mrf.mxu0
        %v5464 = vadd.f32 0.0, %v5463
        %v5465 = vpop.f32.mrf.mxu0
        %v5466 = vadd.f32 0.0, %v5465
        %5467 = vmatmul.bf16.gmra.mxu0 %v5396
        %v5468 = vpop.f32.mrf.mxu0
        %v5469 = vadd.f32 0.0, %v5468
        %v5470 = vpop.f32.mrf.mxu0
        %v5471 = vadd.f32 0.0, %v5470
        %5472 = vmatmul.bf16.gmra.mxu0 %v5399
        %v5473 = vpop.f32.mrf.mxu0
        %v5474 = vadd.f32 0.0, %v5473
        %v5475 = vpop.f32.mrf.mxu0
        %v5476 = vadd.f32 0.0, %v5475
        %5477 = vmatmul.bf16.gmra.mxu0 %v5402
        %v5478 = vpop.f32.mrf.mxu0
        %v5479 = vadd.f32 0.0, %v5478
        %v5480 = vpop.f32.mrf.mxu0
        %v5481 = vadd.f32 0.0, %v5480
        %5482 = vmatmul.bf16.gmra.mxu0 %v5405
        %v5483 = vpop.f32.mrf.mxu0
        %v5484 = vadd.f32 0.0, %v5483
        %v5485 = vpop.f32.mrf.mxu0
        %v5486 = vadd.f32 0.0, %v5485
        %5487 = vmatmul.bf16.gmra.mxu0 %v5408
        %v5488 = vpop.f32.mrf.mxu0
        %v5489 = vadd.f32 0.0, %v5488
        %v5490 = vpop.f32.mrf.mxu0
        %v5491 = vadd.f32 0.0, %v5490
        %5492 = vmatmul.bf16.gmra.mxu0 %v5411
        %v5493 = vpop.f32.mrf.mxu0
        %v5494 = vadd.f32 0.0, %v5493
        %v5495 = vpop.f32.mrf.mxu0
        %v5496 = vadd.f32 0.0, %v5495
        %5497 = vmatmul.bf16.gmra.mxu0 %v5414
        %v5498 = vpop.f32.mrf.mxu0
        %v5499 = vadd.f32 0.0, %v5498
        %v5500 = vpop.f32.mrf.mxu0
        %v5501 = vadd.f32 0.0, %v5500
        %5502 = vmatmul.bf16.gmra.mxu0 %v5417
        %v5503 = vpop.f32.mrf.mxu0
        %v5504 = vadd.f32 0.0, %v5503
        %v5505 = vpop.f32.mrf.mxu0
        %v5506 = vadd.f32 0.0, %v5505
        %5507 = vmatmul.bf16.gmra.mxu0 %v5420
        %v5508 = vpop.f32.mrf.mxu0
        %v5509 = vadd.f32 0.0, %v5508
        %v5510 = vpop.f32.mrf.mxu0
        %v5511 = vadd.f32 0.0, %v5510
        %5512 = vmatmul.bf16.gmra.mxu0 %v5423
        %v5513 = vpop.f32.mrf.mxu0
        %v5514 = vadd.f32 0.0, %v5513
        %v5515 = vpop.f32.mrf.mxu0
        %v5516 = vadd.f32 0.0, %v5515
        %5517 = vmatmul.bf16.gmra.mxu0 %v5426
        %v5518 = vpop.f32.mrf.mxu0
        %v5519 = vadd.f32 0.0, %v5518
        %v5520 = vpop.f32.mrf.mxu0
        %v5521 = vadd.f32 0.0, %v5520
        %5522 = vmatmul.bf16.gmra.mxu0 %v5429
        %v5523 = vpop.f32.mrf.mxu0
        %v5524 = vadd.f32 0.0, %v5523
        %v5525 = vpop.f32.mrf.mxu0
        %v5526 = vadd.f32 0.0, %v5525
        %5527 = vmatmul.bf16.gmra.mxu0 %v5432
        %v5528 = vpop.f32.mrf.mxu0
        %v5529 = vadd.f32 0.0, %v5528
        %v5530 = vpop.f32.mrf.mxu0
        %v5531 = vadd.f32 0.0, %v5530
        %5532 = vdwg.mxu0
        %v5533 = vadd.f32 %v5160, %v5444
        %v5534 = vadd.f32 %v5161, %v5446
        %v5535 = vadd.f32 %v5162, %v5449
        %v5536 = vadd.f32 %v5163, %v5451
        %v5537 = vadd.f32 %v5164, %v5454
        %v5538 = vadd.f32 %v5165, %v5456
        %v5539 = vadd.f32 %v5166, %v5459
        %v5540 = vadd.f32 %v5167, %v5461
        %v5541 = vadd.f32 %v5168, %v5464
        %v5542 = vadd.f32 %v5169, %v5466
        %v5543 = vadd.f32 %v5170, %v5469
        %v5544 = vadd.f32 %v5171, %v5471
        %v5545 = vadd.f32 %v5172, %v5474
        %v5546 = vadd.f32 %v5173, %v5476
        %v5547 = vadd.f32 %v5174, %v5479
        %v5548 = vadd.f32 %v5175, %v5481
        %v5549 = vadd.f32 %v5176, %v5484
        %v5550 = vadd.f32 %v5177, %v5486
        %v5551 = vadd.f32 %v5178, %v5489
        %v5552 = vadd.f32 %v5179, %v5491
        %v5553 = vadd.f32 %v5180, %v5494
        %v5554 = vadd.f32 %v5181, %v5496
        %v5555 = vadd.f32 %v5182, %v5499
        %v5556 = vadd.f32 %v5183, %v5501
        %v5557 = vadd.f32 %v5184, %v5504
        %v5558 = vadd.f32 %v5185, %v5506
        %v5559 = vadd.f32 %v5186, %v5509
        %v5560 = vadd.f32 %v5187, %v5511
        %v5561 = vadd.f32 %v5188, %v5514
        %v5562 = vadd.f32 %v5189, %v5516
        %v5563 = vadd.f32 %v5190, %v5519
        %v5564 = vadd.f32 %v5191, %v5521
        %v5565 = vadd.f32 %v5192, %v5524
        %v5566 = vadd.f32 %v5193, %v5526
        %v5567 = vadd.f32 %v5194, %v5529
        %v5568 = vadd.f32 %v5195, %v5531
        %v5569 = vld [vmem:[#allocation2 + $0xa0] sm:$0x7]
        %s5570 = scalar_lea.vmem %s1, 112
        %v5571 = vld [vmem:[%s5570] sm:$0xf]
        %v5572 = vld [vmem:[%s5570 + $0x4] sm:$0xf]
        %v5573 = vld [vmem:[%s5570 + $0x8] sm:$0xf]
        %v5574 = vld [vmem:[%s5570 + $0xc] sm:$0xf]
        %v5576 = vunpack.c.l.b16 %v5569
        %v5577 = vpack.c.b16 %v5576, %v5576
        %vm5578 = vsmask.f32 5376
        %v5580 = vshrl.u32 %v5312, 16
        %v5582 = vrot.slane %v5580, 2
        %v5583 = vshll.u32 %v5312, 16
        %v5585 = vrot.slane %v5583, 3
        %v5586 = vor.u32 %v5582, %v5585
        %v5588 = vshrl.u32 %v5313, 16
        %v5590 = vrot.slane %v5588, 2
        %v5591 = vshll.u32 %v5313, 16
        %v5593 = vrot.slane %v5591, 3
        %v5594 = vor.u32 %v5590, %v5593
        %v5595 = vsel %vm5578, %v5586, %v5594
        %v5597 = vshrl.u32 %v5314, 16
        %v5599 = vrot.slane %v5597, 2
        %v5600 = vshll.u32 %v5314, 16
        %v5602 = vrot.slane %v5600, 3
        %v5603 = vor.u32 %v5599, %v5602
        %v5604 = vsel %vm5578, %v5594, %v5603
        %v5606 = vshrl.u32 %v5315, 16
        %v5608 = vrot.slane %v5606, 2
        %v5609 = vshll.u32 %v5315, 16
        %v5611 = vrot.slane %v5609, 3
        %v5612 = vor.u32 %v5608, %v5611
        %v5613 = vsel %vm5578, %v5603, %v5612
        %v5615 = vshrl.u32 %v5316, 16
        %v5617 = vrot.slane %v5615, 2
        %v5618 = vshll.u32 %v5316, 16
        %v5620 = vrot.slane %v5618, 3
        %v5621 = vor.u32 %v5617, %v5620
        %v5622 = vsel %vm5578, %v5612, %v5621
        %v5624 = vshrl.u32 %v5317, 16
        %v5626 = vrot.slane %v5624, 2
        %v5627 = vshll.u32 %v5317, 16
        %v5629 = vrot.slane %v5627, 3
        %v5630 = vor.u32 %v5626, %v5629
        %v5631 = vsel %vm5578, %v5621, %v5630
        %v5633 = vshrl.u32 %v5318, 16
        %v5635 = vrot.slane %v5633, 2
        %v5636 = vshll.u32 %v5318, 16
        %v5638 = vrot.slane %v5636, 3
        %v5639 = vor.u32 %v5635, %v5638
        %v5640 = vsel %vm5578, %v5630, %v5639
        %v5642 = vshrl.u32 %v5319, 16
        %v5644 = vrot.slane %v5642, 2
        %v5645 = vshll.u32 %v5319, 16
        %v5647 = vrot.slane %v5645, 3
        %v5648 = vor.u32 %v5644, %v5647
        %v5649 = vsel %vm5578, %v5639, %v5648
        %v5651 = vshrl.u32 %v5320, 16
        %v5653 = vrot.slane %v5651, 2
        %v5654 = vshll.u32 %v5320, 16
        %v5656 = vrot.slane %v5654, 3
        %v5657 = vor.u32 %v5653, %v5656
        %v5658 = vsel %vm5578, %v5648, %v5657
        %v5660 = vshrl.u32 %v5321, 16
        %v5662 = vrot.slane %v5660, 2
        %v5663 = vshll.u32 %v5321, 16
        %v5665 = vrot.slane %v5663, 3
        %v5666 = vor.u32 %v5662, %v5665
        %v5667 = vsel %vm5578, %v5657, %v5666
        %v5669 = vshrl.u32 %v5322, 16
        %v5671 = vrot.slane %v5669, 2
        %v5672 = vshll.u32 %v5322, 16
        %v5674 = vrot.slane %v5672, 3
        %v5675 = vor.u32 %v5671, %v5674
        %v5676 = vsel %vm5578, %v5666, %v5675
        %v5678 = vshrl.u32 %v5323, 16
        %v5680 = vrot.slane %v5678, 2
        %v5681 = vshll.u32 %v5323, 16
        %v5683 = vrot.slane %v5681, 3
        %v5684 = vor.u32 %v5680, %v5683
        %v5685 = vsel %vm5578, %v5675, %v5684
        %v5687 = vshrl.u32 %v5324, 16
        %v5689 = vrot.slane %v5687, 2
        %v5690 = vshll.u32 %v5324, 16
        %v5692 = vrot.slane %v5690, 3
        %v5693 = vor.u32 %v5689, %v5692
        %v5694 = vsel %vm5578, %v5684, %v5693
        %v5696 = vshrl.u32 %v5325, 16
        %v5698 = vrot.slane %v5696, 2
        %v5699 = vshll.u32 %v5325, 16
        %v5701 = vrot.slane %v5699, 3
        %v5702 = vor.u32 %v5698, %v5701
        %v5703 = vsel %vm5578, %v5693, %v5702
        %v5705 = vshrl.u32 %v5326, 16
        %v5707 = vrot.slane %v5705, 2
        %v5708 = vshll.u32 %v5326, 16
        %v5710 = vrot.slane %v5708, 3
        %v5711 = vor.u32 %v5707, %v5710
        %v5712 = vsel %vm5578, %v5702, %v5711
        %v5714 = vshrl.u32 %v5327, 16
        %v5716 = vrot.slane %v5714, 2
        %v5717 = vshll.u32 %v5327, 16
        %v5719 = vrot.slane %v5717, 3
        %v5720 = vor.u32 %v5716, %v5719
        %v5721 = vsel %vm5578, %v5711, %v5720
        %v5723 = vshrl.u32 %v5328, 16
        %v5725 = vrot.slane %v5723, 2
        %v5726 = vshll.u32 %v5328, 16
        %v5728 = vrot.slane %v5726, 3
        %v5729 = vor.u32 %v5725, %v5728
        %v5730 = vsel %vm5578, %v5720, %v5729
        %v5732 = vshrl.u32 %v5329, 16
        %v5734 = vrot.slane %v5732, 2
        %v5735 = vshll.u32 %v5329, 16
        %v5737 = vrot.slane %v5735, 3
        %v5738 = vor.u32 %v5734, %v5737
        %v5739 = vsel %vm5578, %v5729, %v5738
        %v5741 = vshrl.u32 %v5577, 16
        %v5743 = vrot.slane %v5741, 2
        %v5744 = vshll.u32 %v5577, 16
        %v5746 = vrot.slane %v5744, 3
        %v5747 = vor.u32 %v5743, %v5746
        %v5748 = vsel %vm5578, %v5738, %v5747
        %v5753 = vunpack.c.l.b16 %v5571
        %v5754 = vunpack.c.l.b16 %v5572
        %v5755 = vunpack.c.l.b16 %v5573
        %v5756 = vunpack.c.l.b16 %v5574
        %v5757 = vpack.c.b16 %v5754, %v5753
        %v5758 = vpack.c.b16 %v5756, %v5755
        %v5762 = vsel %vm3645, %v5595, 0
        %v5765 = vsel %vm3645, %v5604, 0
        %v5768 = vsel %vm3645, %v5613, 0
        %v5771 = vsel %vm3645, %v5622, 0
        %v5774 = vsel %vm3645, %v5631, 0
        %v5777 = vsel %vm3645, %v5640, 0
        %v5780 = vsel %vm3645, %v5649, 0
        %v5783 = vsel %vm3645, %v5658, 0
        %v5786 = vsel %vm3645, %v5667, 0
        %v5789 = vsel %vm3645, %v5676, 0
        %v5792 = vsel %vm3645, %v5685, 0
        %v5795 = vsel %vm3645, %v5694, 0
        %v5798 = vsel %vm3645, %v5703, 0
        %v5801 = vsel %vm3645, %v5712, 0
        %v5804 = vsel %vm3645, %v5721, 0
        %v5807 = vsel %vm3645, %v5730, 0
        %v5810 = vsel %vm3645, %v5739, 0
        %v5813 = vsel %vm3645, %v5748, 0
        %5815 = vmatpush.bf16.msra.mxu0 0
        %5816 = vmatpush.bf16.msra.mxu0 0
        %5817 = vmatpush.bf16.msra.mxu0 0
        %5818 = vmatpush.bf16.msra.mxu0 0
        %5819 = vmatpush.bf16.msra.mxu0 0
        %5820 = vmatpush.bf16.msra.mxu0 0
        %5821 = vmatpush.bf16.msra.mxu0 %v5758
        %5822 = vmatpush.bf16.msra.mxu0 %v5757
        %5823 = vmatmul.bf16.gmra.mxu0 %v5762
        %v5824 = vpop.f32.mrf.mxu0
        %v5825 = vadd.f32 0.0, %v5824
        %v5826 = vpop.f32.mrf.mxu0
        %v5827 = vadd.f32 0.0, %v5826
        %5828 = vmatmul.bf16.gmra.mxu0 %v5765
        %v5829 = vpop.f32.mrf.mxu0
        %v5830 = vadd.f32 0.0, %v5829
        %v5831 = vpop.f32.mrf.mxu0
        %v5832 = vadd.f32 0.0, %v5831
        %5833 = vmatmul.bf16.gmra.mxu0 %v5768
        %v5834 = vpop.f32.mrf.mxu0
        %v5835 = vadd.f32 0.0, %v5834
        %v5836 = vpop.f32.mrf.mxu0
        %v5837 = vadd.f32 0.0, %v5836
        %5838 = vmatmul.bf16.gmra.mxu0 %v5771
        %v5839 = vpop.f32.mrf.mxu0
        %v5840 = vadd.f32 0.0, %v5839
        %v5841 = vpop.f32.mrf.mxu0
        %v5842 = vadd.f32 0.0, %v5841
        %5843 = vmatmul.bf16.gmra.mxu0 %v5774
        %v5844 = vpop.f32.mrf.mxu0
        %v5845 = vadd.f32 0.0, %v5844
        %v5846 = vpop.f32.mrf.mxu0
        %v5847 = vadd.f32 0.0, %v5846
        %5848 = vmatmul.bf16.gmra.mxu0 %v5777
        %v5849 = vpop.f32.mrf.mxu0
        %v5850 = vadd.f32 0.0, %v5849
        %v5851 = vpop.f32.mrf.mxu0
        %v5852 = vadd.f32 0.0, %v5851
        %5853 = vmatmul.bf16.gmra.mxu0 %v5780
        %v5854 = vpop.f32.mrf.mxu0
        %v5855 = vadd.f32 0.0, %v5854
        %v5856 = vpop.f32.mrf.mxu0
        %v5857 = vadd.f32 0.0, %v5856
        %5858 = vmatmul.bf16.gmra.mxu0 %v5783
        %v5859 = vpop.f32.mrf.mxu0
        %v5860 = vadd.f32 0.0, %v5859
        %v5861 = vpop.f32.mrf.mxu0
        %v5862 = vadd.f32 0.0, %v5861
        %5863 = vmatmul.bf16.gmra.mxu0 %v5786
        %v5864 = vpop.f32.mrf.mxu0
        %v5865 = vadd.f32 0.0, %v5864
        %v5866 = vpop.f32.mrf.mxu0
        %v5867 = vadd.f32 0.0, %v5866
        %5868 = vmatmul.bf16.gmra.mxu0 %v5789
        %v5869 = vpop.f32.mrf.mxu0
        %v5870 = vadd.f32 0.0, %v5869
        %v5871 = vpop.f32.mrf.mxu0
        %v5872 = vadd.f32 0.0, %v5871
        %5873 = vmatmul.bf16.gmra.mxu0 %v5792
        %v5874 = vpop.f32.mrf.mxu0
        %v5875 = vadd.f32 0.0, %v5874
        %v5876 = vpop.f32.mrf.mxu0
        %v5877 = vadd.f32 0.0, %v5876
        %5878 = vmatmul.bf16.gmra.mxu0 %v5795
        %v5879 = vpop.f32.mrf.mxu0
        %v5880 = vadd.f32 0.0, %v5879
        %v5881 = vpop.f32.mrf.mxu0
        %v5882 = vadd.f32 0.0, %v5881
        %5883 = vmatmul.bf16.gmra.mxu0 %v5798
        %v5884 = vpop.f32.mrf.mxu0
        %v5885 = vadd.f32 0.0, %v5884
        %v5886 = vpop.f32.mrf.mxu0
        %v5887 = vadd.f32 0.0, %v5886
        %5888 = vmatmul.bf16.gmra.mxu0 %v5801
        %v5889 = vpop.f32.mrf.mxu0
        %v5890 = vadd.f32 0.0, %v5889
        %v5891 = vpop.f32.mrf.mxu0
        %v5892 = vadd.f32 0.0, %v5891
        %5893 = vmatmul.bf16.gmra.mxu0 %v5804
        %v5894 = vpop.f32.mrf.mxu0
        %v5895 = vadd.f32 0.0, %v5894
        %v5896 = vpop.f32.mrf.mxu0
        %v5897 = vadd.f32 0.0, %v5896
        %5898 = vmatmul.bf16.gmra.mxu0 %v5807
        %v5899 = vpop.f32.mrf.mxu0
        %v5900 = vadd.f32 0.0, %v5899
        %v5901 = vpop.f32.mrf.mxu0
        %v5902 = vadd.f32 0.0, %v5901
        %5903 = vmatmul.bf16.gmra.mxu0 %v5810
        %v5904 = vpop.f32.mrf.mxu0
        %v5905 = vadd.f32 0.0, %v5904
        %v5906 = vpop.f32.mrf.mxu0
        %v5907 = vadd.f32 0.0, %v5906
        %5908 = vmatmul.bf16.gmra.mxu0 %v5813
        %v5909 = vpop.f32.mrf.mxu0
        %v5910 = vadd.f32 0.0, %v5909
        %v5911 = vpop.f32.mrf.mxu0
        %v5912 = vadd.f32 0.0, %v5911
        %5913 = vdwg.mxu0
        %v5914 = vadd.f32 %v5533, %v5825
        %v5915 = vadd.f32 %v5534, %v5827
        %v5916 = vadd.f32 %v5535, %v5830
        %v5917 = vadd.f32 %v5536, %v5832
        %v5918 = vadd.f32 %v5537, %v5835
        %v5919 = vadd.f32 %v5538, %v5837
        %v5920 = vadd.f32 %v5539, %v5840
        %v5921 = vadd.f32 %v5540, %v5842
        %v5922 = vadd.f32 %v5541, %v5845
        %v5923 = vadd.f32 %v5542, %v5847
        %v5924 = vadd.f32 %v5543, %v5850
        %v5925 = vadd.f32 %v5544, %v5852
        %v5926 = vadd.f32 %v5545, %v5855
        %v5927 = vadd.f32 %v5546, %v5857
        %v5928 = vadd.f32 %v5547, %v5860
        %v5929 = vadd.f32 %v5548, %v5862
        %v5930 = vadd.f32 %v5549, %v5865
        %v5931 = vadd.f32 %v5550, %v5867
        %v5932 = vadd.f32 %v5551, %v5870
        %v5933 = vadd.f32 %v5552, %v5872
        %v5934 = vadd.f32 %v5553, %v5875
        %v5935 = vadd.f32 %v5554, %v5877
        %v5936 = vadd.f32 %v5555, %v5880
        %v5937 = vadd.f32 %v5556, %v5882
        %v5938 = vadd.f32 %v5557, %v5885
        %v5939 = vadd.f32 %v5558, %v5887
        %v5940 = vadd.f32 %v5559, %v5890
        %v5941 = vadd.f32 %v5560, %v5892
        %v5942 = vadd.f32 %v5561, %v5895
        %v5943 = vadd.f32 %v5562, %v5897
        %v5944 = vadd.f32 %v5563, %v5900
        %v5945 = vadd.f32 %v5564, %v5902
        %v5946 = vadd.f32 %v5565, %v5905
        %v5947 = vadd.f32 %v5566, %v5907
        %v5948 = vadd.f32 %v5567, %v5910
        %v5949 = vadd.f32 %v5568, %v5912
        %v5950 = vld [vmem:[#allocation2 + $0x10] sm:$0x8]
        %s5951 = scalar_lea.vmem %s1, 128
        %v5952 = vld [vmem:[%s5951] sm:$0xf]
        %v5953 = vld [vmem:[%s5951 + $0x4] sm:$0xf]
        %v5954 = vld [vmem:[%s5951 + $0x8] sm:$0xf]
        %v5955 = vld [vmem:[%s5951 + $0xc] sm:$0xf]
        %v5957 = vunpack.c.l.b16 %v5950
        %v5958 = vpack.c.b16 %v5276, %v5957
        %vm5959 = vcmask 1044480
        %v5960 = vrot.slane %v5958, 3
        %v5961 = vrot.slane %v5313, 3
        %v5962 = vsel %vm5959, %v5960, %v5961
        %v5963 = vrot.slane %v5314, 3
        %v5964 = vsel %vm5959, %v5961, %v5963
        %v5965 = vrot.slane %v5315, 3
        %v5966 = vsel %vm5959, %v5963, %v5965
        %v5967 = vrot.slane %v5316, 3
        %v5968 = vsel %vm5959, %v5965, %v5967
        %v5969 = vrot.slane %v5317, 3
        %v5970 = vsel %vm5959, %v5967, %v5969
        %v5971 = vrot.slane %v5318, 3
        %v5972 = vsel %vm5959, %v5969, %v5971
        %v5973 = vrot.slane %v5319, 3
        %v5974 = vsel %vm5959, %v5971, %v5973
        %v5975 = vrot.slane %v5320, 3
        %v5976 = vsel %vm5959, %v5973, %v5975
        %v5977 = vrot.slane %v5321, 3
        %v5978 = vsel %vm5959, %v5975, %v5977
        %v5979 = vrot.slane %v5322, 3
        %v5980 = vsel %vm5959, %v5977, %v5979
        %v5981 = vrot.slane %v5323, 3
        %v5982 = vsel %vm5959, %v5979, %v5981
        %v5983 = vrot.slane %v5324, 3
        %v5984 = vsel %vm5959, %v5981, %v5983
        %v5985 = vrot.slane %v5325, 3
        %v5986 = vsel %vm5959, %v5983, %v5985
        %v5987 = vrot.slane %v5326, 3
        %v5988 = vsel %vm5959, %v5985, %v5987
        %v5989 = vrot.slane %v5327, 3
        %v5990 = vsel %vm5959, %v5987, %v5989
        %v5991 = vrot.slane %v5328, 3
        %v5992 = vsel %vm5959, %v5989, %v5991
        %v5993 = vrot.slane %v5329, 3
        %v5994 = vsel %vm5959, %v5991, %v5993
        %v5995 = vrot.slane %v5577, 3
        %v5996 = vsel %vm5959, %v5993, %v5995
        %v6001 = vunpack.c.l.b16 %v5952
        %v6002 = vunpack.c.l.b16 %v5953
        %v6003 = vunpack.c.l.b16 %v5954
        %v6004 = vunpack.c.l.b16 %v5955
        %v6005 = vpack.c.b16 %v6002, %v6001
        %v6006 = vpack.c.b16 %v6004, %v6003
        %v6010 = vsel %vm3645, %v5962, 0
        %v6013 = vsel %vm3645, %v5964, 0
        %v6016 = vsel %vm3645, %v5966, 0
        %v6019 = vsel %vm3645, %v5968, 0
        %v6022 = vsel %vm3645, %v5970, 0
        %v6025 = vsel %vm3645, %v5972, 0
        %v6028 = vsel %vm3645, %v5974, 0
        %v6031 = vsel %vm3645, %v5976, 0
        %v6034 = vsel %vm3645, %v5978, 0
        %v6037 = vsel %vm3645, %v5980, 0
        %v6040 = vsel %vm3645, %v5982, 0
        %v6043 = vsel %vm3645, %v5984, 0
        %v6046 = vsel %vm3645, %v5986, 0
        %v6049 = vsel %vm3645, %v5988, 0
        %v6052 = vsel %vm3645, %v5990, 0
        %v6055 = vsel %vm3645, %v5992, 0
        %v6058 = vsel %vm3645, %v5994, 0
        %v6061 = vsel %vm3645, %v5996, 0
        %6063 = vmatpush.bf16.msra.mxu0 0
        %6064 = vmatpush.bf16.msra.mxu0 0
        %6065 = vmatpush.bf16.msra.mxu0 0
        %6066 = vmatpush.bf16.msra.mxu0 0
        %6067 = vmatpush.bf16.msra.mxu0 0
        %6068 = vmatpush.bf16.msra.mxu0 0
        %6069 = vmatpush.bf16.msra.mxu0 %v6006
        %6070 = vmatpush.bf16.msra.mxu0 %v6005
        %6071 = vmatmul.bf16.gmra.mxu0 %v6010
        %v6072 = vpop.f32.mrf.mxu0
        %v6073 = vadd.f32 0.0, %v6072
        %v6074 = vpop.f32.mrf.mxu0
        %v6075 = vadd.f32 0.0, %v6074
        %6076 = vmatmul.bf16.gmra.mxu0 %v6013
        %v6077 = vpop.f32.mrf.mxu0
        %v6078 = vadd.f32 0.0, %v6077
        %v6079 = vpop.f32.mrf.mxu0
        %v6080 = vadd.f32 0.0, %v6079
        %6081 = vmatmul.bf16.gmra.mxu0 %v6016
        %v6082 = vpop.f32.mrf.mxu0
        %v6083 = vadd.f32 0.0, %v6082
        %v6084 = vpop.f32.mrf.mxu0
        %v6085 = vadd.f32 0.0, %v6084
        %6086 = vmatmul.bf16.gmra.mxu0 %v6019
        %v6087 = vpop.f32.mrf.mxu0
        %v6088 = vadd.f32 0.0, %v6087
        %v6089 = vpop.f32.mrf.mxu0
        %v6090 = vadd.f32 0.0, %v6089
        %6091 = vmatmul.bf16.gmra.mxu0 %v6022
        %v6092 = vpop.f32.mrf.mxu0
        %v6093 = vadd.f32 0.0, %v6092
        %v6094 = vpop.f32.mrf.mxu0
        %v6095 = vadd.f32 0.0, %v6094
        %6096 = vmatmul.bf16.gmra.mxu0 %v6025
        %v6097 = vpop.f32.mrf.mxu0
        %v6098 = vadd.f32 0.0, %v6097
        %v6099 = vpop.f32.mrf.mxu0
        %v6100 = vadd.f32 0.0, %v6099
        %6101 = vmatmul.bf16.gmra.mxu0 %v6028
        %v6102 = vpop.f32.mrf.mxu0
        %v6103 = vadd.f32 0.0, %v6102
        %v6104 = vpop.f32.mrf.mxu0
        %v6105 = vadd.f32 0.0, %v6104
        %6106 = vmatmul.bf16.gmra.mxu0 %v6031
        %v6107 = vpop.f32.mrf.mxu0
        %v6108 = vadd.f32 0.0, %v6107
        %v6109 = vpop.f32.mrf.mxu0
        %v6110 = vadd.f32 0.0, %v6109
        %6111 = vmatmul.bf16.gmra.mxu0 %v6034
        %v6112 = vpop.f32.mrf.mxu0
        %v6113 = vadd.f32 0.0, %v6112
        %v6114 = vpop.f32.mrf.mxu0
        %v6115 = vadd.f32 0.0, %v6114
        %6116 = vmatmul.bf16.gmra.mxu0 %v6037
        %v6117 = vpop.f32.mrf.mxu0
        %v6118 = vadd.f32 0.0, %v6117
        %v6119 = vpop.f32.mrf.mxu0
        %v6120 = vadd.f32 0.0, %v6119
        %6121 = vmatmul.bf16.gmra.mxu0 %v6040
        %v6122 = vpop.f32.mrf.mxu0
        %v6123 = vadd.f32 0.0, %v6122
        %v6124 = vpop.f32.mrf.mxu0
        %v6125 = vadd.f32 0.0, %v6124
        %6126 = vmatmul.bf16.gmra.mxu0 %v6043
        %v6127 = vpop.f32.mrf.mxu0
        %v6128 = vadd.f32 0.0, %v6127
        %v6129 = vpop.f32.mrf.mxu0
        %v6130 = vadd.f32 0.0, %v6129
        %6131 = vmatmul.bf16.gmra.mxu0 %v6046
        %v6132 = vpop.f32.mrf.mxu0
        %v6133 = vadd.f32 0.0, %v6132
        %v6134 = vpop.f32.mrf.mxu0
        %v6135 = vadd.f32 0.0, %v6134
        %6136 = vmatmul.bf16.gmra.mxu0 %v6049
        %v6137 = vpop.f32.mrf.mxu0
        %v6138 = vadd.f32 0.0, %v6137
        %v6139 = vpop.f32.mrf.mxu0
        %v6140 = vadd.f32 0.0, %v6139
        %6141 = vmatmul.bf16.gmra.mxu0 %v6052
        %v6142 = vpop.f32.mrf.mxu0
        %v6143 = vadd.f32 0.0, %v6142
        %v6144 = vpop.f32.mrf.mxu0
        %v6145 = vadd.f32 0.0, %v6144
        %6146 = vmatmul.bf16.gmra.mxu0 %v6055
        %v6147 = vpop.f32.mrf.mxu0
        %v6148 = vadd.f32 0.0, %v6147
        %v6149 = vpop.f32.mrf.mxu0
        %v6150 = vadd.f32 0.0, %v6149
        %6151 = vmatmul.bf16.gmra.mxu0 %v6058
        %v6152 = vpop.f32.mrf.mxu0
        %v6153 = vadd.f32 0.0, %v6152
        %v6154 = vpop.f32.mrf.mxu0
        %v6155 = vadd.f32 0.0, %v6154
        %6156 = vmatmul.bf16.gmra.mxu0 %v6061
        %v6157 = vpop.f32.mrf.mxu0
        %v6158 = vadd.f32 0.0, %v6157
        %v6159 = vpop.f32.mrf.mxu0
        %v6160 = vadd.f32 0.0, %v6159
        %6161 = vdwg.mxu0
        %v6162 = vadd.f32 %v5914, %v6073
        %v6163 = vadd.f32 %v5915, %v6075
        %v6164 = vadd.f32 %v5916, %v6078
        %v6165 = vadd.f32 %v5917, %v6080
        %v6166 = vadd.f32 %v5918, %v6083
        %v6167 = vadd.f32 %v5919, %v6085
        %v6168 = vadd.f32 %v5920, %v6088
        %v6169 = vadd.f32 %v5921, %v6090
        %v6170 = vadd.f32 %v5922, %v6093
        %v6171 = vadd.f32 %v5923, %v6095
        %v6172 = vadd.f32 %v5924, %v6098
        %v6173 = vadd.f32 %v5925, %v6100
        %v6174 = vadd.f32 %v5926, %v6103
        %v6175 = vadd.f32 %v5927, %v6105
        %v6176 = vadd.f32 %v5928, %v6108
        %v6177 = vadd.f32 %v5929, %v6110
        %v6178 = vadd.f32 %v5930, %v6113
        %v6179 = vadd.f32 %v5931, %v6115
        %v6180 = vadd.f32 %v5932, %v6118
        %v6181 = vadd.f32 %v5933, %v6120
        %v6182 = vadd.f32 %v5934, %v6123
        %v6183 = vadd.f32 %v5935, %v6125
        %v6184 = vadd.f32 %v5936, %v6128
        %v6185 = vadd.f32 %v5937, %v6130
        %v6186 = vadd.f32 %v5938, %v6133
        %v6187 = vadd.f32 %v5939, %v6135
        %v6188 = vadd.f32 %v5940, %v6138
        %v6189 = vadd.f32 %v5941, %v6140
        %v6190 = vadd.f32 %v5942, %v6143
        %v6191 = vadd.f32 %v5943, %v6145
        %v6192 = vadd.f32 %v5944, %v6148
        %v6193 = vadd.f32 %v5945, %v6150
        %v6194 = vadd.f32 %v5946, %v6153
        %v6195 = vadd.f32 %v5947, %v6155
        %v6196 = vadd.f32 %v5948, %v6158
        %v6197 = vadd.f32 %v5949, %v6160
        %v6199 = vperm.slane %v3344, 0
        %v6201 = vadd.f32 %v6162, %v6199
        %v6202 = vadd.f32 %v6163, %v6199
        %v6203 = vadd.f32 %v6164, %v6199
        %v6204 = vadd.f32 %v6165, %v6199
        %v6205 = vadd.f32 %v6166, %v6199
        %v6206 = vadd.f32 %v6167, %v6199
        %v6207 = vadd.f32 %v6168, %v6199
        %v6208 = vadd.f32 %v6169, %v6199
        %v6209 = vadd.f32 %v6170, %v6199
        %v6210 = vadd.f32 %v6171, %v6199
        %v6211 = vadd.f32 %v6172, %v6199
        %v6212 = vadd.f32 %v6173, %v6199
        %v6213 = vadd.f32 %v6174, %v6199
        %v6214 = vadd.f32 %v6175, %v6199
        %v6215 = vadd.f32 %v6176, %v6199
        %v6216 = vadd.f32 %v6177, %v6199
        %v6217 = vadd.f32 %v6178, %v6199
        %v6218 = vadd.f32 %v6179, %v6199
        %v6219 = vadd.f32 %v6180, %v6199
        %v6220 = vadd.f32 %v6181, %v6199
        %v6221 = vadd.f32 %v6182, %v6199
        %v6222 = vadd.f32 %v6183, %v6199
        %v6223 = vadd.f32 %v6184, %v6199
        %v6224 = vadd.f32 %v6185, %v6199
        %v6225 = vadd.f32 %v6186, %v6199
        %v6226 = vadd.f32 %v6187, %v6199
        %v6227 = vadd.f32 %v6188, %v6199
        %v6228 = vadd.f32 %v6189, %v6199
        %v6229 = vadd.f32 %v6190, %v6199
        %v6230 = vadd.f32 %v6191, %v6199
        %v6231 = vadd.f32 %v6192, %v6199
        %v6232 = vadd.f32 %v6193, %v6199
        %v6233 = vadd.f32 %v6194, %v6199
        %v6234 = vadd.f32 %v6195, %v6199
        %v6235 = vadd.f32 %v6196, %v6199
        %v6236 = vadd.f32 %v6197, %v6199
        %v6237 = vmax.f32 %v6201, 0.0
        %v6238 = vmax.f32 %v6202, 0.0
        %v6239 = vmax.f32 %v6203, 0.0
        %v6240 = vmax.f32 %v6204, 0.0
        %v6241 = vmax.f32 %v6205, 0.0
        %v6242 = vmax.f32 %v6206, 0.0
        %v6243 = vmax.f32 %v6207, 0.0
        %v6244 = vmax.f32 %v6208, 0.0
        %v6245 = vmax.f32 %v6209, 0.0
        %v6246 = vmax.f32 %v6210, 0.0
        %v6247 = vmax.f32 %v6211, 0.0
        %v6248 = vmax.f32 %v6212, 0.0
        %v6249 = vmax.f32 %v6213, 0.0
        %v6250 = vmax.f32 %v6214, 0.0
        %v6251 = vmax.f32 %v6215, 0.0
        %v6252 = vmax.f32 %v6216, 0.0
        %v6253 = vmax.f32 %v6217, 0.0
        %v6254 = vmax.f32 %v6218, 0.0
        %v6255 = vmax.f32 %v6219, 0.0
        %v6256 = vmax.f32 %v6220, 0.0
        %v6257 = vmax.f32 %v6221, 0.0
        %v6258 = vmax.f32 %v6222, 0.0
        %v6259 = vmax.f32 %v6223, 0.0
        %v6260 = vmax.f32 %v6224, 0.0
        %v6261 = vmax.f32 %v6225, 0.0
        %v6262 = vmax.f32 %v6226, 0.0
        %v6263 = vmax.f32 %v6227, 0.0
        %v6264 = vmax.f32 %v6228, 0.0
        %v6265 = vmax.f32 %v6229, 0.0
        %v6266 = vmax.f32 %v6230, 0.0
        %v6267 = vmax.f32 %v6231, 0.0
        %v6268 = vmax.f32 %v6232, 0.0
        %v6269 = vmax.f32 %v6233, 0.0
        %v6270 = vmax.f32 %v6234, 0.0
        %v6271 = vmax.f32 %v6235, 0.0
        %v6272 = vmax.f32 %v6236, 0.0
        %v6273 = vlaneseq
        %v6274 = vshrl.u32 %v6273, 7
        %v6275 = vadd.s32 %v6274, 8
        %v6276 = vadd.s32 %v6274, 16
        %v6277 = vadd.s32 %v6274, 24
        %v6278 = vadd.s32 %v6274, 32
        %v6279 = vadd.s32 %v6274, 40
        %v6280 = vadd.s32 %v6274, 48
        %v6281 = vadd.s32 %v6274, 56
        %v6282 = vadd.s32 %v6274, 64
        %v6283 = vadd.s32 %v6274, 72
        %v6284 = vadd.s32 %v6274, 80
        %v6285 = vadd.s32 %v6274, 88
        %v6286 = vadd.s32 %v6274, 96
        %v6287 = vadd.s32 %v6274, 104
        %v6288 = vadd.s32 %v6274, 112
        %v6289 = vadd.s32 %v6274, 120
        %v6290 = vadd.s32 %v6274, 128
        %v6291 = vadd.s32 %v6274, 136
        %v6292 = vadd.s32 %v6274, 144
        %v6293 = vadd.s32 %v6274, 152
        %v6294 = vadd.s32 %v6274, 160
        %v6295 = vadd.s32 %v6274, 168
        %v6296 = vadd.s32 %v6274, 176
        %v6297 = vadd.s32 %v6274, 184
        %v6298 = vadd.s32 %v6274, 192
        %v6299 = vadd.s32 %v6274, 200
        %v6300 = vadd.s32 %v6274, 208
        %v6301 = vadd.s32 %v6274, 216
        %v6302 = vadd.s32 %v6274, 224
        %v6303 = vadd.s32 %v6274, 232
        %v6304 = vadd.s32 %v6274, 240
        %v6305 = vadd.s32 %v6274, 248
        %v6306 = vadd.s32 %v6274, 256
        %v6307 = vadd.s32 %v6274, 264
        %v6308 = vadd.s32 %v6274, 272
        %v6309 = vadd.s32 %v6274, 280
        %vm6310 = vcmp.lt.s32.totalorder %v6274, 0
        %v6311 = vsub.s32 0, %v6274
        %v6312 = vsel %vm6310, %v6311, %v6274
        %v6313 = vand.u32 %v6312, 65535
        %v6314 = vshrl.u32 %v6312, 16
        %v6316 = vmul.u32 %v6313, 14564
        %v6317 = vmul.u32 %v6313, 58254
        %v6318 = vmul.u32 %v6314, 14564
        %v6319 = vmul.u32 %v6314, 58254
        %v6320 = vshll.u32 %v6317, 16
        %v6321 = vshrl.u32 %v6317, 16
        %v6322 = vshll.u32 %v6318, 16
        %v6323 = vshrl.u32 %v6318, 16
        %vm6324 = vc.u32 %v6316, %v6320
        %v6325 = vsel %vm6324, 1, 0
        %v6326 = vadd.s32 %v6316, %v6320
        %v6327 = vadd.s32 %v6319, %v6325
        %vm6328 = vc.u32 %v6326, %v6322
        %v6329 = vsel %vm6328, 1, 0
        %v6330 = vadd.s32 %v6326, %v6322
        %v6331 = vadd.s32 %v6327, %v6329
        %v6332 = vadd.s32 %v6331, %v6321
        %v6333 = vadd.s32 %v6332, %v6323
        %v6334 = vshrl.u32 %v6333, 4
        %v6335 = vmul.u32 %v6334, 18
        %v6336 = vsub.s32 %v6312, %v6335
        %v6337 = vsub.s32 0, %v6336
        %v6338 = vsel %vm6310, %v6337, %v6336
        %vm6339 = vcmp.lt.s32.totalorder %v6275, 0
        %v6340 = vsub.s32 0, %v6275
        %v6341 = vsel %vm6339, %v6340, %v6275
        %v6342 = vand.u32 %v6341, 65535
        %v6343 = vshrl.u32 %v6341, 16
        %v6345 = vmul.u32 %v6342, 14564
        %v6346 = vmul.u32 %v6342, 58254
        %v6347 = vmul.u32 %v6343, 14564
        %v6348 = vmul.u32 %v6343, 58254
        %v6349 = vshll.u32 %v6346, 16
        %v6350 = vshrl.u32 %v6346, 16
        %v6351 = vshll.u32 %v6347, 16
        %v6352 = vshrl.u32 %v6347, 16
        %vm6353 = vc.u32 %v6345, %v6349
        %v6354 = vsel %vm6353, 1, 0
        %v6355 = vadd.s32 %v6345, %v6349
        %v6356 = vadd.s32 %v6348, %v6354
        %vm6357 = vc.u32 %v6355, %v6351
        %v6358 = vsel %vm6357, 1, 0
        %v6359 = vadd.s32 %v6355, %v6351
        %v6360 = vadd.s32 %v6356, %v6358
        %v6361 = vadd.s32 %v6360, %v6350
        %v6362 = vadd.s32 %v6361, %v6352
        %v6363 = vshrl.u32 %v6362, 4
        %v6364 = vmul.u32 %v6363, 18
        %v6365 = vsub.s32 %v6341, %v6364
        %v6366 = vsub.s32 0, %v6365
        %v6367 = vsel %vm6339, %v6366, %v6365
        %vm6368 = vcmp.lt.s32.totalorder %v6276, 0
        %v6369 = vsub.s32 0, %v6276
        %v6370 = vsel %vm6368, %v6369, %v6276
        %v6371 = vand.u32 %v6370, 65535
        %v6372 = vshrl.u32 %v6370, 16
        %v6374 = vmul.u32 %v6371, 14564
        %v6375 = vmul.u32 %v6371, 58254
        %v6376 = vmul.u32 %v6372, 14564
        %v6377 = vmul.u32 %v6372, 58254
        %v6378 = vshll.u32 %v6375, 16
        %v6379 = vshrl.u32 %v6375, 16
        %v6380 = vshll.u32 %v6376, 16
        %v6381 = vshrl.u32 %v6376, 16
        %vm6382 = vc.u32 %v6374, %v6378
        %v6383 = vsel %vm6382, 1, 0
        %v6384 = vadd.s32 %v6374, %v6378
        %v6385 = vadd.s32 %v6377, %v6383
        %vm6386 = vc.u32 %v6384, %v6380
        %v6387 = vsel %vm6386, 1, 0
        %v6388 = vadd.s32 %v6384, %v6380
        %v6389 = vadd.s32 %v6385, %v6387
        %v6390 = vadd.s32 %v6389, %v6379
        %v6391 = vadd.s32 %v6390, %v6381
        %v6392 = vshrl.u32 %v6391, 4
        %v6393 = vmul.u32 %v6392, 18
        %v6394 = vsub.s32 %v6370, %v6393
        %v6395 = vsub.s32 0, %v6394
        %v6396 = vsel %vm6368, %v6395, %v6394
        %vm6397 = vcmp.lt.s32.totalorder %v6277, 0
        %v6398 = vsub.s32 0, %v6277
        %v6399 = vsel %vm6397, %v6398, %v6277
        %v6400 = vand.u32 %v6399, 65535
        %v6401 = vshrl.u32 %v6399, 16
        %v6403 = vmul.u32 %v6400, 14564
        %v6404 = vmul.u32 %v6400, 58254
        %v6405 = vmul.u32 %v6401, 14564
        %v6406 = vmul.u32 %v6401, 58254
        %v6407 = vshll.u32 %v6404, 16
        %v6408 = vshrl.u32 %v6404, 16
        %v6409 = vshll.u32 %v6405, 16
        %v6410 = vshrl.u32 %v6405, 16
        %vm6411 = vc.u32 %v6403, %v6407
        %v6412 = vsel %vm6411, 1, 0
        %v6413 = vadd.s32 %v6403, %v6407
        %v6414 = vadd.s32 %v6406, %v6412
        %vm6415 = vc.u32 %v6413, %v6409
        %v6416 = vsel %vm6415, 1, 0
        %v6417 = vadd.s32 %v6413, %v6409
        %v6418 = vadd.s32 %v6414, %v6416
        %v6419 = vadd.s32 %v6418, %v6408
        %v6420 = vadd.s32 %v6419, %v6410
        %v6421 = vshrl.u32 %v6420, 4
        %v6422 = vmul.u32 %v6421, 18
        %v6423 = vsub.s32 %v6399, %v6422
        %v6424 = vsub.s32 0, %v6423
        %v6425 = vsel %vm6397, %v6424, %v6423
        %vm6426 = vcmp.lt.s32.totalorder %v6278, 0
        %v6427 = vsub.s32 0, %v6278
        %v6428 = vsel %vm6426, %v6427, %v6278
        %v6429 = vand.u32 %v6428, 65535
        %v6430 = vshrl.u32 %v6428, 16
        %v6432 = vmul.u32 %v6429, 14564
        %v6433 = vmul.u32 %v6429, 58254
        %v6434 = vmul.u32 %v6430, 14564
        %v6435 = vmul.u32 %v6430, 58254
        %v6436 = vshll.u32 %v6433, 16
        %v6437 = vshrl.u32 %v6433, 16
        %v6438 = vshll.u32 %v6434, 16
        %v6439 = vshrl.u32 %v6434, 16
        %vm6440 = vc.u32 %v6432, %v6436
        %v6441 = vsel %vm6440, 1, 0
        %v6442 = vadd.s32 %v6432, %v6436
        %v6443 = vadd.s32 %v6435, %v6441
        %vm6444 = vc.u32 %v6442, %v6438
        %v6445 = vsel %vm6444, 1, 0
        %v6446 = vadd.s32 %v6442, %v6438
        %v6447 = vadd.s32 %v6443, %v6445
        %v6448 = vadd.s32 %v6447, %v6437
        %v6449 = vadd.s32 %v6448, %v6439
        %v6450 = vshrl.u32 %v6449, 4
        %v6451 = vmul.u32 %v6450, 18
        %v6452 = vsub.s32 %v6428, %v6451
        %v6453 = vsub.s32 0, %v6452
        %v6454 = vsel %vm6426, %v6453, %v6452
        %vm6455 = vcmp.lt.s32.totalorder %v6279, 0
        %v6456 = vsub.s32 0, %v6279
        %v6457 = vsel %vm6455, %v6456, %v6279
        %v6458 = vand.u32 %v6457, 65535
        %v6459 = vshrl.u32 %v6457, 16
        %v6461 = vmul.u32 %v6458, 14564
        %v6462 = vmul.u32 %v6458, 58254
        %v6463 = vmul.u32 %v6459, 14564
        %v6464 = vmul.u32 %v6459, 58254
        %v6465 = vshll.u32 %v6462, 16
        %v6466 = vshrl.u32 %v6462, 16
        %v6467 = vshll.u32 %v6463, 16
        %v6468 = vshrl.u32 %v6463, 16
        %vm6469 = vc.u32 %v6461, %v6465
        %v6470 = vsel %vm6469, 1, 0
        %v6471 = vadd.s32 %v6461, %v6465
        %v6472 = vadd.s32 %v6464, %v6470
        %vm6473 = vc.u32 %v6471, %v6467
        %v6474 = vsel %vm6473, 1, 0
        %v6475 = vadd.s32 %v6471, %v6467
        %v6476 = vadd.s32 %v6472, %v6474
        %v6477 = vadd.s32 %v6476, %v6466
        %v6478 = vadd.s32 %v6477, %v6468
        %v6479 = vshrl.u32 %v6478, 4
        %v6480 = vmul.u32 %v6479, 18
        %v6481 = vsub.s32 %v6457, %v6480
        %v6482 = vsub.s32 0, %v6481
        %v6483 = vsel %vm6455, %v6482, %v6481
        %vm6484 = vcmp.lt.s32.totalorder %v6280, 0
        %v6485 = vsub.s32 0, %v6280
        %v6486 = vsel %vm6484, %v6485, %v6280
        %v6487 = vand.u32 %v6486, 65535
        %v6488 = vshrl.u32 %v6486, 16
        %v6490 = vmul.u32 %v6487, 14564
        %v6491 = vmul.u32 %v6487, 58254
        %v6492 = vmul.u32 %v6488, 14564
        %v6493 = vmul.u32 %v6488, 58254
        %v6494 = vshll.u32 %v6491, 16
        %v6495 = vshrl.u32 %v6491, 16
        %v6496 = vshll.u32 %v6492, 16
        %v6497 = vshrl.u32 %v6492, 16
        %vm6498 = vc.u32 %v6490, %v6494
        %v6499 = vsel %vm6498, 1, 0
        %v6500 = vadd.s32 %v6490, %v6494
        %v6501 = vadd.s32 %v6493, %v6499
        %vm6502 = vc.u32 %v6500, %v6496
        %v6503 = vsel %vm6502, 1, 0
        %v6504 = vadd.s32 %v6500, %v6496
        %v6505 = vadd.s32 %v6501, %v6503
        %v6506 = vadd.s32 %v6505, %v6495
        %v6507 = vadd.s32 %v6506, %v6497
        %v6508 = vshrl.u32 %v6507, 4
        %v6509 = vmul.u32 %v6508, 18
        %v6510 = vsub.s32 %v6486, %v6509
        %v6511 = vsub.s32 0, %v6510
        %v6512 = vsel %vm6484, %v6511, %v6510
        %vm6513 = vcmp.lt.s32.totalorder %v6281, 0
        %v6514 = vsub.s32 0, %v6281
        %v6515 = vsel %vm6513, %v6514, %v6281
        %v6516 = vand.u32 %v6515, 65535
        %v6517 = vshrl.u32 %v6515, 16
        %v6519 = vmul.u32 %v6516, 14564
        %v6520 = vmul.u32 %v6516, 58254
        %v6521 = vmul.u32 %v6517, 14564
        %v6522 = vmul.u32 %v6517, 58254
        %v6523 = vshll.u32 %v6520, 16
        %v6524 = vshrl.u32 %v6520, 16
        %v6525 = vshll.u32 %v6521, 16
        %v6526 = vshrl.u32 %v6521, 16
        %vm6527 = vc.u32 %v6519, %v6523
        %v6528 = vsel %vm6527, 1, 0
        %v6529 = vadd.s32 %v6519, %v6523
        %v6530 = vadd.s32 %v6522, %v6528
        %vm6531 = vc.u32 %v6529, %v6525
        %v6532 = vsel %vm6531, 1, 0
        %v6533 = vadd.s32 %v6529, %v6525
        %v6534 = vadd.s32 %v6530, %v6532
        %v6535 = vadd.s32 %v6534, %v6524
        %v6536 = vadd.s32 %v6535, %v6526
        %v6537 = vshrl.u32 %v6536, 4
        %v6538 = vmul.u32 %v6537, 18
        %v6539 = vsub.s32 %v6515, %v6538
        %v6540 = vsub.s32 0, %v6539
        %v6541 = vsel %vm6513, %v6540, %v6539
        %vm6542 = vcmp.lt.s32.totalorder %v6282, 0
        %v6543 = vsub.s32 0, %v6282
        %v6544 = vsel %vm6542, %v6543, %v6282
        %v6545 = vand.u32 %v6544, 65535
        %v6546 = vshrl.u32 %v6544, 16
        %v6548 = vmul.u32 %v6545, 14564
        %v6549 = vmul.u32 %v6545, 58254
        %v6550 = vmul.u32 %v6546, 14564
        %v6551 = vmul.u32 %v6546, 58254
        %v6552 = vshll.u32 %v6549, 16
        %v6553 = vshrl.u32 %v6549, 16
        %v6554 = vshll.u32 %v6550, 16
        %v6555 = vshrl.u32 %v6550, 16
        %vm6556 = vc.u32 %v6548, %v6552
        %v6557 = vsel %vm6556, 1, 0
        %v6558 = vadd.s32 %v6548, %v6552
        %v6559 = vadd.s32 %v6551, %v6557
        %vm6560 = vc.u32 %v6558, %v6554
        %v6561 = vsel %vm6560, 1, 0
        %v6562 = vadd.s32 %v6558, %v6554
        %v6563 = vadd.s32 %v6559, %v6561
        %v6564 = vadd.s32 %v6563, %v6553
        %v6565 = vadd.s32 %v6564, %v6555
        %v6566 = vshrl.u32 %v6565, 4
        %v6567 = vmul.u32 %v6566, 18
        %v6568 = vsub.s32 %v6544, %v6567
        %v6569 = vsub.s32 0, %v6568
        %v6570 = vsel %vm6542, %v6569, %v6568
        %vm6571 = vcmp.lt.s32.totalorder %v6283, 0
        %v6572 = vsub.s32 0, %v6283
        %v6573 = vsel %vm6571, %v6572, %v6283
        %v6574 = vand.u32 %v6573, 65535
        %v6575 = vshrl.u32 %v6573, 16
        %v6577 = vmul.u32 %v6574, 14564
        %v6578 = vmul.u32 %v6574, 58254
        %v6579 = vmul.u32 %v6575, 14564
        %v6580 = vmul.u32 %v6575, 58254
        %v6581 = vshll.u32 %v6578, 16
        %v6582 = vshrl.u32 %v6578, 16
        %v6583 = vshll.u32 %v6579, 16
        %v6584 = vshrl.u32 %v6579, 16
        %vm6585 = vc.u32 %v6577, %v6581
        %v6586 = vsel %vm6585, 1, 0
        %v6587 = vadd.s32 %v6577, %v6581
        %v6588 = vadd.s32 %v6580, %v6586
        %vm6589 = vc.u32 %v6587, %v6583
        %v6590 = vsel %vm6589, 1, 0
        %v6591 = vadd.s32 %v6587, %v6583
        %v6592 = vadd.s32 %v6588, %v6590
        %v6593 = vadd.s32 %v6592, %v6582
        %v6594 = vadd.s32 %v6593, %v6584
        %v6595 = vshrl.u32 %v6594, 4
        %v6596 = vmul.u32 %v6595, 18
        %v6597 = vsub.s32 %v6573, %v6596
        %v6598 = vsub.s32 0, %v6597
        %v6599 = vsel %vm6571, %v6598, %v6597
        %vm6600 = vcmp.lt.s32.totalorder %v6284, 0
        %v6601 = vsub.s32 0, %v6284
        %v6602 = vsel %vm6600, %v6601, %v6284
        %v6603 = vand.u32 %v6602, 65535
        %v6604 = vshrl.u32 %v6602, 16
        %v6606 = vmul.u32 %v6603, 14564
        %v6607 = vmul.u32 %v6603, 58254
        %v6608 = vmul.u32 %v6604, 14564
        %v6609 = vmul.u32 %v6604, 58254
        %v6610 = vshll.u32 %v6607, 16
        %v6611 = vshrl.u32 %v6607, 16
        %v6612 = vshll.u32 %v6608, 16
        %v6613 = vshrl.u32 %v6608, 16
        %vm6614 = vc.u32 %v6606, %v6610
        %v6615 = vsel %vm6614, 1, 0
        %v6616 = vadd.s32 %v6606, %v6610
        %v6617 = vadd.s32 %v6609, %v6615
        %vm6618 = vc.u32 %v6616, %v6612
        %v6619 = vsel %vm6618, 1, 0
        %v6620 = vadd.s32 %v6616, %v6612
        %v6621 = vadd.s32 %v6617, %v6619
        %v6622 = vadd.s32 %v6621, %v6611
        %v6623 = vadd.s32 %v6622, %v6613
        %v6624 = vshrl.u32 %v6623, 4
        %v6625 = vmul.u32 %v6624, 18
        %v6626 = vsub.s32 %v6602, %v6625
        %v6627 = vsub.s32 0, %v6626
        %v6628 = vsel %vm6600, %v6627, %v6626
        %vm6629 = vcmp.lt.s32.totalorder %v6285, 0
        %v6630 = vsub.s32 0, %v6285
        %v6631 = vsel %vm6629, %v6630, %v6285
        %v6632 = vand.u32 %v6631, 65535
        %v6633 = vshrl.u32 %v6631, 16
        %v6635 = vmul.u32 %v6632, 14564
        %v6636 = vmul.u32 %v6632, 58254
        %v6637 = vmul.u32 %v6633, 14564
        %v6638 = vmul.u32 %v6633, 58254
        %v6639 = vshll.u32 %v6636, 16
        %v6640 = vshrl.u32 %v6636, 16
        %v6641 = vshll.u32 %v6637, 16
        %v6642 = vshrl.u32 %v6637, 16
        %vm6643 = vc.u32 %v6635, %v6639
        %v6644 = vsel %vm6643, 1, 0
        %v6645 = vadd.s32 %v6635, %v6639
        %v6646 = vadd.s32 %v6638, %v6644
        %vm6647 = vc.u32 %v6645, %v6641
        %v6648 = vsel %vm6647, 1, 0
        %v6649 = vadd.s32 %v6645, %v6641
        %v6650 = vadd.s32 %v6646, %v6648
        %v6651 = vadd.s32 %v6650, %v6640
        %v6652 = vadd.s32 %v6651, %v6642
        %v6653 = vshrl.u32 %v6652, 4
        %v6654 = vmul.u32 %v6653, 18
        %v6655 = vsub.s32 %v6631, %v6654
        %v6656 = vsub.s32 0, %v6655
        %v6657 = vsel %vm6629, %v6656, %v6655
        %vm6658 = vcmp.lt.s32.totalorder %v6286, 0
        %v6659 = vsub.s32 0, %v6286
        %v6660 = vsel %vm6658, %v6659, %v6286
        %v6661 = vand.u32 %v6660, 65535
        %v6662 = vshrl.u32 %v6660, 16
        %v6664 = vmul.u32 %v6661, 14564
        %v6665 = vmul.u32 %v6661, 58254
        %v6666 = vmul.u32 %v6662, 14564
        %v6667 = vmul.u32 %v6662, 58254
        %v6668 = vshll.u32 %v6665, 16
        %v6669 = vshrl.u32 %v6665, 16
        %v6670 = vshll.u32 %v6666, 16
        %v6671 = vshrl.u32 %v6666, 16
        %vm6672 = vc.u32 %v6664, %v6668
        %v6673 = vsel %vm6672, 1, 0
        %v6674 = vadd.s32 %v6664, %v6668
        %v6675 = vadd.s32 %v6667, %v6673
        %vm6676 = vc.u32 %v6674, %v6670
        %v6677 = vsel %vm6676, 1, 0
        %v6678 = vadd.s32 %v6674, %v6670
        %v6679 = vadd.s32 %v6675, %v6677
        %v6680 = vadd.s32 %v6679, %v6669
        %v6681 = vadd.s32 %v6680, %v6671
        %v6682 = vshrl.u32 %v6681, 4
        %v6683 = vmul.u32 %v6682, 18
        %v6684 = vsub.s32 %v6660, %v6683
        %v6685 = vsub.s32 0, %v6684
        %v6686 = vsel %vm6658, %v6685, %v6684
        %vm6687 = vcmp.lt.s32.totalorder %v6287, 0
        %v6688 = vsub.s32 0, %v6287
        %v6689 = vsel %vm6687, %v6688, %v6287
        %v6690 = vand.u32 %v6689, 65535
        %v6691 = vshrl.u32 %v6689, 16
        %v6693 = vmul.u32 %v6690, 14564
        %v6694 = vmul.u32 %v6690, 58254
        %v6695 = vmul.u32 %v6691, 14564
        %v6696 = vmul.u32 %v6691, 58254
        %v6697 = vshll.u32 %v6694, 16
        %v6698 = vshrl.u32 %v6694, 16
        %v6699 = vshll.u32 %v6695, 16
        %v6700 = vshrl.u32 %v6695, 16
        %vm6701 = vc.u32 %v6693, %v6697
        %v6702 = vsel %vm6701, 1, 0
        %v6703 = vadd.s32 %v6693, %v6697
        %v6704 = vadd.s32 %v6696, %v6702
        %vm6705 = vc.u32 %v6703, %v6699
        %v6706 = vsel %vm6705, 1, 0
        %v6707 = vadd.s32 %v6703, %v6699
        %v6708 = vadd.s32 %v6704, %v6706
        %v6709 = vadd.s32 %v6708, %v6698
        %v6710 = vadd.s32 %v6709, %v6700
        %v6711 = vshrl.u32 %v6710, 4
        %v6712 = vmul.u32 %v6711, 18
        %v6713 = vsub.s32 %v6689, %v6712
        %v6714 = vsub.s32 0, %v6713
        %v6715 = vsel %vm6687, %v6714, %v6713
        %vm6716 = vcmp.lt.s32.totalorder %v6288, 0
        %v6717 = vsub.s32 0, %v6288
        %v6718 = vsel %vm6716, %v6717, %v6288
        %v6719 = vand.u32 %v6718, 65535
        %v6720 = vshrl.u32 %v6718, 16
        %v6722 = vmul.u32 %v6719, 14564
        %v6723 = vmul.u32 %v6719, 58254
        %v6724 = vmul.u32 %v6720, 14564
        %v6725 = vmul.u32 %v6720, 58254
        %v6726 = vshll.u32 %v6723, 16
        %v6727 = vshrl.u32 %v6723, 16
        %v6728 = vshll.u32 %v6724, 16
        %v6729 = vshrl.u32 %v6724, 16
        %vm6730 = vc.u32 %v6722, %v6726
        %v6731 = vsel %vm6730, 1, 0
        %v6732 = vadd.s32 %v6722, %v6726
        %v6733 = vadd.s32 %v6725, %v6731
        %vm6734 = vc.u32 %v6732, %v6728
        %v6735 = vsel %vm6734, 1, 0
        %v6736 = vadd.s32 %v6732, %v6728
        %v6737 = vadd.s32 %v6733, %v6735
        %v6738 = vadd.s32 %v6737, %v6727
        %v6739 = vadd.s32 %v6738, %v6729
        %v6740 = vshrl.u32 %v6739, 4
        %v6741 = vmul.u32 %v6740, 18
        %v6742 = vsub.s32 %v6718, %v6741
        %v6743 = vsub.s32 0, %v6742
        %v6744 = vsel %vm6716, %v6743, %v6742
        %vm6745 = vcmp.lt.s32.totalorder %v6289, 0
        %v6746 = vsub.s32 0, %v6289
        %v6747 = vsel %vm6745, %v6746, %v6289
        %v6748 = vand.u32 %v6747, 65535
        %v6749 = vshrl.u32 %v6747, 16
        %v6751 = vmul.u32 %v6748, 14564
        %v6752 = vmul.u32 %v6748, 58254
        %v6753 = vmul.u32 %v6749, 14564
        %v6754 = vmul.u32 %v6749, 58254
        %v6755 = vshll.u32 %v6752, 16
        %v6756 = vshrl.u32 %v6752, 16
        %v6757 = vshll.u32 %v6753, 16
        %v6758 = vshrl.u32 %v6753, 16
        %vm6759 = vc.u32 %v6751, %v6755
        %v6760 = vsel %vm6759, 1, 0
        %v6761 = vadd.s32 %v6751, %v6755
        %v6762 = vadd.s32 %v6754, %v6760
        %vm6763 = vc.u32 %v6761, %v6757
        %v6764 = vsel %vm6763, 1, 0
        %v6765 = vadd.s32 %v6761, %v6757
        %v6766 = vadd.s32 %v6762, %v6764
        %v6767 = vadd.s32 %v6766, %v6756
        %v6768 = vadd.s32 %v6767, %v6758
        %v6769 = vshrl.u32 %v6768, 4
        %v6770 = vmul.u32 %v6769, 18
        %v6771 = vsub.s32 %v6747, %v6770
        %v6772 = vsub.s32 0, %v6771
        %v6773 = vsel %vm6745, %v6772, %v6771
        %vm6774 = vcmp.lt.s32.totalorder %v6290, 0
        %v6775 = vsub.s32 0, %v6290
        %v6776 = vsel %vm6774, %v6775, %v6290
        %v6777 = vand.u32 %v6776, 65535
        %v6778 = vshrl.u32 %v6776, 16
        %v6780 = vmul.u32 %v6777, 14564
        %v6781 = vmul.u32 %v6777, 58254
        %v6782 = vmul.u32 %v6778, 14564
        %v6783 = vmul.u32 %v6778, 58254
        %v6784 = vshll.u32 %v6781, 16
        %v6785 = vshrl.u32 %v6781, 16
        %v6786 = vshll.u32 %v6782, 16
        %v6787 = vshrl.u32 %v6782, 16
        %vm6788 = vc.u32 %v6780, %v6784
        %v6789 = vsel %vm6788, 1, 0
        %v6790 = vadd.s32 %v6780, %v6784
        %v6791 = vadd.s32 %v6783, %v6789
        %vm6792 = vc.u32 %v6790, %v6786
        %v6793 = vsel %vm6792, 1, 0
        %v6794 = vadd.s32 %v6790, %v6786
        %v6795 = vadd.s32 %v6791, %v6793
        %v6796 = vadd.s32 %v6795, %v6785
        %v6797 = vadd.s32 %v6796, %v6787
        %v6798 = vshrl.u32 %v6797, 4
        %v6799 = vmul.u32 %v6798, 18
        %v6800 = vsub.s32 %v6776, %v6799
        %v6801 = vsub.s32 0, %v6800
        %v6802 = vsel %vm6774, %v6801, %v6800
        %vm6803 = vcmp.lt.s32.totalorder %v6291, 0
        %v6804 = vsub.s32 0, %v6291
        %v6805 = vsel %vm6803, %v6804, %v6291
        %v6806 = vand.u32 %v6805, 65535
        %v6807 = vshrl.u32 %v6805, 16
        %v6809 = vmul.u32 %v6806, 14564
        %v6810 = vmul.u32 %v6806, 58254
        %v6811 = vmul.u32 %v6807, 14564
        %v6812 = vmul.u32 %v6807, 58254
        %v6813 = vshll.u32 %v6810, 16
        %v6814 = vshrl.u32 %v6810, 16
        %v6815 = vshll.u32 %v6811, 16
        %v6816 = vshrl.u32 %v6811, 16
        %vm6817 = vc.u32 %v6809, %v6813
        %v6818 = vsel %vm6817, 1, 0
        %v6819 = vadd.s32 %v6809, %v6813
        %v6820 = vadd.s32 %v6812, %v6818
        %vm6821 = vc.u32 %v6819, %v6815
        %v6822 = vsel %vm6821, 1, 0
        %v6823 = vadd.s32 %v6819, %v6815
        %v6824 = vadd.s32 %v6820, %v6822
        %v6825 = vadd.s32 %v6824, %v6814
        %v6826 = vadd.s32 %v6825, %v6816
        %v6827 = vshrl.u32 %v6826, 4
        %v6828 = vmul.u32 %v6827, 18
        %v6829 = vsub.s32 %v6805, %v6828
        %v6830 = vsub.s32 0, %v6829
        %v6831 = vsel %vm6803, %v6830, %v6829
        %vm6832 = vcmp.lt.s32.totalorder %v6292, 0
        %v6833 = vsub.s32 0, %v6292
        %v6834 = vsel %vm6832, %v6833, %v6292
        %v6835 = vand.u32 %v6834, 65535
        %v6836 = vshrl.u32 %v6834, 16
        %v6838 = vmul.u32 %v6835, 14564
        %v6839 = vmul.u32 %v6835, 58254
        %v6840 = vmul.u32 %v6836, 14564
        %v6841 = vmul.u32 %v6836, 58254
        %v6842 = vshll.u32 %v6839, 16
        %v6843 = vshrl.u32 %v6839, 16
        %v6844 = vshll.u32 %v6840, 16
        %v6845 = vshrl.u32 %v6840, 16
        %vm6846 = vc.u32 %v6838, %v6842
        %v6847 = vsel %vm6846, 1, 0
        %v6848 = vadd.s32 %v6838, %v6842
        %v6849 = vadd.s32 %v6841, %v6847
        %vm6850 = vc.u32 %v6848, %v6844
        %v6851 = vsel %vm6850, 1, 0
        %v6852 = vadd.s32 %v6848, %v6844
        %v6853 = vadd.s32 %v6849, %v6851
        %v6854 = vadd.s32 %v6853, %v6843
        %v6855 = vadd.s32 %v6854, %v6845
        %v6856 = vshrl.u32 %v6855, 4
        %v6857 = vmul.u32 %v6856, 18
        %v6858 = vsub.s32 %v6834, %v6857
        %v6859 = vsub.s32 0, %v6858
        %v6860 = vsel %vm6832, %v6859, %v6858
        %vm6861 = vcmp.lt.s32.totalorder %v6293, 0
        %v6862 = vsub.s32 0, %v6293
        %v6863 = vsel %vm6861, %v6862, %v6293
        %v6864 = vand.u32 %v6863, 65535
        %v6865 = vshrl.u32 %v6863, 16
        %v6867 = vmul.u32 %v6864, 14564
        %v6868 = vmul.u32 %v6864, 58254
        %v6869 = vmul.u32 %v6865, 14564
        %v6870 = vmul.u32 %v6865, 58254
        %v6871 = vshll.u32 %v6868, 16
        %v6872 = vshrl.u32 %v6868, 16
        %v6873 = vshll.u32 %v6869, 16
        %v6874 = vshrl.u32 %v6869, 16
        %vm6875 = vc.u32 %v6867, %v6871
        %v6876 = vsel %vm6875, 1, 0
        %v6877 = vadd.s32 %v6867, %v6871
        %v6878 = vadd.s32 %v6870, %v6876
        %vm6879 = vc.u32 %v6877, %v6873
        %v6880 = vsel %vm6879, 1, 0
        %v6881 = vadd.s32 %v6877, %v6873
        %v6882 = vadd.s32 %v6878, %v6880
        %v6883 = vadd.s32 %v6882, %v6872
        %v6884 = vadd.s32 %v6883, %v6874
        %v6885 = vshrl.u32 %v6884, 4
        %v6886 = vmul.u32 %v6885, 18
        %v6887 = vsub.s32 %v6863, %v6886
        %v6888 = vsub.s32 0, %v6887
        %v6889 = vsel %vm6861, %v6888, %v6887
        %vm6890 = vcmp.lt.s32.totalorder %v6294, 0
        %v6891 = vsub.s32 0, %v6294
        %v6892 = vsel %vm6890, %v6891, %v6294
        %v6893 = vand.u32 %v6892, 65535
        %v6894 = vshrl.u32 %v6892, 16
        %v6896 = vmul.u32 %v6893, 14564
        %v6897 = vmul.u32 %v6893, 58254
        %v6898 = vmul.u32 %v6894, 14564
        %v6899 = vmul.u32 %v6894, 58254
        %v6900 = vshll.u32 %v6897, 16
        %v6901 = vshrl.u32 %v6897, 16
        %v6902 = vshll.u32 %v6898, 16
        %v6903 = vshrl.u32 %v6898, 16
        %vm6904 = vc.u32 %v6896, %v6900
        %v6905 = vsel %vm6904, 1, 0
        %v6906 = vadd.s32 %v6896, %v6900
        %v6907 = vadd.s32 %v6899, %v6905
        %vm6908 = vc.u32 %v6906, %v6902
        %v6909 = vsel %vm6908, 1, 0
        %v6910 = vadd.s32 %v6906, %v6902
        %v6911 = vadd.s32 %v6907, %v6909
        %v6912 = vadd.s32 %v6911, %v6901
        %v6913 = vadd.s32 %v6912, %v6903
        %v6914 = vshrl.u32 %v6913, 4
        %v6915 = vmul.u32 %v6914, 18
        %v6916 = vsub.s32 %v6892, %v6915
        %v6917 = vsub.s32 0, %v6916
        %v6918 = vsel %vm6890, %v6917, %v6916
        %vm6919 = vcmp.lt.s32.totalorder %v6295, 0
        %v6920 = vsub.s32 0, %v6295
        %v6921 = vsel %vm6919, %v6920, %v6295
        %v6922 = vand.u32 %v6921, 65535
        %v6923 = vshrl.u32 %v6921, 16
        %v6925 = vmul.u32 %v6922, 14564
        %v6926 = vmul.u32 %v6922, 58254
        %v6927 = vmul.u32 %v6923, 14564
        %v6928 = vmul.u32 %v6923, 58254
        %v6929 = vshll.u32 %v6926, 16
        %v6930 = vshrl.u32 %v6926, 16
        %v6931 = vshll.u32 %v6927, 16
        %v6932 = vshrl.u32 %v6927, 16
        %vm6933 = vc.u32 %v6925, %v6929
        %v6934 = vsel %vm6933, 1, 0
        %v6935 = vadd.s32 %v6925, %v6929
        %v6936 = vadd.s32 %v6928, %v6934
        %vm6937 = vc.u32 %v6935, %v6931
        %v6938 = vsel %vm6937, 1, 0
        %v6939 = vadd.s32 %v6935, %v6931
        %v6940 = vadd.s32 %v6936, %v6938
        %v6941 = vadd.s32 %v6940, %v6930
        %v6942 = vadd.s32 %v6941, %v6932
        %v6943 = vshrl.u32 %v6942, 4
        %v6944 = vmul.u32 %v6943, 18
        %v6945 = vsub.s32 %v6921, %v6944
        %v6946 = vsub.s32 0, %v6945
        %v6947 = vsel %vm6919, %v6946, %v6945
        %vm6948 = vcmp.lt.s32.totalorder %v6296, 0
        %v6949 = vsub.s32 0, %v6296
        %v6950 = vsel %vm6948, %v6949, %v6296
        %v6951 = vand.u32 %v6950, 65535
        %v6952 = vshrl.u32 %v6950, 16
        %v6954 = vmul.u32 %v6951, 14564
        %v6955 = vmul.u32 %v6951, 58254
        %v6956 = vmul.u32 %v6952, 14564
        %v6957 = vmul.u32 %v6952, 58254
        %v6958 = vshll.u32 %v6955, 16
        %v6959 = vshrl.u32 %v6955, 16
        %v6960 = vshll.u32 %v6956, 16
        %v6961 = vshrl.u32 %v6956, 16
        %vm6962 = vc.u32 %v6954, %v6958
        %v6963 = vsel %vm6962, 1, 0
        %v6964 = vadd.s32 %v6954, %v6958
        %v6965 = vadd.s32 %v6957, %v6963
        %vm6966 = vc.u32 %v6964, %v6960
        %v6967 = vsel %vm6966, 1, 0
        %v6968 = vadd.s32 %v6964, %v6960
        %v6969 = vadd.s32 %v6965, %v6967
        %v6970 = vadd.s32 %v6969, %v6959
        %v6971 = vadd.s32 %v6970, %v6961
        %v6972 = vshrl.u32 %v6971, 4
        %v6973 = vmul.u32 %v6972, 18
        %v6974 = vsub.s32 %v6950, %v6973
        %v6975 = vsub.s32 0, %v6974
        %v6976 = vsel %vm6948, %v6975, %v6974
        %vm6977 = vcmp.lt.s32.totalorder %v6297, 0
        %v6978 = vsub.s32 0, %v6297
        %v6979 = vsel %vm6977, %v6978, %v6297
        %v6980 = vand.u32 %v6979, 65535
        %v6981 = vshrl.u32 %v6979, 16
        %v6983 = vmul.u32 %v6980, 14564
        %v6984 = vmul.u32 %v6980, 58254
        %v6985 = vmul.u32 %v6981, 14564
        %v6986 = vmul.u32 %v6981, 58254
        %v6987 = vshll.u32 %v6984, 16
        %v6988 = vshrl.u32 %v6984, 16
        %v6989 = vshll.u32 %v6985, 16
        %v6990 = vshrl.u32 %v6985, 16
        %vm6991 = vc.u32 %v6983, %v6987
        %v6992 = vsel %vm6991, 1, 0
        %v6993 = vadd.s32 %v6983, %v6987
        %v6994 = vadd.s32 %v6986, %v6992
        %vm6995 = vc.u32 %v6993, %v6989
        %v6996 = vsel %vm6995, 1, 0
        %v6997 = vadd.s32 %v6993, %v6989
        %v6998 = vadd.s32 %v6994, %v6996
        %v6999 = vadd.s32 %v6998, %v6988
        %v7000 = vadd.s32 %v6999, %v6990
        %v7001 = vshrl.u32 %v7000, 4
        %v7002 = vmul.u32 %v7001, 18
        %v7003 = vsub.s32 %v6979, %v7002
        %v7004 = vsub.s32 0, %v7003
        %v7005 = vsel %vm6977, %v7004, %v7003
        %vm7006 = vcmp.lt.s32.totalorder %v6298, 0
        %v7007 = vsub.s32 0, %v6298
        %v7008 = vsel %vm7006, %v7007, %v6298
        %v7009 = vand.u32 %v7008, 65535
        %v7010 = vshrl.u32 %v7008, 16
        %v7012 = vmul.u32 %v7009, 14564
        %v7013 = vmul.u32 %v7009, 58254
        %v7014 = vmul.u32 %v7010, 14564
        %v7015 = vmul.u32 %v7010, 58254
        %v7016 = vshll.u32 %v7013, 16
        %v7017 = vshrl.u32 %v7013, 16
        %v7018 = vshll.u32 %v7014, 16
        %v7019 = vshrl.u32 %v7014, 16
        %vm7020 = vc.u32 %v7012, %v7016
        %v7021 = vsel %vm7020, 1, 0
        %v7022 = vadd.s32 %v7012, %v7016
        %v7023 = vadd.s32 %v7015, %v7021
        %vm7024 = vc.u32 %v7022, %v7018
        %v7025 = vsel %vm7024, 1, 0
        %v7026 = vadd.s32 %v7022, %v7018
        %v7027 = vadd.s32 %v7023, %v7025
        %v7028 = vadd.s32 %v7027, %v7017
        %v7029 = vadd.s32 %v7028, %v7019
        %v7030 = vshrl.u32 %v7029, 4
        %v7031 = vmul.u32 %v7030, 18
        %v7032 = vsub.s32 %v7008, %v7031
        %v7033 = vsub.s32 0, %v7032
        %v7034 = vsel %vm7006, %v7033, %v7032
        %vm7035 = vcmp.lt.s32.totalorder %v6299, 0
        %v7036 = vsub.s32 0, %v6299
        %v7037 = vsel %vm7035, %v7036, %v6299
        %v7038 = vand.u32 %v7037, 65535
        %v7039 = vshrl.u32 %v7037, 16
        %v7041 = vmul.u32 %v7038, 14564
        %v7042 = vmul.u32 %v7038, 58254
        %v7043 = vmul.u32 %v7039, 14564
        %v7044 = vmul.u32 %v7039, 58254
        %v7045 = vshll.u32 %v7042, 16
        %v7046 = vshrl.u32 %v7042, 16
        %v7047 = vshll.u32 %v7043, 16
        %v7048 = vshrl.u32 %v7043, 16
        %vm7049 = vc.u32 %v7041, %v7045
        %v7050 = vsel %vm7049, 1, 0
        %v7051 = vadd.s32 %v7041, %v7045
        %v7052 = vadd.s32 %v7044, %v7050
        %vm7053 = vc.u32 %v7051, %v7047
        %v7054 = vsel %vm7053, 1, 0
        %v7055 = vadd.s32 %v7051, %v7047
        %v7056 = vadd.s32 %v7052, %v7054
        %v7057 = vadd.s32 %v7056, %v7046
        %v7058 = vadd.s32 %v7057, %v7048
        %v7059 = vshrl.u32 %v7058, 4
        %v7060 = vmul.u32 %v7059, 18
        %v7061 = vsub.s32 %v7037, %v7060
        %v7062 = vsub.s32 0, %v7061
        %v7063 = vsel %vm7035, %v7062, %v7061
        %vm7064 = vcmp.lt.s32.totalorder %v6300, 0
        %v7065 = vsub.s32 0, %v6300
        %v7066 = vsel %vm7064, %v7065, %v6300
        %v7067 = vand.u32 %v7066, 65535
        %v7068 = vshrl.u32 %v7066, 16
        %v7070 = vmul.u32 %v7067, 14564
        %v7071 = vmul.u32 %v7067, 58254
        %v7072 = vmul.u32 %v7068, 14564
        %v7073 = vmul.u32 %v7068, 58254
        %v7074 = vshll.u32 %v7071, 16
        %v7075 = vshrl.u32 %v7071, 16
        %v7076 = vshll.u32 %v7072, 16
        %v7077 = vshrl.u32 %v7072, 16
        %vm7078 = vc.u32 %v7070, %v7074
        %v7079 = vsel %vm7078, 1, 0
        %v7080 = vadd.s32 %v7070, %v7074
        %v7081 = vadd.s32 %v7073, %v7079
        %vm7082 = vc.u32 %v7080, %v7076
        %v7083 = vsel %vm7082, 1, 0
        %v7084 = vadd.s32 %v7080, %v7076
        %v7085 = vadd.s32 %v7081, %v7083
        %v7086 = vadd.s32 %v7085, %v7075
        %v7087 = vadd.s32 %v7086, %v7077
        %v7088 = vshrl.u32 %v7087, 4
        %v7089 = vmul.u32 %v7088, 18
        %v7090 = vsub.s32 %v7066, %v7089
        %v7091 = vsub.s32 0, %v7090
        %v7092 = vsel %vm7064, %v7091, %v7090
        %vm7093 = vcmp.lt.s32.totalorder %v6301, 0
        %v7094 = vsub.s32 0, %v6301
        %v7095 = vsel %vm7093, %v7094, %v6301
        %v7096 = vand.u32 %v7095, 65535
        %v7097 = vshrl.u32 %v7095, 16
        %v7099 = vmul.u32 %v7096, 14564
        %v7100 = vmul.u32 %v7096, 58254
        %v7101 = vmul.u32 %v7097, 14564
        %v7102 = vmul.u32 %v7097, 58254
        %v7103 = vshll.u32 %v7100, 16
        %v7104 = vshrl.u32 %v7100, 16
        %v7105 = vshll.u32 %v7101, 16
        %v7106 = vshrl.u32 %v7101, 16
        %vm7107 = vc.u32 %v7099, %v7103
        %v7108 = vsel %vm7107, 1, 0
        %v7109 = vadd.s32 %v7099, %v7103
        %v7110 = vadd.s32 %v7102, %v7108
        %vm7111 = vc.u32 %v7109, %v7105
        %v7112 = vsel %vm7111, 1, 0
        %v7113 = vadd.s32 %v7109, %v7105
        %v7114 = vadd.s32 %v7110, %v7112
        %v7115 = vadd.s32 %v7114, %v7104
        %v7116 = vadd.s32 %v7115, %v7106
        %v7117 = vshrl.u32 %v7116, 4
        %v7118 = vmul.u32 %v7117, 18
        %v7119 = vsub.s32 %v7095, %v7118
        %v7120 = vsub.s32 0, %v7119
        %v7121 = vsel %vm7093, %v7120, %v7119
        %vm7122 = vcmp.lt.s32.totalorder %v6302, 0
        %v7123 = vsub.s32 0, %v6302
        %v7124 = vsel %vm7122, %v7123, %v6302
        %v7125 = vand.u32 %v7124, 65535
        %v7126 = vshrl.u32 %v7124, 16
        %v7128 = vmul.u32 %v7125, 14564
        %v7129 = vmul.u32 %v7125, 58254
        %v7130 = vmul.u32 %v7126, 14564
        %v7131 = vmul.u32 %v7126, 58254
        %v7132 = vshll.u32 %v7129, 16
        %v7133 = vshrl.u32 %v7129, 16
        %v7134 = vshll.u32 %v7130, 16
        %v7135 = vshrl.u32 %v7130, 16
        %vm7136 = vc.u32 %v7128, %v7132
        %v7137 = vsel %vm7136, 1, 0
        %v7138 = vadd.s32 %v7128, %v7132
        %v7139 = vadd.s32 %v7131, %v7137
        %vm7140 = vc.u32 %v7138, %v7134
        %v7141 = vsel %vm7140, 1, 0
        %v7142 = vadd.s32 %v7138, %v7134
        %v7143 = vadd.s32 %v7139, %v7141
        %v7144 = vadd.s32 %v7143, %v7133
        %v7145 = vadd.s32 %v7144, %v7135
        %v7146 = vshrl.u32 %v7145, 4
        %v7147 = vmul.u32 %v7146, 18
        %v7148 = vsub.s32 %v7124, %v7147
        %v7149 = vsub.s32 0, %v7148
        %v7150 = vsel %vm7122, %v7149, %v7148
        %vm7151 = vcmp.lt.s32.totalorder %v6303, 0
        %v7152 = vsub.s32 0, %v6303
        %v7153 = vsel %vm7151, %v7152, %v6303
        %v7154 = vand.u32 %v7153, 65535
        %v7155 = vshrl.u32 %v7153, 16
        %v7157 = vmul.u32 %v7154, 14564
        %v7158 = vmul.u32 %v7154, 58254
        %v7159 = vmul.u32 %v7155, 14564
        %v7160 = vmul.u32 %v7155, 58254
        %v7161 = vshll.u32 %v7158, 16
        %v7162 = vshrl.u32 %v7158, 16
        %v7163 = vshll.u32 %v7159, 16
        %v7164 = vshrl.u32 %v7159, 16
        %vm7165 = vc.u32 %v7157, %v7161
        %v7166 = vsel %vm7165, 1, 0
        %v7167 = vadd.s32 %v7157, %v7161
        %v7168 = vadd.s32 %v7160, %v7166
        %vm7169 = vc.u32 %v7167, %v7163
        %v7170 = vsel %vm7169, 1, 0
        %v7171 = vadd.s32 %v7167, %v7163
        %v7172 = vadd.s32 %v7168, %v7170
        %v7173 = vadd.s32 %v7172, %v7162
        %v7174 = vadd.s32 %v7173, %v7164
        %v7175 = vshrl.u32 %v7174, 4
        %v7176 = vmul.u32 %v7175, 18
        %v7177 = vsub.s32 %v7153, %v7176
        %v7178 = vsub.s32 0, %v7177
        %v7179 = vsel %vm7151, %v7178, %v7177
        %vm7180 = vcmp.lt.s32.totalorder %v6304, 0
        %v7181 = vsub.s32 0, %v6304
        %v7182 = vsel %vm7180, %v7181, %v6304
        %v7183 = vand.u32 %v7182, 65535
        %v7184 = vshrl.u32 %v7182, 16
        %v7186 = vmul.u32 %v7183, 14564
        %v7187 = vmul.u32 %v7183, 58254
        %v7188 = vmul.u32 %v7184, 14564
        %v7189 = vmul.u32 %v7184, 58254
        %v7190 = vshll.u32 %v7187, 16
        %v7191 = vshrl.u32 %v7187, 16
        %v7192 = vshll.u32 %v7188, 16
        %v7193 = vshrl.u32 %v7188, 16
        %vm7194 = vc.u32 %v7186, %v7190
        %v7195 = vsel %vm7194, 1, 0
        %v7196 = vadd.s32 %v7186, %v7190
        %v7197 = vadd.s32 %v7189, %v7195
        %vm7198 = vc.u32 %v7196, %v7192
        %v7199 = vsel %vm7198, 1, 0
        %v7200 = vadd.s32 %v7196, %v7192
        %v7201 = vadd.s32 %v7197, %v7199
        %v7202 = vadd.s32 %v7201, %v7191
        %v7203 = vadd.s32 %v7202, %v7193
        %v7204 = vshrl.u32 %v7203, 4
        %v7205 = vmul.u32 %v7204, 18
        %v7206 = vsub.s32 %v7182, %v7205
        %v7207 = vsub.s32 0, %v7206
        %v7208 = vsel %vm7180, %v7207, %v7206
        %vm7209 = vcmp.lt.s32.totalorder %v6305, 0
        %v7210 = vsub.s32 0, %v6305
        %v7211 = vsel %vm7209, %v7210, %v6305
        %v7212 = vand.u32 %v7211, 65535
        %v7213 = vshrl.u32 %v7211, 16
        %v7215 = vmul.u32 %v7212, 14564
        %v7216 = vmul.u32 %v7212, 58254
        %v7217 = vmul.u32 %v7213, 14564
        %v7218 = vmul.u32 %v7213, 58254
        %v7219 = vshll.u32 %v7216, 16
        %v7220 = vshrl.u32 %v7216, 16
        %v7221 = vshll.u32 %v7217, 16
        %v7222 = vshrl.u32 %v7217, 16
        %vm7223 = vc.u32 %v7215, %v7219
        %v7224 = vsel %vm7223, 1, 0
        %v7225 = vadd.s32 %v7215, %v7219
        %v7226 = vadd.s32 %v7218, %v7224
        %vm7227 = vc.u32 %v7225, %v7221
        %v7228 = vsel %vm7227, 1, 0
        %v7229 = vadd.s32 %v7225, %v7221
        %v7230 = vadd.s32 %v7226, %v7228
        %v7231 = vadd.s32 %v7230, %v7220
        %v7232 = vadd.s32 %v7231, %v7222
        %v7233 = vshrl.u32 %v7232, 4
        %v7234 = vmul.u32 %v7233, 18
        %v7235 = vsub.s32 %v7211, %v7234
        %v7236 = vsub.s32 0, %v7235
        %v7237 = vsel %vm7209, %v7236, %v7235
        %vm7238 = vcmp.lt.s32.totalorder %v6306, 0
        %v7239 = vsub.s32 0, %v6306
        %v7240 = vsel %vm7238, %v7239, %v6306
        %v7241 = vand.u32 %v7240, 65535
        %v7242 = vshrl.u32 %v7240, 16
        %v7244 = vmul.u32 %v7241, 14564
        %v7245 = vmul.u32 %v7241, 58254
        %v7246 = vmul.u32 %v7242, 14564
        %v7247 = vmul.u32 %v7242, 58254
        %v7248 = vshll.u32 %v7245, 16
        %v7249 = vshrl.u32 %v7245, 16
        %v7250 = vshll.u32 %v7246, 16
        %v7251 = vshrl.u32 %v7246, 16
        %vm7252 = vc.u32 %v7244, %v7248
        %v7253 = vsel %vm7252, 1, 0
        %v7254 = vadd.s32 %v7244, %v7248
        %v7255 = vadd.s32 %v7247, %v7253
        %vm7256 = vc.u32 %v7254, %v7250
        %v7257 = vsel %vm7256, 1, 0
        %v7258 = vadd.s32 %v7254, %v7250
        %v7259 = vadd.s32 %v7255, %v7257
        %v7260 = vadd.s32 %v7259, %v7249
        %v7261 = vadd.s32 %v7260, %v7251
        %v7262 = vshrl.u32 %v7261, 4
        %v7263 = vmul.u32 %v7262, 18
        %v7264 = vsub.s32 %v7240, %v7263
        %v7265 = vsub.s32 0, %v7264
        %v7266 = vsel %vm7238, %v7265, %v7264
        %vm7267 = vcmp.lt.s32.totalorder %v6307, 0
        %v7268 = vsub.s32 0, %v6307
        %v7269 = vsel %vm7267, %v7268, %v6307
        %v7270 = vand.u32 %v7269, 65535
        %v7271 = vshrl.u32 %v7269, 16
        %v7273 = vmul.u32 %v7270, 14564
        %v7274 = vmul.u32 %v7270, 58254
        %v7275 = vmul.u32 %v7271, 14564
        %v7276 = vmul.u32 %v7271, 58254
        %v7277 = vshll.u32 %v7274, 16
        %v7278 = vshrl.u32 %v7274, 16
        %v7279 = vshll.u32 %v7275, 16
        %v7280 = vshrl.u32 %v7275, 16
        %vm7281 = vc.u32 %v7273, %v7277
        %v7282 = vsel %vm7281, 1, 0
        %v7283 = vadd.s32 %v7273, %v7277
        %v7284 = vadd.s32 %v7276, %v7282
        %vm7285 = vc.u32 %v7283, %v7279
        %v7286 = vsel %vm7285, 1, 0
        %v7287 = vadd.s32 %v7283, %v7279
        %v7288 = vadd.s32 %v7284, %v7286
        %v7289 = vadd.s32 %v7288, %v7278
        %v7290 = vadd.s32 %v7289, %v7280
        %v7291 = vshrl.u32 %v7290, 4
        %v7292 = vmul.u32 %v7291, 18
        %v7293 = vsub.s32 %v7269, %v7292
        %v7294 = vsub.s32 0, %v7293
        %v7295 = vsel %vm7267, %v7294, %v7293
        %vm7296 = vcmp.lt.s32.totalorder %v6308, 0
        %v7297 = vsub.s32 0, %v6308
        %v7298 = vsel %vm7296, %v7297, %v6308
        %v7299 = vand.u32 %v7298, 65535
        %v7300 = vshrl.u32 %v7298, 16
        %v7302 = vmul.u32 %v7299, 14564
        %v7303 = vmul.u32 %v7299, 58254
        %v7304 = vmul.u32 %v7300, 14564
        %v7305 = vmul.u32 %v7300, 58254
        %v7306 = vshll.u32 %v7303, 16
        %v7307 = vshrl.u32 %v7303, 16
        %v7308 = vshll.u32 %v7304, 16
        %v7309 = vshrl.u32 %v7304, 16
        %vm7310 = vc.u32 %v7302, %v7306
        %v7311 = vsel %vm7310, 1, 0
        %v7312 = vadd.s32 %v7302, %v7306
        %v7313 = vadd.s32 %v7305, %v7311
        %vm7314 = vc.u32 %v7312, %v7308
        %v7315 = vsel %vm7314, 1, 0
        %v7316 = vadd.s32 %v7312, %v7308
        %v7317 = vadd.s32 %v7313, %v7315
        %v7318 = vadd.s32 %v7317, %v7307
        %v7319 = vadd.s32 %v7318, %v7309
        %v7320 = vshrl.u32 %v7319, 4
        %v7321 = vmul.u32 %v7320, 18
        %v7322 = vsub.s32 %v7298, %v7321
        %v7323 = vsub.s32 0, %v7322
        %v7324 = vsel %vm7296, %v7323, %v7322
        %vm7325 = vcmp.lt.s32.totalorder %v6309, 0
        %v7326 = vsub.s32 0, %v6309
        %v7327 = vsel %vm7325, %v7326, %v6309
        %v7328 = vand.u32 %v7327, 65535
        %v7329 = vshrl.u32 %v7327, 16
        %v7331 = vmul.u32 %v7328, 14564
        %v7332 = vmul.u32 %v7328, 58254
        %v7333 = vmul.u32 %v7329, 14564
        %v7334 = vmul.u32 %v7329, 58254
        %v7335 = vshll.u32 %v7332, 16
        %v7336 = vshrl.u32 %v7332, 16
        %v7337 = vshll.u32 %v7333, 16
        %v7338 = vshrl.u32 %v7333, 16
        %vm7339 = vc.u32 %v7331, %v7335
        %v7340 = vsel %vm7339, 1, 0
        %v7341 = vadd.s32 %v7331, %v7335
        %v7342 = vadd.s32 %v7334, %v7340
        %vm7343 = vc.u32 %v7341, %v7337
        %v7344 = vsel %vm7343, 1, 0
        %v7345 = vadd.s32 %v7341, %v7337
        %v7346 = vadd.s32 %v7342, %v7344
        %v7347 = vadd.s32 %v7346, %v7336
        %v7348 = vadd.s32 %v7347, %v7338
        %v7349 = vshrl.u32 %v7348, 4
        %v7350 = vmul.u32 %v7349, 18
        %v7351 = vsub.s32 %v7327, %v7350
        %v7352 = vsub.s32 0, %v7351
        %v7353 = vsel %vm7325, %v7352, %v7351
        %vm7354 = vcmp.ne.s32.totalorder %v6338, 0
        %vm7355 = vcmp.ne.s32.totalorder %v6367, 0
        %vm7356 = vcmp.ne.s32.totalorder %v6396, 0
        %vm7357 = vcmp.ne.s32.totalorder %v6425, 0
        %vm7358 = vcmp.ne.s32.totalorder %v6454, 0
        %vm7359 = vcmp.ne.s32.totalorder %v6483, 0
        %vm7360 = vcmp.ne.s32.totalorder %v6512, 0
        %vm7361 = vcmp.ne.s32.totalorder %v6541, 0
        %vm7362 = vcmp.ne.s32.totalorder %v6570, 0
        %vm7363 = vcmp.ne.s32.totalorder %v6599, 0
        %vm7364 = vcmp.ne.s32.totalorder %v6628, 0
        %vm7365 = vcmp.ne.s32.totalorder %v6657, 0
        %vm7366 = vcmp.ne.s32.totalorder %v6686, 0
        %vm7367 = vcmp.ne.s32.totalorder %v6715, 0
        %vm7368 = vcmp.ne.s32.totalorder %v6744, 0
        %vm7369 = vcmp.ne.s32.totalorder %v6773, 0
        %vm7370 = vcmp.ne.s32.totalorder %v6802, 0
        %vm7371 = vcmp.ne.s32.totalorder %v6831, 0
        %vm7372 = vcmp.ne.s32.totalorder %v6860, 0
        %vm7373 = vcmp.ne.s32.totalorder %v6889, 0
        %vm7374 = vcmp.ne.s32.totalorder %v6918, 0
        %vm7375 = vcmp.ne.s32.totalorder %v6947, 0
        %vm7376 = vcmp.ne.s32.totalorder %v6976, 0
        %vm7377 = vcmp.ne.s32.totalorder %v7005, 0
        %vm7378 = vcmp.ne.s32.totalorder %v7034, 0
        %vm7379 = vcmp.ne.s32.totalorder %v7063, 0
        %vm7380 = vcmp.ne.s32.totalorder %v7092, 0
        %vm7381 = vcmp.ne.s32.totalorder %v7121, 0
        %vm7382 = vcmp.ne.s32.totalorder %v7150, 0
        %vm7383 = vcmp.ne.s32.totalorder %v7179, 0
        %vm7384 = vcmp.ne.s32.totalorder %v7208, 0
        %vm7385 = vcmp.ne.s32.totalorder %v7237, 0
        %vm7386 = vcmp.ne.s32.totalorder %v7266, 0
        %vm7387 = vcmp.ne.s32.totalorder %v7295, 0
        %vm7388 = vcmp.ne.s32.totalorder %v7324, 0
        %vm7389 = vcmp.ne.s32.totalorder %v7353, 0
        %vm7390 = vcmp.lt.s32.totalorder %v6338, 0
        %vm7391 = vcmp.lt.s32.totalorder %v6367, 0
        %vm7392 = vcmp.lt.s32.totalorder %v6396, 0
        %vm7393 = vcmp.lt.s32.totalorder %v6425, 0
        %vm7394 = vcmp.lt.s32.totalorder %v6454, 0
        %vm7395 = vcmp.lt.s32.totalorder %v6483, 0
        %vm7396 = vcmp.lt.s32.totalorder %v6512, 0
        %vm7397 = vcmp.lt.s32.totalorder %v6541, 0
        %vm7398 = vcmp.lt.s32.totalorder %v6570, 0
        %vm7399 = vcmp.lt.s32.totalorder %v6599, 0
        %vm7400 = vcmp.lt.s32.totalorder %v6628, 0
        %vm7401 = vcmp.lt.s32.totalorder %v6657, 0
        %vm7402 = vcmp.lt.s32.totalorder %v6686, 0
        %vm7403 = vcmp.lt.s32.totalorder %v6715, 0
        %vm7404 = vcmp.lt.s32.totalorder %v6744, 0
        %vm7405 = vcmp.lt.s32.totalorder %v6773, 0
        %vm7406 = vcmp.lt.s32.totalorder %v6802, 0
        %vm7407 = vcmp.lt.s32.totalorder %v6831, 0
        %vm7408 = vcmp.lt.s32.totalorder %v6860, 0
        %vm7409 = vcmp.lt.s32.totalorder %v6889, 0
        %vm7410 = vcmp.lt.s32.totalorder %v6918, 0
        %vm7411 = vcmp.lt.s32.totalorder %v6947, 0
        %vm7412 = vcmp.lt.s32.totalorder %v6976, 0
        %vm7413 = vcmp.lt.s32.totalorder %v7005, 0
        %vm7414 = vcmp.lt.s32.totalorder %v7034, 0
        %vm7415 = vcmp.lt.s32.totalorder %v7063, 0
        %vm7416 = vcmp.lt.s32.totalorder %v7092, 0
        %vm7417 = vcmp.lt.s32.totalorder %v7121, 0
        %vm7418 = vcmp.lt.s32.totalorder %v7150, 0
        %vm7419 = vcmp.lt.s32.totalorder %v7179, 0
        %vm7420 = vcmp.lt.s32.totalorder %v7208, 0
        %vm7421 = vcmp.lt.s32.totalorder %v7237, 0
        %vm7422 = vcmp.lt.s32.totalorder %v7266, 0
        %vm7423 = vcmp.lt.s32.totalorder %v7295, 0
        %vm7424 = vcmp.lt.s32.totalorder %v7324, 0
        %vm7425 = vcmp.lt.s32.totalorder %v7353, 0
        %vm7426 = vmand %vm7390, %vm7354
        %vm7427 = vmand %vm7391, %vm7355
        %vm7428 = vmand %vm7392, %vm7356
        %vm7429 = vmand %vm7393, %vm7357
        %vm7430 = vmand %vm7394, %vm7358
        %vm7431 = vmand %vm7395, %vm7359
        %vm7432 = vmand %vm7396, %vm7360
        %vm7433 = vmand %vm7397, %vm7361
        %vm7434 = vmand %vm7398, %vm7362
        %vm7435 = vmand %vm7399, %vm7363
        %vm7436 = vmand %vm7400, %vm7364
        %vm7437 = vmand %vm7401, %vm7365
        %vm7438 = vmand %vm7402, %vm7366
        %vm7439 = vmand %vm7403, %vm7367
        %vm7440 = vmand %vm7404, %vm7368
        %vm7441 = vmand %vm7405, %vm7369
        %vm7442 = vmand %vm7406, %vm7370
        %vm7443 = vmand %vm7407, %vm7371
        %vm7444 = vmand %vm7408, %vm7372
        %vm7445 = vmand %vm7409, %vm7373
        %vm7446 = vmand %vm7410, %vm7374
        %vm7447 = vmand %vm7411, %vm7375
        %vm7448 = vmand %vm7412, %vm7376
        %vm7449 = vmand %vm7413, %vm7377
        %vm7450 = vmand %vm7414, %vm7378
        %vm7451 = vmand %vm7415, %vm7379
        %vm7452 = vmand %vm7416, %vm7380
        %vm7453 = vmand %vm7417, %vm7381
        %vm7454 = vmand %vm7418, %vm7382
        %vm7455 = vmand %vm7419, %vm7383
        %vm7456 = vmand %vm7420, %vm7384
        %vm7457 = vmand %vm7421, %vm7385
        %vm7458 = vmand %vm7422, %vm7386
        %vm7459 = vmand %vm7423, %vm7387
        %vm7460 = vmand %vm7424, %vm7388
        %vm7461 = vmand %vm7425, %vm7389
        %v7462 = vadd.s32 %v6338, 18
        %v7463 = vadd.s32 %v6367, 18
        %v7464 = vadd.s32 %v6396, 18
        %v7465 = vadd.s32 %v6425, 18
        %v7466 = vadd.s32 %v6454, 18
        %v7467 = vadd.s32 %v6483, 18
        %v7468 = vadd.s32 %v6512, 18
        %v7469 = vadd.s32 %v6541, 18
        %v7470 = vadd.s32 %v6570, 18
        %v7471 = vadd.s32 %v6599, 18
        %v7472 = vadd.s32 %v6628, 18
        %v7473 = vadd.s32 %v6657, 18
        %v7474 = vadd.s32 %v6686, 18
        %v7475 = vadd.s32 %v6715, 18
        %v7476 = vadd.s32 %v6744, 18
        %v7477 = vadd.s32 %v6773, 18
        %v7478 = vadd.s32 %v6802, 18
        %v7479 = vadd.s32 %v6831, 18
        %v7480 = vadd.s32 %v6860, 18
        %v7481 = vadd.s32 %v6889, 18
        %v7482 = vadd.s32 %v6918, 18
        %v7483 = vadd.s32 %v6947, 18
        %v7484 = vadd.s32 %v6976, 18
        %v7485 = vadd.s32 %v7005, 18
        %v7486 = vadd.s32 %v7034, 18
        %v7487 = vadd.s32 %v7063, 18
        %v7488 = vadd.s32 %v7092, 18
        %v7489 = vadd.s32 %v7121, 18
        %v7490 = vadd.s32 %v7150, 18
        %v7491 = vadd.s32 %v7179, 18
        %v7492 = vadd.s32 %v7208, 18
        %v7493 = vadd.s32 %v7237, 18
        %v7494 = vadd.s32 %v7266, 18
        %v7495 = vadd.s32 %v7295, 18
        %v7496 = vadd.s32 %v7324, 18
        %v7497 = vadd.s32 %v7353, 18
        %v7498 = vsel %vm7426, %v7462, %v6338
        %v7499 = vsel %vm7427, %v7463, %v6367
        %v7500 = vsel %vm7428, %v7464, %v6396
        %v7501 = vsel %vm7429, %v7465, %v6425
        %v7502 = vsel %vm7430, %v7466, %v6454
        %v7503 = vsel %vm7431, %v7467, %v6483
        %v7504 = vsel %vm7432, %v7468, %v6512
        %v7505 = vsel %vm7433, %v7469, %v6541
        %v7506 = vsel %vm7434, %v7470, %v6570
        %v7507 = vsel %vm7435, %v7471, %v6599
        %v7508 = vsel %vm7436, %v7472, %v6628
        %v7509 = vsel %vm7437, %v7473, %v6657
        %v7510 = vsel %vm7438, %v7474, %v6686
        %v7511 = vsel %vm7439, %v7475, %v6715
        %v7512 = vsel %vm7440, %v7476, %v6744
        %v7513 = vsel %vm7441, %v7477, %v6773
        %v7514 = vsel %vm7442, %v7478, %v6802
        %v7515 = vsel %vm7443, %v7479, %v6831
        %v7516 = vsel %vm7444, %v7480, %v6860
        %v7517 = vsel %vm7445, %v7481, %v6889
        %v7518 = vsel %vm7446, %v7482, %v6918
        %v7519 = vsel %vm7447, %v7483, %v6947
        %v7520 = vsel %vm7448, %v7484, %v6976
        %v7521 = vsel %vm7449, %v7485, %v7005
        %v7522 = vsel %vm7450, %v7486, %v7034
        %v7523 = vsel %vm7451, %v7487, %v7063
        %v7524 = vsel %vm7452, %v7488, %v7092
        %v7525 = vsel %vm7453, %v7489, %v7121
        %v7526 = vsel %vm7454, %v7490, %v7150
        %v7527 = vsel %vm7455, %v7491, %v7179
        %v7528 = vsel %vm7456, %v7492, %v7208
        %v7529 = vsel %vm7457, %v7493, %v7237
        %v7530 = vsel %vm7458, %v7494, %v7266
        %v7531 = vsel %vm7459, %v7495, %v7295
        %v7532 = vsel %vm7460, %v7496, %v7324
        %v7533 = vsel %vm7461, %v7497, %v7353
        %vm7534 = vcmp.lt.s32.totalorder %v7498, 16
        %vm7535 = vcmp.lt.s32.totalorder %v7499, 16
        %vm7536 = vcmp.lt.s32.totalorder %v7500, 16
        %vm7537 = vcmp.lt.s32.totalorder %v7501, 16
        %vm7538 = vcmp.lt.s32.totalorder %v7502, 16
        %vm7539 = vcmp.lt.s32.totalorder %v7503, 16
        %vm7540 = vcmp.lt.s32.totalorder %v7504, 16
        %vm7541 = vcmp.lt.s32.totalorder %v7505, 16
        %vm7542 = vcmp.lt.s32.totalorder %v7506, 16
        %vm7543 = vcmp.lt.s32.totalorder %v7507, 16
        %vm7544 = vcmp.lt.s32.totalorder %v7508, 16
        %vm7545 = vcmp.lt.s32.totalorder %v7509, 16
        %vm7546 = vcmp.lt.s32.totalorder %v7510, 16
        %vm7547 = vcmp.lt.s32.totalorder %v7511, 16
        %vm7548 = vcmp.lt.s32.totalorder %v7512, 16
        %vm7549 = vcmp.lt.s32.totalorder %v7513, 16
        %vm7550 = vcmp.lt.s32.totalorder %v7514, 16
        %vm7551 = vcmp.lt.s32.totalorder %v7515, 16
        %vm7552 = vcmp.lt.s32.totalorder %v7516, 16
        %vm7553 = vcmp.lt.s32.totalorder %v7517, 16
        %vm7554 = vcmp.lt.s32.totalorder %v7518, 16
        %vm7555 = vcmp.lt.s32.totalorder %v7519, 16
        %vm7556 = vcmp.lt.s32.totalorder %v7520, 16
        %vm7557 = vcmp.lt.s32.totalorder %v7521, 16
        %vm7558 = vcmp.lt.s32.totalorder %v7522, 16
        %vm7559 = vcmp.lt.s32.totalorder %v7523, 16
        %vm7560 = vcmp.lt.s32.totalorder %v7524, 16
        %vm7561 = vcmp.lt.s32.totalorder %v7525, 16
        %vm7562 = vcmp.lt.s32.totalorder %v7526, 16
        %vm7563 = vcmp.lt.s32.totalorder %v7527, 16
        %vm7564 = vcmp.lt.s32.totalorder %v7528, 16
        %vm7565 = vcmp.lt.s32.totalorder %v7529, 16
        %vm7566 = vcmp.lt.s32.totalorder %v7530, 16
        %vm7567 = vcmp.lt.s32.totalorder %v7531, 16
        %vm7568 = vcmp.lt.s32.totalorder %v7532, 16
        %vm7569 = vcmp.lt.s32.totalorder %v7533, 16
        %v7570 = vsel %vm7534, 1, 0
        %v7571 = vsel %vm7535, 1, 0
        %v7572 = vsel %vm7536, 1, 0
        %v7573 = vsel %vm7537, 1, 0
        %v7574 = vsel %vm7538, 1, 0
        %v7575 = vsel %vm7539, 1, 0
        %v7576 = vsel %vm7540, 1, 0
        %v7577 = vsel %vm7541, 1, 0
        %v7578 = vsel %vm7542, 1, 0
        %v7579 = vsel %vm7543, 1, 0
        %v7580 = vsel %vm7544, 1, 0
        %v7581 = vsel %vm7545, 1, 0
        %v7582 = vsel %vm7546, 1, 0
        %v7583 = vsel %vm7547, 1, 0
        %v7584 = vsel %vm7548, 1, 0
        %v7585 = vsel %vm7549, 1, 0
        %v7586 = vsel %vm7550, 1, 0
        %v7587 = vsel %vm7551, 1, 0
        %v7588 = vsel %vm7552, 1, 0
        %v7589 = vsel %vm7553, 1, 0
        %v7590 = vsel %vm7554, 1, 0
        %v7591 = vsel %vm7555, 1, 0
        %v7592 = vsel %vm7556, 1, 0
        %v7593 = vsel %vm7557, 1, 0
        %v7594 = vsel %vm7558, 1, 0
        %v7595 = vsel %vm7559, 1, 0
        %v7596 = vsel %vm7560, 1, 0
        %v7597 = vsel %vm7561, 1, 0
        %v7598 = vsel %vm7562, 1, 0
        %v7599 = vsel %vm7563, 1, 0
        %v7600 = vsel %vm7564, 1, 0
        %v7601 = vsel %vm7565, 1, 0
        %v7602 = vsel %vm7566, 1, 0
        %v7603 = vsel %vm7567, 1, 0
        %v7604 = vsel %vm7568, 1, 0
        %v7605 = vsel %vm7569, 1, 0
        %vm7606 = vcmp.eq.s32.totalorder %v7570, 1
        %vm7607 = vcmp.eq.s32.totalorder %v7571, 1
        %vm7608 = vcmp.eq.s32.totalorder %v7572, 1
        %vm7609 = vcmp.eq.s32.totalorder %v7573, 1
        %vm7610 = vcmp.eq.s32.totalorder %v7574, 1
        %vm7611 = vcmp.eq.s32.totalorder %v7575, 1
        %vm7612 = vcmp.eq.s32.totalorder %v7576, 1
        %vm7613 = vcmp.eq.s32.totalorder %v7577, 1
        %vm7614 = vcmp.eq.s32.totalorder %v7578, 1
        %vm7615 = vcmp.eq.s32.totalorder %v7579, 1
        %vm7616 = vcmp.eq.s32.totalorder %v7580, 1
        %vm7617 = vcmp.eq.s32.totalorder %v7581, 1
        %vm7618 = vcmp.eq.s32.totalorder %v7582, 1
        %vm7619 = vcmp.eq.s32.totalorder %v7583, 1
        %vm7620 = vcmp.eq.s32.totalorder %v7584, 1
        %vm7621 = vcmp.eq.s32.totalorder %v7585, 1
        %vm7622 = vcmp.eq.s32.totalorder %v7586, 1
        %vm7623 = vcmp.eq.s32.totalorder %v7587, 1
        %vm7624 = vcmp.eq.s32.totalorder %v7588, 1
        %vm7625 = vcmp.eq.s32.totalorder %v7589, 1
        %vm7626 = vcmp.eq.s32.totalorder %v7590, 1
        %vm7627 = vcmp.eq.s32.totalorder %v7591, 1
        %vm7628 = vcmp.eq.s32.totalorder %v7592, 1
        %vm7629 = vcmp.eq.s32.totalorder %v7593, 1
        %vm7630 = vcmp.eq.s32.totalorder %v7594, 1
        %vm7631 = vcmp.eq.s32.totalorder %v7595, 1
        %vm7632 = vcmp.eq.s32.totalorder %v7596, 1
        %vm7633 = vcmp.eq.s32.totalorder %v7597, 1
        %vm7634 = vcmp.eq.s32.totalorder %v7598, 1
        %vm7635 = vcmp.eq.s32.totalorder %v7599, 1
        %vm7636 = vcmp.eq.s32.totalorder %v7600, 1
        %vm7637 = vcmp.eq.s32.totalorder %v7601, 1
        %vm7638 = vcmp.eq.s32.totalorder %v7602, 1
        %vm7639 = vcmp.eq.s32.totalorder %v7603, 1
        %vm7640 = vcmp.eq.s32.totalorder %v7604, 1
        %vm7641 = vcmp.eq.s32.totalorder %v7605, 1
        %v7642 = vsel %vm7606, %v6237, 0.0
        %v7643 = vsel %vm7607, %v6238, 0.0
        %v7644 = vsel %vm7608, %v6239, 0.0
        %v7645 = vsel %vm7609, %v6240, 0.0
        %v7646 = vsel %vm7610, %v6241, 0.0
        %v7647 = vsel %vm7611, %v6242, 0.0
        %v7648 = vsel %vm7612, %v6243, 0.0
        %v7649 = vsel %vm7613, %v6244, 0.0
        %v7650 = vsel %vm7614, %v6245, 0.0
        %v7651 = vsel %vm7615, %v6246, 0.0
        %v7652 = vsel %vm7616, %v6247, 0.0
        %v7653 = vsel %vm7617, %v6248, 0.0
        %v7654 = vsel %vm7618, %v6249, 0.0
        %v7655 = vsel %vm7619, %v6250, 0.0
        %v7656 = vsel %vm7620, %v6251, 0.0
        %v7657 = vsel %vm7621, %v6252, 0.0
        %v7658 = vsel %vm7622, %v6253, 0.0
        %v7659 = vsel %vm7623, %v6254, 0.0
        %v7660 = vsel %vm7624, %v6255, 0.0
        %v7661 = vsel %vm7625, %v6256, 0.0
        %v7662 = vsel %vm7626, %v6257, 0.0
        %v7663 = vsel %vm7627, %v6258, 0.0
        %v7664 = vsel %vm7628, %v6259, 0.0
        %v7665 = vsel %vm7629, %v6260, 0.0
        %v7666 = vsel %vm7630, %v6261, 0.0
        %v7667 = vsel %vm7631, %v6262, 0.0
        %v7668 = vsel %vm7632, %v6263, 0.0
        %v7669 = vsel %vm7633, %v6264, 0.0
        %v7670 = vsel %vm7634, %v6265, 0.0
        %v7671 = vsel %vm7635, %v6266, 0.0
        %v7672 = vsel %vm7636, %v6267, 0.0
        %v7673 = vsel %vm7637, %v6268, 0.0
        %v7674 = vsel %vm7638, %v6269, 0.0
        %v7675 = vsel %vm7639, %v6270, 0.0
        %v7676 = vsel %vm7640, %v6271, 0.0
        %v7677 = vsel %vm7641, %v6272, 0.0
        %v7678 = vpack.c.bf16 %v7642, %v7642
        %v7679 = vpack.c.bf16 %v7643, %v7643
        %v7680 = vpack.c.bf16 %v7644, %v7644
        %v7681 = vpack.c.bf16 %v7645, %v7645
        %v7682 = vpack.c.bf16 %v7646, %v7646
        %v7683 = vpack.c.bf16 %v7647, %v7647
        %v7684 = vpack.c.bf16 %v7648, %v7648
        %v7685 = vpack.c.bf16 %v7649, %v7649
        %v7686 = vpack.c.bf16 %v7650, %v7650
        %v7687 = vpack.c.bf16 %v7651, %v7651
        %v7688 = vpack.c.bf16 %v7652, %v7652
        %v7689 = vpack.c.bf16 %v7653, %v7653
        %v7690 = vpack.c.bf16 %v7654, %v7654
        %v7691 = vpack.c.bf16 %v7655, %v7655
        %v7692 = vpack.c.bf16 %v7656, %v7656
        %v7693 = vpack.c.bf16 %v7657, %v7657
        %v7694 = vpack.c.bf16 %v7658, %v7658
        %v7695 = vpack.c.bf16 %v7659, %v7659
        %v7696 = vpack.c.bf16 %v7660, %v7660
        %v7697 = vpack.c.bf16 %v7661, %v7661
        %v7698 = vpack.c.bf16 %v7662, %v7662
        %v7699 = vpack.c.bf16 %v7663, %v7663
        %v7700 = vpack.c.bf16 %v7664, %v7664
        %v7701 = vpack.c.bf16 %v7665, %v7665
        %v7702 = vpack.c.bf16 %v7666, %v7666
        %v7703 = vpack.c.bf16 %v7667, %v7667
        %v7704 = vpack.c.bf16 %v7668, %v7668
        %v7705 = vpack.c.bf16 %v7669, %v7669
        %v7706 = vpack.c.bf16 %v7670, %v7670
        %v7707 = vpack.c.bf16 %v7671, %v7671
        %v7708 = vpack.c.bf16 %v7672, %v7672
        %v7709 = vpack.c.bf16 %v7673, %v7673
        %v7710 = vpack.c.bf16 %v7674, %v7674
        %v7711 = vpack.c.bf16 %v7675, %v7675
        %v7712 = vpack.c.bf16 %v7676, %v7676
        %v7713 = vpack.c.bf16 %v7677, %v7677
        %v7715 = vshrl.u32 %v7678, 16
        %v7717 = vrot.slane %v7715, 6
        %v7718 = vshll.u32 %v7678, 16
        %v7720 = vrot.slane %v7718, 7
        %v7721 = vor.u32 %v7717, %v7720
        %v7722 = vrot.slane %v7721, 4
        %v7724 = vshrl.u32 %v7679, 16
        %v7726 = vrot.slane %v7724, 6
        %v7727 = vshll.u32 %v7679, 16
        %v7729 = vrot.slane %v7727, 7
        %v7730 = vor.u32 %v7726, %v7729
        %v7731 = vsel %vm489, %v7722, %v7730
        %v7732 = vrot.slane %v7730, 4
        %v7734 = vshrl.u32 %v7680, 16
        %v7736 = vrot.slane %v7734, 6
        %v7737 = vshll.u32 %v7680, 16
        %v7739 = vrot.slane %v7737, 7
        %v7740 = vor.u32 %v7736, %v7739
        %v7741 = vsel %vm489, %v7732, %v7740
        %v7742 = vrot.slane %v7740, 4
        %v7744 = vshrl.u32 %v7681, 16
        %v7746 = vrot.slane %v7744, 6
        %v7747 = vshll.u32 %v7681, 16
        %v7749 = vrot.slane %v7747, 7
        %v7750 = vor.u32 %v7746, %v7749
        %v7751 = vsel %vm489, %v7742, %v7750
        %v7752 = vrot.slane %v7750, 4
        %v7754 = vshrl.u32 %v7682, 16
        %v7756 = vrot.slane %v7754, 6
        %v7757 = vshll.u32 %v7682, 16
        %v7759 = vrot.slane %v7757, 7
        %v7760 = vor.u32 %v7756, %v7759
        %v7761 = vsel %vm489, %v7752, %v7760
        %v7762 = vrot.slane %v7760, 4
        %v7764 = vshrl.u32 %v7683, 16
        %v7766 = vrot.slane %v7764, 6
        %v7767 = vshll.u32 %v7683, 16
        %v7769 = vrot.slane %v7767, 7
        %v7770 = vor.u32 %v7766, %v7769
        %v7771 = vsel %vm489, %v7762, %v7770
        %v7772 = vrot.slane %v7770, 4
        %v7774 = vshrl.u32 %v7684, 16
        %v7776 = vrot.slane %v7774, 6
        %v7777 = vshll.u32 %v7684, 16
        %v7779 = vrot.slane %v7777, 7
        %v7780 = vor.u32 %v7776, %v7779
        %v7781 = vsel %vm489, %v7772, %v7780
        %v7782 = vrot.slane %v7780, 4
        %v7784 = vshrl.u32 %v7685, 16
        %v7786 = vrot.slane %v7784, 6
        %v7787 = vshll.u32 %v7685, 16
        %v7789 = vrot.slane %v7787, 7
        %v7790 = vor.u32 %v7786, %v7789
        %v7791 = vsel %vm489, %v7782, %v7790
        %v7792 = vrot.slane %v7790, 4
        %v7794 = vshrl.u32 %v7686, 16
        %v7796 = vrot.slane %v7794, 6
        %v7797 = vshll.u32 %v7686, 16
        %v7799 = vrot.slane %v7797, 7
        %v7800 = vor.u32 %v7796, %v7799
        %v7801 = vsel %vm489, %v7792, %v7800
        %v7802 = vrot.slane %v7800, 4
        %v7804 = vshrl.u32 %v7687, 16
        %v7806 = vrot.slane %v7804, 6
        %v7807 = vshll.u32 %v7687, 16
        %v7809 = vrot.slane %v7807, 7
        %v7810 = vor.u32 %v7806, %v7809
        %v7811 = vsel %vm489, %v7802, %v7810
        %v7812 = vrot.slane %v7810, 4
        %v7814 = vshrl.u32 %v7688, 16
        %v7816 = vrot.slane %v7814, 6
        %v7817 = vshll.u32 %v7688, 16
        %v7819 = vrot.slane %v7817, 7
        %v7820 = vor.u32 %v7816, %v7819
        %v7821 = vsel %vm489, %v7812, %v7820
        %v7822 = vrot.slane %v7820, 4
        %v7824 = vshrl.u32 %v7689, 16
        %v7826 = vrot.slane %v7824, 6
        %v7827 = vshll.u32 %v7689, 16
        %v7829 = vrot.slane %v7827, 7
        %v7830 = vor.u32 %v7826, %v7829
        %v7831 = vsel %vm489, %v7822, %v7830
        %v7832 = vrot.slane %v7830, 4
        %v7834 = vshrl.u32 %v7690, 16
        %v7836 = vrot.slane %v7834, 6
        %v7837 = vshll.u32 %v7690, 16
        %v7839 = vrot.slane %v7837, 7
        %v7840 = vor.u32 %v7836, %v7839
        %v7841 = vsel %vm489, %v7832, %v7840
        %v7842 = vrot.slane %v7840, 4
        %v7844 = vshrl.u32 %v7691, 16
        %v7846 = vrot.slane %v7844, 6
        %v7847 = vshll.u32 %v7691, 16
        %v7849 = vrot.slane %v7847, 7
        %v7850 = vor.u32 %v7846, %v7849
        %v7851 = vsel %vm489, %v7842, %v7850
        %v7852 = vrot.slane %v7850, 4
        %v7854 = vshrl.u32 %v7692, 16
        %v7856 = vrot.slane %v7854, 6
        %v7857 = vshll.u32 %v7692, 16
        %v7859 = vrot.slane %v7857, 7
        %v7860 = vor.u32 %v7856, %v7859
        %v7861 = vsel %vm489, %v7852, %v7860
        %v7862 = vrot.slane %v7860, 4
        %v7864 = vshrl.u32 %v7693, 16
        %v7866 = vrot.slane %v7864, 6
        %v7867 = vshll.u32 %v7693, 16
        %v7869 = vrot.slane %v7867, 7
        %v7870 = vor.u32 %v7866, %v7869
        %v7871 = vsel %vm489, %v7862, %v7870
        %v7872 = vrot.slane %v7870, 4
        %v7874 = vshrl.u32 %v7694, 16
        %v7876 = vrot.slane %v7874, 6
        %v7877 = vshll.u32 %v7694, 16
        %v7879 = vrot.slane %v7877, 7
        %v7880 = vor.u32 %v7876, %v7879
        %v7881 = vsel %vm489, %v7872, %v7880
        %v7882 = vrot.slane %v7880, 4
        %v7884 = vshrl.u32 %v7695, 16
        %v7886 = vrot.slane %v7884, 6
        %v7887 = vshll.u32 %v7695, 16
        %v7889 = vrot.slane %v7887, 7
        %v7890 = vor.u32 %v7886, %v7889
        %v7891 = vsel %vm489, %v7882, %v7890
        %v7892 = vrot.slane %v7890, 4
        %v7894 = vshrl.u32 %v7696, 16
        %v7896 = vrot.slane %v7894, 6
        %v7897 = vshll.u32 %v7696, 16
        %v7899 = vrot.slane %v7897, 7
        %v7900 = vor.u32 %v7896, %v7899
        %v7901 = vsel %vm489, %v7892, %v7900
        %v7902 = vrot.slane %v7900, 4
        %v7904 = vshrl.u32 %v7697, 16
        %v7906 = vrot.slane %v7904, 6
        %v7907 = vshll.u32 %v7697, 16
        %v7909 = vrot.slane %v7907, 7
        %v7910 = vor.u32 %v7906, %v7909
        %v7911 = vsel %vm489, %v7902, %v7910
        %v7912 = vrot.slane %v7910, 4
        %v7914 = vshrl.u32 %v7698, 16
        %v7916 = vrot.slane %v7914, 6
        %v7917 = vshll.u32 %v7698, 16
        %v7919 = vrot.slane %v7917, 7
        %v7920 = vor.u32 %v7916, %v7919
        %v7921 = vsel %vm489, %v7912, %v7920
        %v7922 = vrot.slane %v7920, 4
        %v7924 = vshrl.u32 %v7699, 16
        %v7926 = vrot.slane %v7924, 6
        %v7927 = vshll.u32 %v7699, 16
        %v7929 = vrot.slane %v7927, 7
        %v7930 = vor.u32 %v7926, %v7929
        %v7931 = vsel %vm489, %v7922, %v7930
        %v7932 = vrot.slane %v7930, 4
        %v7934 = vshrl.u32 %v7700, 16
        %v7936 = vrot.slane %v7934, 6
        %v7937 = vshll.u32 %v7700, 16
        %v7939 = vrot.slane %v7937, 7
        %v7940 = vor.u32 %v7936, %v7939
        %v7941 = vsel %vm489, %v7932, %v7940
        %v7942 = vrot.slane %v7940, 4
        %v7944 = vshrl.u32 %v7701, 16
        %v7946 = vrot.slane %v7944, 6
        %v7947 = vshll.u32 %v7701, 16
        %v7949 = vrot.slane %v7947, 7
        %v7950 = vor.u32 %v7946, %v7949
        %v7951 = vsel %vm489, %v7942, %v7950
        %v7952 = vrot.slane %v7950, 4
        %v7954 = vshrl.u32 %v7702, 16
        %v7956 = vrot.slane %v7954, 6
        %v7957 = vshll.u32 %v7702, 16
        %v7959 = vrot.slane %v7957, 7
        %v7960 = vor.u32 %v7956, %v7959
        %v7961 = vsel %vm489, %v7952, %v7960
        %v7962 = vrot.slane %v7960, 4
        %v7964 = vshrl.u32 %v7703, 16
        %v7966 = vrot.slane %v7964, 6
        %v7967 = vshll.u32 %v7703, 16
        %v7969 = vrot.slane %v7967, 7
        %v7970 = vor.u32 %v7966, %v7969
        %v7971 = vsel %vm489, %v7962, %v7970
        %v7972 = vrot.slane %v7970, 4
        %v7974 = vshrl.u32 %v7704, 16
        %v7976 = vrot.slane %v7974, 6
        %v7977 = vshll.u32 %v7704, 16
        %v7979 = vrot.slane %v7977, 7
        %v7980 = vor.u32 %v7976, %v7979
        %v7981 = vsel %vm489, %v7972, %v7980
        %v7982 = vrot.slane %v7980, 4
        %v7984 = vshrl.u32 %v7705, 16
        %v7986 = vrot.slane %v7984, 6
        %v7987 = vshll.u32 %v7705, 16
        %v7989 = vrot.slane %v7987, 7
        %v7990 = vor.u32 %v7986, %v7989
        %v7991 = vsel %vm489, %v7982, %v7990
        %v7992 = vrot.slane %v7990, 4
        %v7994 = vshrl.u32 %v7706, 16
        %v7996 = vrot.slane %v7994, 6
        %v7997 = vshll.u32 %v7706, 16
        %v7999 = vrot.slane %v7997, 7
        %v8000 = vor.u32 %v7996, %v7999
        %v8001 = vsel %vm489, %v7992, %v8000
        %v8002 = vrot.slane %v8000, 4
        %v8004 = vshrl.u32 %v7707, 16
        %v8006 = vrot.slane %v8004, 6
        %v8007 = vshll.u32 %v7707, 16
        %v8009 = vrot.slane %v8007, 7
        %v8010 = vor.u32 %v8006, %v8009
        %v8011 = vsel %vm489, %v8002, %v8010
        %v8012 = vrot.slane %v8010, 4
        %v8014 = vshrl.u32 %v7708, 16
        %v8016 = vrot.slane %v8014, 6
        %v8017 = vshll.u32 %v7708, 16
        %v8019 = vrot.slane %v8017, 7
        %v8020 = vor.u32 %v8016, %v8019
        %v8021 = vsel %vm489, %v8012, %v8020
        %v8022 = vrot.slane %v8020, 4
        %v8024 = vshrl.u32 %v7709, 16
        %v8026 = vrot.slane %v8024, 6
        %v8027 = vshll.u32 %v7709, 16
        %v8029 = vrot.slane %v8027, 7
        %v8030 = vor.u32 %v8026, %v8029
        %v8031 = vsel %vm489, %v8022, %v8030
        %v8032 = vrot.slane %v8030, 4
        %v8034 = vshrl.u32 %v7710, 16
        %v8036 = vrot.slane %v8034, 6
        %v8037 = vshll.u32 %v7710, 16
        %v8039 = vrot.slane %v8037, 7
        %v8040 = vor.u32 %v8036, %v8039
        %v8041 = vsel %vm489, %v8032, %v8040
        %v8042 = vrot.slane %v8040, 4
        %v8044 = vshrl.u32 %v7711, 16
        %v8046 = vrot.slane %v8044, 6
        %v8047 = vshll.u32 %v7711, 16
        %v8049 = vrot.slane %v8047, 7
        %v8050 = vor.u32 %v8046, %v8049
        %v8051 = vsel %vm489, %v8042, %v8050
        %v8052 = vrot.slane %v8050, 4
        %v8054 = vshrl.u32 %v7712, 16
        %v8056 = vrot.slane %v8054, 6
        %v8057 = vshll.u32 %v7712, 16
        %v8059 = vrot.slane %v8057, 7
        %v8060 = vor.u32 %v8056, %v8059
        %v8061 = vsel %vm489, %v8052, %v8060
        %v8062 = vrot.slane %v8060, 4
        %v8064 = vshrl.u32 %v7713, 16
        %v8066 = vrot.slane %v8064, 6
        %v8067 = vshll.u32 %v7713, 16
        %v8069 = vrot.slane %v8067, 7
        %v8070 = vor.u32 %v8066, %v8069
        %v8071 = vsel %vm489, %v8062, %v8070
        %v8072 = vrot.slane %v8070, 4
        %vm8110 = vcmask 519169
        %vm8111 = vmand %vm8110, %vm513
        %v8112 = vld [vmem:[#allocation3 + $0x8] sm:$0xe]
        %v8113 = vsel %vm8111, %v7721, %v8112
        %8114 = vst [vmem:[#allocation3 + $0x8] sm:$0xe] %v8113
        %8115 = vst.msk [vmem:[#allocation3 + $0xc] sm:$0xf] %vm273, %v7731
        %8116 = vst.msk [vmem:[#allocation3 + $0x10] sm:$0xf] %vm273, %v7741
        %8117 = vst.msk [vmem:[#allocation3 + $0x14] sm:$0xf] %vm273, %v7751
        %8118 = vst.msk [vmem:[#allocation3 + $0x18] sm:$0xf] %vm273, %v7761
        %8119 = vst.msk [vmem:[#allocation3 + $0x1c] sm:$0xf] %vm273, %v7771
        %8120 = vst.msk [vmem:[#allocation3 + $0x20] sm:$0xf] %vm273, %v7781
        %8121 = vst.msk [vmem:[#allocation3 + $0x24] sm:$0xf] %vm273, %v7791
        %8122 = vst.msk [vmem:[#allocation3 + $0x28] sm:$0xf] %vm273, %v7801
        %8123 = vst.msk [vmem:[#allocation3 + $0x2c] sm:$0xf] %vm273, %v7811
        %8124 = vst.msk [vmem:[#allocation3 + $0x30] sm:$0xf] %vm273, %v7821
        %8125 = vst.msk [vmem:[#allocation3 + $0x34] sm:$0xf] %vm273, %v7831
        %8126 = vst.msk [vmem:[#allocation3 + $0x38] sm:$0xf] %vm273, %v7841
        %8127 = vst.msk [vmem:[#allocation3 + $0x3c] sm:$0xf] %vm273, %v7851
        %8128 = vst.msk [vmem:[#allocation3 + $0x40] sm:$0xf] %vm273, %v7861
        %8129 = vst.msk [vmem:[#allocation3 + $0x44] sm:$0xf] %vm273, %v7871
        %8130 = vst.msk [vmem:[#allocation3 + $0x48] sm:$0xf] %vm273, %v7881
        %8131 = vst.msk [vmem:[#allocation3 + $0x4c] sm:$0xf] %vm273, %v7891
        %8132 = vst.msk [vmem:[#allocation3 + $0x50] sm:$0xf] %vm273, %v7901
        %8133 = vst.msk [vmem:[#allocation3 + $0x54] sm:$0xf] %vm273, %v7911
        %8134 = vst.msk [vmem:[#allocation3 + $0x58] sm:$0xf] %vm273, %v7921
        %8135 = vst.msk [vmem:[#allocation3 + $0x5c] sm:$0xf] %vm273, %v7931
        %8136 = vst.msk [vmem:[#allocation3 + $0x60] sm:$0xf] %vm273, %v7941
        %8137 = vst.msk [vmem:[#allocation3 + $0x64] sm:$0xf] %vm273, %v7951
        %8138 = vst.msk [vmem:[#allocation3 + $0x68] sm:$0xf] %vm273, %v7961
        %8139 = vst.msk [vmem:[#allocation3 + $0x6c] sm:$0xf] %vm273, %v7971
        %8140 = vst.msk [vmem:[#allocation3 + $0x70] sm:$0xf] %vm273, %v7981
        %8141 = vst.msk [vmem:[#allocation3 + $0x74] sm:$0xf] %vm273, %v7991
        %8142 = vst.msk [vmem:[#allocation3 + $0x78] sm:$0xf] %vm273, %v8001
        %8143 = vst.msk [vmem:[#allocation3 + $0x7c] sm:$0xf] %vm273, %v8011
        %8144 = vst.msk [vmem:[#allocation3 + $0x80] sm:$0xf] %vm273, %v8021
        %8145 = vst.msk [vmem:[#allocation3 + $0x84] sm:$0xf] %vm273, %v8031
        %8146 = vst.msk [vmem:[#allocation3 + $0x88] sm:$0xf] %vm273, %v8041
        %8147 = vst.msk [vmem:[#allocation3 + $0x8c] sm:$0xf] %vm273, %v8051
        %8148 = vst.msk [vmem:[#allocation3 + $0x90] sm:$0xf] %vm273, %v8061
        %8149 = vst.msk [vmem:[#allocation3 + $0x94] sm:$0xf] %vm273, %v8071
        %vm8150 = vcmask 517120
        %vm8151 = vmand %vm8150, %vm487
        %v8152 = vld [vmem:[#allocation3 + $0x98] sm:$0x3]
        %v8153 = vsel %vm8151, %v8072, %v8152
        %8154 = vst [vmem:[#allocation3 + $0x98] sm:$0x3] %v8153
        %v8155 = vld [vmem:[#allocation3] sm:$0xf]
        %v8156 = vld [vmem:[#allocation3 + $0x4] sm:$0xf]
        %v8157 = vld [vmem:[#allocation3 + $0x8] sm:$0xf]
        %v8158 = vld [vmem:[#allocation3 + $0xc] sm:$0xf]
        %v8159 = vld [vmem:[#allocation3 + $0x10] sm:$0xf]
        %v8160 = vld [vmem:[#allocation3 + $0x14] sm:$0xf]
        %v8161 = vld [vmem:[#allocation3 + $0x18] sm:$0xf]
        %v8162 = vld [vmem:[#allocation3 + $0x1c] sm:$0xf]
        %v8163 = vld [vmem:[#allocation3 + $0x20] sm:$0xf]
        %v8164 = vld [vmem:[#allocation3 + $0x24] sm:$0xf]
        %v8165 = vld [vmem:[#allocation3 + $0x28] sm:$0xf]
        %v8166 = vld [vmem:[#allocation3 + $0x2c] sm:$0xf]
        %v8167 = vld [vmem:[#allocation3 + $0x30] sm:$0xf]
        %v8168 = vld [vmem:[#allocation3 + $0x34] sm:$0xf]
        %v8169 = vld [vmem:[#allocation3 + $0x38] sm:$0xf]
        %v8170 = vld [vmem:[#allocation3 + $0x3c] sm:$0xf]
        %v8171 = vld [vmem:[#allocation3 + $0x40] sm:$0xf]
        %v8172 = vld [vmem:[#allocation3 + $0x44] sm:$0xf]
        %v8173 = vld [vmem:[#allocation3 + $0x48] sm:$0xf]
        %v8174 = vld [vmem:[#allocation3 + $0x4c] sm:$0xf]
        %v8175 = vld [vmem:[#allocation3 + $0x50] sm:$0xf]
        %v8176 = vld [vmem:[#allocation3 + $0x54] sm:$0xf]
        %v8177 = vld [vmem:[#allocation3 + $0x58] sm:$0xf]
        %v8178 = vld [vmem:[#allocation3 + $0x5c] sm:$0xf]
        %v8179 = vld [vmem:[#allocation3 + $0x60] sm:$0xf]
        %v8180 = vld [vmem:[#allocation3 + $0x64] sm:$0xf]
        %v8181 = vld [vmem:[#allocation3 + $0x68] sm:$0xf]
        %v8182 = vld [vmem:[#allocation3 + $0x6c] sm:$0xf]
        %v8183 = vld [vmem:[#allocation3 + $0x70] sm:$0xf]
        %v8184 = vld [vmem:[#allocation3 + $0x74] sm:$0xf]
        %v8185 = vld [vmem:[#allocation3 + $0x78] sm:$0xf]
        %v8186 = vld [vmem:[#allocation3 + $0x7c] sm:$0xf]
        %v8187 = vld [vmem:[#allocation3 + $0x80] sm:$0xf]
        %v8188 = vld [vmem:[#allocation3 + $0x84] sm:$0xf]
        %v8189 = vld [vmem:[#allocation3 + $0x88] sm:$0xf]
        %v8190 = vld [vmem:[#allocation3 + $0x8c] sm:$0xf]
        %v8191 = vld [vmem:[#allocation3 + $0x90] sm:$0xf]
        %v8192 = vld [vmem:[#allocation3 + $0x94] sm:$0xf]
        %v8193 = vld [vmem:[#allocation3 + $0x98] sm:$0xf]
        %v8194 = vld [vmem:[#allocation3 + $0x9c] sm:$0xf]
        %v8195 = vld [vmem:[#allocation3 + $0xa0] sm:$0xf]
        %v8196 = vld [vmem:[#allocation3 + $0xa4] sm:$0xf]
        %v8197 = vld [vmem:[#allocation3 + $0xa8] sm:$0xf]
        %v8198 = vld [vmem:[#allocation3 + $0xac] sm:$0xf]
        %v8199 = vld [vmem:[#allocation3 + $0xb0] sm:$0xf]
        %v8200 = vld [vmem:[#allocation3 + $0xb4] sm:$0xf]
        %v8201 = vld [vmem:[#allocation3 + $0xb8] sm:$0xf]
        %v8202 = vld [vmem:[#allocation3 + $0xbc] sm:$0xf]
        %v8203 = vld [vmem:[%s3] sm:$0xf]
        %v8204 = vld [vmem:[%s3 + $0x4] sm:$0xf]
        %v8205 = vld [vmem:[%s3 + $0x8] sm:$0xf]
        %v8206 = vld [vmem:[%s3 + $0xc] sm:$0xf]
        %v8207 = vld [vmem:[%s3 + $0x10] sm:$0xf]
        %v8208 = vld [vmem:[%s3 + $0x14] sm:$0xf]
        %v8209 = vld [vmem:[%s3 + $0x18] sm:$0xf]
        %v8210 = vld [vmem:[%s3 + $0x1c] sm:$0xf]
        %v8259 = vunpack.c.l.b16 %v8155
        %v8260 = vunpack.c.l.b16 %v8156
        %v8261 = vunpack.c.l.b16 %v8157
        %v8262 = vunpack.c.l.b16 %v8158
        %v8263 = vunpack.c.l.b16 %v8159
        %v8264 = vunpack.c.l.b16 %v8160
        %v8265 = vunpack.c.l.b16 %v8161
        %v8266 = vunpack.c.l.b16 %v8162
        %v8267 = vunpack.c.l.b16 %v8163
        %v8268 = vunpack.c.l.b16 %v8164
        %v8269 = vunpack.c.l.b16 %v8165
        %v8270 = vunpack.c.l.b16 %v8166
        %v8271 = vunpack.c.l.b16 %v8167
        %v8272 = vunpack.c.l.b16 %v8168
        %v8273 = vunpack.c.l.b16 %v8169
        %v8274 = vunpack.c.l.b16 %v8170
        %v8275 = vunpack.c.l.b16 %v8171
        %v8276 = vunpack.c.l.b16 %v8172
        %v8277 = vunpack.c.l.b16 %v8173
        %v8278 = vunpack.c.l.b16 %v8174
        %v8279 = vunpack.c.l.b16 %v8175
        %v8280 = vunpack.c.l.b16 %v8176
        %v8281 = vunpack.c.l.b16 %v8177
        %v8282 = vunpack.c.l.b16 %v8178
        %v8283 = vunpack.c.l.b16 %v8179
        %v8284 = vunpack.c.l.b16 %v8180
        %v8285 = vunpack.c.l.b16 %v8181
        %v8286 = vunpack.c.l.b16 %v8182
        %v8287 = vunpack.c.l.b16 %v8183
        %v8288 = vunpack.c.l.b16 %v8184
        %v8289 = vunpack.c.l.b16 %v8185
        %v8290 = vunpack.c.l.b16 %v8186
        %v8291 = vunpack.c.l.b16 %v8187
        %v8292 = vunpack.c.l.b16 %v8188
        %v8293 = vunpack.c.l.b16 %v8189
        %v8294 = vunpack.c.l.b16 %v8190
        %v8295 = vunpack.c.l.b16 %v8191
        %v8296 = vunpack.c.l.b16 %v8192
        %v8297 = vunpack.c.l.b16 %v8193
        %v8298 = vunpack.c.l.b16 %v8194
        %v8299 = vunpack.c.l.b16 %v8195
        %v8300 = vunpack.c.l.b16 %v8196
        %v8301 = vunpack.c.l.b16 %v8197
        %v8302 = vunpack.c.l.b16 %v8198
        %v8303 = vunpack.c.l.b16 %v8199
        %v8304 = vunpack.c.l.b16 %v8200
        %v8305 = vunpack.c.l.b16 %v8201
        %v8306 = vunpack.c.l.b16 %v8202
        %v8307 = vpack.c.b16 %v8260, %v8259
        %v8308 = vpack.c.b16 %v8262, %v8261
        %v8309 = vpack.c.b16 %v8264, %v8263
        %v8310 = vpack.c.b16 %v8266, %v8265
        %v8311 = vpack.c.b16 %v8268, %v8267
        %v8312 = vpack.c.b16 %v8270, %v8269
        %v8313 = vpack.c.b16 %v8272, %v8271
        %v8314 = vpack.c.b16 %v8274, %v8273
        %v8315 = vpack.c.b16 %v8276, %v8275
        %v8316 = vpack.c.b16 %v8278, %v8277
        %v8317 = vpack.c.b16 %v8280, %v8279
        %v8318 = vpack.c.b16 %v8282, %v8281
        %v8319 = vpack.c.b16 %v8284, %v8283
        %v8320 = vpack.c.b16 %v8286, %v8285
        %v8321 = vpack.c.b16 %v8288, %v8287
        %v8322 = vpack.c.b16 %v8290, %v8289
        %v8323 = vpack.c.b16 %v8292, %v8291
        %v8324 = vpack.c.b16 %v8294, %v8293
        %v8325 = vpack.c.b16 %v8296, %v8295
        %v8326 = vpack.c.b16 %v8298, %v8297
        %v8327 = vpack.c.b16 %v8300, %v8299
        %v8328 = vpack.c.b16 %v8302, %v8301
        %v8329 = vpack.c.b16 %v8304, %v8303
        %v8330 = vpack.c.b16 %v8306, %v8305
        %v8339 = vunpack.c.l.b16 %v8203
        %v8340 = vunpack.c.l.b16 %v8204
        %v8341 = vunpack.c.l.b16 %v8205
        %v8342 = vunpack.c.l.b16 %v8206
        %v8343 = vunpack.c.l.b16 %v8207
        %v8344 = vunpack.c.l.b16 %v8208
        %v8345 = vunpack.c.l.b16 %v8209
        %v8346 = vunpack.c.l.b16 %v8210
        %v8347 = vpack.c.b16 %v8340, %v8339
        %v8348 = vpack.c.b16 %v8342, %v8341
        %v8349 = vpack.c.b16 %v8344, %v8343
        %v8350 = vpack.c.b16 %v8346, %v8345
        %vm8355 = vcmask 523264
        %v8357 = vsel %vm8355, %v8307, 0
        %v8360 = vsel %vm8355, %v8308, 0
        %v8363 = vsel %vm8355, %v8309, 0
        %v8366 = vsel %vm8355, %v8310, 0
        %v8369 = vsel %vm8355, %v8311, 0
        %v8372 = vsel %vm8355, %v8312, 0
        %v8375 = vsel %vm8355, %v8313, 0
        %v8378 = vsel %vm8355, %v8314, 0
        %v8381 = vsel %vm8355, %v8315, 0
        %v8384 = vsel %vm8355, %v8316, 0
        %v8387 = vsel %vm8355, %v8317, 0
        %v8390 = vsel %vm8355, %v8318, 0
        %v8393 = vsel %vm8355, %v8319, 0
        %v8396 = vsel %vm8355, %v8320, 0
        %v8399 = vsel %vm8355, %v8321, 0
        %v8402 = vsel %vm8355, %v8322, 0
        %v8405 = vsel %vm8355, %v8323, 0
        %v8408 = vsel %vm8355, %v8324, 0
        %v8411 = vsel %vm8355, %v8325, 0
        %v8414 = vsel %vm8355, %v8326, 0
        %v8417 = vsel %vm8355, %v8327, 0
        %v8420 = vsel %vm8355, %v8328, 0
        %v8423 = vsel %vm8355, %v8329, 0
        %v8426 = vsel %vm8355, %v8330, 0
        %8428 = vmatpush.bf16.msra.mxu0 0
        %8429 = vmatpush.bf16.msra.mxu0 0
        %8430 = vmatpush.bf16.msra.mxu0 0
        %8431 = vmatpush.bf16.msra.mxu0 0
        %8432 = vmatpush.bf16.msra.mxu0 %v8350
        %8433 = vmatpush.bf16.msra.mxu0 %v8349
        %8434 = vmatpush.bf16.msra.mxu0 %v8348
        %8435 = vmatpush.bf16.msra.mxu0 %v8347
        %8436 = vmatmul.bf16.gmra.mxu0 %v8357
        %v8437 = vpop.f32.mrf.mxu0
        %v8438 = vadd.f32 0.0, %v8437
        %v8439 = vpop.f32.mrf.mxu0
        %v8440 = vadd.f32 0.0, %v8439
        %8441 = vmatmul.bf16.gmra.mxu0 %v8360
        %v8442 = vpop.f32.mrf.mxu0
        %v8443 = vadd.f32 0.0, %v8442
        %v8444 = vpop.f32.mrf.mxu0
        %v8445 = vadd.f32 0.0, %v8444
        %8446 = vmatmul.bf16.gmra.mxu0 %v8363
        %v8447 = vpop.f32.mrf.mxu0
        %v8448 = vadd.f32 0.0, %v8447
        %v8449 = vpop.f32.mrf.mxu0
        %v8450 = vadd.f32 0.0, %v8449
        %8451 = vmatmul.bf16.gmra.mxu0 %v8366
        %v8452 = vpop.f32.mrf.mxu0
        %v8453 = vadd.f32 0.0, %v8452
        %v8454 = vpop.f32.mrf.mxu0
        %v8455 = vadd.f32 0.0, %v8454
        %8456 = vmatmul.bf16.gmra.mxu0 %v8369
        %v8457 = vpop.f32.mrf.mxu0
        %v8458 = vadd.f32 0.0, %v8457
        %v8459 = vpop.f32.mrf.mxu0
        %v8460 = vadd.f32 0.0, %v8459
        %8461 = vmatmul.bf16.gmra.mxu0 %v8372
        %v8462 = vpop.f32.mrf.mxu0
        %v8463 = vadd.f32 0.0, %v8462
        %v8464 = vpop.f32.mrf.mxu0
        %v8465 = vadd.f32 0.0, %v8464
        %8466 = vmatmul.bf16.gmra.mxu0 %v8375
        %v8467 = vpop.f32.mrf.mxu0
        %v8468 = vadd.f32 0.0, %v8467
        %v8469 = vpop.f32.mrf.mxu0
        %v8470 = vadd.f32 0.0, %v8469
        %8471 = vmatmul.bf16.gmra.mxu0 %v8378
        %v8472 = vpop.f32.mrf.mxu0
        %v8473 = vadd.f32 0.0, %v8472
        %v8474 = vpop.f32.mrf.mxu0
        %v8475 = vadd.f32 0.0, %v8474
        %8476 = vmatmul.bf16.gmra.mxu0 %v8381
        %v8477 = vpop.f32.mrf.mxu0
        %v8478 = vadd.f32 0.0, %v8477
        %v8479 = vpop.f32.mrf.mxu0
        %v8480 = vadd.f32 0.0, %v8479
        %8481 = vmatmul.bf16.gmra.mxu0 %v8384
        %v8482 = vpop.f32.mrf.mxu0
        %v8483 = vadd.f32 0.0, %v8482
        %v8484 = vpop.f32.mrf.mxu0
        %v8485 = vadd.f32 0.0, %v8484
        %8486 = vmatmul.bf16.gmra.mxu0 %v8387
        %v8487 = vpop.f32.mrf.mxu0
        %v8488 = vadd.f32 0.0, %v8487
        %v8489 = vpop.f32.mrf.mxu0
        %v8490 = vadd.f32 0.0, %v8489
        %8491 = vmatmul.bf16.gmra.mxu0 %v8390
        %v8492 = vpop.f32.mrf.mxu0
        %v8493 = vadd.f32 0.0, %v8492
        %v8494 = vpop.f32.mrf.mxu0
        %v8495 = vadd.f32 0.0, %v8494
        %8496 = vmatmul.bf16.gmra.mxu0 %v8393
        %v8497 = vpop.f32.mrf.mxu0
        %v8498 = vadd.f32 0.0, %v8497
        %v8499 = vpop.f32.mrf.mxu0
        %v8500 = vadd.f32 0.0, %v8499
        %8501 = vmatmul.bf16.gmra.mxu0 %v8396
        %v8502 = vpop.f32.mrf.mxu0
        %v8503 = vadd.f32 0.0, %v8502
        %v8504 = vpop.f32.mrf.mxu0
        %v8505 = vadd.f32 0.0, %v8504
        %8506 = vmatmul.bf16.gmra.mxu0 %v8399
        %v8507 = vpop.f32.mrf.mxu0
        %v8508 = vadd.f32 0.0, %v8507
        %v8509 = vpop.f32.mrf.mxu0
        %v8510 = vadd.f32 0.0, %v8509
        %8511 = vmatmul.bf16.gmra.mxu0 %v8402
        %v8512 = vpop.f32.mrf.mxu0
        %v8513 = vadd.f32 0.0, %v8512
        %v8514 = vpop.f32.mrf.mxu0
        %v8515 = vadd.f32 0.0, %v8514
        %8516 = vmatmul.bf16.gmra.mxu0 %v8405
        %v8517 = vpop.f32.mrf.mxu0
        %v8518 = vadd.f32 0.0, %v8517
        %v8519 = vpop.f32.mrf.mxu0
        %v8520 = vadd.f32 0.0, %v8519
        %8521 = vmatmul.bf16.gmra.mxu0 %v8408
        %v8522 = vpop.f32.mrf.mxu0
        %v8523 = vadd.f32 0.0, %v8522
        %v8524 = vpop.f32.mrf.mxu0
        %v8525 = vadd.f32 0.0, %v8524
        %8526 = vmatmul.bf16.gmra.mxu0 %v8411
        %v8527 = vpop.f32.mrf.mxu0
        %v8528 = vadd.f32 0.0, %v8527
        %v8529 = vpop.f32.mrf.mxu0
        %v8530 = vadd.f32 0.0, %v8529
        %8531 = vmatmul.bf16.gmra.mxu0 %v8414
        %v8532 = vpop.f32.mrf.mxu0
        %v8533 = vadd.f32 0.0, %v8532
        %v8534 = vpop.f32.mrf.mxu0
        %v8535 = vadd.f32 0.0, %v8534
        %8536 = vmatmul.bf16.gmra.mxu0 %v8417
        %v8537 = vpop.f32.mrf.mxu0
        %v8538 = vadd.f32 0.0, %v8537
        %v8539 = vpop.f32.mrf.mxu0
        %8540 = vmatmul.bf16.gmra.mxu0 %v8420
        %v8541 = vpop.f32.mrf.mxu0
        %v8542 = vpop.f32.mrf.mxu0
        %8543 = vmatmul.bf16.gmra.mxu0 %v8423
        %v8544 = vpop.f32.mrf.mxu0
        %v8545 = vpop.f32.mrf.mxu0
        %8546 = vmatmul.bf16.gmra.mxu0 %v8426
        %v8547 = vpop.f32.mrf.mxu0
        %v8548 = vpop.f32.mrf.mxu0
        %8549 = vdwg.mxu0
        %v8550 = vadd.f32 %v8438, 0.0
        %v8551 = vadd.f32 %v8440, 0.0
        %v8552 = vadd.f32 %v8443, 0.0
        %v8553 = vadd.f32 %v8445, 0.0
        %v8554 = vadd.f32 %v8448, 0.0
        %v8555 = vadd.f32 %v8450, 0.0
        %v8556 = vadd.f32 %v8453, 0.0
        %v8557 = vadd.f32 %v8455, 0.0
        %v8558 = vadd.f32 %v8458, 0.0
        %v8559 = vadd.f32 %v8460, 0.0
        %v8560 = vadd.f32 %v8463, 0.0
        %v8561 = vadd.f32 %v8465, 0.0
        %v8562 = vadd.f32 %v8468, 0.0
        %v8563 = vadd.f32 %v8470, 0.0
        %v8564 = vadd.f32 %v8473, 0.0
        %v8565 = vadd.f32 %v8475, 0.0
        %v8566 = vadd.f32 %v8478, 0.0
        %v8567 = vadd.f32 %v8480, 0.0
        %v8568 = vadd.f32 %v8483, 0.0
        %v8569 = vadd.f32 %v8485, 0.0
        %v8570 = vadd.f32 %v8488, 0.0
        %v8571 = vadd.f32 %v8490, 0.0
        %v8572 = vadd.f32 %v8493, 0.0
        %v8573 = vadd.f32 %v8495, 0.0
        %v8574 = vadd.f32 %v8498, 0.0
        %v8575 = vadd.f32 %v8500, 0.0
        %v8576 = vadd.f32 %v8503, 0.0
        %v8577 = vadd.f32 %v8505, 0.0
        %v8578 = vadd.f32 %v8508, 0.0
        %v8579 = vadd.f32 %v8510, 0.0
        %v8580 = vadd.f32 %v8513, 0.0
        %v8581 = vadd.f32 %v8515, 0.0
        %v8582 = vadd.f32 %v8518, 0.0
        %v8583 = vadd.f32 %v8520, 0.0
        %v8584 = vadd.f32 %v8523, 0.0
        %v8585 = vadd.f32 %v8525, 0.0
        %vm8623 = vcmask 1046528
        %v8624 = vrot.slane %v8438, 1
        %v8625 = vrot.slane %v8440, 1
        %v8626 = vsel %vm8623, %v8624, %v8625
        %v8627 = vrot.slane %v8443, 1
        %v8628 = vsel %vm8623, %v8625, %v8627
        %v8629 = vrot.slane %v8445, 1
        %v8630 = vsel %vm8623, %v8627, %v8629
        %v8631 = vrot.slane %v8448, 1
        %v8632 = vsel %vm8623, %v8629, %v8631
        %v8633 = vrot.slane %v8450, 1
        %v8634 = vsel %vm8623, %v8631, %v8633
        %v8635 = vrot.slane %v8453, 1
        %v8636 = vsel %vm8623, %v8633, %v8635
        %v8637 = vrot.slane %v8455, 1
        %v8638 = vsel %vm8623, %v8635, %v8637
        %v8639 = vrot.slane %v8458, 1
        %v8640 = vsel %vm8623, %v8637, %v8639
        %v8641 = vrot.slane %v8460, 1
        %v8642 = vsel %vm8623, %v8639, %v8641
        %v8643 = vrot.slane %v8463, 1
        %v8644 = vsel %vm8623, %v8641, %v8643
        %v8645 = vrot.slane %v8465, 1
        %v8646 = vsel %vm8623, %v8643, %v8645
        %v8647 = vrot.slane %v8468, 1
        %v8648 = vsel %vm8623, %v8645, %v8647
        %v8649 = vrot.slane %v8470, 1
        %v8650 = vsel %vm8623, %v8647, %v8649
        %v8651 = vrot.slane %v8473, 1
        %v8652 = vsel %vm8623, %v8649, %v8651
        %v8653 = vrot.slane %v8475, 1
        %v8654 = vsel %vm8623, %v8651, %v8653
        %v8655 = vrot.slane %v8478, 1
        %v8656 = vsel %vm8623, %v8653, %v8655
        %v8657 = vrot.slane %v8480, 1
        %v8658 = vsel %vm8623, %v8655, %v8657
        %v8659 = vrot.slane %v8483, 1
        %v8660 = vsel %vm8623, %v8657, %v8659
        %v8661 = vrot.slane %v8485, 1
        %v8662 = vsel %vm8623, %v8659, %v8661
        %v8663 = vrot.slane %v8488, 1
        %v8664 = vsel %vm8623, %v8661, %v8663
        %v8665 = vrot.slane %v8490, 1
        %v8666 = vsel %vm8623, %v8663, %v8665
        %v8667 = vrot.slane %v8493, 1
        %v8668 = vsel %vm8623, %v8665, %v8667
        %v8669 = vrot.slane %v8495, 1
        %v8670 = vsel %vm8623, %v8667, %v8669
        %v8671 = vrot.slane %v8498, 1
        %v8672 = vsel %vm8623, %v8669, %v8671
        %v8673 = vrot.slane %v8500, 1
        %v8674 = vsel %vm8623, %v8671, %v8673
        %v8675 = vrot.slane %v8503, 1
        %v8676 = vsel %vm8623, %v8673, %v8675
        %v8677 = vrot.slane %v8505, 1
        %v8678 = vsel %vm8623, %v8675, %v8677
        %v8679 = vrot.slane %v8508, 1
        %v8680 = vsel %vm8623, %v8677, %v8679
        %v8681 = vrot.slane %v8510, 1
        %v8682 = vsel %vm8623, %v8679, %v8681
        %v8683 = vrot.slane %v8513, 1
        %v8684 = vsel %vm8623, %v8681, %v8683
        %v8685 = vrot.slane %v8515, 1
        %v8686 = vsel %vm8623, %v8683, %v8685
        %v8687 = vrot.slane %v8518, 1
        %v8688 = vsel %vm8623, %v8685, %v8687
        %v8689 = vrot.slane %v8520, 1
        %v8690 = vsel %vm8623, %v8687, %v8689
        %v8691 = vrot.slane %v8523, 1
        %v8692 = vsel %vm8623, %v8689, %v8691
        %v8693 = vrot.slane %v8525, 1
        %v8694 = vsel %vm8623, %v8691, %v8693
        %v8695 = vrot.slane %v8528, 1
        %v8696 = vsel %vm8623, %v8693, %v8695
        %8697 = vrot.lane.b32.xlu0 %v8626, 126
        %v8698 = vpop.permute.xlu0 %8697
        %8699 = vrot.lane.b32.xlu0 %v8628, 126
        %v8700 = vpop.permute.xlu0 %8699
        %8701 = vrot.lane.b32.xlu0 %v8630, 126
        %v8702 = vpop.permute.xlu0 %8701
        %8703 = vrot.lane.b32.xlu0 %v8632, 126
        %v8704 = vpop.permute.xlu0 %8703
        %8705 = vrot.lane.b32.xlu0 %v8634, 126
        %v8706 = vpop.permute.xlu0 %8705
        %8707 = vrot.lane.b32.xlu0 %v8636, 126
        %v8708 = vpop.permute.xlu0 %8707
        %8709 = vrot.lane.b32.xlu0 %v8638, 126
        %v8710 = vpop.permute.xlu0 %8709
        %8711 = vrot.lane.b32.xlu0 %v8640, 126
        %v8712 = vpop.permute.xlu0 %8711
        %8713 = vrot.lane.b32.xlu0 %v8642, 126
        %v8714 = vpop.permute.xlu0 %8713
        %8715 = vrot.lane.b32.xlu0 %v8644, 126
        %v8716 = vpop.permute.xlu0 %8715
        %8717 = vrot.lane.b32.xlu0 %v8646, 126
        %v8718 = vpop.permute.xlu0 %8717
        %8719 = vrot.lane.b32.xlu0 %v8648, 126
        %v8720 = vpop.permute.xlu0 %8719
        %8721 = vrot.lane.b32.xlu0 %v8650, 126
        %v8722 = vpop.permute.xlu0 %8721
        %8723 = vrot.lane.b32.xlu0 %v8652, 126
        %v8724 = vpop.permute.xlu0 %8723
        %8725 = vrot.lane.b32.xlu0 %v8654, 126
        %v8726 = vpop.permute.xlu0 %8725
        %8727 = vrot.lane.b32.xlu0 %v8656, 126
        %v8728 = vpop.permute.xlu0 %8727
        %8729 = vrot.lane.b32.xlu0 %v8658, 126
        %v8730 = vpop.permute.xlu0 %8729
        %8731 = vrot.lane.b32.xlu0 %v8660, 126
        %v8732 = vpop.permute.xlu0 %8731
        %8733 = vrot.lane.b32.xlu0 %v8662, 126
        %v8734 = vpop.permute.xlu0 %8733
        %8735 = vrot.lane.b32.xlu0 %v8664, 126
        %v8736 = vpop.permute.xlu0 %8735
        %8737 = vrot.lane.b32.xlu0 %v8666, 126
        %v8738 = vpop.permute.xlu0 %8737
        %8739 = vrot.lane.b32.xlu0 %v8668, 126
        %v8740 = vpop.permute.xlu0 %8739
        %8741 = vrot.lane.b32.xlu0 %v8670, 126
        %v8742 = vpop.permute.xlu0 %8741
        %8743 = vrot.lane.b32.xlu0 %v8672, 126
        %v8744 = vpop.permute.xlu0 %8743
        %8745 = vrot.lane.b32.xlu0 %v8674, 126
        %v8746 = vpop.permute.xlu0 %8745
        %8747 = vrot.lane.b32.xlu0 %v8676, 126
        %v8748 = vpop.permute.xlu0 %8747
        %8749 = vrot.lane.b32.xlu0 %v8678, 126
        %v8750 = vpop.permute.xlu0 %8749
        %8751 = vrot.lane.b32.xlu0 %v8680, 126
        %v8752 = vpop.permute.xlu0 %8751
        %8753 = vrot.lane.b32.xlu0 %v8682, 126
        %v8754 = vpop.permute.xlu0 %8753
        %8755 = vrot.lane.b32.xlu0 %v8684, 126
        %v8756 = vpop.permute.xlu0 %8755
        %8757 = vrot.lane.b32.xlu0 %v8686, 126
        %v8758 = vpop.permute.xlu0 %8757
        %8759 = vrot.lane.b32.xlu0 %v8688, 126
        %v8760 = vpop.permute.xlu0 %8759
        %8761 = vrot.lane.b32.xlu0 %v8690, 126
        %v8762 = vpop.permute.xlu0 %8761
        %8763 = vrot.lane.b32.xlu0 %v8692, 126
        %v8764 = vpop.permute.xlu0 %8763
        %8765 = vrot.lane.b32.xlu0 %v8694, 126
        %v8766 = vpop.permute.xlu0 %8765
        %8767 = vrot.lane.b32.xlu0 %v8696, 126
        %v8768 = vpop.permute.xlu0 %8767
        %v8805 = vadd.f32 %v8550, %v8698
        %v8806 = vadd.f32 %v8551, %v8700
        %v8807 = vadd.f32 %v8552, %v8702
        %v8808 = vadd.f32 %v8553, %v8704
        %v8809 = vadd.f32 %v8554, %v8706
        %v8810 = vadd.f32 %v8555, %v8708
        %v8811 = vadd.f32 %v8556, %v8710
        %v8812 = vadd.f32 %v8557, %v8712
        %v8813 = vadd.f32 %v8558, %v8714
        %v8814 = vadd.f32 %v8559, %v8716
        %v8815 = vadd.f32 %v8560, %v8718
        %v8816 = vadd.f32 %v8561, %v8720
        %v8817 = vadd.f32 %v8562, %v8722
        %v8818 = vadd.f32 %v8563, %v8724
        %v8819 = vadd.f32 %v8564, %v8726
        %v8820 = vadd.f32 %v8565, %v8728
        %v8821 = vadd.f32 %v8566, %v8730
        %v8822 = vadd.f32 %v8567, %v8732
        %v8823 = vadd.f32 %v8568, %v8734
        %v8824 = vadd.f32 %v8569, %v8736
        %v8825 = vadd.f32 %v8570, %v8738
        %v8826 = vadd.f32 %v8571, %v8740
        %v8827 = vadd.f32 %v8572, %v8742
        %v8828 = vadd.f32 %v8573, %v8744
        %v8829 = vadd.f32 %v8574, %v8746
        %v8830 = vadd.f32 %v8575, %v8748
        %v8831 = vadd.f32 %v8576, %v8750
        %v8832 = vadd.f32 %v8577, %v8752
        %v8833 = vadd.f32 %v8578, %v8754
        %v8834 = vadd.f32 %v8579, %v8756
        %v8835 = vadd.f32 %v8580, %v8758
        %v8836 = vadd.f32 %v8581, %v8760
        %v8837 = vadd.f32 %v8582, %v8762
        %v8838 = vadd.f32 %v8583, %v8764
        %v8839 = vadd.f32 %v8584, %v8766
        %v8840 = vadd.f32 %v8585, %v8768
        %vm8841 = vcmask 1045504
        %v8842 = vrot.slane %v8438, 2
        %v8843 = vrot.slane %v8440, 2
        %v8844 = vsel %vm8841, %v8842, %v8843
        %v8845 = vrot.slane %v8443, 2
        %v8846 = vsel %vm8841, %v8843, %v8845
        %v8847 = vrot.slane %v8445, 2
        %v8848 = vsel %vm8841, %v8845, %v8847
        %v8849 = vrot.slane %v8448, 2
        %v8850 = vsel %vm8841, %v8847, %v8849
        %v8851 = vrot.slane %v8450, 2
        %v8852 = vsel %vm8841, %v8849, %v8851
        %v8853 = vrot.slane %v8453, 2
        %v8854 = vsel %vm8841, %v8851, %v8853
        %v8855 = vrot.slane %v8455, 2
        %v8856 = vsel %vm8841, %v8853, %v8855
        %v8857 = vrot.slane %v8458, 2
        %v8858 = vsel %vm8841, %v8855, %v8857
        %v8859 = vrot.slane %v8460, 2
        %v8860 = vsel %vm8841, %v8857, %v8859
        %v8861 = vrot.slane %v8463, 2
        %v8862 = vsel %vm8841, %v8859, %v8861
        %v8863 = vrot.slane %v8465, 2
        %v8864 = vsel %vm8841, %v8861, %v8863
        %v8865 = vrot.slane %v8468, 2
        %v8866 = vsel %vm8841, %v8863, %v8865
        %v8867 = vrot.slane %v8470, 2
        %v8868 = vsel %vm8841, %v8865, %v8867
        %v8869 = vrot.slane %v8473, 2
        %v8870 = vsel %vm8841, %v8867, %v8869
        %v8871 = vrot.slane %v8475, 2
        %v8872 = vsel %vm8841, %v8869, %v8871
        %v8873 = vrot.slane %v8478, 2
        %v8874 = vsel %vm8841, %v8871, %v8873
        %v8875 = vrot.slane %v8480, 2
        %v8876 = vsel %vm8841, %v8873, %v8875
        %v8877 = vrot.slane %v8483, 2
        %v8878 = vsel %vm8841, %v8875, %v8877
        %v8879 = vrot.slane %v8485, 2
        %v8880 = vsel %vm8841, %v8877, %v8879
        %v8881 = vrot.slane %v8488, 2
        %v8882 = vsel %vm8841, %v8879, %v8881
        %v8883 = vrot.slane %v8490, 2
        %v8884 = vsel %vm8841, %v8881, %v8883
        %v8885 = vrot.slane %v8493, 2
        %v8886 = vsel %vm8841, %v8883, %v8885
        %v8887 = vrot.slane %v8495, 2
        %v8888 = vsel %vm8841, %v8885, %v8887
        %v8889 = vrot.slane %v8498, 2
        %v8890 = vsel %vm8841, %v8887, %v8889
        %v8891 = vrot.slane %v8500, 2
        %v8892 = vsel %vm8841, %v8889, %v8891
        %v8893 = vrot.slane %v8503, 2
        %v8894 = vsel %vm8841, %v8891, %v8893
        %v8895 = vrot.slane %v8505, 2
        %v8896 = vsel %vm8841, %v8893, %v8895
        %v8897 = vrot.slane %v8508, 2
        %v8898 = vsel %vm8841, %v8895, %v8897
        %v8899 = vrot.slane %v8510, 2
        %v8900 = vsel %vm8841, %v8897, %v8899
        %v8901 = vrot.slane %v8513, 2
        %v8902 = vsel %vm8841, %v8899, %v8901
        %v8903 = vrot.slane %v8515, 2
        %v8904 = vsel %vm8841, %v8901, %v8903
        %v8905 = vrot.slane %v8518, 2
        %v8906 = vsel %vm8841, %v8903, %v8905
        %v8907 = vrot.slane %v8520, 2
        %v8908 = vsel %vm8841, %v8905, %v8907
        %v8909 = vrot.slane %v8523, 2
        %v8910 = vsel %vm8841, %v8907, %v8909
        %v8911 = vrot.slane %v8525, 2
        %v8912 = vsel %vm8841, %v8909, %v8911
        %v8913 = vrot.slane %v8528, 2
        %v8914 = vsel %vm8841, %v8911, %v8913
        %8915 = vrot.lane.b32.xlu0 %v8844, 124
        %v8916 = vpop.permute.xlu0 %8915
        %8917 = vrot.lane.b32.xlu0 %v8846, 124
        %v8918 = vpop.permute.xlu0 %8917
        %8919 = vrot.lane.b32.xlu0 %v8848, 124
        %v8920 = vpop.permute.xlu0 %8919
        %8921 = vrot.lane.b32.xlu0 %v8850, 124
        %v8922 = vpop.permute.xlu0 %8921
        %8923 = vrot.lane.b32.xlu0 %v8852, 124
        %v8924 = vpop.permute.xlu0 %8923
        %8925 = vrot.lane.b32.xlu0 %v8854, 124
        %v8926 = vpop.permute.xlu0 %8925
        %8927 = vrot.lane.b32.xlu0 %v8856, 124
        %v8928 = vpop.permute.xlu0 %8927
        %8929 = vrot.lane.b32.xlu0 %v8858, 124
        %v8930 = vpop.permute.xlu0 %8929
        %8931 = vrot.lane.b32.xlu0 %v8860, 124
        %v8932 = vpop.permute.xlu0 %8931
        %8933 = vrot.lane.b32.xlu0 %v8862, 124
        %v8934 = vpop.permute.xlu0 %8933
        %8935 = vrot.lane.b32.xlu0 %v8864, 124
        %v8936 = vpop.permute.xlu0 %8935
        %8937 = vrot.lane.b32.xlu0 %v8866, 124
        %v8938 = vpop.permute.xlu0 %8937
        %8939 = vrot.lane.b32.xlu0 %v8868, 124
        %v8940 = vpop.permute.xlu0 %8939
        %8941 = vrot.lane.b32.xlu0 %v8870, 124
        %v8942 = vpop.permute.xlu0 %8941
        %8943 = vrot.lane.b32.xlu0 %v8872, 124
        %v8944 = vpop.permute.xlu0 %8943
        %8945 = vrot.lane.b32.xlu0 %v8874, 124
        %v8946 = vpop.permute.xlu0 %8945
        %8947 = vrot.lane.b32.xlu0 %v8876, 124
        %v8948 = vpop.permute.xlu0 %8947
        %8949 = vrot.lane.b32.xlu0 %v8878, 124
        %v8950 = vpop.permute.xlu0 %8949
        %8951 = vrot.lane.b32.xlu0 %v8880, 124
        %v8952 = vpop.permute.xlu0 %8951
        %8953 = vrot.lane.b32.xlu0 %v8882, 124
        %v8954 = vpop.permute.xlu0 %8953
        %8955 = vrot.lane.b32.xlu0 %v8884, 124
        %v8956 = vpop.permute.xlu0 %8955
        %8957 = vrot.lane.b32.xlu0 %v8886, 124
        %v8958 = vpop.permute.xlu0 %8957
        %8959 = vrot.lane.b32.xlu0 %v8888, 124
        %v8960 = vpop.permute.xlu0 %8959
        %8961 = vrot.lane.b32.xlu0 %v8890, 124
        %v8962 = vpop.permute.xlu0 %8961
        %8963 = vrot.lane.b32.xlu0 %v8892, 124
        %v8964 = vpop.permute.xlu0 %8963
        %8965 = vrot.lane.b32.xlu0 %v8894, 124
        %v8966 = vpop.permute.xlu0 %8965
        %8967 = vrot.lane.b32.xlu0 %v8896, 124
        %v8968 = vpop.permute.xlu0 %8967
        %8969 = vrot.lane.b32.xlu0 %v8898, 124
        %v8970 = vpop.permute.xlu0 %8969
        %8971 = vrot.lane.b32.xlu0 %v8900, 124
        %v8972 = vpop.permute.xlu0 %8971
        %8973 = vrot.lane.b32.xlu0 %v8902, 124
        %v8974 = vpop.permute.xlu0 %8973
        %8975 = vrot.lane.b32.xlu0 %v8904, 124
        %v8976 = vpop.permute.xlu0 %8975
        %8977 = vrot.lane.b32.xlu0 %v8906, 124
        %v8978 = vpop.permute.xlu0 %8977
        %8979 = vrot.lane.b32.xlu0 %v8908, 124
        %v8980 = vpop.permute.xlu0 %8979
        %8981 = vrot.lane.b32.xlu0 %v8910, 124
        %v8982 = vpop.permute.xlu0 %8981
        %8983 = vrot.lane.b32.xlu0 %v8912, 124
        %v8984 = vpop.permute.xlu0 %8983
        %8985 = vrot.lane.b32.xlu0 %v8914, 124
        %v8986 = vpop.permute.xlu0 %8985
        %v9023 = vadd.f32 %v8805, %v8916
        %v9024 = vadd.f32 %v8806, %v8918
        %v9025 = vadd.f32 %v8807, %v8920
        %v9026 = vadd.f32 %v8808, %v8922
        %v9027 = vadd.f32 %v8809, %v8924
        %v9028 = vadd.f32 %v8810, %v8926
        %v9029 = vadd.f32 %v8811, %v8928
        %v9030 = vadd.f32 %v8812, %v8930
        %v9031 = vadd.f32 %v8813, %v8932
        %v9032 = vadd.f32 %v8814, %v8934
        %v9033 = vadd.f32 %v8815, %v8936
        %v9034 = vadd.f32 %v8816, %v8938
        %v9035 = vadd.f32 %v8817, %v8940
        %v9036 = vadd.f32 %v8818, %v8942
        %v9037 = vadd.f32 %v8819, %v8944
        %v9038 = vadd.f32 %v8820, %v8946
        %v9039 = vadd.f32 %v8821, %v8948
        %v9040 = vadd.f32 %v8822, %v8950
        %v9041 = vadd.f32 %v8823, %v8952
        %v9042 = vadd.f32 %v8824, %v8954
        %v9043 = vadd.f32 %v8825, %v8956
        %v9044 = vadd.f32 %v8826, %v8958
        %v9045 = vadd.f32 %v8827, %v8960
        %v9046 = vadd.f32 %v8828, %v8962
        %v9047 = vadd.f32 %v8829, %v8964
        %v9048 = vadd.f32 %v8830, %v8966
        %v9049 = vadd.f32 %v8831, %v8968
        %v9050 = vadd.f32 %v8832, %v8970
        %v9051 = vadd.f32 %v8833, %v8972
        %v9052 = vadd.f32 %v8834, %v8974
        %v9053 = vadd.f32 %v8835, %v8976
        %v9054 = vadd.f32 %v8836, %v8978
        %v9055 = vadd.f32 %v8837, %v8980
        %v9056 = vadd.f32 %v8838, %v8982
        %v9057 = vadd.f32 %v8839, %v8984
        %v9058 = vadd.f32 %v8840, %v8986
        %v9061 = vrot.slane %v8530, 2
        %v9062 = vsel %vm8841, %v8913, %v9061
        %v9063 = vrot.slane %v8533, 2
        %v9064 = vsel %vm8841, %v9061, %v9063
        %9065 = vrot.lane.b32.xlu0 %v8848, 122
        %v9066 = vpop.permute.xlu0 %9065
        %9067 = vrot.lane.b32.xlu0 %v8850, 122
        %v9068 = vpop.permute.xlu0 %9067
        %9069 = vrot.lane.b32.xlu0 %v8852, 122
        %v9070 = vpop.permute.xlu0 %9069
        %9071 = vrot.lane.b32.xlu0 %v8854, 122
        %v9072 = vpop.permute.xlu0 %9071
        %9073 = vrot.lane.b32.xlu0 %v8856, 122
        %v9074 = vpop.permute.xlu0 %9073
        %9075 = vrot.lane.b32.xlu0 %v8858, 122
        %v9076 = vpop.permute.xlu0 %9075
        %9077 = vrot.lane.b32.xlu0 %v8860, 122
        %v9078 = vpop.permute.xlu0 %9077
        %9079 = vrot.lane.b32.xlu0 %v8862, 122
        %v9080 = vpop.permute.xlu0 %9079
        %9081 = vrot.lane.b32.xlu0 %v8864, 122
        %v9082 = vpop.permute.xlu0 %9081
        %9083 = vrot.lane.b32.xlu0 %v8866, 122
        %v9084 = vpop.permute.xlu0 %9083
        %9085 = vrot.lane.b32.xlu0 %v8868, 122
        %v9086 = vpop.permute.xlu0 %9085
        %9087 = vrot.lane.b32.xlu0 %v8870, 122
        %v9088 = vpop.permute.xlu0 %9087
        %9089 = vrot.lane.b32.xlu0 %v8872, 122
        %v9090 = vpop.permute.xlu0 %9089
        %9091 = vrot.lane.b32.xlu0 %v8874, 122
        %v9092 = vpop.permute.xlu0 %9091
        %9093 = vrot.lane.b32.xlu0 %v8876, 122
        %v9094 = vpop.permute.xlu0 %9093
        %9095 = vrot.lane.b32.xlu0 %v8878, 122
        %v9096 = vpop.permute.xlu0 %9095
        %9097 = vrot.lane.b32.xlu0 %v8880, 122
        %v9098 = vpop.permute.xlu0 %9097
        %9099 = vrot.lane.b32.xlu0 %v8882, 122
        %v9100 = vpop.permute.xlu0 %9099
        %9101 = vrot.lane.b32.xlu0 %v8884, 122
        %v9102 = vpop.permute.xlu0 %9101
        %9103 = vrot.lane.b32.xlu0 %v8886, 122
        %v9104 = vpop.permute.xlu0 %9103
        %9105 = vrot.lane.b32.xlu0 %v8888, 122
        %v9106 = vpop.permute.xlu0 %9105
        %9107 = vrot.lane.b32.xlu0 %v8890, 122
        %v9108 = vpop.permute.xlu0 %9107
        %9109 = vrot.lane.b32.xlu0 %v8892, 122
        %v9110 = vpop.permute.xlu0 %9109
        %9111 = vrot.lane.b32.xlu0 %v8894, 122
        %v9112 = vpop.permute.xlu0 %9111
        %9113 = vrot.lane.b32.xlu0 %v8896, 122
        %v9114 = vpop.permute.xlu0 %9113
        %9115 = vrot.lane.b32.xlu0 %v8898, 122
        %v9116 = vpop.permute.xlu0 %9115
        %9117 = vrot.lane.b32.xlu0 %v8900, 122
        %v9118 = vpop.permute.xlu0 %9117
        %9119 = vrot.lane.b32.xlu0 %v8902, 122
        %v9120 = vpop.permute.xlu0 %9119
        %9121 = vrot.lane.b32.xlu0 %v8904, 122
        %v9122 = vpop.permute.xlu0 %9121
        %9123 = vrot.lane.b32.xlu0 %v8906, 122
        %v9124 = vpop.permute.xlu0 %9123
        %9125 = vrot.lane.b32.xlu0 %v8908, 122
        %v9126 = vpop.permute.xlu0 %9125
        %9127 = vrot.lane.b32.xlu0 %v8910, 122
        %v9128 = vpop.permute.xlu0 %9127
        %9129 = vrot.lane.b32.xlu0 %v8912, 122
        %v9130 = vpop.permute.xlu0 %9129
        %9131 = vrot.lane.b32.xlu0 %v8914, 122
        %v9132 = vpop.permute.xlu0 %9131
        %9133 = vrot.lane.b32.xlu0 %v9062, 122
        %v9134 = vpop.permute.xlu0 %9133
        %9135 = vrot.lane.b32.xlu0 %v9064, 122
        %v9136 = vpop.permute.xlu0 %9135
        %v9173 = vadd.f32 %v9023, %v9066
        %v9174 = vadd.f32 %v9024, %v9068
        %v9175 = vadd.f32 %v9025, %v9070
        %v9176 = vadd.f32 %v9026, %v9072
        %v9177 = vadd.f32 %v9027, %v9074
        %v9178 = vadd.f32 %v9028, %v9076
        %v9179 = vadd.f32 %v9029, %v9078
        %v9180 = vadd.f32 %v9030, %v9080
        %v9181 = vadd.f32 %v9031, %v9082
        %v9182 = vadd.f32 %v9032, %v9084
        %v9183 = vadd.f32 %v9033, %v9086
        %v9184 = vadd.f32 %v9034, %v9088
        %v9185 = vadd.f32 %v9035, %v9090
        %v9186 = vadd.f32 %v9036, %v9092
        %v9187 = vadd.f32 %v9037, %v9094
        %v9188 = vadd.f32 %v9038, %v9096
        %v9189 = vadd.f32 %v9039, %v9098
        %v9190 = vadd.f32 %v9040, %v9100
        %v9191 = vadd.f32 %v9041, %v9102
        %v9192 = vadd.f32 %v9042, %v9104
        %v9193 = vadd.f32 %v9043, %v9106
        %v9194 = vadd.f32 %v9044, %v9108
        %v9195 = vadd.f32 %v9045, %v9110
        %v9196 = vadd.f32 %v9046, %v9112
        %v9197 = vadd.f32 %v9047, %v9114
        %v9198 = vadd.f32 %v9048, %v9116
        %v9199 = vadd.f32 %v9049, %v9118
        %v9200 = vadd.f32 %v9050, %v9120
        %v9201 = vadd.f32 %v9051, %v9122
        %v9202 = vadd.f32 %v9052, %v9124
        %v9203 = vadd.f32 %v9053, %v9126
        %v9204 = vadd.f32 %v9054, %v9128
        %v9205 = vadd.f32 %v9055, %v9130
        %v9206 = vadd.f32 %v9056, %v9132
        %v9207 = vadd.f32 %v9057, %v9134
        %v9208 = vadd.f32 %v9058, %v9136
        %vm9209 = vcmask 1044480
        %v9210 = vrot.slane %v8443, 3
        %v9211 = vrot.slane %v8445, 3
        %v9212 = vsel %vm9209, %v9210, %v9211
        %v9213 = vrot.slane %v8448, 3
        %v9214 = vsel %vm9209, %v9211, %v9213
        %v9215 = vrot.slane %v8450, 3
        %v9216 = vsel %vm9209, %v9213, %v9215
        %v9217 = vrot.slane %v8453, 3
        %v9218 = vsel %vm9209, %v9215, %v9217
        %v9219 = vrot.slane %v8455, 3
        %v9220 = vsel %vm9209, %v9217, %v9219
        %v9221 = vrot.slane %v8458, 3
        %v9222 = vsel %vm9209, %v9219, %v9221
        %v9223 = vrot.slane %v8460, 3
        %v9224 = vsel %vm9209, %v9221, %v9223
        %v9225 = vrot.slane %v8463, 3
        %v9226 = vsel %vm9209, %v9223, %v9225
        %v9227 = vrot.slane %v8465, 3
        %v9228 = vsel %vm9209, %v9225, %v9227
        %v9229 = vrot.slane %v8468, 3
        %v9230 = vsel %vm9209, %v9227, %v9229
        %v9231 = vrot.slane %v8470, 3
        %v9232 = vsel %vm9209, %v9229, %v9231
        %v9233 = vrot.slane %v8473, 3
        %v9234 = vsel %vm9209, %v9231, %v9233
        %v9235 = vrot.slane %v8475, 3
        %v9236 = vsel %vm9209, %v9233, %v9235
        %v9237 = vrot.slane %v8478, 3
        %v9238 = vsel %vm9209, %v9235, %v9237
        %v9239 = vrot.slane %v8480, 3
        %v9240 = vsel %vm9209, %v9237, %v9239
        %v9241 = vrot.slane %v8483, 3
        %v9242 = vsel %vm9209, %v9239, %v9241
        %v9243 = vrot.slane %v8485, 3
        %v9244 = vsel %vm9209, %v9241, %v9243
        %v9245 = vrot.slane %v8488, 3
        %v9246 = vsel %vm9209, %v9243, %v9245
        %v9247 = vrot.slane %v8490, 3
        %v9248 = vsel %vm9209, %v9245, %v9247
        %v9249 = vrot.slane %v8493, 3
        %v9250 = vsel %vm9209, %v9247, %v9249
        %v9251 = vrot.slane %v8495, 3
        %v9252 = vsel %vm9209, %v9249, %v9251
        %v9253 = vrot.slane %v8498, 3
        %v9254 = vsel %vm9209, %v9251, %v9253
        %v9255 = vrot.slane %v8500, 3
        %v9256 = vsel %vm9209, %v9253, %v9255
        %v9257 = vrot.slane %v8503, 3
        %v9258 = vsel %vm9209, %v9255, %v9257
        %v9259 = vrot.slane %v8505, 3
        %v9260 = vsel %vm9209, %v9257, %v9259
        %v9261 = vrot.slane %v8508, 3
        %v9262 = vsel %vm9209, %v9259, %v9261
        %v9263 = vrot.slane %v8510, 3
        %v9264 = vsel %vm9209, %v9261, %v9263
        %v9265 = vrot.slane %v8513, 3
        %v9266 = vsel %vm9209, %v9263, %v9265
        %v9267 = vrot.slane %v8515, 3
        %v9268 = vsel %vm9209, %v9265, %v9267
        %v9269 = vrot.slane %v8518, 3
        %v9270 = vsel %vm9209, %v9267, %v9269
        %v9271 = vrot.slane %v8520, 3
        %v9272 = vsel %vm9209, %v9269, %v9271
        %v9273 = vrot.slane %v8523, 3
        %v9274 = vsel %vm9209, %v9271, %v9273
        %v9275 = vrot.slane %v8525, 3
        %v9276 = vsel %vm9209, %v9273, %v9275
        %v9277 = vrot.slane %v8528, 3
        %v9278 = vsel %vm9209, %v9275, %v9277
        %v9279 = vrot.slane %v8530, 3
        %v9280 = vsel %vm9209, %v9277, %v9279
        %v9281 = vrot.slane %v8533, 3
        %v9282 = vsel %vm9209, %v9279, %v9281
        %9283 = vrot.lane.b32.xlu0 %v9212, 120
        %v9284 = vpop.permute.xlu0 %9283
        %9285 = vrot.lane.b32.xlu0 %v9214, 120
        %v9286 = vpop.permute.xlu0 %9285
        %9287 = vrot.lane.b32.xlu0 %v9216, 120
        %v9288 = vpop.permute.xlu0 %9287
        %9289 = vrot.lane.b32.xlu0 %v9218, 120
        %v9290 = vpop.permute.xlu0 %9289
        %9291 = vrot.lane.b32.xlu0 %v9220, 120
        %v9292 = vpop.permute.xlu0 %9291
        %9293 = vrot.lane.b32.xlu0 %v9222, 120
        %v9294 = vpop.permute.xlu0 %9293
        %9295 = vrot.lane.b32.xlu0 %v9224, 120
        %v9296 = vpop.permute.xlu0 %9295
        %9297 = vrot.lane.b32.xlu0 %v9226, 120
        %v9298 = vpop.permute.xlu0 %9297
        %9299 = vrot.lane.b32.xlu0 %v9228, 120
        %v9300 = vpop.permute.xlu0 %9299
        %9301 = vrot.lane.b32.xlu0 %v9230, 120
        %v9302 = vpop.permute.xlu0 %9301
        %9303 = vrot.lane.b32.xlu0 %v9232, 120
        %v9304 = vpop.permute.xlu0 %9303
        %9305 = vrot.lane.b32.xlu0 %v9234, 120
        %v9306 = vpop.permute.xlu0 %9305
        %9307 = vrot.lane.b32.xlu0 %v9236, 120
        %v9308 = vpop.permute.xlu0 %9307
        %9309 = vrot.lane.b32.xlu0 %v9238, 120
        %v9310 = vpop.permute.xlu0 %9309
        %9311 = vrot.lane.b32.xlu0 %v9240, 120
        %v9312 = vpop.permute.xlu0 %9311
        %9313 = vrot.lane.b32.xlu0 %v9242, 120
        %v9314 = vpop.permute.xlu0 %9313
        %9315 = vrot.lane.b32.xlu0 %v9244, 120
        %v9316 = vpop.permute.xlu0 %9315
        %9317 = vrot.lane.b32.xlu0 %v9246, 120
        %v9318 = vpop.permute.xlu0 %9317
        %9319 = vrot.lane.b32.xlu0 %v9248, 120
        %v9320 = vpop.permute.xlu0 %9319
        %9321 = vrot.lane.b32.xlu0 %v9250, 120
        %v9322 = vpop.permute.xlu0 %9321
        %9323 = vrot.lane.b32.xlu0 %v9252, 120
        %v9324 = vpop.permute.xlu0 %9323
        %9325 = vrot.lane.b32.xlu0 %v9254, 120
        %v9326 = vpop.permute.xlu0 %9325
        %9327 = vrot.lane.b32.xlu0 %v9256, 120
        %v9328 = vpop.permute.xlu0 %9327
        %9329 = vrot.lane.b32.xlu0 %v9258, 120
        %v9330 = vpop.permute.xlu0 %9329
        %9331 = vrot.lane.b32.xlu0 %v9260, 120
        %v9332 = vpop.permute.xlu0 %9331
        %9333 = vrot.lane.b32.xlu0 %v9262, 120
        %v9334 = vpop.permute.xlu0 %9333
        %9335 = vrot.lane.b32.xlu0 %v9264, 120
        %v9336 = vpop.permute.xlu0 %9335
        %9337 = vrot.lane.b32.xlu0 %v9266, 120
        %v9338 = vpop.permute.xlu0 %9337
        %9339 = vrot.lane.b32.xlu0 %v9268, 120
        %v9340 = vpop.permute.xlu0 %9339
        %9341 = vrot.lane.b32.xlu0 %v9270, 120
        %v9342 = vpop.permute.xlu0 %9341
        %9343 = vrot.lane.b32.xlu0 %v9272, 120
        %v9344 = vpop.permute.xlu0 %9343
        %9345 = vrot.lane.b32.xlu0 %v9274, 120
        %v9346 = vpop.permute.xlu0 %9345
        %9347 = vrot.lane.b32.xlu0 %v9276, 120
        %v9348 = vpop.permute.xlu0 %9347
        %9349 = vrot.lane.b32.xlu0 %v9278, 120
        %v9350 = vpop.permute.xlu0 %9349
        %9351 = vrot.lane.b32.xlu0 %v9280, 120
        %v9352 = vpop.permute.xlu0 %9351
        %9353 = vrot.lane.b32.xlu0 %v9282, 120
        %v9354 = vpop.permute.xlu0 %9353
        %v9391 = vadd.f32 %v9173, %v9284
        %v9392 = vadd.f32 %v9174, %v9286
        %v9393 = vadd.f32 %v9175, %v9288
        %v9394 = vadd.f32 %v9176, %v9290
        %v9395 = vadd.f32 %v9177, %v9292
        %v9396 = vadd.f32 %v9178, %v9294
        %v9397 = vadd.f32 %v9179, %v9296
        %v9398 = vadd.f32 %v9180, %v9298
        %v9399 = vadd.f32 %v9181, %v9300
        %v9400 = vadd.f32 %v9182, %v9302
        %v9401 = vadd.f32 %v9183, %v9304
        %v9402 = vadd.f32 %v9184, %v9306
        %v9403 = vadd.f32 %v9185, %v9308
        %v9404 = vadd.f32 %v9186, %v9310
        %v9405 = vadd.f32 %v9187, %v9312
        %v9406 = vadd.f32 %v9188, %v9314
        %v9407 = vadd.f32 %v9189, %v9316
        %v9408 = vadd.f32 %v9190, %v9318
        %v9409 = vadd.f32 %v9191, %v9320
        %v9410 = vadd.f32 %v9192, %v9322
        %v9411 = vadd.f32 %v9193, %v9324
        %v9412 = vadd.f32 %v9194, %v9326
        %v9413 = vadd.f32 %v9195, %v9328
        %v9414 = vadd.f32 %v9196, %v9330
        %v9415 = vadd.f32 %v9197, %v9332
        %v9416 = vadd.f32 %v9198, %v9334
        %v9417 = vadd.f32 %v9199, %v9336
        %v9418 = vadd.f32 %v9200, %v9338
        %v9419 = vadd.f32 %v9201, %v9340
        %v9420 = vadd.f32 %v9202, %v9342
        %v9421 = vadd.f32 %v9203, %v9344
        %v9422 = vadd.f32 %v9204, %v9346
        %v9423 = vadd.f32 %v9205, %v9348
        %v9424 = vadd.f32 %v9206, %v9350
        %v9425 = vadd.f32 %v9207, %v9352
        %v9426 = vadd.f32 %v9208, %v9354
        %vm9427 = vcmask 1043456
        %v9428 = vrot.slane %v8443, 4
        %v9429 = vrot.slane %v8445, 4
        %v9430 = vsel %vm9427, %v9428, %v9429
        %v9431 = vrot.slane %v8448, 4
        %v9432 = vsel %vm9427, %v9429, %v9431
        %v9433 = vrot.slane %v8450, 4
        %v9434 = vsel %vm9427, %v9431, %v9433
        %v9435 = vrot.slane %v8453, 4
        %v9436 = vsel %vm9427, %v9433, %v9435
        %v9437 = vrot.slane %v8455, 4
        %v9438 = vsel %vm9427, %v9435, %v9437
        %v9439 = vrot.slane %v8458, 4
        %v9440 = vsel %vm9427, %v9437, %v9439
        %v9441 = vrot.slane %v8460, 4
        %v9442 = vsel %vm9427, %v9439, %v9441
        %v9443 = vrot.slane %v8463, 4
        %v9444 = vsel %vm9427, %v9441, %v9443
        %v9445 = vrot.slane %v8465, 4
        %v9446 = vsel %vm9427, %v9443, %v9445
        %v9447 = vrot.slane %v8468, 4
        %v9448 = vsel %vm9427, %v9445, %v9447
        %v9449 = vrot.slane %v8470, 4
        %v9450 = vsel %vm9427, %v9447, %v9449
        %v9451 = vrot.slane %v8473, 4
        %v9452 = vsel %vm9427, %v9449, %v9451
        %v9453 = vrot.slane %v8475, 4
        %v9454 = vsel %vm9427, %v9451, %v9453
        %v9455 = vrot.slane %v8478, 4
        %v9456 = vsel %vm9427, %v9453, %v9455
        %v9457 = vrot.slane %v8480, 4
        %v9458 = vsel %vm9427, %v9455, %v9457
        %v9459 = vrot.slane %v8483, 4
        %v9460 = vsel %vm9427, %v9457, %v9459
        %v9461 = vrot.slane %v8485, 4
        %v9462 = vsel %vm9427, %v9459, %v9461
        %v9463 = vrot.slane %v8488, 4
        %v9464 = vsel %vm9427, %v9461, %v9463
        %v9465 = vrot.slane %v8490, 4
        %v9466 = vsel %vm9427, %v9463, %v9465
        %v9467 = vrot.slane %v8493, 4
        %v9468 = vsel %vm9427, %v9465, %v9467
        %v9469 = vrot.slane %v8495, 4
        %v9470 = vsel %vm9427, %v9467, %v9469
        %v9471 = vrot.slane %v8498, 4
        %v9472 = vsel %vm9427, %v9469, %v9471
        %v9473 = vrot.slane %v8500, 4
        %v9474 = vsel %vm9427, %v9471, %v9473
        %v9475 = vrot.slane %v8503, 4
        %v9476 = vsel %vm9427, %v9473, %v9475
        %v9477 = vrot.slane %v8505, 4
        %v9478 = vsel %vm9427, %v9475, %v9477
        %v9479 = vrot.slane %v8508, 4
        %v9480 = vsel %vm9427, %v9477, %v9479
        %v9481 = vrot.slane %v8510, 4
        %v9482 = vsel %vm9427, %v9479, %v9481
        %v9483 = vrot.slane %v8513, 4
        %v9484 = vsel %vm9427, %v9481, %v9483
        %v9485 = vrot.slane %v8515, 4
        %v9486 = vsel %vm9427, %v9483, %v9485
        %v9487 = vrot.slane %v8518, 4
        %v9488 = vsel %vm9427, %v9485, %v9487
        %v9489 = vrot.slane %v8520, 4
        %v9490 = vsel %vm9427, %v9487, %v9489
        %v9491 = vrot.slane %v8523, 4
        %v9492 = vsel %vm9427, %v9489, %v9491
        %v9493 = vrot.slane %v8525, 4
        %v9494 = vsel %vm9427, %v9491, %v9493
        %v9495 = vrot.slane %v8528, 4
        %v9496 = vsel %vm9427, %v9493, %v9495
        %v9497 = vrot.slane %v8530, 4
        %v9498 = vsel %vm9427, %v9495, %v9497
        %v9499 = vrot.slane %v8533, 4
        %v9500 = vsel %vm9427, %v9497, %v9499
        %9501 = vrot.lane.b32.xlu0 %v9430, 118
        %v9502 = vpop.permute.xlu0 %9501
        %9503 = vrot.lane.b32.xlu0 %v9432, 118
        %v9504 = vpop.permute.xlu0 %9503
        %9505 = vrot.lane.b32.xlu0 %v9434, 118
        %v9506 = vpop.permute.xlu0 %9505
        %9507 = vrot.lane.b32.xlu0 %v9436, 118
        %v9508 = vpop.permute.xlu0 %9507
        %9509 = vrot.lane.b32.xlu0 %v9438, 118
        %v9510 = vpop.permute.xlu0 %9509
        %9511 = vrot.lane.b32.xlu0 %v9440, 118
        %v9512 = vpop.permute.xlu0 %9511
        %9513 = vrot.lane.b32.xlu0 %v9442, 118
        %v9514 = vpop.permute.xlu0 %9513
        %9515 = vrot.lane.b32.xlu0 %v9444, 118
        %v9516 = vpop.permute.xlu0 %9515
        %9517 = vrot.lane.b32.xlu0 %v9446, 118
        %v9518 = vpop.permute.xlu0 %9517
        %9519 = vrot.lane.b32.xlu0 %v9448, 118
        %v9520 = vpop.permute.xlu0 %9519
        %9521 = vrot.lane.b32.xlu0 %v9450, 118
        %v9522 = vpop.permute.xlu0 %9521
        %9523 = vrot.lane.b32.xlu0 %v9452, 118
        %v9524 = vpop.permute.xlu0 %9523
        %9525 = vrot.lane.b32.xlu0 %v9454, 118
        %v9526 = vpop.permute.xlu0 %9525
        %9527 = vrot.lane.b32.xlu0 %v9456, 118
        %v9528 = vpop.permute.xlu0 %9527
        %9529 = vrot.lane.b32.xlu0 %v9458, 118
        %v9530 = vpop.permute.xlu0 %9529
        %9531 = vrot.lane.b32.xlu0 %v9460, 118
        %v9532 = vpop.permute.xlu0 %9531
        %9533 = vrot.lane.b32.xlu0 %v9462, 118
        %v9534 = vpop.permute.xlu0 %9533
        %9535 = vrot.lane.b32.xlu0 %v9464, 118
        %v9536 = vpop.permute.xlu0 %9535
        %9537 = vrot.lane.b32.xlu0 %v9466, 118
        %v9538 = vpop.permute.xlu0 %9537
        %9539 = vrot.lane.b32.xlu0 %v9468, 118
        %v9540 = vpop.permute.xlu0 %9539
        %9541 = vrot.lane.b32.xlu0 %v9470, 118
        %v9542 = vpop.permute.xlu0 %9541
        %9543 = vrot.lane.b32.xlu0 %v9472, 118
        %v9544 = vpop.permute.xlu0 %9543
        %9545 = vrot.lane.b32.xlu0 %v9474, 118
        %v9546 = vpop.permute.xlu0 %9545
        %9547 = vrot.lane.b32.xlu0 %v9476, 118
        %v9548 = vpop.permute.xlu0 %9547
        %9549 = vrot.lane.b32.xlu0 %v9478, 118
        %v9550 = vpop.permute.xlu0 %9549
        %9551 = vrot.lane.b32.xlu0 %v9480, 118
        %v9552 = vpop.permute.xlu0 %9551
        %9553 = vrot.lane.b32.xlu0 %v9482, 118
        %v9554 = vpop.permute.xlu0 %9553
        %9555 = vrot.lane.b32.xlu0 %v9484, 118
        %v9556 = vpop.permute.xlu0 %9555
        %9557 = vrot.lane.b32.xlu0 %v9486, 118
        %v9558 = vpop.permute.xlu0 %9557
        %9559 = vrot.lane.b32.xlu0 %v9488, 118
        %v9560 = vpop.permute.xlu0 %9559
        %9561 = vrot.lane.b32.xlu0 %v9490, 118
        %v9562 = vpop.permute.xlu0 %9561
        %9563 = vrot.lane.b32.xlu0 %v9492, 118
        %v9564 = vpop.permute.xlu0 %9563
        %9565 = vrot.lane.b32.xlu0 %v9494, 118
        %v9566 = vpop.permute.xlu0 %9565
        %9567 = vrot.lane.b32.xlu0 %v9496, 118
        %v9568 = vpop.permute.xlu0 %9567
        %9569 = vrot.lane.b32.xlu0 %v9498, 118
        %v9570 = vpop.permute.xlu0 %9569
        %9571 = vrot.lane.b32.xlu0 %v9500, 118
        %v9572 = vpop.permute.xlu0 %9571
        %v9609 = vadd.f32 %v9391, %v9502
        %v9610 = vadd.f32 %v9392, %v9504
        %v9611 = vadd.f32 %v9393, %v9506
        %v9612 = vadd.f32 %v9394, %v9508
        %v9613 = vadd.f32 %v9395, %v9510
        %v9614 = vadd.f32 %v9396, %v9512
        %v9615 = vadd.f32 %v9397, %v9514
        %v9616 = vadd.f32 %v9398, %v9516
        %v9617 = vadd.f32 %v9399, %v9518
        %v9618 = vadd.f32 %v9400, %v9520
        %v9619 = vadd.f32 %v9401, %v9522
        %v9620 = vadd.f32 %v9402, %v9524
        %v9621 = vadd.f32 %v9403, %v9526
        %v9622 = vadd.f32 %v9404, %v9528
        %v9623 = vadd.f32 %v9405, %v9530
        %v9624 = vadd.f32 %v9406, %v9532
        %v9625 = vadd.f32 %v9407, %v9534
        %v9626 = vadd.f32 %v9408, %v9536
        %v9627 = vadd.f32 %v9409, %v9538
        %v9628 = vadd.f32 %v9410, %v9540
        %v9629 = vadd.f32 %v9411, %v9542
        %v9630 = vadd.f32 %v9412, %v9544
        %v9631 = vadd.f32 %v9413, %v9546
        %v9632 = vadd.f32 %v9414, %v9548
        %v9633 = vadd.f32 %v9415, %v9550
        %v9634 = vadd.f32 %v9416, %v9552
        %v9635 = vadd.f32 %v9417, %v9554
        %v9636 = vadd.f32 %v9418, %v9556
        %v9637 = vadd.f32 %v9419, %v9558
        %v9638 = vadd.f32 %v9420, %v9560
        %v9639 = vadd.f32 %v9421, %v9562
        %v9640 = vadd.f32 %v9422, %v9564
        %v9641 = vadd.f32 %v9423, %v9566
        %v9642 = vadd.f32 %v9424, %v9568
        %v9643 = vadd.f32 %v9425, %v9570
        %v9644 = vadd.f32 %v9426, %v9572
        %v9647 = vrot.slane %v8535, 4
        %v9648 = vsel %vm9427, %v9499, %v9647
        %v9649 = vrot.slane %v8538, 4
        %v9650 = vsel %vm9427, %v9647, %v9649
        %9651 = vrot.lane.b32.xlu0 %v9434, 116
        %v9652 = vpop.permute.xlu0 %9651
        %9653 = vrot.lane.b32.xlu0 %v9436, 116
        %v9654 = vpop.permute.xlu0 %9653
        %9655 = vrot.lane.b32.xlu0 %v9438, 116
        %v9656 = vpop.permute.xlu0 %9655
        %9657 = vrot.lane.b32.xlu0 %v9440, 116
        %v9658 = vpop.permute.xlu0 %9657
        %9659 = vrot.lane.b32.xlu0 %v9442, 116
        %v9660 = vpop.permute.xlu0 %9659
        %9661 = vrot.lane.b32.xlu0 %v9444, 116
        %v9662 = vpop.permute.xlu0 %9661
        %9663 = vrot.lane.b32.xlu0 %v9446, 116
        %v9664 = vpop.permute.xlu0 %9663
        %9665 = vrot.lane.b32.xlu0 %v9448, 116
        %v9666 = vpop.permute.xlu0 %9665
        %9667 = vrot.lane.b32.xlu0 %v9450, 116
        %v9668 = vpop.permute.xlu0 %9667
        %9669 = vrot.lane.b32.xlu0 %v9452, 116
        %v9670 = vpop.permute.xlu0 %9669
        %9671 = vrot.lane.b32.xlu0 %v9454, 116
        %v9672 = vpop.permute.xlu0 %9671
        %9673 = vrot.lane.b32.xlu0 %v9456, 116
        %v9674 = vpop.permute.xlu0 %9673
        %9675 = vrot.lane.b32.xlu0 %v9458, 116
        %v9676 = vpop.permute.xlu0 %9675
        %9677 = vrot.lane.b32.xlu0 %v9460, 116
        %v9678 = vpop.permute.xlu0 %9677
        %9679 = vrot.lane.b32.xlu0 %v9462, 116
        %v9680 = vpop.permute.xlu0 %9679
        %9681 = vrot.lane.b32.xlu0 %v9464, 116
        %v9682 = vpop.permute.xlu0 %9681
        %9683 = vrot.lane.b32.xlu0 %v9466, 116
        %v9684 = vpop.permute.xlu0 %9683
        %9685 = vrot.lane.b32.xlu0 %v9468, 116
        %v9686 = vpop.permute.xlu0 %9685
        %9687 = vrot.lane.b32.xlu0 %v9470, 116
        %v9688 = vpop.permute.xlu0 %9687
        %9689 = vrot.lane.b32.xlu0 %v9472, 116
        %v9690 = vpop.permute.xlu0 %9689
        %9691 = vrot.lane.b32.xlu0 %v9474, 116
        %v9692 = vpop.permute.xlu0 %9691
        %9693 = vrot.lane.b32.xlu0 %v9476, 116
        %v9694 = vpop.permute.xlu0 %9693
        %9695 = vrot.lane.b32.xlu0 %v9478, 116
        %v9696 = vpop.permute.xlu0 %9695
        %9697 = vrot.lane.b32.xlu0 %v9480, 116
        %v9698 = vpop.permute.xlu0 %9697
        %9699 = vrot.lane.b32.xlu0 %v9482, 116
        %v9700 = vpop.permute.xlu0 %9699
        %9701 = vrot.lane.b32.xlu0 %v9484, 116
        %v9702 = vpop.permute.xlu0 %9701
        %9703 = vrot.lane.b32.xlu0 %v9486, 116
        %v9704 = vpop.permute.xlu0 %9703
        %9705 = vrot.lane.b32.xlu0 %v9488, 116
        %v9706 = vpop.permute.xlu0 %9705
        %9707 = vrot.lane.b32.xlu0 %v9490, 116
        %v9708 = vpop.permute.xlu0 %9707
        %9709 = vrot.lane.b32.xlu0 %v9492, 116
        %v9710 = vpop.permute.xlu0 %9709
        %9711 = vrot.lane.b32.xlu0 %v9494, 116
        %v9712 = vpop.permute.xlu0 %9711
        %9713 = vrot.lane.b32.xlu0 %v9496, 116
        %v9714 = vpop.permute.xlu0 %9713
        %9715 = vrot.lane.b32.xlu0 %v9498, 116
        %v9716 = vpop.permute.xlu0 %9715
        %9717 = vrot.lane.b32.xlu0 %v9500, 116
        %v9718 = vpop.permute.xlu0 %9717
        %9719 = vrot.lane.b32.xlu0 %v9648, 116
        %v9720 = vpop.permute.xlu0 %9719
        %9721 = vrot.lane.b32.xlu0 %v9650, 116
        %v9722 = vpop.permute.xlu0 %9721
        %v9759 = vadd.f32 %v9609, %v9652
        %v9760 = vadd.f32 %v9610, %v9654
        %v9761 = vadd.f32 %v9611, %v9656
        %v9762 = vadd.f32 %v9612, %v9658
        %v9763 = vadd.f32 %v9613, %v9660
        %v9764 = vadd.f32 %v9614, %v9662
        %v9765 = vadd.f32 %v9615, %v9664
        %v9766 = vadd.f32 %v9616, %v9666
        %v9767 = vadd.f32 %v9617, %v9668
        %v9768 = vadd.f32 %v9618, %v9670
        %v9769 = vadd.f32 %v9619, %v9672
        %v9770 = vadd.f32 %v9620, %v9674
        %v9771 = vadd.f32 %v9621, %v9676
        %v9772 = vadd.f32 %v9622, %v9678
        %v9773 = vadd.f32 %v9623, %v9680
        %v9774 = vadd.f32 %v9624, %v9682
        %v9775 = vadd.f32 %v9625, %v9684
        %v9776 = vadd.f32 %v9626, %v9686
        %v9777 = vadd.f32 %v9627, %v9688
        %v9778 = vadd.f32 %v9628, %v9690
        %v9779 = vadd.f32 %v9629, %v9692
        %v9780 = vadd.f32 %v9630, %v9694
        %v9781 = vadd.f32 %v9631, %v9696
        %v9782 = vadd.f32 %v9632, %v9698
        %v9783 = vadd.f32 %v9633, %v9700
        %v9784 = vadd.f32 %v9634, %v9702
        %v9785 = vadd.f32 %v9635, %v9704
        %v9786 = vadd.f32 %v9636, %v9706
        %v9787 = vadd.f32 %v9637, %v9708
        %v9788 = vadd.f32 %v9638, %v9710
        %v9789 = vadd.f32 %v9639, %v9712
        %v9790 = vadd.f32 %v9640, %v9714
        %v9791 = vadd.f32 %v9641, %v9716
        %v9792 = vadd.f32 %v9642, %v9718
        %v9793 = vadd.f32 %v9643, %v9720
        %v9794 = vadd.f32 %v9644, %v9722
        %vm9795 = vcmask 1042432
        %v9796 = vrot.slane %v8448, 5
        %v9797 = vrot.slane %v8450, 5
        %v9798 = vsel %vm9795, %v9796, %v9797
        %v9799 = vrot.slane %v8453, 5
        %v9800 = vsel %vm9795, %v9797, %v9799
        %v9801 = vrot.slane %v8455, 5
        %v9802 = vsel %vm9795, %v9799, %v9801
        %v9803 = vrot.slane %v8458, 5
        %v9804 = vsel %vm9795, %v9801, %v9803
        %v9805 = vrot.slane %v8460, 5
        %v9806 = vsel %vm9795, %v9803, %v9805
        %v9807 = vrot.slane %v8463, 5
        %v9808 = vsel %vm9795, %v9805, %v9807
        %v9809 = vrot.slane %v8465, 5
        %v9810 = vsel %vm9795, %v9807, %v9809
        %v9811 = vrot.slane %v8468, 5
        %v9812 = vsel %vm9795, %v9809, %v9811
        %v9813 = vrot.slane %v8470, 5
        %v9814 = vsel %vm9795, %v9811, %v9813
        %v9815 = vrot.slane %v8473, 5
        %v9816 = vsel %vm9795, %v9813, %v9815
        %v9817 = vrot.slane %v8475, 5
        %v9818 = vsel %vm9795, %v9815, %v9817
        %v9819 = vrot.slane %v8478, 5
        %v9820 = vsel %vm9795, %v9817, %v9819
        %v9821 = vrot.slane %v8480, 5
        %v9822 = vsel %vm9795, %v9819, %v9821
        %v9823 = vrot.slane %v8483, 5
        %v9824 = vsel %vm9795, %v9821, %v9823
        %v9825 = vrot.slane %v8485, 5
        %v9826 = vsel %vm9795, %v9823, %v9825
        %v9827 = vrot.slane %v8488, 5
        %v9828 = vsel %vm9795, %v9825, %v9827
        %v9829 = vrot.slane %v8490, 5
        %v9830 = vsel %vm9795, %v9827, %v9829
        %v9831 = vrot.slane %v8493, 5
        %v9832 = vsel %vm9795, %v9829, %v9831
        %v9833 = vrot.slane %v8495, 5
        %v9834 = vsel %vm9795, %v9831, %v9833
        %v9835 = vrot.slane %v8498, 5
        %v9836 = vsel %vm9795, %v9833, %v9835
        %v9837 = vrot.slane %v8500, 5
        %v9838 = vsel %vm9795, %v9835, %v9837
        %v9839 = vrot.slane %v8503, 5
        %v9840 = vsel %vm9795, %v9837, %v9839
        %v9841 = vrot.slane %v8505, 5
        %v9842 = vsel %vm9795, %v9839, %v9841
        %v9843 = vrot.slane %v8508, 5
        %v9844 = vsel %vm9795, %v9841, %v9843
        %v9845 = vrot.slane %v8510, 5
        %v9846 = vsel %vm9795, %v9843, %v9845
        %v9847 = vrot.slane %v8513, 5
        %v9848 = vsel %vm9795, %v9845, %v9847
        %v9849 = vrot.slane %v8515, 5
        %v9850 = vsel %vm9795, %v9847, %v9849
        %v9851 = vrot.slane %v8518, 5
        %v9852 = vsel %vm9795, %v9849, %v9851
        %v9853 = vrot.slane %v8520, 5
        %v9854 = vsel %vm9795, %v9851, %v9853
        %v9855 = vrot.slane %v8523, 5
        %v9856 = vsel %vm9795, %v9853, %v9855
        %v9857 = vrot.slane %v8525, 5
        %v9858 = vsel %vm9795, %v9855, %v9857
        %v9859 = vrot.slane %v8528, 5
        %v9860 = vsel %vm9795, %v9857, %v9859
        %v9861 = vrot.slane %v8530, 5
        %v9862 = vsel %vm9795, %v9859, %v9861
        %v9863 = vrot.slane %v8533, 5
        %v9864 = vsel %vm9795, %v9861, %v9863
        %v9865 = vrot.slane %v8535, 5
        %v9866 = vsel %vm9795, %v9863, %v9865
        %v9867 = vrot.slane %v8538, 5
        %v9868 = vsel %vm9795, %v9865, %v9867
        %9869 = vrot.lane.b32.xlu0 %v9798, 114
        %v9870 = vpop.permute.xlu0 %9869
        %9871 = vrot.lane.b32.xlu0 %v9800, 114
        %v9872 = vpop.permute.xlu0 %9871
        %9873 = vrot.lane.b32.xlu0 %v9802, 114
        %v9874 = vpop.permute.xlu0 %9873
        %9875 = vrot.lane.b32.xlu0 %v9804, 114
        %v9876 = vpop.permute.xlu0 %9875
        %9877 = vrot.lane.b32.xlu0 %v9806, 114
        %v9878 = vpop.permute.xlu0 %9877
        %9879 = vrot.lane.b32.xlu0 %v9808, 114
        %v9880 = vpop.permute.xlu0 %9879
        %9881 = vrot.lane.b32.xlu0 %v9810, 114
        %v9882 = vpop.permute.xlu0 %9881
        %9883 = vrot.lane.b32.xlu0 %v9812, 114
        %v9884 = vpop.permute.xlu0 %9883
        %9885 = vrot.lane.b32.xlu0 %v9814, 114
        %v9886 = vpop.permute.xlu0 %9885
        %9887 = vrot.lane.b32.xlu0 %v9816, 114
        %v9888 = vpop.permute.xlu0 %9887
        %9889 = vrot.lane.b32.xlu0 %v9818, 114
        %v9890 = vpop.permute.xlu0 %9889
        %9891 = vrot.lane.b32.xlu0 %v9820, 114
        %v9892 = vpop.permute.xlu0 %9891
        %9893 = vrot.lane.b32.xlu0 %v9822, 114
        %v9894 = vpop.permute.xlu0 %9893
        %9895 = vrot.lane.b32.xlu0 %v9824, 114
        %v9896 = vpop.permute.xlu0 %9895
        %9897 = vrot.lane.b32.xlu0 %v9826, 114
        %v9898 = vpop.permute.xlu0 %9897
        %9899 = vrot.lane.b32.xlu0 %v9828, 114
        %v9900 = vpop.permute.xlu0 %9899
        %9901 = vrot.lane.b32.xlu0 %v9830, 114
        %v9902 = vpop.permute.xlu0 %9901
        %9903 = vrot.lane.b32.xlu0 %v9832, 114
        %v9904 = vpop.permute.xlu0 %9903
        %9905 = vrot.lane.b32.xlu0 %v9834, 114
        %v9906 = vpop.permute.xlu0 %9905
        %9907 = vrot.lane.b32.xlu0 %v9836, 114
        %v9908 = vpop.permute.xlu0 %9907
        %9909 = vrot.lane.b32.xlu0 %v9838, 114
        %v9910 = vpop.permute.xlu0 %9909
        %9911 = vrot.lane.b32.xlu0 %v9840, 114
        %v9912 = vpop.permute.xlu0 %9911
        %9913 = vrot.lane.b32.xlu0 %v9842, 114
        %v9914 = vpop.permute.xlu0 %9913
        %9915 = vrot.lane.b32.xlu0 %v9844, 114
        %v9916 = vpop.permute.xlu0 %9915
        %9917 = vrot.lane.b32.xlu0 %v9846, 114
        %v9918 = vpop.permute.xlu0 %9917
        %9919 = vrot.lane.b32.xlu0 %v9848, 114
        %v9920 = vpop.permute.xlu0 %9919
        %9921 = vrot.lane.b32.xlu0 %v9850, 114
        %v9922 = vpop.permute.xlu0 %9921
        %9923 = vrot.lane.b32.xlu0 %v9852, 114
        %v9924 = vpop.permute.xlu0 %9923
        %9925 = vrot.lane.b32.xlu0 %v9854, 114
        %v9926 = vpop.permute.xlu0 %9925
        %9927 = vrot.lane.b32.xlu0 %v9856, 114
        %v9928 = vpop.permute.xlu0 %9927
        %9929 = vrot.lane.b32.xlu0 %v9858, 114
        %v9930 = vpop.permute.xlu0 %9929
        %9931 = vrot.lane.b32.xlu0 %v9860, 114
        %v9932 = vpop.permute.xlu0 %9931
        %9933 = vrot.lane.b32.xlu0 %v9862, 114
        %v9934 = vpop.permute.xlu0 %9933
        %9935 = vrot.lane.b32.xlu0 %v9864, 114
        %v9936 = vpop.permute.xlu0 %9935
        %9937 = vrot.lane.b32.xlu0 %v9866, 114
        %v9938 = vpop.permute.xlu0 %9937
        %9939 = vrot.lane.b32.xlu0 %v9868, 114
        %v9940 = vpop.permute.xlu0 %9939
        %v9977 = vadd.f32 %v9759, %v9870
        %v9978 = vadd.f32 %v9760, %v9872
        %v9979 = vadd.f32 %v9761, %v9874
        %v9980 = vadd.f32 %v9762, %v9876
        %v9981 = vadd.f32 %v9763, %v9878
        %v9982 = vadd.f32 %v9764, %v9880
        %v9983 = vadd.f32 %v9765, %v9882
        %v9984 = vadd.f32 %v9766, %v9884
        %v9985 = vadd.f32 %v9767, %v9886
        %v9986 = vadd.f32 %v9768, %v9888
        %v9987 = vadd.f32 %v9769, %v9890
        %v9988 = vadd.f32 %v9770, %v9892
        %v9989 = vadd.f32 %v9771, %v9894
        %v9990 = vadd.f32 %v9772, %v9896
        %v9991 = vadd.f32 %v9773, %v9898
        %v9992 = vadd.f32 %v9774, %v9900
        %v9993 = vadd.f32 %v9775, %v9902
        %v9994 = vadd.f32 %v9776, %v9904
        %v9995 = vadd.f32 %v9777, %v9906
        %v9996 = vadd.f32 %v9778, %v9908
        %v9997 = vadd.f32 %v9779, %v9910
        %v9998 = vadd.f32 %v9780, %v9912
        %v9999 = vadd.f32 %v9781, %v9914
        %v10000 = vadd.f32 %v9782, %v9916
        %v10001 = vadd.f32 %v9783, %v9918
        %v10002 = vadd.f32 %v9784, %v9920
        %v10003 = vadd.f32 %v9785, %v9922
        %v10004 = vadd.f32 %v9786, %v9924
        %v10005 = vadd.f32 %v9787, %v9926
        %v10006 = vadd.f32 %v9788, %v9928
        %v10007 = vadd.f32 %v9789, %v9930
        %v10008 = vadd.f32 %v9790, %v9932
        %v10009 = vadd.f32 %v9791, %v9934
        %v10010 = vadd.f32 %v9792, %v9936
        %v10011 = vadd.f32 %v9793, %v9938
        %v10012 = vadd.f32 %v9794, %v9940
        %vm10013 = vcmask 1041408
        %v10014 = vrot.slane %v8448, 6
        %v10015 = vrot.slane %v8450, 6
        %v10016 = vsel %vm10013, %v10014, %v10015
        %v10017 = vrot.slane %v8453, 6
        %v10018 = vsel %vm10013, %v10015, %v10017
        %v10019 = vrot.slane %v8455, 6
        %v10020 = vsel %vm10013, %v10017, %v10019
        %v10021 = vrot.slane %v8458, 6
        %v10022 = vsel %vm10013, %v10019, %v10021
        %v10023 = vrot.slane %v8460, 6
        %v10024 = vsel %vm10013, %v10021, %v10023
        %v10025 = vrot.slane %v8463, 6
        %v10026 = vsel %vm10013, %v10023, %v10025
        %v10027 = vrot.slane %v8465, 6
        %v10028 = vsel %vm10013, %v10025, %v10027
        %v10029 = vrot.slane %v8468, 6
        %v10030 = vsel %vm10013, %v10027, %v10029
        %v10031 = vrot.slane %v8470, 6
        %v10032 = vsel %vm10013, %v10029, %v10031
        %v10033 = vrot.slane %v8473, 6
        %v10034 = vsel %vm10013, %v10031, %v10033
        %v10035 = vrot.slane %v8475, 6
        %v10036 = vsel %vm10013, %v10033, %v10035
        %v10037 = vrot.slane %v8478, 6
        %v10038 = vsel %vm10013, %v10035, %v10037
        %v10039 = vrot.slane %v8480, 6
        %v10040 = vsel %vm10013, %v10037, %v10039
        %v10041 = vrot.slane %v8483, 6
        %v10042 = vsel %vm10013, %v10039, %v10041
        %v10043 = vrot.slane %v8485, 6
        %v10044 = vsel %vm10013, %v10041, %v10043
        %v10045 = vrot.slane %v8488, 6
        %v10046 = vsel %vm10013, %v10043, %v10045
        %v10047 = vrot.slane %v8490, 6
        %v10048 = vsel %vm10013, %v10045, %v10047
        %v10049 = vrot.slane %v8493, 6
        %v10050 = vsel %vm10013, %v10047, %v10049
        %v10051 = vrot.slane %v8495, 6
        %v10052 = vsel %vm10013, %v10049, %v10051
        %v10053 = vrot.slane %v8498, 6
        %v10054 = vsel %vm10013, %v10051, %v10053
        %v10055 = vrot.slane %v8500, 6
        %v10056 = vsel %vm10013, %v10053, %v10055
        %v10057 = vrot.slane %v8503, 6
        %v10058 = vsel %vm10013, %v10055, %v10057
        %v10059 = vrot.slane %v8505, 6
        %v10060 = vsel %vm10013, %v10057, %v10059
        %v10061 = vrot.slane %v8508, 6
        %v10062 = vsel %vm10013, %v10059, %v10061
        %v10063 = vrot.slane %v8510, 6
        %v10064 = vsel %vm10013, %v10061, %v10063
        %v10065 = vrot.slane %v8513, 6
        %v10066 = vsel %vm10013, %v10063, %v10065
        %v10067 = vrot.slane %v8515, 6
        %v10068 = vsel %vm10013, %v10065, %v10067
        %v10069 = vrot.slane %v8518, 6
        %v10070 = vsel %vm10013, %v10067, %v10069
        %v10071 = vrot.slane %v8520, 6
        %v10072 = vsel %vm10013, %v10069, %v10071
        %v10073 = vrot.slane %v8523, 6
        %v10074 = vsel %vm10013, %v10071, %v10073
        %v10075 = vrot.slane %v8525, 6
        %v10076 = vsel %vm10013, %v10073, %v10075
        %v10077 = vrot.slane %v8528, 6
        %v10078 = vsel %vm10013, %v10075, %v10077
        %v10079 = vrot.slane %v8530, 6
        %v10080 = vsel %vm10013, %v10077, %v10079
        %v10081 = vrot.slane %v8533, 6
        %v10082 = vsel %vm10013, %v10079, %v10081
        %v10083 = vrot.slane %v8535, 6
        %v10084 = vsel %vm10013, %v10081, %v10083
        %v10085 = vrot.slane %v8538, 6
        %v10086 = vsel %vm10013, %v10083, %v10085
        %10087 = vrot.lane.b32.xlu0 %v10016, 112
        %v10088 = vpop.permute.xlu0 %10087
        %10089 = vrot.lane.b32.xlu0 %v10018, 112
        %v10090 = vpop.permute.xlu0 %10089
        %10091 = vrot.lane.b32.xlu0 %v10020, 112
        %v10092 = vpop.permute.xlu0 %10091
        %10093 = vrot.lane.b32.xlu0 %v10022, 112
        %v10094 = vpop.permute.xlu0 %10093
        %10095 = vrot.lane.b32.xlu0 %v10024, 112
        %v10096 = vpop.permute.xlu0 %10095
        %10097 = vrot.lane.b32.xlu0 %v10026, 112
        %v10098 = vpop.permute.xlu0 %10097
        %10099 = vrot.lane.b32.xlu0 %v10028, 112
        %v10100 = vpop.permute.xlu0 %10099
        %10101 = vrot.lane.b32.xlu0 %v10030, 112
        %v10102 = vpop.permute.xlu0 %10101
        %10103 = vrot.lane.b32.xlu0 %v10032, 112
        %v10104 = vpop.permute.xlu0 %10103
        %10105 = vrot.lane.b32.xlu0 %v10034, 112
        %v10106 = vpop.permute.xlu0 %10105
        %10107 = vrot.lane.b32.xlu0 %v10036, 112
        %v10108 = vpop.permute.xlu0 %10107
        %10109 = vrot.lane.b32.xlu0 %v10038, 112
        %v10110 = vpop.permute.xlu0 %10109
        %10111 = vrot.lane.b32.xlu0 %v10040, 112
        %v10112 = vpop.permute.xlu0 %10111
        %10113 = vrot.lane.b32.xlu0 %v10042, 112
        %v10114 = vpop.permute.xlu0 %10113
        %10115 = vrot.lane.b32.xlu0 %v10044, 112
        %v10116 = vpop.permute.xlu0 %10115
        %10117 = vrot.lane.b32.xlu0 %v10046, 112
        %v10118 = vpop.permute.xlu0 %10117
        %10119 = vrot.lane.b32.xlu0 %v10048, 112
        %v10120 = vpop.permute.xlu0 %10119
        %10121 = vrot.lane.b32.xlu0 %v10050, 112
        %v10122 = vpop.permute.xlu0 %10121
        %10123 = vrot.lane.b32.xlu0 %v10052, 112
        %v10124 = vpop.permute.xlu0 %10123
        %10125 = vrot.lane.b32.xlu0 %v10054, 112
        %v10126 = vpop.permute.xlu0 %10125
        %10127 = vrot.lane.b32.xlu0 %v10056, 112
        %v10128 = vpop.permute.xlu0 %10127
        %10129 = vrot.lane.b32.xlu0 %v10058, 112
        %v10130 = vpop.permute.xlu0 %10129
        %10131 = vrot.lane.b32.xlu0 %v10060, 112
        %v10132 = vpop.permute.xlu0 %10131
        %10133 = vrot.lane.b32.xlu0 %v10062, 112
        %v10134 = vpop.permute.xlu0 %10133
        %10135 = vrot.lane.b32.xlu0 %v10064, 112
        %v10136 = vpop.permute.xlu0 %10135
        %10137 = vrot.lane.b32.xlu0 %v10066, 112
        %v10138 = vpop.permute.xlu0 %10137
        %10139 = vrot.lane.b32.xlu0 %v10068, 112
        %v10140 = vpop.permute.xlu0 %10139
        %10141 = vrot.lane.b32.xlu0 %v10070, 112
        %v10142 = vpop.permute.xlu0 %10141
        %10143 = vrot.lane.b32.xlu0 %v10072, 112
        %v10144 = vpop.permute.xlu0 %10143
        %10145 = vrot.lane.b32.xlu0 %v10074, 112
        %v10146 = vpop.permute.xlu0 %10145
        %10147 = vrot.lane.b32.xlu0 %v10076, 112
        %v10148 = vpop.permute.xlu0 %10147
        %10149 = vrot.lane.b32.xlu0 %v10078, 112
        %v10150 = vpop.permute.xlu0 %10149
        %10151 = vrot.lane.b32.xlu0 %v10080, 112
        %v10152 = vpop.permute.xlu0 %10151
        %10153 = vrot.lane.b32.xlu0 %v10082, 112
        %v10154 = vpop.permute.xlu0 %10153
        %10155 = vrot.lane.b32.xlu0 %v10084, 112
        %v10156 = vpop.permute.xlu0 %10155
        %10157 = vrot.lane.b32.xlu0 %v10086, 112
        %v10158 = vpop.permute.xlu0 %10157
        %v10195 = vadd.f32 %v9977, %v10088
        %v10196 = vadd.f32 %v9978, %v10090
        %v10197 = vadd.f32 %v9979, %v10092
        %v10198 = vadd.f32 %v9980, %v10094
        %v10199 = vadd.f32 %v9981, %v10096
        %v10200 = vadd.f32 %v9982, %v10098
        %v10201 = vadd.f32 %v9983, %v10100
        %v10202 = vadd.f32 %v9984, %v10102
        %v10203 = vadd.f32 %v9985, %v10104
        %v10204 = vadd.f32 %v9986, %v10106
        %v10205 = vadd.f32 %v9987, %v10108
        %v10206 = vadd.f32 %v9988, %v10110
        %v10207 = vadd.f32 %v9989, %v10112
        %v10208 = vadd.f32 %v9990, %v10114
        %v10209 = vadd.f32 %v9991, %v10116
        %v10210 = vadd.f32 %v9992, %v10118
        %v10211 = vadd.f32 %v9993, %v10120
        %v10212 = vadd.f32 %v9994, %v10122
        %v10213 = vadd.f32 %v9995, %v10124
        %v10214 = vadd.f32 %v9996, %v10126
        %v10215 = vadd.f32 %v9997, %v10128
        %v10216 = vadd.f32 %v9998, %v10130
        %v10217 = vadd.f32 %v9999, %v10132
        %v10218 = vadd.f32 %v10000, %v10134
        %v10219 = vadd.f32 %v10001, %v10136
        %v10220 = vadd.f32 %v10002, %v10138
        %v10221 = vadd.f32 %v10003, %v10140
        %v10222 = vadd.f32 %v10004, %v10142
        %v10223 = vadd.f32 %v10005, %v10144
        %v10224 = vadd.f32 %v10006, %v10146
        %v10225 = vadd.f32 %v10007, %v10148
        %v10226 = vadd.f32 %v10008, %v10150
        %v10227 = vadd.f32 %v10009, %v10152
        %v10228 = vadd.f32 %v10010, %v10154
        %v10229 = vadd.f32 %v10011, %v10156
        %v10230 = vadd.f32 %v10012, %v10158
        %v10231 = vld [vmem:[%s4] sm:$0x1]
        %v10233 = vperm.slane %v10231, 0
        %v10235 = vadd.f32 %v10195, %v10233
        %v10236 = vadd.f32 %v10196, %v10233
        %v10237 = vadd.f32 %v10197, %v10233
        %v10238 = vadd.f32 %v10198, %v10233
        %v10239 = vadd.f32 %v10199, %v10233
        %v10240 = vadd.f32 %v10200, %v10233
        %v10241 = vadd.f32 %v10201, %v10233
        %v10242 = vadd.f32 %v10202, %v10233
        %v10243 = vadd.f32 %v10203, %v10233
        %v10244 = vadd.f32 %v10204, %v10233
        %v10245 = vadd.f32 %v10205, %v10233
        %v10246 = vadd.f32 %v10206, %v10233
        %v10247 = vadd.f32 %v10207, %v10233
        %v10248 = vadd.f32 %v10208, %v10233
        %v10249 = vadd.f32 %v10209, %v10233
        %v10250 = vadd.f32 %v10210, %v10233
        %v10251 = vadd.f32 %v10211, %v10233
        %v10252 = vadd.f32 %v10212, %v10233
        %v10253 = vadd.f32 %v10213, %v10233
        %v10254 = vadd.f32 %v10214, %v10233
        %v10255 = vadd.f32 %v10215, %v10233
        %v10256 = vadd.f32 %v10216, %v10233
        %v10257 = vadd.f32 %v10217, %v10233
        %v10258 = vadd.f32 %v10218, %v10233
        %v10259 = vadd.f32 %v10219, %v10233
        %v10260 = vadd.f32 %v10220, %v10233
        %v10261 = vadd.f32 %v10221, %v10233
        %v10262 = vadd.f32 %v10222, %v10233
        %v10263 = vadd.f32 %v10223, %v10233
        %v10264 = vadd.f32 %v10224, %v10233
        %v10265 = vadd.f32 %v10225, %v10233
        %v10266 = vadd.f32 %v10226, %v10233
        %v10267 = vadd.f32 %v10227, %v10233
        %v10268 = vadd.f32 %v10228, %v10233
        %v10269 = vadd.f32 %v10229, %v10233
        %v10270 = vadd.f32 %v10230, %v10233
        %10271 = vxpose.xlu0.b32.start [1/16] %v10235, 128
        %10272 = vxpose.xlu0.b32.cont [2/16] %v10236, 128
        %10273 = vxpose.xlu0.b32.cont [3/16] %v10237, 128
        %10274 = vxpose.xlu0.b32.cont [4/16] %v10238, 128
        %10275 = vxpose.xlu0.b32.cont [5/16] %v10239, 128
        %10276 = vxpose.xlu0.b32.cont [6/16] %v10240, 128
        %10277 = vxpose.xlu0.b32.cont [7/16] %v10241, 128
        %10278 = vxpose.xlu0.b32.cont [8/16] %v10242, 128
        %10279 = vxpose.xlu0.b32.cont [9/16] %v10243, 128
        %10280 = vxpose.xlu0.b32.cont [10/16] %v10244, 128
        %10281 = vxpose.xlu0.b32.cont [11/16] %v10245, 128
        %10282 = vxpose.xlu0.b32.cont [12/16] %v10246, 128
        %10283 = vxpose.xlu0.b32.cont [13/16] %v10247, 128
        %10284 = vxpose.xlu0.b32.cont [14/16] %v10248, 128
        %10285 = vxpose.xlu0.b32.cont [15/16] %v10249, 128
        %10286 = vxpose.xlu0.b32.end [16/16] %v10250, 128
        %v10287 = vpop.trf.xlu0
        %v10288 = vpop.trf.xlu0
        %v10289 = vpop.trf.xlu0
        %v10290 = vpop.trf.xlu0
        %v10291 = vpop.trf.xlu0
        %v10292 = vpop.trf.xlu0
        %v10293 = vpop.trf.xlu0
        %v10294 = vpop.trf.xlu0
        %v10295 = vpop.trf.xlu0
        %v10296 = vpop.trf.xlu0
        %v10297 = vpop.trf.xlu0
        %v10298 = vpop.trf.xlu0
        %v10299 = vpop.trf.xlu0
        %v10300 = vpop.trf.xlu0
        %v10301 = vpop.trf.xlu0
        %v10302 = vpop.trf.xlu0
        %10303 = vxpose.xlu0.b32.start [1/16] %v10251, 128
        %10304 = vxpose.xlu0.b32.cont [2/16] %v10252, 128
        %10305 = vxpose.xlu0.b32.cont [3/16] %v10253, 128
        %10306 = vxpose.xlu0.b32.cont [4/16] %v10254, 128
        %10307 = vxpose.xlu0.b32.cont [5/16] %v10255, 128
        %10308 = vxpose.xlu0.b32.cont [6/16] %v10256, 128
        %10309 = vxpose.xlu0.b32.cont [7/16] %v10257, 128
        %10310 = vxpose.xlu0.b32.cont [8/16] %v10258, 128
        %10311 = vxpose.xlu0.b32.cont [9/16] %v10259, 128
        %10312 = vxpose.xlu0.b32.cont [10/16] %v10260, 128
        %10313 = vxpose.xlu0.b32.cont [11/16] %v10261, 128
        %10314 = vxpose.xlu0.b32.cont [12/16] %v10262, 128
        %10315 = vxpose.xlu0.b32.cont [13/16] %v10263, 128
        %10316 = vxpose.xlu0.b32.cont [14/16] %v10264, 128
        %10317 = vxpose.xlu0.b32.cont [15/16] %v10265, 128
        %10318 = vxpose.xlu0.b32.end [16/16] %v10266, 128
        %v10319 = vpop.trf.xlu0
        %v10320 = vpop.trf.xlu0
        %v10321 = vpop.trf.xlu0
        %v10322 = vpop.trf.xlu0
        %v10323 = vpop.trf.xlu0
        %v10324 = vpop.trf.xlu0
        %v10325 = vpop.trf.xlu0
        %v10326 = vpop.trf.xlu0
        %v10327 = vpop.trf.xlu0
        %v10328 = vpop.trf.xlu0
        %v10329 = vpop.trf.xlu0
        %v10330 = vpop.trf.xlu0
        %v10331 = vpop.trf.xlu0
        %v10332 = vpop.trf.xlu0
        %v10333 = vpop.trf.xlu0
        %v10334 = vpop.trf.xlu0
        %10335 = vxpose.xlu0.b32.start [1/16] %v10267, 128
        %10336 = vxpose.xlu0.b32.cont [2/16] %v10268, 128
        %10337 = vxpose.xlu0.b32.cont [3/16] %v10269, 128
        %10338 = vxpose.xlu0.b32.cont [4/16] %v10270, 128
        %10339 = vxpose.xlu0.b32.cont [5/16] 0.0, 128
        %10340 = vxpose.xlu0.b32.cont [6/16] 0.0, 128
        %10341 = vxpose.xlu0.b32.cont [7/16] 0.0, 128
        %10342 = vxpose.xlu0.b32.cont [8/16] 0.0, 128
        %10343 = vxpose.xlu0.b32.cont [9/16] 0.0, 128
        %10344 = vxpose.xlu0.b32.cont [10/16] 0.0, 128
        %10345 = vxpose.xlu0.b32.cont [11/16] 0.0, 128
        %10346 = vxpose.xlu0.b32.cont [12/16] 0.0, 128
        %10347 = vxpose.xlu0.b32.cont [13/16] 0.0, 128
        %10348 = vxpose.xlu0.b32.cont [14/16] 0.0, 128
        %10349 = vxpose.xlu0.b32.cont [15/16] 0.0, 128
        %10350 = vxpose.xlu0.b32.end [16/16] 0.0, 128
        %v10351 = vpop.trf.xlu0
        %v10352 = vpop.trf.xlu0
        %v10353 = vpop.trf.xlu0
        %v10354 = vpop.trf.xlu0
        %v10355 = vpop.trf.xlu0
        %v10356 = vpop.trf.xlu0
        %v10357 = vpop.trf.xlu0
        %v10358 = vpop.trf.xlu0
        %v10359 = vpop.trf.xlu0
        %v10360 = vpop.trf.xlu0
        %v10361 = vpop.trf.xlu0
        %v10362 = vpop.trf.xlu0
        %v10363 = vpop.trf.xlu0
        %v10364 = vpop.trf.xlu0
        %v10365 = vpop.trf.xlu0
        %v10366 = vpop.trf.xlu0
        %v10368 = vrot.slane %v10287, 1
        %vm10370 = vcmask 122880
        %10371 = vst.msk [vmem:[%s217] sm:$0x1] %vm10370, %v10287
        %10372 = vst.msk [vmem:[%s217 + $0x10] sm:$0x1] %vm10370, %v10368
        %v10373 = vperm.slane %v10287, 0
        %v10374 = vperm.slane %v10368, 0
        %10375 = vrot.lane.b32.xlu0 %v10373, 110
        %v10376 = vpop.permute.xlu0 %10375
        %10377 = vrot.lane.b32.xlu0 %v10374, 110
        %v10378 = vpop.permute.xlu0 %10377
        %10381 = vst.msk [vmem:[%s217 + $0x1] sm:$0x1] %vm10370, %v10376
        %10382 = vst.msk [vmem:[%s217 + $0x11] sm:$0x1] %vm10370, %v10378
        %10383 = vrot.lane.b32.xlu0 %v10373, 92
        %v10384 = vpop.permute.xlu0 %10383
        %10385 = vrot.lane.b32.xlu0 %v10374, 92
        %v10386 = vpop.permute.xlu0 %10385
        %10389 = vst.msk [vmem:[%s217 + $0x2] sm:$0x1] %vm10370, %v10384
        %10390 = vst.msk [vmem:[%s217 + $0x12] sm:$0x1] %vm10370, %v10386
        %10391 = vrot.lane.b32.xlu0 %v10373, 74
        %v10392 = vpop.permute.xlu0 %10391
        %10393 = vrot.lane.b32.xlu0 %v10374, 74
        %v10394 = vpop.permute.xlu0 %10393
        %10397 = vst.msk [vmem:[%s217 + $0x3] sm:$0x1] %vm10370, %v10392
        %10398 = vst.msk [vmem:[%s217 + $0x13] sm:$0x1] %vm10370, %v10394
        %10399 = vrot.lane.b32.xlu0 %v10373, 56
        %v10400 = vpop.permute.xlu0 %10399
        %10401 = vrot.lane.b32.xlu0 %v10374, 56
        %v10402 = vpop.permute.xlu0 %10401
        %10405 = vst.msk [vmem:[%s217 + $0x4] sm:$0x1] %vm10370, %v10400
        %10406 = vst.msk [vmem:[%s217 + $0x14] sm:$0x1] %vm10370, %v10402
        %10407 = vrot.lane.b32.xlu0 %v10373, 38
        %v10408 = vpop.permute.xlu0 %10407
        %10409 = vrot.lane.b32.xlu0 %v10374, 38
        %v10410 = vpop.permute.xlu0 %10409
        %10413 = vst.msk [vmem:[%s217 + $0x5] sm:$0x1] %vm10370, %v10408
        %10414 = vst.msk [vmem:[%s217 + $0x15] sm:$0x1] %vm10370, %v10410
        %10415 = vrot.lane.b32.xlu0 %v10373, 20
        %v10416 = vpop.permute.xlu0 %10415
        %10417 = vrot.lane.b32.xlu0 %v10374, 20
        %v10418 = vpop.permute.xlu0 %10417
        %10421 = vst.msk [vmem:[%s217 + $0x6] sm:$0x1] %vm10370, %v10416
        %10422 = vst.msk [vmem:[%s217 + $0x16] sm:$0x1] %vm10370, %v10418
        %v10424 = vrot.slane %v10319, 7
        %vm10425 = vcmask 1040384
        %v10426 = vsel %vm10425, %v10287, %v10424
        %v10427 = vsel %vm387, %v10287, %v10424
        %v10428 = vrot.slane %v10427, 1
        %v10429 = vperm.slane %v10426, 0
        %v10430 = vperm.slane %v10426, 1
        %v10431 = vperm.slane %v10428, 0
        %v10432 = vperm.slane %v10428, 1
        %10433 = vrot.lane.b32.xlu0 %v10429, 2
        %v10434 = vpop.permute.xlu0 %10433
        %10435 = vrot.lane.b32.xlu0 %v10430, 2
        %v10436 = vpop.permute.xlu0 %10435
        %10437 = vrot.lane.b32.xlu0 %v10431, 2
        %v10438 = vpop.permute.xlu0 %10437
        %10439 = vrot.lane.b32.xlu0 %v10432, 2
        %v10440 = vpop.permute.xlu0 %10439
        %vm10441 = vcmask 15360
        %v10442 = vsel %vm10441, %v10434, %v10436
        %v10443 = vsel %vm10441, %v10438, %v10440
        %10446 = vst.msk [vmem:[%s217 + $0x7] sm:$0x1] %vm10370, %v10442
        %10447 = vst.msk [vmem:[%s217 + $0x17] sm:$0x1] %vm10370, %v10443
        %v10448 = vrot.slane %v10319, 1
        %v10449 = vperm.slane %v10319, 0
        %v10450 = vperm.slane %v10448, 0
        %10451 = vrot.lane.b32.xlu0 %v10449, 112
        %v10452 = vpop.permute.xlu0 %10451
        %10453 = vrot.lane.b32.xlu0 %v10450, 112
        %v10454 = vpop.permute.xlu0 %10453
        %10457 = vst.msk [vmem:[%s217 + $0x8] sm:$0x1] %vm10370, %v10452
        %10458 = vst.msk [vmem:[%s217 + $0x18] sm:$0x1] %vm10370, %v10454
        %10459 = vrot.lane.b32.xlu0 %v10449, 94
        %v10460 = vpop.permute.xlu0 %10459
        %10461 = vrot.lane.b32.xlu0 %v10450, 94
        %v10462 = vpop.permute.xlu0 %10461
        %10465 = vst.msk [vmem:[%s217 + $0x9] sm:$0x1] %vm10370, %v10460
        %10466 = vst.msk [vmem:[%s217 + $0x19] sm:$0x1] %vm10370, %v10462
        %10467 = vrot.lane.b32.xlu0 %v10449, 76
        %v10468 = vpop.permute.xlu0 %10467
        %10469 = vrot.lane.b32.xlu0 %v10450, 76
        %v10470 = vpop.permute.xlu0 %10469
        %10473 = vst.msk [vmem:[%s217 + $0xa] sm:$0x1] %vm10370, %v10468
        %10474 = vst.msk [vmem:[%s217 + $0x1a] sm:$0x1] %vm10370, %v10470
        %10475 = vrot.lane.b32.xlu0 %v10449, 58
        %v10476 = vpop.permute.xlu0 %10475
        %10477 = vrot.lane.b32.xlu0 %v10450, 58
        %v10478 = vpop.permute.xlu0 %10477
        %10481 = vst.msk [vmem:[%s217 + $0xb] sm:$0x1] %vm10370, %v10476
        %10482 = vst.msk [vmem:[%s217 + $0x1b] sm:$0x1] %vm10370, %v10478
        %10483 = vrot.lane.b32.xlu0 %v10449, 40
        %v10484 = vpop.permute.xlu0 %10483
        %10485 = vrot.lane.b32.xlu0 %v10450, 40
        %v10486 = vpop.permute.xlu0 %10485
        %10489 = vst.msk [vmem:[%s217 + $0xc] sm:$0x1] %vm10370, %v10484
        %10490 = vst.msk [vmem:[%s217 + $0x1c] sm:$0x1] %vm10370, %v10486
        %10491 = vrot.lane.b32.xlu0 %v10449, 22
        %v10492 = vpop.permute.xlu0 %10491
        %10493 = vrot.lane.b32.xlu0 %v10450, 22
        %v10494 = vpop.permute.xlu0 %10493
        %10497 = vst.msk [vmem:[%s217 + $0xd] sm:$0x1] %vm10370, %v10492
        %10498 = vst.msk [vmem:[%s217 + $0x1d] sm:$0x1] %vm10370, %v10494
        %v10500 = vrot.slane %v10351, 7
        %v10501 = vsel %vm10425, %v10319, %v10500
        %v10502 = vsel %vm387, %v10319, %v10500
        %v10503 = vrot.slane %v10502, 1
        %v10504 = vperm.slane %v10501, 0
        %v10505 = vperm.slane %v10501, 1
        %v10506 = vperm.slane %v10503, 0
        %v10507 = vperm.slane %v10503, 1
        %10508 = vrot.lane.b32.xlu0 %v10504, 4
        %v10509 = vpop.permute.xlu0 %10508
        %10510 = vrot.lane.b32.xlu0 %v10505, 4
        %v10511 = vpop.permute.xlu0 %10510
        %10512 = vrot.lane.b32.xlu0 %v10506, 4
        %v10513 = vpop.permute.xlu0 %10512
        %10514 = vrot.lane.b32.xlu0 %v10507, 4
        %v10515 = vpop.permute.xlu0 %10514
        %vm10516 = vcmask 31744
        %v10517 = vsel %vm10516, %v10509, %v10511
        %v10518 = vsel %vm10516, %v10513, %v10515
        %10521 = vst.msk [vmem:[%s217 + $0xe] sm:$0x1] %vm10370, %v10517
        %10522 = vst.msk [vmem:[%s217 + $0x1e] sm:$0x1] %vm10370, %v10518
        %v10523 = vrot.slane %v10351, 1
        %v10524 = vperm.slane %v10351, 0
        %v10525 = vperm.slane %v10523, 0
        %10526 = vrot.lane.b32.xlu0 %v10524, 114
        %v10527 = vpop.permute.xlu0 %10526
        %10528 = vrot.lane.b32.xlu0 %v10525, 114
        %v10529 = vpop.permute.xlu0 %10528
        %10532 = vst.msk [vmem:[%s217 + $0xf] sm:$0x1] %vm10370, %v10527
        %10533 = vst.msk [vmem:[%s217 + $0x1f] sm:$0x1] %vm10370, %v10529
        %s10534 = sand.u32 %s137, 1
        %s10535 = scalar_lea.sflag [#allocation5], %s10534
        %s10536 = sand.u32 %s137, 1
        %s10537 = smul.addr %s10536, 32
        %s10538 = scalar_lea.vmem [#allocation4], %s10537
        // Predicated region
        $region41: #{tpu_custom_call.1} parent=39 // pred_check
          %p10539 = pneg %p147
        $region42: #{tpu_custom_call.1} parent=39 // pred_check_branch
          %10541 = sbr.rel (%p10539) target = $region44
        $region43: #{tpu_custom_call.1} parent=39 // pred_region
          %10543 = vsyncadd %s10535, 0
          %s10544 = smul.addr %s19, 4
          %s10545 = smul.addr %s10544, 8
          %s10546 = scalar_lea.hbm %s5, %s10545
          %s10547 = sshll.u32 %s10538, 4
          %s10548 = int_to_ptr.vmem [resolvable:$true] %s10547
          %s10549 = sshll.u32 %s10546, 4
          %s10550 = int_to_ptr.hbm [resolvable:$true] %s10549
          %10555 = dma.vmem_to_hbm [thread:$0]  %s10548, 512, %s10550, %s10535, 128, 128, 8
        $region44: #{tpu_custom_call.1} parent=39 // pred_fallthru
          _
      $region40: #{tpu_custom_call.1} parent=5 // pred_fallthru
        _
      %p10556 = scmp.le.s32.totalorder 2, %s14
      // Predicated region
      $region45: #{tpu_custom_call.1} parent=5 // pred_check
        %p10557 = pneg %p10556
      $region46: #{tpu_custom_call.1} parent=5 // pred_check_branch
        %10559 = sbr.rel (%p10557) target = $region48
      $region47: #{tpu_custom_call.1} parent=5 // pred_region
        %s10560 = ssub.s32 %s14, 2
        // Predicated region
        $region49: #{tpu_custom_call.1} parent=47 // pred_check
          %p10561 = pneg %p153
        $region50: #{tpu_custom_call.1} parent=47 // pred_check_branch
          %10563 = sbr.rel (%p10561) target = $region52
        $region51: #{tpu_custom_call.1} parent=47 // pred_region
          %s10564 = sand.u32 %s138, 1
          %s10565 = scalar_lea.sflag [#allocation5], %s10564
          %s10566 = sand.u32 %s138, 1
          %s10567 = smul.addr %s10566, 32
          %s10568 = scalar_lea.vmem [#allocation4], %s10567
          %10570 = dma.done %s10565, 512
        $region52: #{tpu_custom_call.1} parent=47 // pred_fallthru
          _
      $region48: #{tpu_custom_call.1} parent=5 // pred_fallthru
        _
    $region6: #{tpu_custom_call.1} parent=1 // loop_footer
      %s18 = sadd.s32 1, %s14
    $region7: #{tpu_custom_call.1} parent=1 // loop_footer_branch
      %13 = sbr.rel target = $region3
    $region8: #{tpu_custom_call.1} parent=1 // loop_exit
      _
    %10571 = vsyncpa [#allocation5], 1
    %s10572 = scalar_lea.sflag [#allocation5], 1
    %10573 = vsyncpa %s10572, 1

</llo_original>
